<compile_context>
chip_gen: v5e
topology: v5e:2x2
jax: 0.10.0
libtpu: 0.0.40
codegen_flags: <defaults>
</compile_context>

<pallas_src>
import functools

import jax
import jax.numpy as jnp
from jax.experimental import pallas as pl
from jax.experimental.pallas import tpu as pltpu


def attention_block_kernel(x_ref, w0_ref, w1_ref, o_ref, *, block_b, seq_len,
                           exp_dtype=None):
    # x_ref : (Bblk, T, F) VMEM tile (Bblk examples per grid step)
    # w0_ref: (F, H)   first Linear weight, stored (in, out)
    # w1_ref: (1, H)   second Linear weight as a row
    # o_ref : (Bblk, F)
    bblk, t = block_b, seq_len
    f = x_ref.shape[2]

    x3 = x_ref[...].astype(jnp.float32)                          # (Bblk, T, F)

    # Softmax over features (torch dim=2): lane-axis reduction.
    x3 = x3 - jnp.max(x3, axis=-1, keepdims=True)
    if exp_dtype is not None:
        # Optional EUP-throughput knob for v6e/v7x ONLY (v5e has no bf16 EUP);
        # accuracy-gated because the result feeds a log.
        ex = jnp.exp(x3.astype(exp_dtype)).astype(jnp.float32)
    else:
        ex = jnp.exp(x3)
    # Exact reciprocal of the small (Bblk, T, 1) denominator, then broadcast
    # multiply (cheaper than a full (Bblk, T, F) divide, no approx error).
    xs3 = ex * (1.0 / jnp.sum(ex, axis=-1, keepdims=True))

    # First Linear on the MXU: flatten (Bblk, T, F) -> (Bblk*T, F) so the MXU
    # M dimension is filled (T=8 keeps the merge layout-preserving).
    xs_flat = xs3.reshape(bblk * t, f)
    h = jnp.dot(xs_flat.astype(w0_ref.dtype), w0_ref[...],
                preferred_element_type=jnp.float32)               # (Bblk*T, H)
    h = jnp.maximum(h, 0.0)

    # Second Linear (H -> 1): VPU multiply + lane reduction (avoids a
    # lane-sparse N=1 MXU matmul).
    s = jnp.sum(h * w1_ref[...], axis=-1, keepdims=True)          # (Bblk*T, 1)

    # Softmax over the sequence (torch dim=1), per example, exact denominator.
    s3 = s.reshape(bblk, t, 1)                                    # (Bblk, T, 1)
    s3 = s3 - jnp.max(s3, axis=1, keepdims=True)
    es = jnp.exp(s3)
    w3 = es * (1.0 / jnp.sum(es, axis=1, keepdims=True))

    # Attention-weighted sum over the sequence, then log.
    y = jnp.sum(w3 * xs3, axis=1)                                 # (Bblk, F)
    o_ref[...] = jnp.log(y).astype(o_ref.dtype)


def _choose_batch_block(batch, block_b, min_grid_steps):
    """Per-step batch block: largest multiple of 8 <= block_b, but capped so
    the grid keeps >= min_grid_steps steps (v7x two-TC sharding) when B > 8."""
    if batch <= 8:
        return batch                       # single block == full dim (legal)
    cap = max(8, (block_b // 8) * 8)
    want = ((pl.cdiv(batch, max(min_grid_steps, 1)) + 7) // 8) * 8
    return max(8, min(cap, want))


def attention_block(x, w0, w1, *, block_b=256, min_grid_steps=2,
                    matmul_dtype=None, exp_dtype=None):
    """x: (B, T, F); w0: (F, H); w1: (H, 1). Returns (B, F).

    block_b       : cap on examples per grid step (multiple of 8). Larger is
                    better until the grid gets too short; sweep 128-512.
    min_grid_steps: keep at least this many grid steps when B > 8 so the
                    "parallel" grid axis can split across both v7x TCs.
    matmul_dtype  : e.g. jnp.bfloat16 to feed bf16 MXU operands (accumulation
                    stays f32). Valid on v5e, v6e and v7x — only elementwise
                    math needs f32, and it stays f32 here.
    exp_dtype     : e.g. jnp.bfloat16 on v6e/v7x to double EUP exp throughput
                    in the feature softmax; leave None on v5e / for accuracy.
    """
    B, T, F = x.shape
    Fw, H = w0.shape
    assert Fw == F and w1.shape == (H, 1)

    if matmul_dtype is not None:
        w0 = w0.astype(matmul_dtype)       # also halves weight DMA bytes
    w1_row = w1.reshape(1, H).astype(jnp.float32)

    bblk = _choose_batch_block(B, block_b, min_grid_steps)
    grid = pl.cdiv(B, bblk)                # ragged last block handled by Pallas

    kernel = functools.partial(attention_block_kernel, block_b=bblk,
                               seq_len=T, exp_dtype=exp_dtype)

    return pl.pallas_call(
        kernel,
        out_shape=jax.ShapeDtypeStruct((B, F), x.dtype),
        grid_spec=pltpu.PrefetchScalarGridSpec(
            num_scalar_prefetch=0,
            grid=(grid,),
            in_specs=[
                pl.BlockSpec((bblk, T, F), lambda b: (b, 0, 0)),
                pl.BlockSpec((F, H), lambda b: (0, 0)),   # weights resident
                pl.BlockSpec((1, H), lambda b: (0, 0)),
            ],
            out_specs=pl.BlockSpec((bblk, F), lambda b: (b, 0)),
        ),
        compiler_params=pltpu.CompilerParams(
            dimension_semantics=("parallel",)),           # 2-TC split on v7x
    )(x, w0, w1_row)


def attention_block_ref(x, w0, w1):
    """Pure-JAX reference mirroring the PyTorch forward."""
    xs = jax.nn.softmax(x, axis=2)
    h = jnp.maximum(jnp.einsum("btf,fh->bth", xs, w0), 0.0)
    s = jnp.einsum("bth,ho->bto", h, w1)           # (B, T, 1)
    w = jax.nn.softmax(s, axis=1)
    return jnp.log(jnp.sum(w * xs, axis=1))        # (B, F)


if __name__ == "__main__":
    # Shapes consistent with the module: (B, T, F), hidden = F.
    T, F = 8, 32
    H = F

    key = jax.random.PRNGKey(0)
    kx, k0, k1 = jax.random.split(key, 3)

    x_all = jax.random.normal(kx, (256, T, F), dtype=jnp.float32)
    # Linear weights stored transposed ((in, out)) for right-matmul.
    w0 = jax.random.normal(k0, (F, H), dtype=jnp.float32) * (1.0 / jnp.sqrt(F))
    w1 = jax.random.normal(k1, (H, 1), dtype=jnp.float32) * (1.0 / jnp.sqrt(H))

    # B=256: large batch block (bblk=128, even grid of 2).
    # B=32 : even grid of 2 small blocks.
    # B=20 : ragged last block (no wrapper pad / slice).
    # B=2  : single block equal to the full batch dim.
    for B in (256, 32, 20, 2):
        x = x_all[:B]
        out = jax.block_until_ready(attention_block(x, w0, w1))
        ref = attention_block_ref(x, w0, w1)
        assert out.shape == (B, F)
        # Approx reciprocals were removed (exact softmax denominators); the
        # remaining slack only covers TPU default (bf16-pass) matmul precision
        # on either side of the comparison at F=H=32.
        assert jnp.allclose(out, ref, atol=1e-2, rtol=1e-2), (
            f"mismatch vs reference for B={B}")

    # bf16 MXU-operand path (valid on v5e/v6e/v7x; elementwise math stays f32).
    out_bf16 = jax.block_until_ready(
        attention_block(x_all[:32], w0, w1, matmul_dtype=jnp.bfloat16))
    ref_32 = attention_block_ref(x_all[:32], w0, w1)
    assert jnp.allclose(out_bf16, ref_32, atol=5e-2, rtol=5e-2), (
        "mismatch vs reference for bf16 matmul path")

    print("KERNEL_OK")
</pallas_src>

<mosaic_0001>
module attributes {stable_mosaic.version = 11 : i64} {
  func.func @attention_block_kernel(%arg0: i32, %arg1: memref<128x8x32xf32, #tpu.memory_space<vmem>>, %arg2: memref<32x32xf32, #tpu.memory_space<vmem>>, %arg3: memref<1x32xf32, #tpu.memory_space<vmem>>, %arg4: memref<128x32xf32, #tpu.memory_space<vmem>>) attributes {dimension_semantics = [#tpu.dimension_semantics<parallel>], iteration_bounds = array<i64: 2>, scalar_prefetch = 0 : i64, scratch_operands = 0 : i64, tpu.core_type = #tpu.core_type<tc>, window_params = [{transform_indices = @transform_0, window_bounds = array<i64: 128, 8, 32>}, {pipeline_mode = #tpu.pipeline_mode<synchronous>, transform_indices = @transform_1, window_bounds = array<i64: 32, 32>}, {pipeline_mode = #tpu.pipeline_mode<synchronous>, transform_indices = @transform_2, window_bounds = array<i64: 1, 32>}, {transform_indices = @transform_3, window_bounds = array<i64: 128, 32>}]} {
    %c0 = arith.constant 0 : index
    %c0_0 = arith.constant 0 : index
    %c0_1 = arith.constant 0 : index
    %0 = vector.load %arg1[%c0, %c0_0, %c0_1] : memref<128x8x32xf32, #tpu.memory_space<vmem>>, vector<128x8x32xf32>
    %cst = arith.constant dense<0xFF800000> : vector<128x8xf32>
    %1 = vector.multi_reduction <maximumf>, %0, %cst [2] : vector<128x8x32xf32> to vector<128x8xf32>
    %2 = vector.shape_cast %1 : vector<128x8xf32> to vector<128x8x1xf32>
    %3 = vector.broadcast %2 : vector<128x8x1xf32> to vector<128x8x32xf32>
    %4 = arith.subf %0, %3 : vector<128x8x32xf32>
    %5 = math.exp %4 : vector<128x8x32xf32>
    %cst_2 = arith.constant dense<0.000000e+00> : vector<128x8xf32>
    %6 = vector.multi_reduction <add>, %5, %cst_2 [2] : vector<128x8x32xf32> to vector<128x8xf32>
    %7 = vector.shape_cast %6 : vector<128x8xf32> to vector<128x8x1xf32>
    %cst_3 = arith.constant 1.000000e+00 : f32
    %8 = vector.broadcast %cst_3 : f32 to vector<128x8x1xf32>
    %9 = arith.divf %8, %7 : vector<128x8x1xf32>
    %10 = vector.broadcast %9 : vector<128x8x1xf32> to vector<128x8x32xf32>
    %11 = arith.mulf %5, %10 : vector<128x8x32xf32>
    %12 = vector.shape_cast %11 : vector<128x8x32xf32> to vector<1024x32xf32>
    %c0_4 = arith.constant 0 : index
    %c0_5 = arith.constant 0 : index
    %13 = vector.load %arg2[%c0_4, %c0_5] : memref<32x32xf32, #tpu.memory_space<vmem>>, vector<32x32xf32>
    %cst_6 = arith.constant dense<0.000000e+00> : vector<1024x32xf32>
    %14 = tpu.matmul %12, %13, %cst_6 {dimension_numbers = #tpu.dot_dimension_numbers<[1], [0], [0], [1], [0, 0, 1, 1], [], []>} : vector<1024x32xf32>, vector<32x32xf32>, vector<1024x32xf32> -> vector<1024x32xf32>
    %cst_7 = arith.constant 0.000000e+00 : f32
    %15 = vector.broadcast %cst_7 : f32 to vector<1024x32xf32>
    %16 = arith.maximumf %14, %15 : vector<1024x32xf32>
    %c0_8 = arith.constant 0 : index
    %c0_9 = arith.constant 0 : index
    %17 = vector.load %arg3[%c0_8, %c0_9] : memref<1x32xf32, #tpu.memory_space<vmem>>, vector<1x32xf32>
    %18 = vector.broadcast %17 : vector<1x32xf32> to vector<1024x32xf32>
    %19 = arith.mulf %16, %18 : vector<1024x32xf32>
    %cst_10 = arith.constant dense<0.000000e+00> : vector<1024xf32>
    %20 = vector.multi_reduction <add>, %19, %cst_10 [1] : vector<1024x32xf32> to vector<1024xf32>
    %21 = vector.shape_cast %20 : vector<1024xf32> to vector<1024x1xf32>
    %22 = vector.shape_cast %21 : vector<1024x1xf32> to vector<128x8x1xf32>
    %cst_11 = arith.constant dense<0xFF800000> : vector<128x1xf32>
    %23 = vector.multi_reduction <maximumf>, %22, %cst_11 [1] : vector<128x8x1xf32> to vector<128x1xf32>
    %24 = vector.shape_cast %23 : vector<128x1xf32> to vector<128x1x1xf32>
    %25 = vector.broadcast %24 : vector<128x1x1xf32> to vector<128x8x1xf32>
    %26 = arith.subf %22, %25 : vector<128x8x1xf32>
    %27 = math.exp %26 : vector<128x8x1xf32>
    %cst_12 = arith.constant dense<0.000000e+00> : vector<128x1xf32>
    %28 = vector.multi_reduction <add>, %27, %cst_12 [1] : vector<128x8x1xf32> to vector<128x1xf32>
    %29 = vector.shape_cast %28 : vector<128x1xf32> to vector<128x1x1xf32>
    %cst_13 = arith.constant 1.000000e+00 : f32
    %30 = vector.broadcast %cst_13 : f32 to vector<128x1x1xf32>
    %31 = arith.divf %30, %29 : vector<128x1x1xf32>
    %32 = vector.broadcast %31 : vector<128x1x1xf32> to vector<128x8x1xf32>
    %33 = arith.mulf %27, %32 : vector<128x8x1xf32>
    %34 = vector.broadcast %33 : vector<128x8x1xf32> to vector<128x8x32xf32>
    %35 = arith.mulf %34, %11 : vector<128x8x32xf32>
    %cst_14 = arith.constant dense<0.000000e+00> : vector<128x32xf32>
    %36 = vector.multi_reduction <add>, %35, %cst_14 [1] : vector<128x8x32xf32> to vector<128x32xf32>
    %37 = math.log %36 : vector<128x32xf32>
    %c0_15 = arith.constant 0 : index
    %c0_16 = arith.constant 0 : index
    %38 = vector.load %arg4[%c0_15, %c0_16] : memref<128x32xf32, #tpu.memory_space<vmem>>, vector<128x32xf32>
    tpu.vector_store %arg4[%c0_15, %c0_16], %37 {strides = array<i32>} : memref<128x32xf32, #tpu.memory_space<vmem>>, vector<128x32xf32>,
    return
  }
  func.func @transform_0(%arg0: i32) -> (i32, i32, i32) {
    %c0_i32 = arith.constant 0 : i32
    %c0_i32_0 = arith.constant 0 : i32
    %c0_i32_1 = arith.constant 0 : i32
    return %arg0, %c0_i32, %c0_i32_0 : i32, i32, i32
  }
  func.func @transform_1(%arg0: i32) -> (i32, i32) {
    %c0_i32 = arith.constant 0 : i32
    %c0_i32_0 = arith.constant 0 : i32
    %c0_i32_1 = arith.constant 0 : i32
    return %c0_i32, %c0_i32_0 : i32, i32
  }
  func.func @transform_2(%arg0: i32) -> (i32, i32) {
    %c0_i32 = arith.constant 0 : i32
    %c0_i32_0 = arith.constant 0 : i32
    %c0_i32_1 = arith.constant 0 : i32
    return %c0_i32, %c0_i32_0 : i32, i32
  }
  func.func @transform_3(%arg0: i32) -> (i32, i32) {
    %c0_i32 = arith.constant 0 : i32
    %c0_i32_0 = arith.constant 0 : i32
    return %arg0, %c0_i32 : i32, i32
  }
}

</mosaic_0001>

<llo_original>
// kernel: tpu_custom_call.1
$region0: #{tpu_custom_call.1}
  #allocation0 [shape = 'u32[]', space=smem, size = 0x4, offset = 0x4, fixed_abs, tag = 'smem constant byte address 0x4 - core index']
  #allocation1 [shape = 'u32[72,128]{1,0:T(1,128)}', space=vmem, size = 0x9000, scoped, tag = 'internal scratch']
  %s0 = inlined_call_operand.vmem [shape: f32[256,8,32], index: 0, kind: input, shape index: {}]
  %s1 = inlined_call_operand.vmem [shape: f32[32,32], index: 1, kind: input, shape index: {}]
  %s2 = inlined_call_operand.vmem [shape: f32[1,32], index: 2, kind: input, shape index: {}]
  %s3 = inlined_call_operand.vmem [shape: f32[256,32], index: 3, kind: output, shape index: {}]
  %s4 = sld [smem:[#allocation0]]
  $region45: #{tpu_custom_call.1} parent=0
    _
  %s6 = ssub.s32 1, %s4
  %s7 = scalar_select 0, %s6, %s4
  loop: start=0, step=1, limit=4
  $region2: #{tpu_custom_call.1} parent=0 // loop_pre_header
    _
  $region3: #{tpu_custom_call.1} parent=0 // loop_header
    %s9 = sphi 0, %s13
    %p10 = scmp.ge.s32.totalorder %s9, 4
    %s19 = sphi 0, %s21
    %s22 = sphi 0, %s19
    %s23 = sphi 0, %s22
    %s39 = sphi 0, %s23
    %s43 = sphi 0, %s43
    %s45 = sphi 0, %s43
    %s46 = sphi 0, %s45
    %s60 = sphi 0, %s46
    %s64 = sphi 0, %s64
    %s66 = sphi 0, %s64
    %s67 = sphi 0, %s66
    %s81 = sphi 0, %s67
    %s87 = sphi 0, %s89
    %s90 = sphi 0, %s87
    %s91 = sphi 0, %s90
    %s107 = sphi 0, %s91
  $region4: #{tpu_custom_call.1} parent=0 // loop_header_branch
    %12 = sbr.rel (%p10) target = $region8
  $region5: #{tpu_custom_call.1} parent=0 // loop_body
    %s14 = ssub.s32 %s9, 1
    %s15 = ssub.s32 %s9, 2
    %s16 = sadd.s32 %s9, 1
    %s17 = ssub.s32 %s9, %s16
    %p18 = scmp.eq.s32.totalorder %s17, 0
    %s20 = sadd.s32 %s19, 1
    %s21 = scalar_select %p18, %s19, %s20
    %p24 = pneg %p18
    %p25 = scmp.eq.s32.totalorder %s9, 1
    %p26 = por %p24, %p25
    %p27 = scmp.ne.s32.totalorder %s19, %s22
    %p28 = scmp.eq.s32.totalorder %s9, 0
    %p29 = por %p27, %p28
    %p30 = scmp.ne.s32.totalorder %s19, %s22
    %p31 = scmp.eq.s32.totalorder %s14, 1
    %p32 = por %p30, %p31
    %p33 = scmp.ne.s32.totalorder %s22, %s23
    %p34 = scmp.eq.s32.totalorder %s14, 0
    %p35 = por %p33, %p34
    %p36 = scmp.ne.s32.totalorder %s22, %s23
    %p37 = scmp.eq.s32.totalorder %s15, 1
    %p38 = por %p36, %p37
    %p40 = scmp.ne.s32.totalorder %s23, %s39
    %p41 = scmp.eq.s32.totalorder %s15, 0
    %p42 = por %p40, %p41
    %s44 = sadd.s32 %s43, 1
    %p47 = scmp.eq.s32.totalorder %s9, 1
    %p48 = scmp.ne.s32.totalorder %s43, %s45
    %p49 = scmp.eq.s32.totalorder %s9, 0
    %p50 = por %p48, %p49
    %p51 = scmp.ne.s32.totalorder %s43, %s45
    %p52 = scmp.eq.s32.totalorder %s14, 1
    %p53 = por %p51, %p52
    %p54 = scmp.ne.s32.totalorder %s45, %s46
    %p55 = scmp.eq.s32.totalorder %s14, 0
    %p56 = por %p54, %p55
    %p57 = scmp.ne.s32.totalorder %s45, %s46
    %p58 = scmp.eq.s32.totalorder %s15, 1
    %p59 = por %p57, %p58
    %p61 = scmp.ne.s32.totalorder %s46, %s60
    %p62 = scmp.eq.s32.totalorder %s15, 0
    %p63 = por %p61, %p62
    %s65 = sadd.s32 %s64, 1
    %p68 = scmp.eq.s32.totalorder %s9, 1
    %p69 = scmp.ne.s32.totalorder %s64, %s66
    %p70 = scmp.eq.s32.totalorder %s9, 0
    %p71 = por %p69, %p70
    %p72 = scmp.ne.s32.totalorder %s64, %s66
    %p73 = scmp.eq.s32.totalorder %s14, 1
    %p74 = por %p72, %p73
    %p75 = scmp.ne.s32.totalorder %s66, %s67
    %p76 = scmp.eq.s32.totalorder %s14, 0
    %p77 = por %p75, %p76
    %p78 = scmp.ne.s32.totalorder %s66, %s67
    %p79 = scmp.eq.s32.totalorder %s15, 1
    %p80 = por %p78, %p79
    %p82 = scmp.ne.s32.totalorder %s67, %s81
    %p83 = scmp.eq.s32.totalorder %s15, 0
    %p84 = por %p82, %p83
    %s85 = ssub.s32 %s9, %s16
    %p86 = scmp.eq.s32.totalorder %s85, 0
    %s88 = sadd.s32 %s87, 1
    %s89 = scalar_select %p86, %s87, %s88
    %p92 = pneg %p86
    %p93 = scmp.eq.s32.totalorder %s9, 1
    %p94 = por %p92, %p93
    %p95 = scmp.ne.s32.totalorder %s87, %s90
    %p96 = scmp.eq.s32.totalorder %s9, 0
    %p97 = por %p95, %p96
    %p98 = scmp.ne.s32.totalorder %s87, %s90
    %p99 = scmp.eq.s32.totalorder %s14, 1
    %p100 = por %p98, %p99
    %p101 = scmp.ne.s32.totalorder %s90, %s91
    %p102 = scmp.eq.s32.totalorder %s14, 0
    %p103 = por %p101, %p102
    %p104 = scmp.ne.s32.totalorder %s90, %s91
    %p105 = scmp.eq.s32.totalorder %s15, 1
    %p106 = por %p104, %p105
    %p108 = scmp.ne.s32.totalorder %s91, %s107
    %p109 = scmp.eq.s32.totalorder %s15, 0
    %p110 = por %p108, %p109
    %p111 = scmp.le.s32.totalorder 1, %s9
    %p112 = scmp.lt.s32.totalorder %s9, 3
    %p113 = pnand %p111, %p112
    %p114 = pneg %p113
    // Predicated region
    $region9: #{tpu_custom_call.1} parent=5 // pred_check
      _
    $region10: #{tpu_custom_call.1} parent=5 // pred_check_branch
      %116 = sbr.rel (%p113) target = $region12
    $region11: #{tpu_custom_call.1} parent=5 // pred_region
      %s117 = ssub.s32 %s9, 1
      // Predicated region
      $region13: #{tpu_custom_call.1} parent=11 // pred_check
        %p118 = pneg %p56
      $region14: #{tpu_custom_call.1} parent=11 // pred_check_branch
        %120 = sbr.rel (%p118) target = $region16
      $region15: #{tpu_custom_call.1} parent=11 // pred_region
        _
      $region16: #{tpu_custom_call.1} parent=11 // pred_fallthru
        _
      // Predicated region
      $region17: #{tpu_custom_call.1} parent=11 // pred_check
        %p121 = pneg %p77
      $region18: #{tpu_custom_call.1} parent=11 // pred_check_branch
        %123 = sbr.rel (%p121) target = $region20
      $region19: #{tpu_custom_call.1} parent=11 // pred_region
        _
      $region20: #{tpu_custom_call.1} parent=11 // pred_fallthru
        _
    $region12: #{tpu_custom_call.1} parent=5 // pred_fallthru
      _
    %p124 = scmp.lt.s32.totalorder %s9, 2
    // Predicated region
    $region21: #{tpu_custom_call.1} parent=5 // pred_check
      %p125 = pneg %p124
    $region22: #{tpu_custom_call.1} parent=5 // pred_check_branch
      %127 = sbr.rel (%p125) target = $region24
    $region23: #{tpu_custom_call.1} parent=5 // pred_region
      // Predicated region
      $region25: #{tpu_custom_call.1} parent=23 // pred_check
        %p128 = pneg %p29
      $region26: #{tpu_custom_call.1} parent=23 // pred_check_branch
        %130 = sbr.rel (%p128) target = $region28
      $region27: #{tpu_custom_call.1} parent=23 // pred_region
        %s131 = smul.u32 128, %s9
        %p132 = scmp.lt.s32.totalorder %s131, 255
        %s133 = scalar_select %p132, %s131, 255
        %s134 = smul.addr %s133, 8
        %s135 = scalar_lea.vmem %s0, %s134
        %s136 = smul.u32 128, %s9
      $region28: #{tpu_custom_call.1} parent=23 // pred_fallthru
        _
    $region24: #{tpu_custom_call.1} parent=5 // pred_fallthru
      _
    %p137 = scmp.le.s32.totalorder 1, %s9
    %p138 = scmp.lt.s32.totalorder %s9, 3
    %p139 = pnand %p137, %p138
    %p140 = pneg %p139
    // Predicated region
    $region29: #{tpu_custom_call.1} parent=5 // pred_check
      _
    $region30: #{tpu_custom_call.1} parent=5 // pred_check_branch
      %142 = sbr.rel (%p139) target = $region32
    $region31: #{tpu_custom_call.1} parent=5 // pred_region
      %s143 = ssub.s32 %s9, 1
      %s144 = smul.u32 128, %s14
      %p145 = scmp.lt.s32.totalorder %s144, 255
      %s146 = scalar_select %p145, %s144, 255
      %s147 = smul.addr %s146, 8
      %s148 = scalar_lea.vmem %s0, %s147
      %p149 = pneg %p35
      %p150 = pneg %p32
      %p151 = pneg %p56
      %p152 = pneg %p53
      %p153 = pneg %p77
      %p154 = pneg %p74
      %p155 = pneg %p103
      %p156 = pneg %p100
      %s157 = smul.u32 16, %s14
      %p158 = scmp.lt.s32.totalorder %s157, 31
      %s159 = scalar_select %p158, %s157, 31
      %s160 = smul.addr %s159, 8
      %s161 = scalar_lea.vmem %s3, %s160
      %s162 = smul.u32 128, %s14
      %p163 = scmp.lt.s32.totalorder %s162, 255
      %s164 = scalar_select %p163, %s162, 255
      %s165 = smul.addr %s164, 8
      %s166 = scalar_lea.vmem %s0, %s165
      %s167 = smul.u32 128, %s14
      %s168 = smul.u32 16, %s14
      %p169 = scmp.lt.s32.totalorder %s168, 31
      %s170 = scalar_select %p169, %s168, 31
      %s171 = smul.addr %s170, 8
      %s172 = scalar_lea.vmem %s3, %s171
      %s173 = smul.u32 16, %s14
      %v174 = vld [vmem:[%s166] sm:$0xff]
      %v175 = vld [vmem:[%s166 + $0x8] sm:$0xff]
      %v176 = vld [vmem:[%s166 + $0x10] sm:$0xff]
      %v177 = vld [vmem:[%s166 + $0x18] sm:$0xff]
      %v178 = vld [vmem:[%s166 + $0x20] sm:$0xff]
      %v179 = vld [vmem:[%s166 + $0x28] sm:$0xff]
      %v180 = vld [vmem:[%s166 + $0x30] sm:$0xff]
      %v181 = vld [vmem:[%s166 + $0x38] sm:$0xff]
      %v182 = vld [vmem:[%s166 + $0x40] sm:$0xff]
      %v183 = vld [vmem:[%s166 + $0x48] sm:$0xff]
      %v184 = vld [vmem:[%s166 + $0x50] sm:$0xff]
      %v185 = vld [vmem:[%s166 + $0x58] sm:$0xff]
      %v186 = vld [vmem:[%s166 + $0x60] sm:$0xff]
      %v187 = vld [vmem:[%s166 + $0x68] sm:$0xff]
      %v188 = vld [vmem:[%s166 + $0x70] sm:$0xff]
      %v189 = vld [vmem:[%s166 + $0x78] sm:$0xff]
      %v190 = vld [vmem:[%s166 + $0x80] sm:$0xff]
      %v191 = vld [vmem:[%s166 + $0x88] sm:$0xff]
      %v192 = vld [vmem:[%s166 + $0x90] sm:$0xff]
      %v193 = vld [vmem:[%s166 + $0x98] sm:$0xff]
      %v194 = vld [vmem:[%s166 + $0xa0] sm:$0xff]
      %v195 = vld [vmem:[%s166 + $0xa8] sm:$0xff]
      %v196 = vld [vmem:[%s166 + $0xb0] sm:$0xff]
      %v197 = vld [vmem:[%s166 + $0xb8] sm:$0xff]
      %v198 = vld [vmem:[%s166 + $0xc0] sm:$0xff]
      %v199 = vld [vmem:[%s166 + $0xc8] sm:$0xff]
      %v200 = vld [vmem:[%s166 + $0xd0] sm:$0xff]
      %v201 = vld [vmem:[%s166 + $0xd8] sm:$0xff]
      %v202 = vld [vmem:[%s166 + $0xe0] sm:$0xff]
      %v203 = vld [vmem:[%s166 + $0xe8] sm:$0xff]
      %v204 = vld [vmem:[%s166 + $0xf0] sm:$0xff]
      %v205 = vld [vmem:[%s166 + $0xf8] sm:$0xff]
      %v206 = vld [vmem:[%s166 + $0x100] sm:$0xff]
      %v207 = vld [vmem:[%s166 + $0x108] sm:$0xff]
      %v208 = vld [vmem:[%s166 + $0x110] sm:$0xff]
      %v209 = vld [vmem:[%s166 + $0x118] sm:$0xff]
      %v210 = vld [vmem:[%s166 + $0x120] sm:$0xff]
      %v211 = vld [vmem:[%s166 + $0x128] sm:$0xff]
      %v212 = vld [vmem:[%s166 + $0x130] sm:$0xff]
      %v213 = vld [vmem:[%s166 + $0x138] sm:$0xff]
      %v214 = vld [vmem:[%s166 + $0x140] sm:$0xff]
      %v215 = vld [vmem:[%s166 + $0x148] sm:$0xff]
      %v216 = vld [vmem:[%s166 + $0x150] sm:$0xff]
      %v217 = vld [vmem:[%s166 + $0x158] sm:$0xff]
      %v218 = vld [vmem:[%s166 + $0x160] sm:$0xff]
      %v219 = vld [vmem:[%s166 + $0x168] sm:$0xff]
      %v220 = vld [vmem:[%s166 + $0x170] sm:$0xff]
      %v221 = vld [vmem:[%s166 + $0x178] sm:$0xff]
      %v222 = vld [vmem:[%s166 + $0x180] sm:$0xff]
      %v223 = vld [vmem:[%s166 + $0x188] sm:$0xff]
      %v224 = vld [vmem:[%s166 + $0x190] sm:$0xff]
      %v225 = vld [vmem:[%s166 + $0x198] sm:$0xff]
      %v226 = vld [vmem:[%s166 + $0x1a0] sm:$0xff]
      %v227 = vld [vmem:[%s166 + $0x1a8] sm:$0xff]
      %v228 = vld [vmem:[%s166 + $0x1b0] sm:$0xff]
      %v229 = vld [vmem:[%s166 + $0x1b8] sm:$0xff]
      %v230 = vld [vmem:[%s166 + $0x1c0] sm:$0xff]
      %v231 = vld [vmem:[%s166 + $0x1c8] sm:$0xff]
      %v232 = vld [vmem:[%s166 + $0x1d0] sm:$0xff]
      %v233 = vld [vmem:[%s166 + $0x1d8] sm:$0xff]
      %v234 = vld [vmem:[%s166 + $0x1e0] sm:$0xff]
      %v235 = vld [vmem:[%s166 + $0x1e8] sm:$0xff]
      %v236 = vld [vmem:[%s166 + $0x1f0] sm:$0xff]
      %v237 = vld [vmem:[%s166 + $0x1f8] sm:$0xff]
      %v238 = vld [vmem:[%s166 + $0x200] sm:$0xff]
      %v239 = vld [vmem:[%s166 + $0x208] sm:$0xff]
      %v240 = vld [vmem:[%s166 + $0x210] sm:$0xff]
      %v241 = vld [vmem:[%s166 + $0x218] sm:$0xff]
      %v242 = vld [vmem:[%s166 + $0x220] sm:$0xff]
      %v243 = vld [vmem:[%s166 + $0x228] sm:$0xff]
      %v244 = vld [vmem:[%s166 + $0x230] sm:$0xff]
      %v245 = vld [vmem:[%s166 + $0x238] sm:$0xff]
      %v246 = vld [vmem:[%s166 + $0x240] sm:$0xff]
      %v247 = vld [vmem:[%s166 + $0x248] sm:$0xff]
      %v248 = vld [vmem:[%s166 + $0x250] sm:$0xff]
      %v249 = vld [vmem:[%s166 + $0x258] sm:$0xff]
      %v250 = vld [vmem:[%s166 + $0x260] sm:$0xff]
      %v251 = vld [vmem:[%s166 + $0x268] sm:$0xff]
      %v252 = vld [vmem:[%s166 + $0x270] sm:$0xff]
      %v253 = vld [vmem:[%s166 + $0x278] sm:$0xff]
      %v254 = vld [vmem:[%s166 + $0x280] sm:$0xff]
      %v255 = vld [vmem:[%s166 + $0x288] sm:$0xff]
      %v256 = vld [vmem:[%s166 + $0x290] sm:$0xff]
      %v257 = vld [vmem:[%s166 + $0x298] sm:$0xff]
      %v258 = vld [vmem:[%s166 + $0x2a0] sm:$0xff]
      %v259 = vld [vmem:[%s166 + $0x2a8] sm:$0xff]
      %v260 = vld [vmem:[%s166 + $0x2b0] sm:$0xff]
      %v261 = vld [vmem:[%s166 + $0x2b8] sm:$0xff]
      %v262 = vld [vmem:[%s166 + $0x2c0] sm:$0xff]
      %v263 = vld [vmem:[%s166 + $0x2c8] sm:$0xff]
      %v264 = vld [vmem:[%s166 + $0x2d0] sm:$0xff]
      %v265 = vld [vmem:[%s166 + $0x2d8] sm:$0xff]
      %v266 = vld [vmem:[%s166 + $0x2e0] sm:$0xff]
      %v267 = vld [vmem:[%s166 + $0x2e8] sm:$0xff]
      %v268 = vld [vmem:[%s166 + $0x2f0] sm:$0xff]
      %v269 = vld [vmem:[%s166 + $0x2f8] sm:$0xff]
      %v270 = vld [vmem:[%s166 + $0x300] sm:$0xff]
      %v271 = vld [vmem:[%s166 + $0x308] sm:$0xff]
      %v272 = vld [vmem:[%s166 + $0x310] sm:$0xff]
      %v273 = vld [vmem:[%s166 + $0x318] sm:$0xff]
      %v274 = vld [vmem:[%s166 + $0x320] sm:$0xff]
      %v275 = vld [vmem:[%s166 + $0x328] sm:$0xff]
      %v276 = vld [vmem:[%s166 + $0x330] sm:$0xff]
      %v277 = vld [vmem:[%s166 + $0x338] sm:$0xff]
      %v278 = vld [vmem:[%s166 + $0x340] sm:$0xff]
      %v279 = vld [vmem:[%s166 + $0x348] sm:$0xff]
      %v280 = vld [vmem:[%s166 + $0x350] sm:$0xff]
      %v281 = vld [vmem:[%s166 + $0x358] sm:$0xff]
      %v282 = vld [vmem:[%s166 + $0x360] sm:$0xff]
      %v283 = vld [vmem:[%s166 + $0x368] sm:$0xff]
      %v284 = vld [vmem:[%s166 + $0x370] sm:$0xff]
      %v285 = vld [vmem:[%s166 + $0x378] sm:$0xff]
      %v286 = vld [vmem:[%s166 + $0x380] sm:$0xff]
      %v287 = vld [vmem:[%s166 + $0x388] sm:$0xff]
      %v288 = vld [vmem:[%s166 + $0x390] sm:$0xff]
      %v289 = vld [vmem:[%s166 + $0x398] sm:$0xff]
      %v290 = vld [vmem:[%s166 + $0x3a0] sm:$0xff]
      %v291 = vld [vmem:[%s166 + $0x3a8] sm:$0xff]
      %v292 = vld [vmem:[%s166 + $0x3b0] sm:$0xff]
      %v293 = vld [vmem:[%s166 + $0x3b8] sm:$0xff]
      %v294 = vld [vmem:[%s166 + $0x3c0] sm:$0xff]
      %v295 = vld [vmem:[%s166 + $0x3c8] sm:$0xff]
      %v296 = vld [vmem:[%s166 + $0x3d0] sm:$0xff]
      %v297 = vld [vmem:[%s166 + $0x3d8] sm:$0xff]
      %v298 = vld [vmem:[%s166 + $0x3e0] sm:$0xff]
      %v299 = vld [vmem:[%s166 + $0x3e8] sm:$0xff]
      %v300 = vld [vmem:[%s166 + $0x3f0] sm:$0xff]
      %v301 = vld [vmem:[%s166 + $0x3f8] sm:$0xff]
      %vm302 = vcmask 261120
      %v303 = vsel %vm302, %v174, -inf
      %304 = vmax.xlane.f32.xlu0 %v303
      %v305 = vpop.xlane.xlu0 %304
      %v306 = vsel %vm302, %v175, -inf
      %307 = vmax.xlane.f32.xlu0 %v306
      %v308 = vpop.xlane.xlu0 %307
      %v309 = vsel %vm302, %v176, -inf
      %310 = vmax.xlane.f32.xlu0 %v309
      %v311 = vpop.xlane.xlu0 %310
      %v312 = vsel %vm302, %v177, -inf
      %313 = vmax.xlane.f32.xlu0 %v312
      %v314 = vpop.xlane.xlu0 %313
      %v315 = vsel %vm302, %v178, -inf
      %316 = vmax.xlane.f32.xlu0 %v315
      %v317 = vpop.xlane.xlu0 %316
      %v318 = vsel %vm302, %v179, -inf
      %319 = vmax.xlane.f32.xlu0 %v318
      %v320 = vpop.xlane.xlu0 %319
      %v321 = vsel %vm302, %v180, -inf
      %322 = vmax.xlane.f32.xlu0 %v321
      %v323 = vpop.xlane.xlu0 %322
      %v324 = vsel %vm302, %v181, -inf
      %325 = vmax.xlane.f32.xlu0 %v324
      %v326 = vpop.xlane.xlu0 %325
      %v327 = vsel %vm302, %v182, -inf
      %328 = vmax.xlane.f32.xlu0 %v327
      %v329 = vpop.xlane.xlu0 %328
      %v330 = vsel %vm302, %v183, -inf
      %331 = vmax.xlane.f32.xlu0 %v330
      %v332 = vpop.xlane.xlu0 %331
      %v333 = vsel %vm302, %v184, -inf
      %334 = vmax.xlane.f32.xlu0 %v333
      %v335 = vpop.xlane.xlu0 %334
      %v336 = vsel %vm302, %v185, -inf
      %337 = vmax.xlane.f32.xlu0 %v336
      %v338 = vpop.xlane.xlu0 %337
      %v339 = vsel %vm302, %v186, -inf
      %340 = vmax.xlane.f32.xlu0 %v339
      %v341 = vpop.xlane.xlu0 %340
      %v342 = vsel %vm302, %v187, -inf
      %343 = vmax.xlane.f32.xlu0 %v342
      %v344 = vpop.xlane.xlu0 %343
      %v345 = vsel %vm302, %v188, -inf
      %346 = vmax.xlane.f32.xlu0 %v345
      %v347 = vpop.xlane.xlu0 %346
      %v348 = vsel %vm302, %v189, -inf
      %349 = vmax.xlane.f32.xlu0 %v348
      %v350 = vpop.xlane.xlu0 %349
      %v351 = vsel %vm302, %v190, -inf
      %352 = vmax.xlane.f32.xlu0 %v351
      %v353 = vpop.xlane.xlu0 %352
      %v354 = vsel %vm302, %v191, -inf
      %355 = vmax.xlane.f32.xlu0 %v354
      %v356 = vpop.xlane.xlu0 %355
      %v357 = vsel %vm302, %v192, -inf
      %358 = vmax.xlane.f32.xlu0 %v357
      %v359 = vpop.xlane.xlu0 %358
      %v360 = vsel %vm302, %v193, -inf
      %361 = vmax.xlane.f32.xlu0 %v360
      %v362 = vpop.xlane.xlu0 %361
      %v363 = vsel %vm302, %v194, -inf
      %364 = vmax.xlane.f32.xlu0 %v363
      %v365 = vpop.xlane.xlu0 %364
      %v366 = vsel %vm302, %v195, -inf
      %367 = vmax.xlane.f32.xlu0 %v366
      %v368 = vpop.xlane.xlu0 %367
      %v369 = vsel %vm302, %v196, -inf
      %370 = vmax.xlane.f32.xlu0 %v369
      %v371 = vpop.xlane.xlu0 %370
      %v372 = vsel %vm302, %v197, -inf
      %373 = vmax.xlane.f32.xlu0 %v372
      %v374 = vpop.xlane.xlu0 %373
      %v375 = vsel %vm302, %v198, -inf
      %376 = vmax.xlane.f32.xlu0 %v375
      %v377 = vpop.xlane.xlu0 %376
      %v378 = vsel %vm302, %v199, -inf
      %379 = vmax.xlane.f32.xlu0 %v378
      %v380 = vpop.xlane.xlu0 %379
      %v381 = vsel %vm302, %v200, -inf
      %382 = vmax.xlane.f32.xlu0 %v381
      %v383 = vpop.xlane.xlu0 %382
      %v384 = vsel %vm302, %v201, -inf
      %385 = vmax.xlane.f32.xlu0 %v384
      %v386 = vpop.xlane.xlu0 %385
      %v387 = vsel %vm302, %v202, -inf
      %388 = vmax.xlane.f32.xlu0 %v387
      %v389 = vpop.xlane.xlu0 %388
      %v390 = vsel %vm302, %v203, -inf
      %391 = vmax.xlane.f32.xlu0 %v390
      %v392 = vpop.xlane.xlu0 %391
      %v393 = vsel %vm302, %v204, -inf
      %394 = vmax.xlane.f32.xlu0 %v393
      %v395 = vpop.xlane.xlu0 %394
      %v396 = vsel %vm302, %v205, -inf
      %397 = vmax.xlane.f32.xlu0 %v396
      %v398 = vpop.xlane.xlu0 %397
      %v399 = vsel %vm302, %v206, -inf
      %400 = vmax.xlane.f32.xlu0 %v399
      %v401 = vpop.xlane.xlu0 %400
      %v402 = vsel %vm302, %v207, -inf
      %403 = vmax.xlane.f32.xlu0 %v402
      %v404 = vpop.xlane.xlu0 %403
      %v405 = vsel %vm302, %v208, -inf
      %406 = vmax.xlane.f32.xlu0 %v405
      %v407 = vpop.xlane.xlu0 %406
      %v408 = vsel %vm302, %v209, -inf
      %409 = vmax.xlane.f32.xlu0 %v408
      %v410 = vpop.xlane.xlu0 %409
      %v411 = vsel %vm302, %v210, -inf
      %412 = vmax.xlane.f32.xlu0 %v411
      %v413 = vpop.xlane.xlu0 %412
      %v414 = vsel %vm302, %v211, -inf
      %415 = vmax.xlane.f32.xlu0 %v414
      %v416 = vpop.xlane.xlu0 %415
      %v417 = vsel %vm302, %v212, -inf
      %418 = vmax.xlane.f32.xlu0 %v417
      %v419 = vpop.xlane.xlu0 %418
      %v420 = vsel %vm302, %v213, -inf
      %421 = vmax.xlane.f32.xlu0 %v420
      %v422 = vpop.xlane.xlu0 %421
      %v423 = vsel %vm302, %v214, -inf
      %424 = vmax.xlane.f32.xlu0 %v423
      %v425 = vpop.xlane.xlu0 %424
      %v426 = vsel %vm302, %v215, -inf
      %427 = vmax.xlane.f32.xlu0 %v426
      %v428 = vpop.xlane.xlu0 %427
      %v429 = vsel %vm302, %v216, -inf
      %430 = vmax.xlane.f32.xlu0 %v429
      %v431 = vpop.xlane.xlu0 %430
      %v432 = vsel %vm302, %v217, -inf
      %433 = vmax.xlane.f32.xlu0 %v432
      %v434 = vpop.xlane.xlu0 %433
      %v435 = vsel %vm302, %v218, -inf
      %436 = vmax.xlane.f32.xlu0 %v435
      %v437 = vpop.xlane.xlu0 %436
      %v438 = vsel %vm302, %v219, -inf
      %439 = vmax.xlane.f32.xlu0 %v438
      %v440 = vpop.xlane.xlu0 %439
      %v441 = vsel %vm302, %v220, -inf
      %442 = vmax.xlane.f32.xlu0 %v441
      %v443 = vpop.xlane.xlu0 %442
      %v444 = vsel %vm302, %v221, -inf
      %445 = vmax.xlane.f32.xlu0 %v444
      %v446 = vpop.xlane.xlu0 %445
      %v447 = vsel %vm302, %v222, -inf
      %448 = vmax.xlane.f32.xlu0 %v447
      %v449 = vpop.xlane.xlu0 %448
      %v450 = vsel %vm302, %v223, -inf
      %451 = vmax.xlane.f32.xlu0 %v450
      %v452 = vpop.xlane.xlu0 %451
      %v453 = vsel %vm302, %v224, -inf
      %454 = vmax.xlane.f32.xlu0 %v453
      %v455 = vpop.xlane.xlu0 %454
      %v456 = vsel %vm302, %v225, -inf
      %457 = vmax.xlane.f32.xlu0 %v456
      %v458 = vpop.xlane.xlu0 %457
      %v459 = vsel %vm302, %v226, -inf
      %460 = vmax.xlane.f32.xlu0 %v459
      %v461 = vpop.xlane.xlu0 %460
      %v462 = vsel %vm302, %v227, -inf
      %463 = vmax.xlane.f32.xlu0 %v462
      %v464 = vpop.xlane.xlu0 %463
      %v465 = vsel %vm302, %v228, -inf
      %466 = vmax.xlane.f32.xlu0 %v465
      %v467 = vpop.xlane.xlu0 %466
      %v468 = vsel %vm302, %v229, -inf
      %469 = vmax.xlane.f32.xlu0 %v468
      %v470 = vpop.xlane.xlu0 %469
      %v471 = vsel %vm302, %v230, -inf
      %472 = vmax.xlane.f32.xlu0 %v471
      %v473 = vpop.xlane.xlu0 %472
      %v474 = vsel %vm302, %v231, -inf
      %475 = vmax.xlane.f32.xlu0 %v474
      %v476 = vpop.xlane.xlu0 %475
      %v477 = vsel %vm302, %v232, -inf
      %478 = vmax.xlane.f32.xlu0 %v477
      %v479 = vpop.xlane.xlu0 %478
      %v480 = vsel %vm302, %v233, -inf
      %481 = vmax.xlane.f32.xlu0 %v480
      %v482 = vpop.xlane.xlu0 %481
      %v483 = vsel %vm302, %v234, -inf
      %484 = vmax.xlane.f32.xlu0 %v483
      %v485 = vpop.xlane.xlu0 %484
      %v486 = vsel %vm302, %v235, -inf
      %487 = vmax.xlane.f32.xlu0 %v486
      %v488 = vpop.xlane.xlu0 %487
      %v489 = vsel %vm302, %v236, -inf
      %490 = vmax.xlane.f32.xlu0 %v489
      %v491 = vpop.xlane.xlu0 %490
      %v492 = vsel %vm302, %v237, -inf
      %493 = vmax.xlane.f32.xlu0 %v492
      %v494 = vpop.xlane.xlu0 %493
      %v495 = vsel %vm302, %v238, -inf
      %496 = vmax.xlane.f32.xlu0 %v495
      %v497 = vpop.xlane.xlu0 %496
      %v498 = vsel %vm302, %v239, -inf
      %499 = vmax.xlane.f32.xlu0 %v498
      %v500 = vpop.xlane.xlu0 %499
      %v501 = vsel %vm302, %v240, -inf
      %502 = vmax.xlane.f32.xlu0 %v501
      %v503 = vpop.xlane.xlu0 %502
      %v504 = vsel %vm302, %v241, -inf
      %505 = vmax.xlane.f32.xlu0 %v504
      %v506 = vpop.xlane.xlu0 %505
      %v507 = vsel %vm302, %v242, -inf
      %508 = vmax.xlane.f32.xlu0 %v507
      %v509 = vpop.xlane.xlu0 %508
      %v510 = vsel %vm302, %v243, -inf
      %511 = vmax.xlane.f32.xlu0 %v510
      %v512 = vpop.xlane.xlu0 %511
      %v513 = vsel %vm302, %v244, -inf
      %514 = vmax.xlane.f32.xlu0 %v513
      %v515 = vpop.xlane.xlu0 %514
      %v516 = vsel %vm302, %v245, -inf
      %517 = vmax.xlane.f32.xlu0 %v516
      %v518 = vpop.xlane.xlu0 %517
      %v519 = vsel %vm302, %v246, -inf
      %520 = vmax.xlane.f32.xlu0 %v519
      %v521 = vpop.xlane.xlu0 %520
      %v522 = vsel %vm302, %v247, -inf
      %523 = vmax.xlane.f32.xlu0 %v522
      %v524 = vpop.xlane.xlu0 %523
      %v525 = vsel %vm302, %v248, -inf
      %526 = vmax.xlane.f32.xlu0 %v525
      %v527 = vpop.xlane.xlu0 %526
      %v528 = vsel %vm302, %v249, -inf
      %529 = vmax.xlane.f32.xlu0 %v528
      %v530 = vpop.xlane.xlu0 %529
      %v531 = vsel %vm302, %v250, -inf
      %532 = vmax.xlane.f32.xlu0 %v531
      %v533 = vpop.xlane.xlu0 %532
      %v534 = vsel %vm302, %v251, -inf
      %535 = vmax.xlane.f32.xlu0 %v534
      %v536 = vpop.xlane.xlu0 %535
      %v537 = vsel %vm302, %v252, -inf
      %538 = vmax.xlane.f32.xlu0 %v537
      %v539 = vpop.xlane.xlu0 %538
      %v540 = vsel %vm302, %v253, -inf
      %541 = vmax.xlane.f32.xlu0 %v540
      %v542 = vpop.xlane.xlu0 %541
      %v543 = vsel %vm302, %v254, -inf
      %544 = vmax.xlane.f32.xlu0 %v543
      %v545 = vpop.xlane.xlu0 %544
      %v546 = vsel %vm302, %v255, -inf
      %547 = vmax.xlane.f32.xlu0 %v546
      %v548 = vpop.xlane.xlu0 %547
      %v549 = vsel %vm302, %v256, -inf
      %550 = vmax.xlane.f32.xlu0 %v549
      %v551 = vpop.xlane.xlu0 %550
      %v552 = vsel %vm302, %v257, -inf
      %553 = vmax.xlane.f32.xlu0 %v552
      %v554 = vpop.xlane.xlu0 %553
      %v555 = vsel %vm302, %v258, -inf
      %556 = vmax.xlane.f32.xlu0 %v555
      %v557 = vpop.xlane.xlu0 %556
      %v558 = vsel %vm302, %v259, -inf
      %559 = vmax.xlane.f32.xlu0 %v558
      %v560 = vpop.xlane.xlu0 %559
      %v561 = vsel %vm302, %v260, -inf
      %562 = vmax.xlane.f32.xlu0 %v561
      %v563 = vpop.xlane.xlu0 %562
      %v564 = vsel %vm302, %v261, -inf
      %565 = vmax.xlane.f32.xlu0 %v564
      %v566 = vpop.xlane.xlu0 %565
      %v567 = vsel %vm302, %v262, -inf
      %568 = vmax.xlane.f32.xlu0 %v567
      %v569 = vpop.xlane.xlu0 %568
      %v570 = vsel %vm302, %v263, -inf
      %571 = vmax.xlane.f32.xlu0 %v570
      %v572 = vpop.xlane.xlu0 %571
      %v573 = vsel %vm302, %v264, -inf
      %574 = vmax.xlane.f32.xlu0 %v573
      %v575 = vpop.xlane.xlu0 %574
      %v576 = vsel %vm302, %v265, -inf
      %577 = vmax.xlane.f32.xlu0 %v576
      %v578 = vpop.xlane.xlu0 %577
      %v579 = vsel %vm302, %v266, -inf
      %580 = vmax.xlane.f32.xlu0 %v579
      %v581 = vpop.xlane.xlu0 %580
      %v582 = vsel %vm302, %v267, -inf
      %583 = vmax.xlane.f32.xlu0 %v582
      %v584 = vpop.xlane.xlu0 %583
      %v585 = vsel %vm302, %v268, -inf
      %586 = vmax.xlane.f32.xlu0 %v585
      %v587 = vpop.xlane.xlu0 %586
      %v588 = vsel %vm302, %v269, -inf
      %589 = vmax.xlane.f32.xlu0 %v588
      %v590 = vpop.xlane.xlu0 %589
      %v591 = vsel %vm302, %v270, -inf
      %592 = vmax.xlane.f32.xlu0 %v591
      %v593 = vpop.xlane.xlu0 %592
      %v594 = vsel %vm302, %v271, -inf
      %595 = vmax.xlane.f32.xlu0 %v594
      %v596 = vpop.xlane.xlu0 %595
      %v597 = vsel %vm302, %v272, -inf
      %598 = vmax.xlane.f32.xlu0 %v597
      %v599 = vpop.xlane.xlu0 %598
      %v600 = vsel %vm302, %v273, -inf
      %601 = vmax.xlane.f32.xlu0 %v600
      %v602 = vpop.xlane.xlu0 %601
      %v603 = vsel %vm302, %v274, -inf
      %604 = vmax.xlane.f32.xlu0 %v603
      %v605 = vpop.xlane.xlu0 %604
      %v606 = vsel %vm302, %v275, -inf
      %607 = vmax.xlane.f32.xlu0 %v606
      %v608 = vpop.xlane.xlu0 %607
      %v609 = vsel %vm302, %v276, -inf
      %610 = vmax.xlane.f32.xlu0 %v609
      %v611 = vpop.xlane.xlu0 %610
      %v612 = vsel %vm302, %v277, -inf
      %613 = vmax.xlane.f32.xlu0 %v612
      %v614 = vpop.xlane.xlu0 %613
      %v615 = vsel %vm302, %v278, -inf
      %616 = vmax.xlane.f32.xlu0 %v615
      %v617 = vpop.xlane.xlu0 %616
      %v618 = vsel %vm302, %v279, -inf
      %619 = vmax.xlane.f32.xlu0 %v618
      %v620 = vpop.xlane.xlu0 %619
      %v621 = vsel %vm302, %v280, -inf
      %622 = vmax.xlane.f32.xlu0 %v621
      %v623 = vpop.xlane.xlu0 %622
      %v624 = vsel %vm302, %v281, -inf
      %625 = vmax.xlane.f32.xlu0 %v624
      %v626 = vpop.xlane.xlu0 %625
      %v627 = vsel %vm302, %v282, -inf
      %628 = vmax.xlane.f32.xlu0 %v627
      %v629 = vpop.xlane.xlu0 %628
      %v630 = vsel %vm302, %v283, -inf
      %631 = vmax.xlane.f32.xlu0 %v630
      %v632 = vpop.xlane.xlu0 %631
      %v633 = vsel %vm302, %v284, -inf
      %634 = vmax.xlane.f32.xlu0 %v633
      %v635 = vpop.xlane.xlu0 %634
      %v636 = vsel %vm302, %v285, -inf
      %637 = vmax.xlane.f32.xlu0 %v636
      %v638 = vpop.xlane.xlu0 %637
      %v639 = vsel %vm302, %v286, -inf
      %640 = vmax.xlane.f32.xlu0 %v639
      %v641 = vpop.xlane.xlu0 %640
      %v642 = vsel %vm302, %v287, -inf
      %643 = vmax.xlane.f32.xlu0 %v642
      %v644 = vpop.xlane.xlu0 %643
      %v645 = vsel %vm302, %v288, -inf
      %646 = vmax.xlane.f32.xlu0 %v645
      %v647 = vpop.xlane.xlu0 %646
      %v648 = vsel %vm302, %v289, -inf
      %649 = vmax.xlane.f32.xlu0 %v648
      %v650 = vpop.xlane.xlu0 %649
      %v651 = vsel %vm302, %v290, -inf
      %652 = vmax.xlane.f32.xlu0 %v651
      %v653 = vpop.xlane.xlu0 %652
      %v654 = vsel %vm302, %v291, -inf
      %655 = vmax.xlane.f32.xlu0 %v654
      %v656 = vpop.xlane.xlu0 %655
      %v657 = vsel %vm302, %v292, -inf
      %658 = vmax.xlane.f32.xlu0 %v657
      %v659 = vpop.xlane.xlu0 %658
      %v660 = vsel %vm302, %v293, -inf
      %661 = vmax.xlane.f32.xlu0 %v660
      %v662 = vpop.xlane.xlu0 %661
      %v663 = vsel %vm302, %v294, -inf
      %664 = vmax.xlane.f32.xlu0 %v663
      %v665 = vpop.xlane.xlu0 %664
      %v666 = vsel %vm302, %v295, -inf
      %667 = vmax.xlane.f32.xlu0 %v666
      %v668 = vpop.xlane.xlu0 %667
      %v669 = vsel %vm302, %v296, -inf
      %670 = vmax.xlane.f32.xlu0 %v669
      %v671 = vpop.xlane.xlu0 %670
      %v672 = vsel %vm302, %v297, -inf
      %673 = vmax.xlane.f32.xlu0 %v672
      %v674 = vpop.xlane.xlu0 %673
      %v675 = vsel %vm302, %v298, -inf
      %676 = vmax.xlane.f32.xlu0 %v675
      %v677 = vpop.xlane.xlu0 %676
      %v678 = vsel %vm302, %v299, -inf
      %679 = vmax.xlane.f32.xlu0 %v678
      %v680 = vpop.xlane.xlu0 %679
      %v681 = vsel %vm302, %v300, -inf
      %682 = vmax.xlane.f32.xlu0 %v681
      %v683 = vpop.xlane.xlu0 %682
      %v684 = vsel %vm302, %v301, -inf
      %685 = vmax.xlane.f32.xlu0 %v684
      %v686 = vpop.xlane.xlu0 %685
      %v687 = vsub.f32 %v174, %v305
      %v688 = vsub.f32 %v175, %v308
      %v689 = vsub.f32 %v176, %v311
      %v690 = vsub.f32 %v177, %v314
      %v691 = vsub.f32 %v178, %v317
      %v692 = vsub.f32 %v179, %v320
      %v693 = vsub.f32 %v180, %v323
      %v694 = vsub.f32 %v181, %v326
      %v695 = vsub.f32 %v182, %v329
      %v696 = vsub.f32 %v183, %v332
      %v697 = vsub.f32 %v184, %v335
      %v698 = vsub.f32 %v185, %v338
      %v699 = vsub.f32 %v186, %v341
      %v700 = vsub.f32 %v187, %v344
      %v701 = vsub.f32 %v188, %v347
      %v702 = vsub.f32 %v189, %v350
      %v703 = vsub.f32 %v190, %v353
      %v704 = vsub.f32 %v191, %v356
      %v705 = vsub.f32 %v192, %v359
      %v706 = vsub.f32 %v193, %v362
      %v707 = vsub.f32 %v194, %v365
      %v708 = vsub.f32 %v195, %v368
      %v709 = vsub.f32 %v196, %v371
      %v710 = vsub.f32 %v197, %v374
      %v711 = vsub.f32 %v198, %v377
      %v712 = vsub.f32 %v199, %v380
      %v713 = vsub.f32 %v200, %v383
      %v714 = vsub.f32 %v201, %v386
      %v715 = vsub.f32 %v202, %v389
      %v716 = vsub.f32 %v203, %v392
      %v717 = vsub.f32 %v204, %v395
      %v718 = vsub.f32 %v205, %v398
      %v719 = vsub.f32 %v206, %v401
      %v720 = vsub.f32 %v207, %v404
      %v721 = vsub.f32 %v208, %v407
      %v722 = vsub.f32 %v209, %v410
      %v723 = vsub.f32 %v210, %v413
      %v724 = vsub.f32 %v211, %v416
      %v725 = vsub.f32 %v212, %v419
      %v726 = vsub.f32 %v213, %v422
      %v727 = vsub.f32 %v214, %v425
      %v728 = vsub.f32 %v215, %v428
      %v729 = vsub.f32 %v216, %v431
      %v730 = vsub.f32 %v217, %v434
      %v731 = vsub.f32 %v218, %v437
      %v732 = vsub.f32 %v219, %v440
      %v733 = vsub.f32 %v220, %v443
      %v734 = vsub.f32 %v221, %v446
      %v735 = vsub.f32 %v222, %v449
      %v736 = vsub.f32 %v223, %v452
      %v737 = vsub.f32 %v224, %v455
      %v738 = vsub.f32 %v225, %v458
      %v739 = vsub.f32 %v226, %v461
      %v740 = vsub.f32 %v227, %v464
      %v741 = vsub.f32 %v228, %v467
      %v742 = vsub.f32 %v229, %v470
      %v743 = vsub.f32 %v230, %v473
      %v744 = vsub.f32 %v231, %v476
      %v745 = vsub.f32 %v232, %v479
      %v746 = vsub.f32 %v233, %v482
      %v747 = vsub.f32 %v234, %v485
      %v748 = vsub.f32 %v235, %v488
      %v749 = vsub.f32 %v236, %v491
      %v750 = vsub.f32 %v237, %v494
      %v751 = vsub.f32 %v238, %v497
      %v752 = vsub.f32 %v239, %v500
      %v753 = vsub.f32 %v240, %v503
      %v754 = vsub.f32 %v241, %v506
      %v755 = vsub.f32 %v242, %v509
      %v756 = vsub.f32 %v243, %v512
      %v757 = vsub.f32 %v244, %v515
      %v758 = vsub.f32 %v245, %v518
      %v759 = vsub.f32 %v246, %v521
      %v760 = vsub.f32 %v247, %v524
      %v761 = vsub.f32 %v248, %v527
      %v762 = vsub.f32 %v249, %v530
      %v763 = vsub.f32 %v250, %v533
      %v764 = vsub.f32 %v251, %v536
      %v765 = vsub.f32 %v252, %v539
      %v766 = vsub.f32 %v253, %v542
      %v767 = vsub.f32 %v254, %v545
      %v768 = vsub.f32 %v255, %v548
      %v769 = vsub.f32 %v256, %v551
      %v770 = vsub.f32 %v257, %v554
      %v771 = vsub.f32 %v258, %v557
      %v772 = vsub.f32 %v259, %v560
      %v773 = vsub.f32 %v260, %v563
      %v774 = vsub.f32 %v261, %v566
      %v775 = vsub.f32 %v262, %v569
      %v776 = vsub.f32 %v263, %v572
      %v777 = vsub.f32 %v264, %v575
      %v778 = vsub.f32 %v265, %v578
      %v779 = vsub.f32 %v266, %v581
      %v780 = vsub.f32 %v267, %v584
      %v781 = vsub.f32 %v268, %v587
      %v782 = vsub.f32 %v269, %v590
      %v783 = vsub.f32 %v270, %v593
      %v784 = vsub.f32 %v271, %v596
      %v785 = vsub.f32 %v272, %v599
      %v786 = vsub.f32 %v273, %v602
      %v787 = vsub.f32 %v274, %v605
      %v788 = vsub.f32 %v275, %v608
      %v789 = vsub.f32 %v276, %v611
      %v790 = vsub.f32 %v277, %v614
      %v791 = vsub.f32 %v278, %v617
      %v792 = vsub.f32 %v279, %v620
      %v793 = vsub.f32 %v280, %v623
      %v794 = vsub.f32 %v281, %v626
      %v795 = vsub.f32 %v282, %v629
      %v796 = vsub.f32 %v283, %v632
      %v797 = vsub.f32 %v284, %v635
      %v798 = vsub.f32 %v285, %v638
      %v799 = vsub.f32 %v286, %v641
      %v800 = vsub.f32 %v287, %v644
      %v801 = vsub.f32 %v288, %v647
      %v802 = vsub.f32 %v289, %v650
      %v803 = vsub.f32 %v290, %v653
      %v804 = vsub.f32 %v291, %v656
      %v805 = vsub.f32 %v292, %v659
      %v806 = vsub.f32 %v293, %v662
      %v807 = vsub.f32 %v294, %v665
      %v808 = vsub.f32 %v295, %v668
      %v809 = vsub.f32 %v296, %v671
      %v810 = vsub.f32 %v297, %v674
      %v811 = vsub.f32 %v298, %v677
      %v812 = vsub.f32 %v299, %v680
      %v813 = vsub.f32 %v300, %v683
      %v814 = vsub.f32 %v301, %v686
      %v815 = vmul.f32 %v687, 1.442695
      %v816 = vpow.pop %v815
      %v817 = vmul.f32 %v688, 1.442695
      %v818 = vpow.pop %v817
      %v819 = vmul.f32 %v689, 1.442695
      %v820 = vpow.pop %v819
      %v821 = vmul.f32 %v690, 1.442695
      %v822 = vpow.pop %v821
      %v823 = vmul.f32 %v691, 1.442695
      %v824 = vpow.pop %v823
      %v825 = vmul.f32 %v692, 1.442695
      %v826 = vpow.pop %v825
      %v827 = vmul.f32 %v693, 1.442695
      %v828 = vpow.pop %v827
      %v829 = vmul.f32 %v694, 1.442695
      %v830 = vpow.pop %v829
      %v831 = vmul.f32 %v695, 1.442695
      %v832 = vpow.pop %v831
      %v833 = vmul.f32 %v696, 1.442695
      %v834 = vpow.pop %v833
      %v835 = vmul.f32 %v697, 1.442695
      %v836 = vpow.pop %v835
      %v837 = vmul.f32 %v698, 1.442695
      %v838 = vpow.pop %v837
      %v839 = vmul.f32 %v699, 1.442695
      %v840 = vpow.pop %v839
      %v841 = vmul.f32 %v700, 1.442695
      %v842 = vpow.pop %v841
      %v843 = vmul.f32 %v701, 1.442695
      %v844 = vpow.pop %v843
      %v845 = vmul.f32 %v702, 1.442695
      %v846 = vpow.pop %v845
      %v847 = vmul.f32 %v703, 1.442695
      %v848 = vpow.pop %v847
      %v849 = vmul.f32 %v704, 1.442695
      %v850 = vpow.pop %v849
      %v851 = vmul.f32 %v705, 1.442695
      %v852 = vpow.pop %v851
      %v853 = vmul.f32 %v706, 1.442695
      %v854 = vpow.pop %v853
      %v855 = vmul.f32 %v707, 1.442695
      %v856 = vpow.pop %v855
      %v857 = vmul.f32 %v708, 1.442695
      %v858 = vpow.pop %v857
      %v859 = vmul.f32 %v709, 1.442695
      %v860 = vpow.pop %v859
      %v861 = vmul.f32 %v710, 1.442695
      %v862 = vpow.pop %v861
      %v863 = vmul.f32 %v711, 1.442695
      %v864 = vpow.pop %v863
      %v865 = vmul.f32 %v712, 1.442695
      %v866 = vpow.pop %v865
      %v867 = vmul.f32 %v713, 1.442695
      %v868 = vpow.pop %v867
      %v869 = vmul.f32 %v714, 1.442695
      %v870 = vpow.pop %v869
      %v871 = vmul.f32 %v715, 1.442695
      %v872 = vpow.pop %v871
      %v873 = vmul.f32 %v716, 1.442695
      %v874 = vpow.pop %v873
      %v875 = vmul.f32 %v717, 1.442695
      %v876 = vpow.pop %v875
      %v877 = vmul.f32 %v718, 1.442695
      %v878 = vpow.pop %v877
      %v879 = vmul.f32 %v719, 1.442695
      %v880 = vpow.pop %v879
      %v881 = vmul.f32 %v720, 1.442695
      %v882 = vpow.pop %v881
      %v883 = vmul.f32 %v721, 1.442695
      %v884 = vpow.pop %v883
      %v885 = vmul.f32 %v722, 1.442695
      %v886 = vpow.pop %v885
      %v887 = vmul.f32 %v723, 1.442695
      %v888 = vpow.pop %v887
      %v889 = vmul.f32 %v724, 1.442695
      %v890 = vpow.pop %v889
      %v891 = vmul.f32 %v725, 1.442695
      %v892 = vpow.pop %v891
      %v893 = vmul.f32 %v726, 1.442695
      %v894 = vpow.pop %v893
      %v895 = vmul.f32 %v727, 1.442695
      %v896 = vpow.pop %v895
      %v897 = vmul.f32 %v728, 1.442695
      %v898 = vpow.pop %v897
      %v899 = vmul.f32 %v729, 1.442695
      %v900 = vpow.pop %v899
      %v901 = vmul.f32 %v730, 1.442695
      %v902 = vpow.pop %v901
      %v903 = vmul.f32 %v731, 1.442695
      %v904 = vpow.pop %v903
      %v905 = vmul.f32 %v732, 1.442695
      %v906 = vpow.pop %v905
      %v907 = vmul.f32 %v733, 1.442695
      %v908 = vpow.pop %v907
      %v909 = vmul.f32 %v734, 1.442695
      %v910 = vpow.pop %v909
      %v911 = vmul.f32 %v735, 1.442695
      %v912 = vpow.pop %v911
      %v913 = vmul.f32 %v736, 1.442695
      %v914 = vpow.pop %v913
      %v915 = vmul.f32 %v737, 1.442695
      %v916 = vpow.pop %v915
      %v917 = vmul.f32 %v738, 1.442695
      %v918 = vpow.pop %v917
      %v919 = vmul.f32 %v739, 1.442695
      %v920 = vpow.pop %v919
      %v921 = vmul.f32 %v740, 1.442695
      %v922 = vpow.pop %v921
      %v923 = vmul.f32 %v741, 1.442695
      %v924 = vpow.pop %v923
      %v925 = vmul.f32 %v742, 1.442695
      %v926 = vpow.pop %v925
      %v927 = vmul.f32 %v743, 1.442695
      %v928 = vpow.pop %v927
      %v929 = vmul.f32 %v744, 1.442695
      %v930 = vpow.pop %v929
      %v931 = vmul.f32 %v745, 1.442695
      %v932 = vpow.pop %v931
      %v933 = vmul.f32 %v746, 1.442695
      %v934 = vpow.pop %v933
      %v935 = vmul.f32 %v747, 1.442695
      %v936 = vpow.pop %v935
      %v937 = vmul.f32 %v748, 1.442695
      %v938 = vpow.pop %v937
      %v939 = vmul.f32 %v749, 1.442695
      %v940 = vpow.pop %v939
      %v941 = vmul.f32 %v750, 1.442695
      %v942 = vpow.pop %v941
      %v943 = vmul.f32 %v751, 1.442695
      %v944 = vpow.pop %v943
      %v945 = vmul.f32 %v752, 1.442695
      %v946 = vpow.pop %v945
      %v947 = vmul.f32 %v753, 1.442695
      %v948 = vpow.pop %v947
      %v949 = vmul.f32 %v754, 1.442695
      %v950 = vpow.pop %v949
      %v951 = vmul.f32 %v755, 1.442695
      %v952 = vpow.pop %v951
      %v953 = vmul.f32 %v756, 1.442695
      %v954 = vpow.pop %v953
      %v955 = vmul.f32 %v757, 1.442695
      %v956 = vpow.pop %v955
      %v957 = vmul.f32 %v758, 1.442695
      %v958 = vpow.pop %v957
      %v959 = vmul.f32 %v759, 1.442695
      %v960 = vpow.pop %v959
      %v961 = vmul.f32 %v760, 1.442695
      %v962 = vpow.pop %v961
      %v963 = vmul.f32 %v761, 1.442695
      %v964 = vpow.pop %v963
      %v965 = vmul.f32 %v762, 1.442695
      %v966 = vpow.pop %v965
      %v967 = vmul.f32 %v763, 1.442695
      %v968 = vpow.pop %v967
      %v969 = vmul.f32 %v764, 1.442695
      %v970 = vpow.pop %v969
      %v971 = vmul.f32 %v765, 1.442695
      %v972 = vpow.pop %v971
      %v973 = vmul.f32 %v766, 1.442695
      %v974 = vpow.pop %v973
      %v975 = vmul.f32 %v767, 1.442695
      %v976 = vpow.pop %v975
      %v977 = vmul.f32 %v768, 1.442695
      %v978 = vpow.pop %v977
      %v979 = vmul.f32 %v769, 1.442695
      %v980 = vpow.pop %v979
      %v981 = vmul.f32 %v770, 1.442695
      %v982 = vpow.pop %v981
      %v983 = vmul.f32 %v771, 1.442695
      %v984 = vpow.pop %v983
      %v985 = vmul.f32 %v772, 1.442695
      %v986 = vpow.pop %v985
      %v987 = vmul.f32 %v773, 1.442695
      %v988 = vpow.pop %v987
      %v989 = vmul.f32 %v774, 1.442695
      %v990 = vpow.pop %v989
      %v991 = vmul.f32 %v775, 1.442695
      %v992 = vpow.pop %v991
      %v993 = vmul.f32 %v776, 1.442695
      %v994 = vpow.pop %v993
      %v995 = vmul.f32 %v777, 1.442695
      %v996 = vpow.pop %v995
      %v997 = vmul.f32 %v778, 1.442695
      %v998 = vpow.pop %v997
      %v999 = vmul.f32 %v779, 1.442695
      %v1000 = vpow.pop %v999
      %v1001 = vmul.f32 %v780, 1.442695
      %v1002 = vpow.pop %v1001
      %v1003 = vmul.f32 %v781, 1.442695
      %v1004 = vpow.pop %v1003
      %v1005 = vmul.f32 %v782, 1.442695
      %v1006 = vpow.pop %v1005
      %v1007 = vmul.f32 %v783, 1.442695
      %v1008 = vpow.pop %v1007
      %v1009 = vmul.f32 %v784, 1.442695
      %v1010 = vpow.pop %v1009
      %v1011 = vmul.f32 %v785, 1.442695
      %v1012 = vpow.pop %v1011
      %v1013 = vmul.f32 %v786, 1.442695
      %v1014 = vpow.pop %v1013
      %v1015 = vmul.f32 %v787, 1.442695
      %v1016 = vpow.pop %v1015
      %v1017 = vmul.f32 %v788, 1.442695
      %v1018 = vpow.pop %v1017
      %v1019 = vmul.f32 %v789, 1.442695
      %v1020 = vpow.pop %v1019
      %v1021 = vmul.f32 %v790, 1.442695
      %v1022 = vpow.pop %v1021
      %v1023 = vmul.f32 %v791, 1.442695
      %v1024 = vpow.pop %v1023
      %v1025 = vmul.f32 %v792, 1.442695
      %v1026 = vpow.pop %v1025
      %v1027 = vmul.f32 %v793, 1.442695
      %v1028 = vpow.pop %v1027
      %v1029 = vmul.f32 %v794, 1.442695
      %v1030 = vpow.pop %v1029
      %v1031 = vmul.f32 %v795, 1.442695
      %v1032 = vpow.pop %v1031
      %v1033 = vmul.f32 %v796, 1.442695
      %v1034 = vpow.pop %v1033
      %v1035 = vmul.f32 %v797, 1.442695
      %v1036 = vpow.pop %v1035
      %v1037 = vmul.f32 %v798, 1.442695
      %v1038 = vpow.pop %v1037
      %v1039 = vmul.f32 %v799, 1.442695
      %v1040 = vpow.pop %v1039
      %v1041 = vmul.f32 %v800, 1.442695
      %v1042 = vpow.pop %v1041
      %v1043 = vmul.f32 %v801, 1.442695
      %v1044 = vpow.pop %v1043
      %v1045 = vmul.f32 %v802, 1.442695
      %v1046 = vpow.pop %v1045
      %v1047 = vmul.f32 %v803, 1.442695
      %v1048 = vpow.pop %v1047
      %v1049 = vmul.f32 %v804, 1.442695
      %v1050 = vpow.pop %v1049
      %v1051 = vmul.f32 %v805, 1.442695
      %v1052 = vpow.pop %v1051
      %v1053 = vmul.f32 %v806, 1.442695
      %v1054 = vpow.pop %v1053
      %v1055 = vmul.f32 %v807, 1.442695
      %v1056 = vpow.pop %v1055
      %v1057 = vmul.f32 %v808, 1.442695
      %v1058 = vpow.pop %v1057
      %v1059 = vmul.f32 %v809, 1.442695
      %v1060 = vpow.pop %v1059
      %v1061 = vmul.f32 %v810, 1.442695
      %v1062 = vpow.pop %v1061
      %v1063 = vmul.f32 %v811, 1.442695
      %v1064 = vpow.pop %v1063
      %v1065 = vmul.f32 %v812, 1.442695
      %v1066 = vpow.pop %v1065
      %v1067 = vmul.f32 %v813, 1.442695
      %v1068 = vpow.pop %v1067
      %v1069 = vmul.f32 %v814, 1.442695
      %v1070 = vpow.pop %v1069
      %v1071 = vsel %vm302, %v816, 0.0
      %1072 = vadd.xlane.f32.xlu0 %v1071
      %v1073 = vpop.xlane.xlu0 %1072
      %v1074 = vsel %vm302, %v818, 0.0
      %1075 = vadd.xlane.f32.xlu0 %v1074
      %v1076 = vpop.xlane.xlu0 %1075
      %v1077 = vsel %vm302, %v820, 0.0
      %1078 = vadd.xlane.f32.xlu0 %v1077
      %v1079 = vpop.xlane.xlu0 %1078
      %v1080 = vsel %vm302, %v822, 0.0
      %1081 = vadd.xlane.f32.xlu0 %v1080
      %v1082 = vpop.xlane.xlu0 %1081
      %v1083 = vsel %vm302, %v824, 0.0
      %1084 = vadd.xlane.f32.xlu0 %v1083
      %v1085 = vpop.xlane.xlu0 %1084
      %v1086 = vsel %vm302, %v826, 0.0
      %1087 = vadd.xlane.f32.xlu0 %v1086
      %v1088 = vpop.xlane.xlu0 %1087
      %v1089 = vsel %vm302, %v828, 0.0
      %1090 = vadd.xlane.f32.xlu0 %v1089
      %v1091 = vpop.xlane.xlu0 %1090
      %v1092 = vsel %vm302, %v830, 0.0
      %1093 = vadd.xlane.f32.xlu0 %v1092
      %v1094 = vpop.xlane.xlu0 %1093
      %v1095 = vsel %vm302, %v832, 0.0
      %1096 = vadd.xlane.f32.xlu0 %v1095
      %v1097 = vpop.xlane.xlu0 %1096
      %v1098 = vsel %vm302, %v834, 0.0
      %1099 = vadd.xlane.f32.xlu0 %v1098
      %v1100 = vpop.xlane.xlu0 %1099
      %v1101 = vsel %vm302, %v836, 0.0
      %1102 = vadd.xlane.f32.xlu0 %v1101
      %v1103 = vpop.xlane.xlu0 %1102
      %v1104 = vsel %vm302, %v838, 0.0
      %1105 = vadd.xlane.f32.xlu0 %v1104
      %v1106 = vpop.xlane.xlu0 %1105
      %v1107 = vsel %vm302, %v840, 0.0
      %1108 = vadd.xlane.f32.xlu0 %v1107
      %v1109 = vpop.xlane.xlu0 %1108
      %v1110 = vsel %vm302, %v842, 0.0
      %1111 = vadd.xlane.f32.xlu0 %v1110
      %v1112 = vpop.xlane.xlu0 %1111
      %v1113 = vsel %vm302, %v844, 0.0
      %1114 = vadd.xlane.f32.xlu0 %v1113
      %v1115 = vpop.xlane.xlu0 %1114
      %v1116 = vsel %vm302, %v846, 0.0
      %1117 = vadd.xlane.f32.xlu0 %v1116
      %v1118 = vpop.xlane.xlu0 %1117
      %v1119 = vsel %vm302, %v848, 0.0
      %1120 = vadd.xlane.f32.xlu0 %v1119
      %v1121 = vpop.xlane.xlu0 %1120
      %v1122 = vsel %vm302, %v850, 0.0
      %1123 = vadd.xlane.f32.xlu0 %v1122
      %v1124 = vpop.xlane.xlu0 %1123
      %v1125 = vsel %vm302, %v852, 0.0
      %1126 = vadd.xlane.f32.xlu0 %v1125
      %v1127 = vpop.xlane.xlu0 %1126
      %v1128 = vsel %vm302, %v854, 0.0
      %1129 = vadd.xlane.f32.xlu0 %v1128
      %v1130 = vpop.xlane.xlu0 %1129
      %v1131 = vsel %vm302, %v856, 0.0
      %1132 = vadd.xlane.f32.xlu0 %v1131
      %v1133 = vpop.xlane.xlu0 %1132
      %v1134 = vsel %vm302, %v858, 0.0
      %1135 = vadd.xlane.f32.xlu0 %v1134
      %v1136 = vpop.xlane.xlu0 %1135
      %v1137 = vsel %vm302, %v860, 0.0
      %1138 = vadd.xlane.f32.xlu0 %v1137
      %v1139 = vpop.xlane.xlu0 %1138
      %v1140 = vsel %vm302, %v862, 0.0
      %1141 = vadd.xlane.f32.xlu0 %v1140
      %v1142 = vpop.xlane.xlu0 %1141
      %v1143 = vsel %vm302, %v864, 0.0
      %1144 = vadd.xlane.f32.xlu0 %v1143
      %v1145 = vpop.xlane.xlu0 %1144
      %v1146 = vsel %vm302, %v866, 0.0
      %1147 = vadd.xlane.f32.xlu0 %v1146
      %v1148 = vpop.xlane.xlu0 %1147
      %v1149 = vsel %vm302, %v868, 0.0
      %1150 = vadd.xlane.f32.xlu0 %v1149
      %v1151 = vpop.xlane.xlu0 %1150
      %v1152 = vsel %vm302, %v870, 0.0
      %1153 = vadd.xlane.f32.xlu0 %v1152
      %v1154 = vpop.xlane.xlu0 %1153
      %v1155 = vsel %vm302, %v872, 0.0
      %1156 = vadd.xlane.f32.xlu0 %v1155
      %v1157 = vpop.xlane.xlu0 %1156
      %v1158 = vsel %vm302, %v874, 0.0
      %1159 = vadd.xlane.f32.xlu0 %v1158
      %v1160 = vpop.xlane.xlu0 %1159
      %v1161 = vsel %vm302, %v876, 0.0
      %1162 = vadd.xlane.f32.xlu0 %v1161
      %v1163 = vpop.xlane.xlu0 %1162
      %v1164 = vsel %vm302, %v878, 0.0
      %1165 = vadd.xlane.f32.xlu0 %v1164
      %v1166 = vpop.xlane.xlu0 %1165
      %v1167 = vsel %vm302, %v880, 0.0
      %1168 = vadd.xlane.f32.xlu0 %v1167
      %v1169 = vpop.xlane.xlu0 %1168
      %v1170 = vsel %vm302, %v882, 0.0
      %1171 = vadd.xlane.f32.xlu0 %v1170
      %v1172 = vpop.xlane.xlu0 %1171
      %v1173 = vsel %vm302, %v884, 0.0
      %1174 = vadd.xlane.f32.xlu0 %v1173
      %v1175 = vpop.xlane.xlu0 %1174
      %v1176 = vsel %vm302, %v886, 0.0
      %1177 = vadd.xlane.f32.xlu0 %v1176
      %v1178 = vpop.xlane.xlu0 %1177
      %v1179 = vsel %vm302, %v888, 0.0
      %1180 = vadd.xlane.f32.xlu0 %v1179
      %v1181 = vpop.xlane.xlu0 %1180
      %v1182 = vsel %vm302, %v890, 0.0
      %1183 = vadd.xlane.f32.xlu0 %v1182
      %v1184 = vpop.xlane.xlu0 %1183
      %v1185 = vsel %vm302, %v892, 0.0
      %1186 = vadd.xlane.f32.xlu0 %v1185
      %v1187 = vpop.xlane.xlu0 %1186
      %v1188 = vsel %vm302, %v894, 0.0
      %1189 = vadd.xlane.f32.xlu0 %v1188
      %v1190 = vpop.xlane.xlu0 %1189
      %v1191 = vsel %vm302, %v896, 0.0
      %1192 = vadd.xlane.f32.xlu0 %v1191
      %v1193 = vpop.xlane.xlu0 %1192
      %v1194 = vsel %vm302, %v898, 0.0
      %1195 = vadd.xlane.f32.xlu0 %v1194
      %v1196 = vpop.xlane.xlu0 %1195
      %v1197 = vsel %vm302, %v900, 0.0
      %1198 = vadd.xlane.f32.xlu0 %v1197
      %v1199 = vpop.xlane.xlu0 %1198
      %v1200 = vsel %vm302, %v902, 0.0
      %1201 = vadd.xlane.f32.xlu0 %v1200
      %v1202 = vpop.xlane.xlu0 %1201
      %v1203 = vsel %vm302, %v904, 0.0
      %1204 = vadd.xlane.f32.xlu0 %v1203
      %v1205 = vpop.xlane.xlu0 %1204
      %v1206 = vsel %vm302, %v906, 0.0
      %1207 = vadd.xlane.f32.xlu0 %v1206
      %v1208 = vpop.xlane.xlu0 %1207
      %v1209 = vsel %vm302, %v908, 0.0
      %1210 = vadd.xlane.f32.xlu0 %v1209
      %v1211 = vpop.xlane.xlu0 %1210
      %v1212 = vsel %vm302, %v910, 0.0
      %1213 = vadd.xlane.f32.xlu0 %v1212
      %v1214 = vpop.xlane.xlu0 %1213
      %v1215 = vsel %vm302, %v912, 0.0
      %1216 = vadd.xlane.f32.xlu0 %v1215
      %v1217 = vpop.xlane.xlu0 %1216
      %v1218 = vsel %vm302, %v914, 0.0
      %1219 = vadd.xlane.f32.xlu0 %v1218
      %v1220 = vpop.xlane.xlu0 %1219
      %v1221 = vsel %vm302, %v916, 0.0
      %1222 = vadd.xlane.f32.xlu0 %v1221
      %v1223 = vpop.xlane.xlu0 %1222
      %v1224 = vsel %vm302, %v918, 0.0
      %1225 = vadd.xlane.f32.xlu0 %v1224
      %v1226 = vpop.xlane.xlu0 %1225
      %v1227 = vsel %vm302, %v920, 0.0
      %1228 = vadd.xlane.f32.xlu0 %v1227
      %v1229 = vpop.xlane.xlu0 %1228
      %v1230 = vsel %vm302, %v922, 0.0
      %1231 = vadd.xlane.f32.xlu0 %v1230
      %v1232 = vpop.xlane.xlu0 %1231
      %v1233 = vsel %vm302, %v924, 0.0
      %1234 = vadd.xlane.f32.xlu0 %v1233
      %v1235 = vpop.xlane.xlu0 %1234
      %v1236 = vsel %vm302, %v926, 0.0
      %1237 = vadd.xlane.f32.xlu0 %v1236
      %v1238 = vpop.xlane.xlu0 %1237
      %v1239 = vsel %vm302, %v928, 0.0
      %1240 = vadd.xlane.f32.xlu0 %v1239
      %v1241 = vpop.xlane.xlu0 %1240
      %v1242 = vsel %vm302, %v930, 0.0
      %1243 = vadd.xlane.f32.xlu0 %v1242
      %v1244 = vpop.xlane.xlu0 %1243
      %v1245 = vsel %vm302, %v932, 0.0
      %1246 = vadd.xlane.f32.xlu0 %v1245
      %v1247 = vpop.xlane.xlu0 %1246
      %v1248 = vsel %vm302, %v934, 0.0
      %1249 = vadd.xlane.f32.xlu0 %v1248
      %v1250 = vpop.xlane.xlu0 %1249
      %v1251 = vsel %vm302, %v936, 0.0
      %1252 = vadd.xlane.f32.xlu0 %v1251
      %v1253 = vpop.xlane.xlu0 %1252
      %v1254 = vsel %vm302, %v938, 0.0
      %1255 = vadd.xlane.f32.xlu0 %v1254
      %v1256 = vpop.xlane.xlu0 %1255
      %v1257 = vsel %vm302, %v940, 0.0
      %1258 = vadd.xlane.f32.xlu0 %v1257
      %v1259 = vpop.xlane.xlu0 %1258
      %v1260 = vsel %vm302, %v942, 0.0
      %1261 = vadd.xlane.f32.xlu0 %v1260
      %v1262 = vpop.xlane.xlu0 %1261
      %v1263 = vsel %vm302, %v944, 0.0
      %1264 = vadd.xlane.f32.xlu0 %v1263
      %v1265 = vpop.xlane.xlu0 %1264
      %v1266 = vsel %vm302, %v946, 0.0
      %1267 = vadd.xlane.f32.xlu0 %v1266
      %v1268 = vpop.xlane.xlu0 %1267
      %v1269 = vsel %vm302, %v948, 0.0
      %1270 = vadd.xlane.f32.xlu0 %v1269
      %v1271 = vpop.xlane.xlu0 %1270
      %v1272 = vsel %vm302, %v950, 0.0
      %1273 = vadd.xlane.f32.xlu0 %v1272
      %v1274 = vpop.xlane.xlu0 %1273
      %v1275 = vsel %vm302, %v952, 0.0
      %1276 = vadd.xlane.f32.xlu0 %v1275
      %v1277 = vpop.xlane.xlu0 %1276
      %v1278 = vsel %vm302, %v954, 0.0
      %1279 = vadd.xlane.f32.xlu0 %v1278
      %v1280 = vpop.xlane.xlu0 %1279
      %v1281 = vsel %vm302, %v956, 0.0
      %1282 = vadd.xlane.f32.xlu0 %v1281
      %v1283 = vpop.xlane.xlu0 %1282
      %v1284 = vsel %vm302, %v958, 0.0
      %1285 = vadd.xlane.f32.xlu0 %v1284
      %v1286 = vpop.xlane.xlu0 %1285
      %v1287 = vsel %vm302, %v960, 0.0
      %1288 = vadd.xlane.f32.xlu0 %v1287
      %v1289 = vpop.xlane.xlu0 %1288
      %v1290 = vsel %vm302, %v962, 0.0
      %1291 = vadd.xlane.f32.xlu0 %v1290
      %v1292 = vpop.xlane.xlu0 %1291
      %v1293 = vsel %vm302, %v964, 0.0
      %1294 = vadd.xlane.f32.xlu0 %v1293
      %v1295 = vpop.xlane.xlu0 %1294
      %v1296 = vsel %vm302, %v966, 0.0
      %1297 = vadd.xlane.f32.xlu0 %v1296
      %v1298 = vpop.xlane.xlu0 %1297
      %v1299 = vsel %vm302, %v968, 0.0
      %1300 = vadd.xlane.f32.xlu0 %v1299
      %v1301 = vpop.xlane.xlu0 %1300
      %v1302 = vsel %vm302, %v970, 0.0
      %1303 = vadd.xlane.f32.xlu0 %v1302
      %v1304 = vpop.xlane.xlu0 %1303
      %v1305 = vsel %vm302, %v972, 0.0
      %1306 = vadd.xlane.f32.xlu0 %v1305
      %v1307 = vpop.xlane.xlu0 %1306
      %v1308 = vsel %vm302, %v974, 0.0
      %1309 = vadd.xlane.f32.xlu0 %v1308
      %v1310 = vpop.xlane.xlu0 %1309
      %v1311 = vsel %vm302, %v976, 0.0
      %1312 = vadd.xlane.f32.xlu0 %v1311
      %v1313 = vpop.xlane.xlu0 %1312
      %v1314 = vsel %vm302, %v978, 0.0
      %1315 = vadd.xlane.f32.xlu0 %v1314
      %v1316 = vpop.xlane.xlu0 %1315
      %v1317 = vsel %vm302, %v980, 0.0
      %1318 = vadd.xlane.f32.xlu0 %v1317
      %v1319 = vpop.xlane.xlu0 %1318
      %v1320 = vsel %vm302, %v982, 0.0
      %1321 = vadd.xlane.f32.xlu0 %v1320
      %v1322 = vpop.xlane.xlu0 %1321
      %v1323 = vsel %vm302, %v984, 0.0
      %1324 = vadd.xlane.f32.xlu0 %v1323
      %v1325 = vpop.xlane.xlu0 %1324
      %v1326 = vsel %vm302, %v986, 0.0
      %1327 = vadd.xlane.f32.xlu0 %v1326
      %v1328 = vpop.xlane.xlu0 %1327
      %v1329 = vsel %vm302, %v988, 0.0
      %1330 = vadd.xlane.f32.xlu0 %v1329
      %v1331 = vpop.xlane.xlu0 %1330
      %v1332 = vsel %vm302, %v990, 0.0
      %1333 = vadd.xlane.f32.xlu0 %v1332
      %v1334 = vpop.xlane.xlu0 %1333
      %v1335 = vsel %vm302, %v992, 0.0
      %1336 = vadd.xlane.f32.xlu0 %v1335
      %v1337 = vpop.xlane.xlu0 %1336
      %v1338 = vsel %vm302, %v994, 0.0
      %1339 = vadd.xlane.f32.xlu0 %v1338
      %v1340 = vpop.xlane.xlu0 %1339
      %v1341 = vsel %vm302, %v996, 0.0
      %1342 = vadd.xlane.f32.xlu0 %v1341
      %v1343 = vpop.xlane.xlu0 %1342
      %v1344 = vsel %vm302, %v998, 0.0
      %1345 = vadd.xlane.f32.xlu0 %v1344
      %v1346 = vpop.xlane.xlu0 %1345
      %v1347 = vsel %vm302, %v1000, 0.0
      %1348 = vadd.xlane.f32.xlu0 %v1347
      %v1349 = vpop.xlane.xlu0 %1348
      %v1350 = vsel %vm302, %v1002, 0.0
      %1351 = vadd.xlane.f32.xlu0 %v1350
      %v1352 = vpop.xlane.xlu0 %1351
      %v1353 = vsel %vm302, %v1004, 0.0
      %1354 = vadd.xlane.f32.xlu0 %v1353
      %v1355 = vpop.xlane.xlu0 %1354
      %v1356 = vsel %vm302, %v1006, 0.0
      %1357 = vadd.xlane.f32.xlu0 %v1356
      %v1358 = vpop.xlane.xlu0 %1357
      %v1359 = vsel %vm302, %v1008, 0.0
      %1360 = vadd.xlane.f32.xlu0 %v1359
      %v1361 = vpop.xlane.xlu0 %1360
      %v1362 = vsel %vm302, %v1010, 0.0
      %1363 = vadd.xlane.f32.xlu0 %v1362
      %v1364 = vpop.xlane.xlu0 %1363
      %v1365 = vsel %vm302, %v1012, 0.0
      %1366 = vadd.xlane.f32.xlu0 %v1365
      %v1367 = vpop.xlane.xlu0 %1366
      %v1368 = vsel %vm302, %v1014, 0.0
      %1369 = vadd.xlane.f32.xlu0 %v1368
      %v1370 = vpop.xlane.xlu0 %1369
      %v1371 = vsel %vm302, %v1016, 0.0
      %1372 = vadd.xlane.f32.xlu0 %v1371
      %v1373 = vpop.xlane.xlu0 %1372
      %v1374 = vsel %vm302, %v1018, 0.0
      %1375 = vadd.xlane.f32.xlu0 %v1374
      %v1376 = vpop.xlane.xlu0 %1375
      %v1377 = vsel %vm302, %v1020, 0.0
      %1378 = vadd.xlane.f32.xlu0 %v1377
      %v1379 = vpop.xlane.xlu0 %1378
      %v1380 = vsel %vm302, %v1022, 0.0
      %1381 = vadd.xlane.f32.xlu0 %v1380
      %v1382 = vpop.xlane.xlu0 %1381
      %v1383 = vsel %vm302, %v1024, 0.0
      %1384 = vadd.xlane.f32.xlu0 %v1383
      %v1385 = vpop.xlane.xlu0 %1384
      %v1386 = vsel %vm302, %v1026, 0.0
      %1387 = vadd.xlane.f32.xlu0 %v1386
      %v1388 = vpop.xlane.xlu0 %1387
      %v1389 = vsel %vm302, %v1028, 0.0
      %1390 = vadd.xlane.f32.xlu0 %v1389
      %v1391 = vpop.xlane.xlu0 %1390
      %v1392 = vsel %vm302, %v1030, 0.0
      %1393 = vadd.xlane.f32.xlu0 %v1392
      %v1394 = vpop.xlane.xlu0 %1393
      %v1395 = vsel %vm302, %v1032, 0.0
      %1396 = vadd.xlane.f32.xlu0 %v1395
      %v1397 = vpop.xlane.xlu0 %1396
      %v1398 = vsel %vm302, %v1034, 0.0
      %1399 = vadd.xlane.f32.xlu0 %v1398
      %v1400 = vpop.xlane.xlu0 %1399
      %v1401 = vsel %vm302, %v1036, 0.0
      %1402 = vadd.xlane.f32.xlu0 %v1401
      %v1403 = vpop.xlane.xlu0 %1402
      %v1404 = vsel %vm302, %v1038, 0.0
      %1405 = vadd.xlane.f32.xlu0 %v1404
      %v1406 = vpop.xlane.xlu0 %1405
      %v1407 = vsel %vm302, %v1040, 0.0
      %1408 = vadd.xlane.f32.xlu0 %v1407
      %v1409 = vpop.xlane.xlu0 %1408
      %v1410 = vsel %vm302, %v1042, 0.0
      %1411 = vadd.xlane.f32.xlu0 %v1410
      %v1412 = vpop.xlane.xlu0 %1411
      %v1413 = vsel %vm302, %v1044, 0.0
      %1414 = vadd.xlane.f32.xlu0 %v1413
      %v1415 = vpop.xlane.xlu0 %1414
      %v1416 = vsel %vm302, %v1046, 0.0
      %1417 = vadd.xlane.f32.xlu0 %v1416
      %v1418 = vpop.xlane.xlu0 %1417
      %v1419 = vsel %vm302, %v1048, 0.0
      %1420 = vadd.xlane.f32.xlu0 %v1419
      %v1421 = vpop.xlane.xlu0 %1420
      %v1422 = vsel %vm302, %v1050, 0.0
      %1423 = vadd.xlane.f32.xlu0 %v1422
      %v1424 = vpop.xlane.xlu0 %1423
      %v1425 = vsel %vm302, %v1052, 0.0
      %1426 = vadd.xlane.f32.xlu0 %v1425
      %v1427 = vpop.xlane.xlu0 %1426
      %v1428 = vsel %vm302, %v1054, 0.0
      %1429 = vadd.xlane.f32.xlu0 %v1428
      %v1430 = vpop.xlane.xlu0 %1429
      %v1431 = vsel %vm302, %v1056, 0.0
      %1432 = vadd.xlane.f32.xlu0 %v1431
      %v1433 = vpop.xlane.xlu0 %1432
      %v1434 = vsel %vm302, %v1058, 0.0
      %1435 = vadd.xlane.f32.xlu0 %v1434
      %v1436 = vpop.xlane.xlu0 %1435
      %v1437 = vsel %vm302, %v1060, 0.0
      %1438 = vadd.xlane.f32.xlu0 %v1437
      %v1439 = vpop.xlane.xlu0 %1438
      %v1440 = vsel %vm302, %v1062, 0.0
      %1441 = vadd.xlane.f32.xlu0 %v1440
      %v1442 = vpop.xlane.xlu0 %1441
      %v1443 = vsel %vm302, %v1064, 0.0
      %1444 = vadd.xlane.f32.xlu0 %v1443
      %v1445 = vpop.xlane.xlu0 %1444
      %v1446 = vsel %vm302, %v1066, 0.0
      %1447 = vadd.xlane.f32.xlu0 %v1446
      %v1448 = vpop.xlane.xlu0 %1447
      %v1449 = vsel %vm302, %v1068, 0.0
      %1450 = vadd.xlane.f32.xlu0 %v1449
      %v1451 = vpop.xlane.xlu0 %1450
      %v1452 = vsel %vm302, %v1070, 0.0
      %1453 = vadd.xlane.f32.xlu0 %v1452
      %v1454 = vpop.xlane.xlu0 %1453
      %v1455 = vrcp.pop %v1073
      %v1456 = vmul.f32 %v1073, %v1455
      %v1457 = vsub.f32 1.0, %v1456
      %v1458 = vmul.f32 %v1455, %v1457
      %v1459 = vadd.f32 %v1455, %v1458
      %vm1460 = vweird.f32 %v1073
      %vm1461 = vweird.f32 %v1455
      %vm1462 = vmor %vm1460, %vm1461
      %v1463 = vsel %vm1462, %v1455, %v1459
      %v1464 = vand.u32 2147483647, %v1073
      %vm1465 = vcmp.eq.f32.partialorder %v1464, 8.507059e+37
      %v1466 = vand.u32 %v1073, 2147483648
      %v1467 = vor.u32 1.1754944e-38, %v1466
      %v1468 = vsel %vm1465, %v1467, %v1463
      %v1469 = vmul.f32 1.0, %v1468
      %v1470 = vrcp.pop %v1076
      %v1471 = vmul.f32 %v1076, %v1470
      %v1472 = vsub.f32 1.0, %v1471
      %v1473 = vmul.f32 %v1470, %v1472
      %v1474 = vadd.f32 %v1470, %v1473
      %vm1475 = vweird.f32 %v1076
      %vm1476 = vweird.f32 %v1470
      %vm1477 = vmor %vm1475, %vm1476
      %v1478 = vsel %vm1477, %v1470, %v1474
      %v1479 = vand.u32 2147483647, %v1076
      %vm1480 = vcmp.eq.f32.partialorder %v1479, 8.507059e+37
      %v1481 = vand.u32 %v1076, 2147483648
      %v1482 = vor.u32 1.1754944e-38, %v1481
      %v1483 = vsel %vm1480, %v1482, %v1478
      %v1484 = vmul.f32 1.0, %v1483
      %v1485 = vrcp.pop %v1079
      %v1486 = vmul.f32 %v1079, %v1485
      %v1487 = vsub.f32 1.0, %v1486
      %v1488 = vmul.f32 %v1485, %v1487
      %v1489 = vadd.f32 %v1485, %v1488
      %vm1490 = vweird.f32 %v1079
      %vm1491 = vweird.f32 %v1485
      %vm1492 = vmor %vm1490, %vm1491
      %v1493 = vsel %vm1492, %v1485, %v1489
      %v1494 = vand.u32 2147483647, %v1079
      %vm1495 = vcmp.eq.f32.partialorder %v1494, 8.507059e+37
      %v1496 = vand.u32 %v1079, 2147483648
      %v1497 = vor.u32 1.1754944e-38, %v1496
      %v1498 = vsel %vm1495, %v1497, %v1493
      %v1499 = vmul.f32 1.0, %v1498
      %v1500 = vrcp.pop %v1082
      %v1501 = vmul.f32 %v1082, %v1500
      %v1502 = vsub.f32 1.0, %v1501
      %v1503 = vmul.f32 %v1500, %v1502
      %v1504 = vadd.f32 %v1500, %v1503
      %vm1505 = vweird.f32 %v1082
      %vm1506 = vweird.f32 %v1500
      %vm1507 = vmor %vm1505, %vm1506
      %v1508 = vsel %vm1507, %v1500, %v1504
      %v1509 = vand.u32 2147483647, %v1082
      %vm1510 = vcmp.eq.f32.partialorder %v1509, 8.507059e+37
      %v1511 = vand.u32 %v1082, 2147483648
      %v1512 = vor.u32 1.1754944e-38, %v1511
      %v1513 = vsel %vm1510, %v1512, %v1508
      %v1514 = vmul.f32 1.0, %v1513
      %v1515 = vrcp.pop %v1085
      %v1516 = vmul.f32 %v1085, %v1515
      %v1517 = vsub.f32 1.0, %v1516
      %v1518 = vmul.f32 %v1515, %v1517
      %v1519 = vadd.f32 %v1515, %v1518
      %vm1520 = vweird.f32 %v1085
      %vm1521 = vweird.f32 %v1515
      %vm1522 = vmor %vm1520, %vm1521
      %v1523 = vsel %vm1522, %v1515, %v1519
      %v1524 = vand.u32 2147483647, %v1085
      %vm1525 = vcmp.eq.f32.partialorder %v1524, 8.507059e+37
      %v1526 = vand.u32 %v1085, 2147483648
      %v1527 = vor.u32 1.1754944e-38, %v1526
      %v1528 = vsel %vm1525, %v1527, %v1523
      %v1529 = vmul.f32 1.0, %v1528
      %v1530 = vrcp.pop %v1088
      %v1531 = vmul.f32 %v1088, %v1530
      %v1532 = vsub.f32 1.0, %v1531
      %v1533 = vmul.f32 %v1530, %v1532
      %v1534 = vadd.f32 %v1530, %v1533
      %vm1535 = vweird.f32 %v1088
      %vm1536 = vweird.f32 %v1530
      %vm1537 = vmor %vm1535, %vm1536
      %v1538 = vsel %vm1537, %v1530, %v1534
      %v1539 = vand.u32 2147483647, %v1088
      %vm1540 = vcmp.eq.f32.partialorder %v1539, 8.507059e+37
      %v1541 = vand.u32 %v1088, 2147483648
      %v1542 = vor.u32 1.1754944e-38, %v1541
      %v1543 = vsel %vm1540, %v1542, %v1538
      %v1544 = vmul.f32 1.0, %v1543
      %v1545 = vrcp.pop %v1091
      %v1546 = vmul.f32 %v1091, %v1545
      %v1547 = vsub.f32 1.0, %v1546
      %v1548 = vmul.f32 %v1545, %v1547
      %v1549 = vadd.f32 %v1545, %v1548
      %vm1550 = vweird.f32 %v1091
      %vm1551 = vweird.f32 %v1545
      %vm1552 = vmor %vm1550, %vm1551
      %v1553 = vsel %vm1552, %v1545, %v1549
      %v1554 = vand.u32 2147483647, %v1091
      %vm1555 = vcmp.eq.f32.partialorder %v1554, 8.507059e+37
      %v1556 = vand.u32 %v1091, 2147483648
      %v1557 = vor.u32 1.1754944e-38, %v1556
      %v1558 = vsel %vm1555, %v1557, %v1553
      %v1559 = vmul.f32 1.0, %v1558
      %v1560 = vrcp.pop %v1094
      %v1561 = vmul.f32 %v1094, %v1560
      %v1562 = vsub.f32 1.0, %v1561
      %v1563 = vmul.f32 %v1560, %v1562
      %v1564 = vadd.f32 %v1560, %v1563
      %vm1565 = vweird.f32 %v1094
      %vm1566 = vweird.f32 %v1560
      %vm1567 = vmor %vm1565, %vm1566
      %v1568 = vsel %vm1567, %v1560, %v1564
      %v1569 = vand.u32 2147483647, %v1094
      %vm1570 = vcmp.eq.f32.partialorder %v1569, 8.507059e+37
      %v1571 = vand.u32 %v1094, 2147483648
      %v1572 = vor.u32 1.1754944e-38, %v1571
      %v1573 = vsel %vm1570, %v1572, %v1568
      %v1574 = vmul.f32 1.0, %v1573
      %v1575 = vrcp.pop %v1097
      %v1576 = vmul.f32 %v1097, %v1575
      %v1577 = vsub.f32 1.0, %v1576
      %v1578 = vmul.f32 %v1575, %v1577
      %v1579 = vadd.f32 %v1575, %v1578
      %vm1580 = vweird.f32 %v1097
      %vm1581 = vweird.f32 %v1575
      %vm1582 = vmor %vm1580, %vm1581
      %v1583 = vsel %vm1582, %v1575, %v1579
      %v1584 = vand.u32 2147483647, %v1097
      %vm1585 = vcmp.eq.f32.partialorder %v1584, 8.507059e+37
      %v1586 = vand.u32 %v1097, 2147483648
      %v1587 = vor.u32 1.1754944e-38, %v1586
      %v1588 = vsel %vm1585, %v1587, %v1583
      %v1589 = vmul.f32 1.0, %v1588
      %v1590 = vrcp.pop %v1100
      %v1591 = vmul.f32 %v1100, %v1590
      %v1592 = vsub.f32 1.0, %v1591
      %v1593 = vmul.f32 %v1590, %v1592
      %v1594 = vadd.f32 %v1590, %v1593
      %vm1595 = vweird.f32 %v1100
      %vm1596 = vweird.f32 %v1590
      %vm1597 = vmor %vm1595, %vm1596
      %v1598 = vsel %vm1597, %v1590, %v1594
      %v1599 = vand.u32 2147483647, %v1100
      %vm1600 = vcmp.eq.f32.partialorder %v1599, 8.507059e+37
      %v1601 = vand.u32 %v1100, 2147483648
      %v1602 = vor.u32 1.1754944e-38, %v1601
      %v1603 = vsel %vm1600, %v1602, %v1598
      %v1604 = vmul.f32 1.0, %v1603
      %v1605 = vrcp.pop %v1103
      %v1606 = vmul.f32 %v1103, %v1605
      %v1607 = vsub.f32 1.0, %v1606
      %v1608 = vmul.f32 %v1605, %v1607
      %v1609 = vadd.f32 %v1605, %v1608
      %vm1610 = vweird.f32 %v1103
      %vm1611 = vweird.f32 %v1605
      %vm1612 = vmor %vm1610, %vm1611
      %v1613 = vsel %vm1612, %v1605, %v1609
      %v1614 = vand.u32 2147483647, %v1103
      %vm1615 = vcmp.eq.f32.partialorder %v1614, 8.507059e+37
      %v1616 = vand.u32 %v1103, 2147483648
      %v1617 = vor.u32 1.1754944e-38, %v1616
      %v1618 = vsel %vm1615, %v1617, %v1613
      %v1619 = vmul.f32 1.0, %v1618
      %v1620 = vrcp.pop %v1106
      %v1621 = vmul.f32 %v1106, %v1620
      %v1622 = vsub.f32 1.0, %v1621
      %v1623 = vmul.f32 %v1620, %v1622
      %v1624 = vadd.f32 %v1620, %v1623
      %vm1625 = vweird.f32 %v1106
      %vm1626 = vweird.f32 %v1620
      %vm1627 = vmor %vm1625, %vm1626
      %v1628 = vsel %vm1627, %v1620, %v1624
      %v1629 = vand.u32 2147483647, %v1106
      %vm1630 = vcmp.eq.f32.partialorder %v1629, 8.507059e+37
      %v1631 = vand.u32 %v1106, 2147483648
      %v1632 = vor.u32 1.1754944e-38, %v1631
      %v1633 = vsel %vm1630, %v1632, %v1628
      %v1634 = vmul.f32 1.0, %v1633
      %v1635 = vrcp.pop %v1109
      %v1636 = vmul.f32 %v1109, %v1635
      %v1637 = vsub.f32 1.0, %v1636
      %v1638 = vmul.f32 %v1635, %v1637
      %v1639 = vadd.f32 %v1635, %v1638
      %vm1640 = vweird.f32 %v1109
      %vm1641 = vweird.f32 %v1635
      %vm1642 = vmor %vm1640, %vm1641
      %v1643 = vsel %vm1642, %v1635, %v1639
      %v1644 = vand.u32 2147483647, %v1109
      %vm1645 = vcmp.eq.f32.partialorder %v1644, 8.507059e+37
      %v1646 = vand.u32 %v1109, 2147483648
      %v1647 = vor.u32 1.1754944e-38, %v1646
      %v1648 = vsel %vm1645, %v1647, %v1643
      %v1649 = vmul.f32 1.0, %v1648
      %v1650 = vrcp.pop %v1112
      %v1651 = vmul.f32 %v1112, %v1650
      %v1652 = vsub.f32 1.0, %v1651
      %v1653 = vmul.f32 %v1650, %v1652
      %v1654 = vadd.f32 %v1650, %v1653
      %vm1655 = vweird.f32 %v1112
      %vm1656 = vweird.f32 %v1650
      %vm1657 = vmor %vm1655, %vm1656
      %v1658 = vsel %vm1657, %v1650, %v1654
      %v1659 = vand.u32 2147483647, %v1112
      %vm1660 = vcmp.eq.f32.partialorder %v1659, 8.507059e+37
      %v1661 = vand.u32 %v1112, 2147483648
      %v1662 = vor.u32 1.1754944e-38, %v1661
      %v1663 = vsel %vm1660, %v1662, %v1658
      %v1664 = vmul.f32 1.0, %v1663
      %v1665 = vrcp.pop %v1115
      %v1666 = vmul.f32 %v1115, %v1665
      %v1667 = vsub.f32 1.0, %v1666
      %v1668 = vmul.f32 %v1665, %v1667
      %v1669 = vadd.f32 %v1665, %v1668
      %vm1670 = vweird.f32 %v1115
      %vm1671 = vweird.f32 %v1665
      %vm1672 = vmor %vm1670, %vm1671
      %v1673 = vsel %vm1672, %v1665, %v1669
      %v1674 = vand.u32 2147483647, %v1115
      %vm1675 = vcmp.eq.f32.partialorder %v1674, 8.507059e+37
      %v1676 = vand.u32 %v1115, 2147483648
      %v1677 = vor.u32 1.1754944e-38, %v1676
      %v1678 = vsel %vm1675, %v1677, %v1673
      %v1679 = vmul.f32 1.0, %v1678
      %v1680 = vrcp.pop %v1118
      %v1681 = vmul.f32 %v1118, %v1680
      %v1682 = vsub.f32 1.0, %v1681
      %v1683 = vmul.f32 %v1680, %v1682
      %v1684 = vadd.f32 %v1680, %v1683
      %vm1685 = vweird.f32 %v1118
      %vm1686 = vweird.f32 %v1680
      %vm1687 = vmor %vm1685, %vm1686
      %v1688 = vsel %vm1687, %v1680, %v1684
      %v1689 = vand.u32 2147483647, %v1118
      %vm1690 = vcmp.eq.f32.partialorder %v1689, 8.507059e+37
      %v1691 = vand.u32 %v1118, 2147483648
      %v1692 = vor.u32 1.1754944e-38, %v1691
      %v1693 = vsel %vm1690, %v1692, %v1688
      %v1694 = vmul.f32 1.0, %v1693
      %v1695 = vrcp.pop %v1121
      %v1696 = vmul.f32 %v1121, %v1695
      %v1697 = vsub.f32 1.0, %v1696
      %v1698 = vmul.f32 %v1695, %v1697
      %v1699 = vadd.f32 %v1695, %v1698
      %vm1700 = vweird.f32 %v1121
      %vm1701 = vweird.f32 %v1695
      %vm1702 = vmor %vm1700, %vm1701
      %v1703 = vsel %vm1702, %v1695, %v1699
      %v1704 = vand.u32 2147483647, %v1121
      %vm1705 = vcmp.eq.f32.partialorder %v1704, 8.507059e+37
      %v1706 = vand.u32 %v1121, 2147483648
      %v1707 = vor.u32 1.1754944e-38, %v1706
      %v1708 = vsel %vm1705, %v1707, %v1703
      %v1709 = vmul.f32 1.0, %v1708
      %v1710 = vrcp.pop %v1124
      %v1711 = vmul.f32 %v1124, %v1710
      %v1712 = vsub.f32 1.0, %v1711
      %v1713 = vmul.f32 %v1710, %v1712
      %v1714 = vadd.f32 %v1710, %v1713
      %vm1715 = vweird.f32 %v1124
      %vm1716 = vweird.f32 %v1710
      %vm1717 = vmor %vm1715, %vm1716
      %v1718 = vsel %vm1717, %v1710, %v1714
      %v1719 = vand.u32 2147483647, %v1124
      %vm1720 = vcmp.eq.f32.partialorder %v1719, 8.507059e+37
      %v1721 = vand.u32 %v1124, 2147483648
      %v1722 = vor.u32 1.1754944e-38, %v1721
      %v1723 = vsel %vm1720, %v1722, %v1718
      %v1724 = vmul.f32 1.0, %v1723
      %v1725 = vrcp.pop %v1127
      %v1726 = vmul.f32 %v1127, %v1725
      %v1727 = vsub.f32 1.0, %v1726
      %v1728 = vmul.f32 %v1725, %v1727
      %v1729 = vadd.f32 %v1725, %v1728
      %vm1730 = vweird.f32 %v1127
      %vm1731 = vweird.f32 %v1725
      %vm1732 = vmor %vm1730, %vm1731
      %v1733 = vsel %vm1732, %v1725, %v1729
      %v1734 = vand.u32 2147483647, %v1127
      %vm1735 = vcmp.eq.f32.partialorder %v1734, 8.507059e+37
      %v1736 = vand.u32 %v1127, 2147483648
      %v1737 = vor.u32 1.1754944e-38, %v1736
      %v1738 = vsel %vm1735, %v1737, %v1733
      %v1739 = vmul.f32 1.0, %v1738
      %v1740 = vrcp.pop %v1130
      %v1741 = vmul.f32 %v1130, %v1740
      %v1742 = vsub.f32 1.0, %v1741
      %v1743 = vmul.f32 %v1740, %v1742
      %v1744 = vadd.f32 %v1740, %v1743
      %vm1745 = vweird.f32 %v1130
      %vm1746 = vweird.f32 %v1740
      %vm1747 = vmor %vm1745, %vm1746
      %v1748 = vsel %vm1747, %v1740, %v1744
      %v1749 = vand.u32 2147483647, %v1130
      %vm1750 = vcmp.eq.f32.partialorder %v1749, 8.507059e+37
      %v1751 = vand.u32 %v1130, 2147483648
      %v1752 = vor.u32 1.1754944e-38, %v1751
      %v1753 = vsel %vm1750, %v1752, %v1748
      %v1754 = vmul.f32 1.0, %v1753
      %v1755 = vrcp.pop %v1133
      %v1756 = vmul.f32 %v1133, %v1755
      %v1757 = vsub.f32 1.0, %v1756
      %v1758 = vmul.f32 %v1755, %v1757
      %v1759 = vadd.f32 %v1755, %v1758
      %vm1760 = vweird.f32 %v1133
      %vm1761 = vweird.f32 %v1755
      %vm1762 = vmor %vm1760, %vm1761
      %v1763 = vsel %vm1762, %v1755, %v1759
      %v1764 = vand.u32 2147483647, %v1133
      %vm1765 = vcmp.eq.f32.partialorder %v1764, 8.507059e+37
      %v1766 = vand.u32 %v1133, 2147483648
      %v1767 = vor.u32 1.1754944e-38, %v1766
      %v1768 = vsel %vm1765, %v1767, %v1763
      %v1769 = vmul.f32 1.0, %v1768
      %v1770 = vrcp.pop %v1136
      %v1771 = vmul.f32 %v1136, %v1770
      %v1772 = vsub.f32 1.0, %v1771
      %v1773 = vmul.f32 %v1770, %v1772
      %v1774 = vadd.f32 %v1770, %v1773
      %vm1775 = vweird.f32 %v1136
      %vm1776 = vweird.f32 %v1770
      %vm1777 = vmor %vm1775, %vm1776
      %v1778 = vsel %vm1777, %v1770, %v1774
      %v1779 = vand.u32 2147483647, %v1136
      %vm1780 = vcmp.eq.f32.partialorder %v1779, 8.507059e+37
      %v1781 = vand.u32 %v1136, 2147483648
      %v1782 = vor.u32 1.1754944e-38, %v1781
      %v1783 = vsel %vm1780, %v1782, %v1778
      %v1784 = vmul.f32 1.0, %v1783
      %v1785 = vrcp.pop %v1139
      %v1786 = vmul.f32 %v1139, %v1785
      %v1787 = vsub.f32 1.0, %v1786
      %v1788 = vmul.f32 %v1785, %v1787
      %v1789 = vadd.f32 %v1785, %v1788
      %vm1790 = vweird.f32 %v1139
      %vm1791 = vweird.f32 %v1785
      %vm1792 = vmor %vm1790, %vm1791
      %v1793 = vsel %vm1792, %v1785, %v1789
      %v1794 = vand.u32 2147483647, %v1139
      %vm1795 = vcmp.eq.f32.partialorder %v1794, 8.507059e+37
      %v1796 = vand.u32 %v1139, 2147483648
      %v1797 = vor.u32 1.1754944e-38, %v1796
      %v1798 = vsel %vm1795, %v1797, %v1793
      %v1799 = vmul.f32 1.0, %v1798
      %v1800 = vrcp.pop %v1142
      %v1801 = vmul.f32 %v1142, %v1800
      %v1802 = vsub.f32 1.0, %v1801
      %v1803 = vmul.f32 %v1800, %v1802
      %v1804 = vadd.f32 %v1800, %v1803
      %vm1805 = vweird.f32 %v1142
      %vm1806 = vweird.f32 %v1800
      %vm1807 = vmor %vm1805, %vm1806
      %v1808 = vsel %vm1807, %v1800, %v1804
      %v1809 = vand.u32 2147483647, %v1142
      %vm1810 = vcmp.eq.f32.partialorder %v1809, 8.507059e+37
      %v1811 = vand.u32 %v1142, 2147483648
      %v1812 = vor.u32 1.1754944e-38, %v1811
      %v1813 = vsel %vm1810, %v1812, %v1808
      %v1814 = vmul.f32 1.0, %v1813
      %v1815 = vrcp.pop %v1145
      %v1816 = vmul.f32 %v1145, %v1815
      %v1817 = vsub.f32 1.0, %v1816
      %v1818 = vmul.f32 %v1815, %v1817
      %v1819 = vadd.f32 %v1815, %v1818
      %vm1820 = vweird.f32 %v1145
      %vm1821 = vweird.f32 %v1815
      %vm1822 = vmor %vm1820, %vm1821
      %v1823 = vsel %vm1822, %v1815, %v1819
      %v1824 = vand.u32 2147483647, %v1145
      %vm1825 = vcmp.eq.f32.partialorder %v1824, 8.507059e+37
      %v1826 = vand.u32 %v1145, 2147483648
      %v1827 = vor.u32 1.1754944e-38, %v1826
      %v1828 = vsel %vm1825, %v1827, %v1823
      %v1829 = vmul.f32 1.0, %v1828
      %v1830 = vrcp.pop %v1148
      %v1831 = vmul.f32 %v1148, %v1830
      %v1832 = vsub.f32 1.0, %v1831
      %v1833 = vmul.f32 %v1830, %v1832
      %v1834 = vadd.f32 %v1830, %v1833
      %vm1835 = vweird.f32 %v1148
      %vm1836 = vweird.f32 %v1830
      %vm1837 = vmor %vm1835, %vm1836
      %v1838 = vsel %vm1837, %v1830, %v1834
      %v1839 = vand.u32 2147483647, %v1148
      %vm1840 = vcmp.eq.f32.partialorder %v1839, 8.507059e+37
      %v1841 = vand.u32 %v1148, 2147483648
      %v1842 = vor.u32 1.1754944e-38, %v1841
      %v1843 = vsel %vm1840, %v1842, %v1838
      %v1844 = vmul.f32 1.0, %v1843
      %v1845 = vrcp.pop %v1151
      %v1846 = vmul.f32 %v1151, %v1845
      %v1847 = vsub.f32 1.0, %v1846
      %v1848 = vmul.f32 %v1845, %v1847
      %v1849 = vadd.f32 %v1845, %v1848
      %vm1850 = vweird.f32 %v1151
      %vm1851 = vweird.f32 %v1845
      %vm1852 = vmor %vm1850, %vm1851
      %v1853 = vsel %vm1852, %v1845, %v1849
      %v1854 = vand.u32 2147483647, %v1151
      %vm1855 = vcmp.eq.f32.partialorder %v1854, 8.507059e+37
      %v1856 = vand.u32 %v1151, 2147483648
      %v1857 = vor.u32 1.1754944e-38, %v1856
      %v1858 = vsel %vm1855, %v1857, %v1853
      %v1859 = vmul.f32 1.0, %v1858
      %v1860 = vrcp.pop %v1154
      %v1861 = vmul.f32 %v1154, %v1860
      %v1862 = vsub.f32 1.0, %v1861
      %v1863 = vmul.f32 %v1860, %v1862
      %v1864 = vadd.f32 %v1860, %v1863
      %vm1865 = vweird.f32 %v1154
      %vm1866 = vweird.f32 %v1860
      %vm1867 = vmor %vm1865, %vm1866
      %v1868 = vsel %vm1867, %v1860, %v1864
      %v1869 = vand.u32 2147483647, %v1154
      %vm1870 = vcmp.eq.f32.partialorder %v1869, 8.507059e+37
      %v1871 = vand.u32 %v1154, 2147483648
      %v1872 = vor.u32 1.1754944e-38, %v1871
      %v1873 = vsel %vm1870, %v1872, %v1868
      %v1874 = vmul.f32 1.0, %v1873
      %v1875 = vrcp.pop %v1157
      %v1876 = vmul.f32 %v1157, %v1875
      %v1877 = vsub.f32 1.0, %v1876
      %v1878 = vmul.f32 %v1875, %v1877
      %v1879 = vadd.f32 %v1875, %v1878
      %vm1880 = vweird.f32 %v1157
      %vm1881 = vweird.f32 %v1875
      %vm1882 = vmor %vm1880, %vm1881
      %v1883 = vsel %vm1882, %v1875, %v1879
      %v1884 = vand.u32 2147483647, %v1157
      %vm1885 = vcmp.eq.f32.partialorder %v1884, 8.507059e+37
      %v1886 = vand.u32 %v1157, 2147483648
      %v1887 = vor.u32 1.1754944e-38, %v1886
      %v1888 = vsel %vm1885, %v1887, %v1883
      %v1889 = vmul.f32 1.0, %v1888
      %v1890 = vrcp.pop %v1160
      %v1891 = vmul.f32 %v1160, %v1890
      %v1892 = vsub.f32 1.0, %v1891
      %v1893 = vmul.f32 %v1890, %v1892
      %v1894 = vadd.f32 %v1890, %v1893
      %vm1895 = vweird.f32 %v1160
      %vm1896 = vweird.f32 %v1890
      %vm1897 = vmor %vm1895, %vm1896
      %v1898 = vsel %vm1897, %v1890, %v1894
      %v1899 = vand.u32 2147483647, %v1160
      %vm1900 = vcmp.eq.f32.partialorder %v1899, 8.507059e+37
      %v1901 = vand.u32 %v1160, 2147483648
      %v1902 = vor.u32 1.1754944e-38, %v1901
      %v1903 = vsel %vm1900, %v1902, %v1898
      %v1904 = vmul.f32 1.0, %v1903
      %v1905 = vrcp.pop %v1163
      %v1906 = vmul.f32 %v1163, %v1905
      %v1907 = vsub.f32 1.0, %v1906
      %v1908 = vmul.f32 %v1905, %v1907
      %v1909 = vadd.f32 %v1905, %v1908
      %vm1910 = vweird.f32 %v1163
      %vm1911 = vweird.f32 %v1905
      %vm1912 = vmor %vm1910, %vm1911
      %v1913 = vsel %vm1912, %v1905, %v1909
      %v1914 = vand.u32 2147483647, %v1163
      %vm1915 = vcmp.eq.f32.partialorder %v1914, 8.507059e+37
      %v1916 = vand.u32 %v1163, 2147483648
      %v1917 = vor.u32 1.1754944e-38, %v1916
      %v1918 = vsel %vm1915, %v1917, %v1913
      %v1919 = vmul.f32 1.0, %v1918
      %v1920 = vrcp.pop %v1166
      %v1921 = vmul.f32 %v1166, %v1920
      %v1922 = vsub.f32 1.0, %v1921
      %v1923 = vmul.f32 %v1920, %v1922
      %v1924 = vadd.f32 %v1920, %v1923
      %vm1925 = vweird.f32 %v1166
      %vm1926 = vweird.f32 %v1920
      %vm1927 = vmor %vm1925, %vm1926
      %v1928 = vsel %vm1927, %v1920, %v1924
      %v1929 = vand.u32 2147483647, %v1166
      %vm1930 = vcmp.eq.f32.partialorder %v1929, 8.507059e+37
      %v1931 = vand.u32 %v1166, 2147483648
      %v1932 = vor.u32 1.1754944e-38, %v1931
      %v1933 = vsel %vm1930, %v1932, %v1928
      %v1934 = vmul.f32 1.0, %v1933
      %v1935 = vrcp.pop %v1169
      %v1936 = vmul.f32 %v1169, %v1935
      %v1937 = vsub.f32 1.0, %v1936
      %v1938 = vmul.f32 %v1935, %v1937
      %v1939 = vadd.f32 %v1935, %v1938
      %vm1940 = vweird.f32 %v1169
      %vm1941 = vweird.f32 %v1935
      %vm1942 = vmor %vm1940, %vm1941
      %v1943 = vsel %vm1942, %v1935, %v1939
      %v1944 = vand.u32 2147483647, %v1169
      %vm1945 = vcmp.eq.f32.partialorder %v1944, 8.507059e+37
      %v1946 = vand.u32 %v1169, 2147483648
      %v1947 = vor.u32 1.1754944e-38, %v1946
      %v1948 = vsel %vm1945, %v1947, %v1943
      %v1949 = vmul.f32 1.0, %v1948
      %v1950 = vrcp.pop %v1172
      %v1951 = vmul.f32 %v1172, %v1950
      %v1952 = vsub.f32 1.0, %v1951
      %v1953 = vmul.f32 %v1950, %v1952
      %v1954 = vadd.f32 %v1950, %v1953
      %vm1955 = vweird.f32 %v1172
      %vm1956 = vweird.f32 %v1950
      %vm1957 = vmor %vm1955, %vm1956
      %v1958 = vsel %vm1957, %v1950, %v1954
      %v1959 = vand.u32 2147483647, %v1172
      %vm1960 = vcmp.eq.f32.partialorder %v1959, 8.507059e+37
      %v1961 = vand.u32 %v1172, 2147483648
      %v1962 = vor.u32 1.1754944e-38, %v1961
      %v1963 = vsel %vm1960, %v1962, %v1958
      %v1964 = vmul.f32 1.0, %v1963
      %v1965 = vrcp.pop %v1175
      %v1966 = vmul.f32 %v1175, %v1965
      %v1967 = vsub.f32 1.0, %v1966
      %v1968 = vmul.f32 %v1965, %v1967
      %v1969 = vadd.f32 %v1965, %v1968
      %vm1970 = vweird.f32 %v1175
      %vm1971 = vweird.f32 %v1965
      %vm1972 = vmor %vm1970, %vm1971
      %v1973 = vsel %vm1972, %v1965, %v1969
      %v1974 = vand.u32 2147483647, %v1175
      %vm1975 = vcmp.eq.f32.partialorder %v1974, 8.507059e+37
      %v1976 = vand.u32 %v1175, 2147483648
      %v1977 = vor.u32 1.1754944e-38, %v1976
      %v1978 = vsel %vm1975, %v1977, %v1973
      %v1979 = vmul.f32 1.0, %v1978
      %v1980 = vrcp.pop %v1178
      %v1981 = vmul.f32 %v1178, %v1980
      %v1982 = vsub.f32 1.0, %v1981
      %v1983 = vmul.f32 %v1980, %v1982
      %v1984 = vadd.f32 %v1980, %v1983
      %vm1985 = vweird.f32 %v1178
      %vm1986 = vweird.f32 %v1980
      %vm1987 = vmor %vm1985, %vm1986
      %v1988 = vsel %vm1987, %v1980, %v1984
      %v1989 = vand.u32 2147483647, %v1178
      %vm1990 = vcmp.eq.f32.partialorder %v1989, 8.507059e+37
      %v1991 = vand.u32 %v1178, 2147483648
      %v1992 = vor.u32 1.1754944e-38, %v1991
      %v1993 = vsel %vm1990, %v1992, %v1988
      %v1994 = vmul.f32 1.0, %v1993
      %v1995 = vrcp.pop %v1181
      %v1996 = vmul.f32 %v1181, %v1995
      %v1997 = vsub.f32 1.0, %v1996
      %v1998 = vmul.f32 %v1995, %v1997
      %v1999 = vadd.f32 %v1995, %v1998
      %vm2000 = vweird.f32 %v1181
      %vm2001 = vweird.f32 %v1995
      %vm2002 = vmor %vm2000, %vm2001
      %v2003 = vsel %vm2002, %v1995, %v1999
      %v2004 = vand.u32 2147483647, %v1181
      %vm2005 = vcmp.eq.f32.partialorder %v2004, 8.507059e+37
      %v2006 = vand.u32 %v1181, 2147483648
      %v2007 = vor.u32 1.1754944e-38, %v2006
      %v2008 = vsel %vm2005, %v2007, %v2003
      %v2009 = vmul.f32 1.0, %v2008
      %v2010 = vrcp.pop %v1184
      %v2011 = vmul.f32 %v1184, %v2010
      %v2012 = vsub.f32 1.0, %v2011
      %v2013 = vmul.f32 %v2010, %v2012
      %v2014 = vadd.f32 %v2010, %v2013
      %vm2015 = vweird.f32 %v1184
      %vm2016 = vweird.f32 %v2010
      %vm2017 = vmor %vm2015, %vm2016
      %v2018 = vsel %vm2017, %v2010, %v2014
      %v2019 = vand.u32 2147483647, %v1184
      %vm2020 = vcmp.eq.f32.partialorder %v2019, 8.507059e+37
      %v2021 = vand.u32 %v1184, 2147483648
      %v2022 = vor.u32 1.1754944e-38, %v2021
      %v2023 = vsel %vm2020, %v2022, %v2018
      %v2024 = vmul.f32 1.0, %v2023
      %v2025 = vrcp.pop %v1187
      %v2026 = vmul.f32 %v1187, %v2025
      %v2027 = vsub.f32 1.0, %v2026
      %v2028 = vmul.f32 %v2025, %v2027
      %v2029 = vadd.f32 %v2025, %v2028
      %vm2030 = vweird.f32 %v1187
      %vm2031 = vweird.f32 %v2025
      %vm2032 = vmor %vm2030, %vm2031
      %v2033 = vsel %vm2032, %v2025, %v2029
      %v2034 = vand.u32 2147483647, %v1187
      %vm2035 = vcmp.eq.f32.partialorder %v2034, 8.507059e+37
      %v2036 = vand.u32 %v1187, 2147483648
      %v2037 = vor.u32 1.1754944e-38, %v2036
      %v2038 = vsel %vm2035, %v2037, %v2033
      %v2039 = vmul.f32 1.0, %v2038
      %v2040 = vrcp.pop %v1190
      %v2041 = vmul.f32 %v1190, %v2040
      %v2042 = vsub.f32 1.0, %v2041
      %v2043 = vmul.f32 %v2040, %v2042
      %v2044 = vadd.f32 %v2040, %v2043
      %vm2045 = vweird.f32 %v1190
      %vm2046 = vweird.f32 %v2040
      %vm2047 = vmor %vm2045, %vm2046
      %v2048 = vsel %vm2047, %v2040, %v2044
      %v2049 = vand.u32 2147483647, %v1190
      %vm2050 = vcmp.eq.f32.partialorder %v2049, 8.507059e+37
      %v2051 = vand.u32 %v1190, 2147483648
      %v2052 = vor.u32 1.1754944e-38, %v2051
      %v2053 = vsel %vm2050, %v2052, %v2048
      %v2054 = vmul.f32 1.0, %v2053
      %v2055 = vrcp.pop %v1193
      %v2056 = vmul.f32 %v1193, %v2055
      %v2057 = vsub.f32 1.0, %v2056
      %v2058 = vmul.f32 %v2055, %v2057
      %v2059 = vadd.f32 %v2055, %v2058
      %vm2060 = vweird.f32 %v1193
      %vm2061 = vweird.f32 %v2055
      %vm2062 = vmor %vm2060, %vm2061
      %v2063 = vsel %vm2062, %v2055, %v2059
      %v2064 = vand.u32 2147483647, %v1193
      %vm2065 = vcmp.eq.f32.partialorder %v2064, 8.507059e+37
      %v2066 = vand.u32 %v1193, 2147483648
      %v2067 = vor.u32 1.1754944e-38, %v2066
      %v2068 = vsel %vm2065, %v2067, %v2063
      %v2069 = vmul.f32 1.0, %v2068
      %v2070 = vrcp.pop %v1196
      %v2071 = vmul.f32 %v1196, %v2070
      %v2072 = vsub.f32 1.0, %v2071
      %v2073 = vmul.f32 %v2070, %v2072
      %v2074 = vadd.f32 %v2070, %v2073
      %vm2075 = vweird.f32 %v1196
      %vm2076 = vweird.f32 %v2070
      %vm2077 = vmor %vm2075, %vm2076
      %v2078 = vsel %vm2077, %v2070, %v2074
      %v2079 = vand.u32 2147483647, %v1196
      %vm2080 = vcmp.eq.f32.partialorder %v2079, 8.507059e+37
      %v2081 = vand.u32 %v1196, 2147483648
      %v2082 = vor.u32 1.1754944e-38, %v2081
      %v2083 = vsel %vm2080, %v2082, %v2078
      %v2084 = vmul.f32 1.0, %v2083
      %v2085 = vrcp.pop %v1199
      %v2086 = vmul.f32 %v1199, %v2085
      %v2087 = vsub.f32 1.0, %v2086
      %v2088 = vmul.f32 %v2085, %v2087
      %v2089 = vadd.f32 %v2085, %v2088
      %vm2090 = vweird.f32 %v1199
      %vm2091 = vweird.f32 %v2085
      %vm2092 = vmor %vm2090, %vm2091
      %v2093 = vsel %vm2092, %v2085, %v2089
      %v2094 = vand.u32 2147483647, %v1199
      %vm2095 = vcmp.eq.f32.partialorder %v2094, 8.507059e+37
      %v2096 = vand.u32 %v1199, 2147483648
      %v2097 = vor.u32 1.1754944e-38, %v2096
      %v2098 = vsel %vm2095, %v2097, %v2093
      %v2099 = vmul.f32 1.0, %v2098
      %v2100 = vrcp.pop %v1202
      %v2101 = vmul.f32 %v1202, %v2100
      %v2102 = vsub.f32 1.0, %v2101
      %v2103 = vmul.f32 %v2100, %v2102
      %v2104 = vadd.f32 %v2100, %v2103
      %vm2105 = vweird.f32 %v1202
      %vm2106 = vweird.f32 %v2100
      %vm2107 = vmor %vm2105, %vm2106
      %v2108 = vsel %vm2107, %v2100, %v2104
      %v2109 = vand.u32 2147483647, %v1202
      %vm2110 = vcmp.eq.f32.partialorder %v2109, 8.507059e+37
      %v2111 = vand.u32 %v1202, 2147483648
      %v2112 = vor.u32 1.1754944e-38, %v2111
      %v2113 = vsel %vm2110, %v2112, %v2108
      %v2114 = vmul.f32 1.0, %v2113
      %v2115 = vrcp.pop %v1205
      %v2116 = vmul.f32 %v1205, %v2115
      %v2117 = vsub.f32 1.0, %v2116
      %v2118 = vmul.f32 %v2115, %v2117
      %v2119 = vadd.f32 %v2115, %v2118
      %vm2120 = vweird.f32 %v1205
      %vm2121 = vweird.f32 %v2115
      %vm2122 = vmor %vm2120, %vm2121
      %v2123 = vsel %vm2122, %v2115, %v2119
      %v2124 = vand.u32 2147483647, %v1205
      %vm2125 = vcmp.eq.f32.partialorder %v2124, 8.507059e+37
      %v2126 = vand.u32 %v1205, 2147483648
      %v2127 = vor.u32 1.1754944e-38, %v2126
      %v2128 = vsel %vm2125, %v2127, %v2123
      %v2129 = vmul.f32 1.0, %v2128
      %v2130 = vrcp.pop %v1208
      %v2131 = vmul.f32 %v1208, %v2130
      %v2132 = vsub.f32 1.0, %v2131
      %v2133 = vmul.f32 %v2130, %v2132
      %v2134 = vadd.f32 %v2130, %v2133
      %vm2135 = vweird.f32 %v1208
      %vm2136 = vweird.f32 %v2130
      %vm2137 = vmor %vm2135, %vm2136
      %v2138 = vsel %vm2137, %v2130, %v2134
      %v2139 = vand.u32 2147483647, %v1208
      %vm2140 = vcmp.eq.f32.partialorder %v2139, 8.507059e+37
      %v2141 = vand.u32 %v1208, 2147483648
      %v2142 = vor.u32 1.1754944e-38, %v2141
      %v2143 = vsel %vm2140, %v2142, %v2138
      %v2144 = vmul.f32 1.0, %v2143
      %v2145 = vrcp.pop %v1211
      %v2146 = vmul.f32 %v1211, %v2145
      %v2147 = vsub.f32 1.0, %v2146
      %v2148 = vmul.f32 %v2145, %v2147
      %v2149 = vadd.f32 %v2145, %v2148
      %vm2150 = vweird.f32 %v1211
      %vm2151 = vweird.f32 %v2145
      %vm2152 = vmor %vm2150, %vm2151
      %v2153 = vsel %vm2152, %v2145, %v2149
      %v2154 = vand.u32 2147483647, %v1211
      %vm2155 = vcmp.eq.f32.partialorder %v2154, 8.507059e+37
      %v2156 = vand.u32 %v1211, 2147483648
      %v2157 = vor.u32 1.1754944e-38, %v2156
      %v2158 = vsel %vm2155, %v2157, %v2153
      %v2159 = vmul.f32 1.0, %v2158
      %v2160 = vrcp.pop %v1214
      %v2161 = vmul.f32 %v1214, %v2160
      %v2162 = vsub.f32 1.0, %v2161
      %v2163 = vmul.f32 %v2160, %v2162
      %v2164 = vadd.f32 %v2160, %v2163
      %vm2165 = vweird.f32 %v1214
      %vm2166 = vweird.f32 %v2160
      %vm2167 = vmor %vm2165, %vm2166
      %v2168 = vsel %vm2167, %v2160, %v2164
      %v2169 = vand.u32 2147483647, %v1214
      %vm2170 = vcmp.eq.f32.partialorder %v2169, 8.507059e+37
      %v2171 = vand.u32 %v1214, 2147483648
      %v2172 = vor.u32 1.1754944e-38, %v2171
      %v2173 = vsel %vm2170, %v2172, %v2168
      %v2174 = vmul.f32 1.0, %v2173
      %v2175 = vrcp.pop %v1217
      %v2176 = vmul.f32 %v1217, %v2175
      %v2177 = vsub.f32 1.0, %v2176
      %v2178 = vmul.f32 %v2175, %v2177
      %v2179 = vadd.f32 %v2175, %v2178
      %vm2180 = vweird.f32 %v1217
      %vm2181 = vweird.f32 %v2175
      %vm2182 = vmor %vm2180, %vm2181
      %v2183 = vsel %vm2182, %v2175, %v2179
      %v2184 = vand.u32 2147483647, %v1217
      %vm2185 = vcmp.eq.f32.partialorder %v2184, 8.507059e+37
      %v2186 = vand.u32 %v1217, 2147483648
      %v2187 = vor.u32 1.1754944e-38, %v2186
      %v2188 = vsel %vm2185, %v2187, %v2183
      %v2189 = vmul.f32 1.0, %v2188
      %v2190 = vrcp.pop %v1220
      %v2191 = vmul.f32 %v1220, %v2190
      %v2192 = vsub.f32 1.0, %v2191
      %v2193 = vmul.f32 %v2190, %v2192
      %v2194 = vadd.f32 %v2190, %v2193
      %vm2195 = vweird.f32 %v1220
      %vm2196 = vweird.f32 %v2190
      %vm2197 = vmor %vm2195, %vm2196
      %v2198 = vsel %vm2197, %v2190, %v2194
      %v2199 = vand.u32 2147483647, %v1220
      %vm2200 = vcmp.eq.f32.partialorder %v2199, 8.507059e+37
      %v2201 = vand.u32 %v1220, 2147483648
      %v2202 = vor.u32 1.1754944e-38, %v2201
      %v2203 = vsel %vm2200, %v2202, %v2198
      %v2204 = vmul.f32 1.0, %v2203
      %v2205 = vrcp.pop %v1223
      %v2206 = vmul.f32 %v1223, %v2205
      %v2207 = vsub.f32 1.0, %v2206
      %v2208 = vmul.f32 %v2205, %v2207
      %v2209 = vadd.f32 %v2205, %v2208
      %vm2210 = vweird.f32 %v1223
      %vm2211 = vweird.f32 %v2205
      %vm2212 = vmor %vm2210, %vm2211
      %v2213 = vsel %vm2212, %v2205, %v2209
      %v2214 = vand.u32 2147483647, %v1223
      %vm2215 = vcmp.eq.f32.partialorder %v2214, 8.507059e+37
      %v2216 = vand.u32 %v1223, 2147483648
      %v2217 = vor.u32 1.1754944e-38, %v2216
      %v2218 = vsel %vm2215, %v2217, %v2213
      %v2219 = vmul.f32 1.0, %v2218
      %v2220 = vrcp.pop %v1226
      %v2221 = vmul.f32 %v1226, %v2220
      %v2222 = vsub.f32 1.0, %v2221
      %v2223 = vmul.f32 %v2220, %v2222
      %v2224 = vadd.f32 %v2220, %v2223
      %vm2225 = vweird.f32 %v1226
      %vm2226 = vweird.f32 %v2220
      %vm2227 = vmor %vm2225, %vm2226
      %v2228 = vsel %vm2227, %v2220, %v2224
      %v2229 = vand.u32 2147483647, %v1226
      %vm2230 = vcmp.eq.f32.partialorder %v2229, 8.507059e+37
      %v2231 = vand.u32 %v1226, 2147483648
      %v2232 = vor.u32 1.1754944e-38, %v2231
      %v2233 = vsel %vm2230, %v2232, %v2228
      %v2234 = vmul.f32 1.0, %v2233
      %v2235 = vrcp.pop %v1229
      %v2236 = vmul.f32 %v1229, %v2235
      %v2237 = vsub.f32 1.0, %v2236
      %v2238 = vmul.f32 %v2235, %v2237
      %v2239 = vadd.f32 %v2235, %v2238
      %vm2240 = vweird.f32 %v1229
      %vm2241 = vweird.f32 %v2235
      %vm2242 = vmor %vm2240, %vm2241
      %v2243 = vsel %vm2242, %v2235, %v2239
      %v2244 = vand.u32 2147483647, %v1229
      %vm2245 = vcmp.eq.f32.partialorder %v2244, 8.507059e+37
      %v2246 = vand.u32 %v1229, 2147483648
      %v2247 = vor.u32 1.1754944e-38, %v2246
      %v2248 = vsel %vm2245, %v2247, %v2243
      %v2249 = vmul.f32 1.0, %v2248
      %v2250 = vrcp.pop %v1232
      %v2251 = vmul.f32 %v1232, %v2250
      %v2252 = vsub.f32 1.0, %v2251
      %v2253 = vmul.f32 %v2250, %v2252
      %v2254 = vadd.f32 %v2250, %v2253
      %vm2255 = vweird.f32 %v1232
      %vm2256 = vweird.f32 %v2250
      %vm2257 = vmor %vm2255, %vm2256
      %v2258 = vsel %vm2257, %v2250, %v2254
      %v2259 = vand.u32 2147483647, %v1232
      %vm2260 = vcmp.eq.f32.partialorder %v2259, 8.507059e+37
      %v2261 = vand.u32 %v1232, 2147483648
      %v2262 = vor.u32 1.1754944e-38, %v2261
      %v2263 = vsel %vm2260, %v2262, %v2258
      %v2264 = vmul.f32 1.0, %v2263
      %v2265 = vrcp.pop %v1235
      %v2266 = vmul.f32 %v1235, %v2265
      %v2267 = vsub.f32 1.0, %v2266
      %v2268 = vmul.f32 %v2265, %v2267
      %v2269 = vadd.f32 %v2265, %v2268
      %vm2270 = vweird.f32 %v1235
      %vm2271 = vweird.f32 %v2265
      %vm2272 = vmor %vm2270, %vm2271
      %v2273 = vsel %vm2272, %v2265, %v2269
      %v2274 = vand.u32 2147483647, %v1235
      %vm2275 = vcmp.eq.f32.partialorder %v2274, 8.507059e+37
      %v2276 = vand.u32 %v1235, 2147483648
      %v2277 = vor.u32 1.1754944e-38, %v2276
      %v2278 = vsel %vm2275, %v2277, %v2273
      %v2279 = vmul.f32 1.0, %v2278
      %v2280 = vrcp.pop %v1238
      %v2281 = vmul.f32 %v1238, %v2280
      %v2282 = vsub.f32 1.0, %v2281
      %v2283 = vmul.f32 %v2280, %v2282
      %v2284 = vadd.f32 %v2280, %v2283
      %vm2285 = vweird.f32 %v1238
      %vm2286 = vweird.f32 %v2280
      %vm2287 = vmor %vm2285, %vm2286
      %v2288 = vsel %vm2287, %v2280, %v2284
      %v2289 = vand.u32 2147483647, %v1238
      %vm2290 = vcmp.eq.f32.partialorder %v2289, 8.507059e+37
      %v2291 = vand.u32 %v1238, 2147483648
      %v2292 = vor.u32 1.1754944e-38, %v2291
      %v2293 = vsel %vm2290, %v2292, %v2288
      %v2294 = vmul.f32 1.0, %v2293
      %v2295 = vrcp.pop %v1241
      %v2296 = vmul.f32 %v1241, %v2295
      %v2297 = vsub.f32 1.0, %v2296
      %v2298 = vmul.f32 %v2295, %v2297
      %v2299 = vadd.f32 %v2295, %v2298
      %vm2300 = vweird.f32 %v1241
      %vm2301 = vweird.f32 %v2295
      %vm2302 = vmor %vm2300, %vm2301
      %v2303 = vsel %vm2302, %v2295, %v2299
      %v2304 = vand.u32 2147483647, %v1241
      %vm2305 = vcmp.eq.f32.partialorder %v2304, 8.507059e+37
      %v2306 = vand.u32 %v1241, 2147483648
      %v2307 = vor.u32 1.1754944e-38, %v2306
      %v2308 = vsel %vm2305, %v2307, %v2303
      %v2309 = vmul.f32 1.0, %v2308
      %v2310 = vrcp.pop %v1244
      %v2311 = vmul.f32 %v1244, %v2310
      %v2312 = vsub.f32 1.0, %v2311
      %v2313 = vmul.f32 %v2310, %v2312
      %v2314 = vadd.f32 %v2310, %v2313
      %vm2315 = vweird.f32 %v1244
      %vm2316 = vweird.f32 %v2310
      %vm2317 = vmor %vm2315, %vm2316
      %v2318 = vsel %vm2317, %v2310, %v2314
      %v2319 = vand.u32 2147483647, %v1244
      %vm2320 = vcmp.eq.f32.partialorder %v2319, 8.507059e+37
      %v2321 = vand.u32 %v1244, 2147483648
      %v2322 = vor.u32 1.1754944e-38, %v2321
      %v2323 = vsel %vm2320, %v2322, %v2318
      %v2324 = vmul.f32 1.0, %v2323
      %v2325 = vrcp.pop %v1247
      %v2326 = vmul.f32 %v1247, %v2325
      %v2327 = vsub.f32 1.0, %v2326
      %v2328 = vmul.f32 %v2325, %v2327
      %v2329 = vadd.f32 %v2325, %v2328
      %vm2330 = vweird.f32 %v1247
      %vm2331 = vweird.f32 %v2325
      %vm2332 = vmor %vm2330, %vm2331
      %v2333 = vsel %vm2332, %v2325, %v2329
      %v2334 = vand.u32 2147483647, %v1247
      %vm2335 = vcmp.eq.f32.partialorder %v2334, 8.507059e+37
      %v2336 = vand.u32 %v1247, 2147483648
      %v2337 = vor.u32 1.1754944e-38, %v2336
      %v2338 = vsel %vm2335, %v2337, %v2333
      %v2339 = vmul.f32 1.0, %v2338
      %v2340 = vrcp.pop %v1250
      %v2341 = vmul.f32 %v1250, %v2340
      %v2342 = vsub.f32 1.0, %v2341
      %v2343 = vmul.f32 %v2340, %v2342
      %v2344 = vadd.f32 %v2340, %v2343
      %vm2345 = vweird.f32 %v1250
      %vm2346 = vweird.f32 %v2340
      %vm2347 = vmor %vm2345, %vm2346
      %v2348 = vsel %vm2347, %v2340, %v2344
      %v2349 = vand.u32 2147483647, %v1250
      %vm2350 = vcmp.eq.f32.partialorder %v2349, 8.507059e+37
      %v2351 = vand.u32 %v1250, 2147483648
      %v2352 = vor.u32 1.1754944e-38, %v2351
      %v2353 = vsel %vm2350, %v2352, %v2348
      %v2354 = vmul.f32 1.0, %v2353
      %v2355 = vrcp.pop %v1253
      %v2356 = vmul.f32 %v1253, %v2355
      %v2357 = vsub.f32 1.0, %v2356
      %v2358 = vmul.f32 %v2355, %v2357
      %v2359 = vadd.f32 %v2355, %v2358
      %vm2360 = vweird.f32 %v1253
      %vm2361 = vweird.f32 %v2355
      %vm2362 = vmor %vm2360, %vm2361
      %v2363 = vsel %vm2362, %v2355, %v2359
      %v2364 = vand.u32 2147483647, %v1253
      %vm2365 = vcmp.eq.f32.partialorder %v2364, 8.507059e+37
      %v2366 = vand.u32 %v1253, 2147483648
      %v2367 = vor.u32 1.1754944e-38, %v2366
      %v2368 = vsel %vm2365, %v2367, %v2363
      %v2369 = vmul.f32 1.0, %v2368
      %v2370 = vrcp.pop %v1256
      %v2371 = vmul.f32 %v1256, %v2370
      %v2372 = vsub.f32 1.0, %v2371
      %v2373 = vmul.f32 %v2370, %v2372
      %v2374 = vadd.f32 %v2370, %v2373
      %vm2375 = vweird.f32 %v1256
      %vm2376 = vweird.f32 %v2370
      %vm2377 = vmor %vm2375, %vm2376
      %v2378 = vsel %vm2377, %v2370, %v2374
      %v2379 = vand.u32 2147483647, %v1256
      %vm2380 = vcmp.eq.f32.partialorder %v2379, 8.507059e+37
      %v2381 = vand.u32 %v1256, 2147483648
      %v2382 = vor.u32 1.1754944e-38, %v2381
      %v2383 = vsel %vm2380, %v2382, %v2378
      %v2384 = vmul.f32 1.0, %v2383
      %v2385 = vrcp.pop %v1259
      %v2386 = vmul.f32 %v1259, %v2385
      %v2387 = vsub.f32 1.0, %v2386
      %v2388 = vmul.f32 %v2385, %v2387
      %v2389 = vadd.f32 %v2385, %v2388
      %vm2390 = vweird.f32 %v1259
      %vm2391 = vweird.f32 %v2385
      %vm2392 = vmor %vm2390, %vm2391
      %v2393 = vsel %vm2392, %v2385, %v2389
      %v2394 = vand.u32 2147483647, %v1259
      %vm2395 = vcmp.eq.f32.partialorder %v2394, 8.507059e+37
      %v2396 = vand.u32 %v1259, 2147483648
      %v2397 = vor.u32 1.1754944e-38, %v2396
      %v2398 = vsel %vm2395, %v2397, %v2393
      %v2399 = vmul.f32 1.0, %v2398
      %v2400 = vrcp.pop %v1262
      %v2401 = vmul.f32 %v1262, %v2400
      %v2402 = vsub.f32 1.0, %v2401
      %v2403 = vmul.f32 %v2400, %v2402
      %v2404 = vadd.f32 %v2400, %v2403
      %vm2405 = vweird.f32 %v1262
      %vm2406 = vweird.f32 %v2400
      %vm2407 = vmor %vm2405, %vm2406
      %v2408 = vsel %vm2407, %v2400, %v2404
      %v2409 = vand.u32 2147483647, %v1262
      %vm2410 = vcmp.eq.f32.partialorder %v2409, 8.507059e+37
      %v2411 = vand.u32 %v1262, 2147483648
      %v2412 = vor.u32 1.1754944e-38, %v2411
      %v2413 = vsel %vm2410, %v2412, %v2408
      %v2414 = vmul.f32 1.0, %v2413
      %v2415 = vrcp.pop %v1265
      %v2416 = vmul.f32 %v1265, %v2415
      %v2417 = vsub.f32 1.0, %v2416
      %v2418 = vmul.f32 %v2415, %v2417
      %v2419 = vadd.f32 %v2415, %v2418
      %vm2420 = vweird.f32 %v1265
      %vm2421 = vweird.f32 %v2415
      %vm2422 = vmor %vm2420, %vm2421
      %v2423 = vsel %vm2422, %v2415, %v2419
      %v2424 = vand.u32 2147483647, %v1265
      %vm2425 = vcmp.eq.f32.partialorder %v2424, 8.507059e+37
      %v2426 = vand.u32 %v1265, 2147483648
      %v2427 = vor.u32 1.1754944e-38, %v2426
      %v2428 = vsel %vm2425, %v2427, %v2423
      %v2429 = vmul.f32 1.0, %v2428
      %v2430 = vrcp.pop %v1268
      %v2431 = vmul.f32 %v1268, %v2430
      %v2432 = vsub.f32 1.0, %v2431
      %v2433 = vmul.f32 %v2430, %v2432
      %v2434 = vadd.f32 %v2430, %v2433
      %vm2435 = vweird.f32 %v1268
      %vm2436 = vweird.f32 %v2430
      %vm2437 = vmor %vm2435, %vm2436
      %v2438 = vsel %vm2437, %v2430, %v2434
      %v2439 = vand.u32 2147483647, %v1268
      %vm2440 = vcmp.eq.f32.partialorder %v2439, 8.507059e+37
      %v2441 = vand.u32 %v1268, 2147483648
      %v2442 = vor.u32 1.1754944e-38, %v2441
      %v2443 = vsel %vm2440, %v2442, %v2438
      %v2444 = vmul.f32 1.0, %v2443
      %v2445 = vrcp.pop %v1271
      %v2446 = vmul.f32 %v1271, %v2445
      %v2447 = vsub.f32 1.0, %v2446
      %v2448 = vmul.f32 %v2445, %v2447
      %v2449 = vadd.f32 %v2445, %v2448
      %vm2450 = vweird.f32 %v1271
      %vm2451 = vweird.f32 %v2445
      %vm2452 = vmor %vm2450, %vm2451
      %v2453 = vsel %vm2452, %v2445, %v2449
      %v2454 = vand.u32 2147483647, %v1271
      %vm2455 = vcmp.eq.f32.partialorder %v2454, 8.507059e+37
      %v2456 = vand.u32 %v1271, 2147483648
      %v2457 = vor.u32 1.1754944e-38, %v2456
      %v2458 = vsel %vm2455, %v2457, %v2453
      %v2459 = vmul.f32 1.0, %v2458
      %v2460 = vrcp.pop %v1274
      %v2461 = vmul.f32 %v1274, %v2460
      %v2462 = vsub.f32 1.0, %v2461
      %v2463 = vmul.f32 %v2460, %v2462
      %v2464 = vadd.f32 %v2460, %v2463
      %vm2465 = vweird.f32 %v1274
      %vm2466 = vweird.f32 %v2460
      %vm2467 = vmor %vm2465, %vm2466
      %v2468 = vsel %vm2467, %v2460, %v2464
      %v2469 = vand.u32 2147483647, %v1274
      %vm2470 = vcmp.eq.f32.partialorder %v2469, 8.507059e+37
      %v2471 = vand.u32 %v1274, 2147483648
      %v2472 = vor.u32 1.1754944e-38, %v2471
      %v2473 = vsel %vm2470, %v2472, %v2468
      %v2474 = vmul.f32 1.0, %v2473
      %v2475 = vrcp.pop %v1277
      %v2476 = vmul.f32 %v1277, %v2475
      %v2477 = vsub.f32 1.0, %v2476
      %v2478 = vmul.f32 %v2475, %v2477
      %v2479 = vadd.f32 %v2475, %v2478
      %vm2480 = vweird.f32 %v1277
      %vm2481 = vweird.f32 %v2475
      %vm2482 = vmor %vm2480, %vm2481
      %v2483 = vsel %vm2482, %v2475, %v2479
      %v2484 = vand.u32 2147483647, %v1277
      %vm2485 = vcmp.eq.f32.partialorder %v2484, 8.507059e+37
      %v2486 = vand.u32 %v1277, 2147483648
      %v2487 = vor.u32 1.1754944e-38, %v2486
      %v2488 = vsel %vm2485, %v2487, %v2483
      %v2489 = vmul.f32 1.0, %v2488
      %v2490 = vrcp.pop %v1280
      %v2491 = vmul.f32 %v1280, %v2490
      %v2492 = vsub.f32 1.0, %v2491
      %v2493 = vmul.f32 %v2490, %v2492
      %v2494 = vadd.f32 %v2490, %v2493
      %vm2495 = vweird.f32 %v1280
      %vm2496 = vweird.f32 %v2490
      %vm2497 = vmor %vm2495, %vm2496
      %v2498 = vsel %vm2497, %v2490, %v2494
      %v2499 = vand.u32 2147483647, %v1280
      %vm2500 = vcmp.eq.f32.partialorder %v2499, 8.507059e+37
      %v2501 = vand.u32 %v1280, 2147483648
      %v2502 = vor.u32 1.1754944e-38, %v2501
      %v2503 = vsel %vm2500, %v2502, %v2498
      %v2504 = vmul.f32 1.0, %v2503
      %v2505 = vrcp.pop %v1283
      %v2506 = vmul.f32 %v1283, %v2505
      %v2507 = vsub.f32 1.0, %v2506
      %v2508 = vmul.f32 %v2505, %v2507
      %v2509 = vadd.f32 %v2505, %v2508
      %vm2510 = vweird.f32 %v1283
      %vm2511 = vweird.f32 %v2505
      %vm2512 = vmor %vm2510, %vm2511
      %v2513 = vsel %vm2512, %v2505, %v2509
      %v2514 = vand.u32 2147483647, %v1283
      %vm2515 = vcmp.eq.f32.partialorder %v2514, 8.507059e+37
      %v2516 = vand.u32 %v1283, 2147483648
      %v2517 = vor.u32 1.1754944e-38, %v2516
      %v2518 = vsel %vm2515, %v2517, %v2513
      %v2519 = vmul.f32 1.0, %v2518
      %v2520 = vrcp.pop %v1286
      %v2521 = vmul.f32 %v1286, %v2520
      %v2522 = vsub.f32 1.0, %v2521
      %v2523 = vmul.f32 %v2520, %v2522
      %v2524 = vadd.f32 %v2520, %v2523
      %vm2525 = vweird.f32 %v1286
      %vm2526 = vweird.f32 %v2520
      %vm2527 = vmor %vm2525, %vm2526
      %v2528 = vsel %vm2527, %v2520, %v2524
      %v2529 = vand.u32 2147483647, %v1286
      %vm2530 = vcmp.eq.f32.partialorder %v2529, 8.507059e+37
      %v2531 = vand.u32 %v1286, 2147483648
      %v2532 = vor.u32 1.1754944e-38, %v2531
      %v2533 = vsel %vm2530, %v2532, %v2528
      %v2534 = vmul.f32 1.0, %v2533
      %v2535 = vrcp.pop %v1289
      %v2536 = vmul.f32 %v1289, %v2535
      %v2537 = vsub.f32 1.0, %v2536
      %v2538 = vmul.f32 %v2535, %v2537
      %v2539 = vadd.f32 %v2535, %v2538
      %vm2540 = vweird.f32 %v1289
      %vm2541 = vweird.f32 %v2535
      %vm2542 = vmor %vm2540, %vm2541
      %v2543 = vsel %vm2542, %v2535, %v2539
      %v2544 = vand.u32 2147483647, %v1289
      %vm2545 = vcmp.eq.f32.partialorder %v2544, 8.507059e+37
      %v2546 = vand.u32 %v1289, 2147483648
      %v2547 = vor.u32 1.1754944e-38, %v2546
      %v2548 = vsel %vm2545, %v2547, %v2543
      %v2549 = vmul.f32 1.0, %v2548
      %v2550 = vrcp.pop %v1292
      %v2551 = vmul.f32 %v1292, %v2550
      %v2552 = vsub.f32 1.0, %v2551
      %v2553 = vmul.f32 %v2550, %v2552
      %v2554 = vadd.f32 %v2550, %v2553
      %vm2555 = vweird.f32 %v1292
      %vm2556 = vweird.f32 %v2550
      %vm2557 = vmor %vm2555, %vm2556
      %v2558 = vsel %vm2557, %v2550, %v2554
      %v2559 = vand.u32 2147483647, %v1292
      %vm2560 = vcmp.eq.f32.partialorder %v2559, 8.507059e+37
      %v2561 = vand.u32 %v1292, 2147483648
      %v2562 = vor.u32 1.1754944e-38, %v2561
      %v2563 = vsel %vm2560, %v2562, %v2558
      %v2564 = vmul.f32 1.0, %v2563
      %v2565 = vrcp.pop %v1295
      %v2566 = vmul.f32 %v1295, %v2565
      %v2567 = vsub.f32 1.0, %v2566
      %v2568 = vmul.f32 %v2565, %v2567
      %v2569 = vadd.f32 %v2565, %v2568
      %vm2570 = vweird.f32 %v1295
      %vm2571 = vweird.f32 %v2565
      %vm2572 = vmor %vm2570, %vm2571
      %v2573 = vsel %vm2572, %v2565, %v2569
      %v2574 = vand.u32 2147483647, %v1295
      %vm2575 = vcmp.eq.f32.partialorder %v2574, 8.507059e+37
      %v2576 = vand.u32 %v1295, 2147483648
      %v2577 = vor.u32 1.1754944e-38, %v2576
      %v2578 = vsel %vm2575, %v2577, %v2573
      %v2579 = vmul.f32 1.0, %v2578
      %v2580 = vrcp.pop %v1298
      %v2581 = vmul.f32 %v1298, %v2580
      %v2582 = vsub.f32 1.0, %v2581
      %v2583 = vmul.f32 %v2580, %v2582
      %v2584 = vadd.f32 %v2580, %v2583
      %vm2585 = vweird.f32 %v1298
      %vm2586 = vweird.f32 %v2580
      %vm2587 = vmor %vm2585, %vm2586
      %v2588 = vsel %vm2587, %v2580, %v2584
      %v2589 = vand.u32 2147483647, %v1298
      %vm2590 = vcmp.eq.f32.partialorder %v2589, 8.507059e+37
      %v2591 = vand.u32 %v1298, 2147483648
      %v2592 = vor.u32 1.1754944e-38, %v2591
      %v2593 = vsel %vm2590, %v2592, %v2588
      %v2594 = vmul.f32 1.0, %v2593
      %v2595 = vrcp.pop %v1301
      %v2596 = vmul.f32 %v1301, %v2595
      %v2597 = vsub.f32 1.0, %v2596
      %v2598 = vmul.f32 %v2595, %v2597
      %v2599 = vadd.f32 %v2595, %v2598
      %vm2600 = vweird.f32 %v1301
      %vm2601 = vweird.f32 %v2595
      %vm2602 = vmor %vm2600, %vm2601
      %v2603 = vsel %vm2602, %v2595, %v2599
      %v2604 = vand.u32 2147483647, %v1301
      %vm2605 = vcmp.eq.f32.partialorder %v2604, 8.507059e+37
      %v2606 = vand.u32 %v1301, 2147483648
      %v2607 = vor.u32 1.1754944e-38, %v2606
      %v2608 = vsel %vm2605, %v2607, %v2603
      %v2609 = vmul.f32 1.0, %v2608
      %v2610 = vrcp.pop %v1304
      %v2611 = vmul.f32 %v1304, %v2610
      %v2612 = vsub.f32 1.0, %v2611
      %v2613 = vmul.f32 %v2610, %v2612
      %v2614 = vadd.f32 %v2610, %v2613
      %vm2615 = vweird.f32 %v1304
      %vm2616 = vweird.f32 %v2610
      %vm2617 = vmor %vm2615, %vm2616
      %v2618 = vsel %vm2617, %v2610, %v2614
      %v2619 = vand.u32 2147483647, %v1304
      %vm2620 = vcmp.eq.f32.partialorder %v2619, 8.507059e+37
      %v2621 = vand.u32 %v1304, 2147483648
      %v2622 = vor.u32 1.1754944e-38, %v2621
      %v2623 = vsel %vm2620, %v2622, %v2618
      %v2624 = vmul.f32 1.0, %v2623
      %v2625 = vrcp.pop %v1307
      %v2626 = vmul.f32 %v1307, %v2625
      %v2627 = vsub.f32 1.0, %v2626
      %v2628 = vmul.f32 %v2625, %v2627
      %v2629 = vadd.f32 %v2625, %v2628
      %vm2630 = vweird.f32 %v1307
      %vm2631 = vweird.f32 %v2625
      %vm2632 = vmor %vm2630, %vm2631
      %v2633 = vsel %vm2632, %v2625, %v2629
      %v2634 = vand.u32 2147483647, %v1307
      %vm2635 = vcmp.eq.f32.partialorder %v2634, 8.507059e+37
      %v2636 = vand.u32 %v1307, 2147483648
      %v2637 = vor.u32 1.1754944e-38, %v2636
      %v2638 = vsel %vm2635, %v2637, %v2633
      %v2639 = vmul.f32 1.0, %v2638
      %v2640 = vrcp.pop %v1310
      %v2641 = vmul.f32 %v1310, %v2640
      %v2642 = vsub.f32 1.0, %v2641
      %v2643 = vmul.f32 %v2640, %v2642
      %v2644 = vadd.f32 %v2640, %v2643
      %vm2645 = vweird.f32 %v1310
      %vm2646 = vweird.f32 %v2640
      %vm2647 = vmor %vm2645, %vm2646
      %v2648 = vsel %vm2647, %v2640, %v2644
      %v2649 = vand.u32 2147483647, %v1310
      %vm2650 = vcmp.eq.f32.partialorder %v2649, 8.507059e+37
      %v2651 = vand.u32 %v1310, 2147483648
      %v2652 = vor.u32 1.1754944e-38, %v2651
      %v2653 = vsel %vm2650, %v2652, %v2648
      %v2654 = vmul.f32 1.0, %v2653
      %v2655 = vrcp.pop %v1313
      %v2656 = vmul.f32 %v1313, %v2655
      %v2657 = vsub.f32 1.0, %v2656
      %v2658 = vmul.f32 %v2655, %v2657
      %v2659 = vadd.f32 %v2655, %v2658
      %vm2660 = vweird.f32 %v1313
      %vm2661 = vweird.f32 %v2655
      %vm2662 = vmor %vm2660, %vm2661
      %v2663 = vsel %vm2662, %v2655, %v2659
      %v2664 = vand.u32 2147483647, %v1313
      %vm2665 = vcmp.eq.f32.partialorder %v2664, 8.507059e+37
      %v2666 = vand.u32 %v1313, 2147483648
      %v2667 = vor.u32 1.1754944e-38, %v2666
      %v2668 = vsel %vm2665, %v2667, %v2663
      %v2669 = vmul.f32 1.0, %v2668
      %v2670 = vrcp.pop %v1316
      %v2671 = vmul.f32 %v1316, %v2670
      %v2672 = vsub.f32 1.0, %v2671
      %v2673 = vmul.f32 %v2670, %v2672
      %v2674 = vadd.f32 %v2670, %v2673
      %vm2675 = vweird.f32 %v1316
      %vm2676 = vweird.f32 %v2670
      %vm2677 = vmor %vm2675, %vm2676
      %v2678 = vsel %vm2677, %v2670, %v2674
      %v2679 = vand.u32 2147483647, %v1316
      %vm2680 = vcmp.eq.f32.partialorder %v2679, 8.507059e+37
      %v2681 = vand.u32 %v1316, 2147483648
      %v2682 = vor.u32 1.1754944e-38, %v2681
      %v2683 = vsel %vm2680, %v2682, %v2678
      %v2684 = vmul.f32 1.0, %v2683
      %v2685 = vrcp.pop %v1319
      %v2686 = vmul.f32 %v1319, %v2685
      %v2687 = vsub.f32 1.0, %v2686
      %v2688 = vmul.f32 %v2685, %v2687
      %v2689 = vadd.f32 %v2685, %v2688
      %vm2690 = vweird.f32 %v1319
      %vm2691 = vweird.f32 %v2685
      %vm2692 = vmor %vm2690, %vm2691
      %v2693 = vsel %vm2692, %v2685, %v2689
      %v2694 = vand.u32 2147483647, %v1319
      %vm2695 = vcmp.eq.f32.partialorder %v2694, 8.507059e+37
      %v2696 = vand.u32 %v1319, 2147483648
      %v2697 = vor.u32 1.1754944e-38, %v2696
      %v2698 = vsel %vm2695, %v2697, %v2693
      %v2699 = vmul.f32 1.0, %v2698
      %v2700 = vrcp.pop %v1322
      %v2701 = vmul.f32 %v1322, %v2700
      %v2702 = vsub.f32 1.0, %v2701
      %v2703 = vmul.f32 %v2700, %v2702
      %v2704 = vadd.f32 %v2700, %v2703
      %vm2705 = vweird.f32 %v1322
      %vm2706 = vweird.f32 %v2700
      %vm2707 = vmor %vm2705, %vm2706
      %v2708 = vsel %vm2707, %v2700, %v2704
      %v2709 = vand.u32 2147483647, %v1322
      %vm2710 = vcmp.eq.f32.partialorder %v2709, 8.507059e+37
      %v2711 = vand.u32 %v1322, 2147483648
      %v2712 = vor.u32 1.1754944e-38, %v2711
      %v2713 = vsel %vm2710, %v2712, %v2708
      %v2714 = vmul.f32 1.0, %v2713
      %v2715 = vrcp.pop %v1325
      %v2716 = vmul.f32 %v1325, %v2715
      %v2717 = vsub.f32 1.0, %v2716
      %v2718 = vmul.f32 %v2715, %v2717
      %v2719 = vadd.f32 %v2715, %v2718
      %vm2720 = vweird.f32 %v1325
      %vm2721 = vweird.f32 %v2715
      %vm2722 = vmor %vm2720, %vm2721
      %v2723 = vsel %vm2722, %v2715, %v2719
      %v2724 = vand.u32 2147483647, %v1325
      %vm2725 = vcmp.eq.f32.partialorder %v2724, 8.507059e+37
      %v2726 = vand.u32 %v1325, 2147483648
      %v2727 = vor.u32 1.1754944e-38, %v2726
      %v2728 = vsel %vm2725, %v2727, %v2723
      %v2729 = vmul.f32 1.0, %v2728
      %v2730 = vrcp.pop %v1328
      %v2731 = vmul.f32 %v1328, %v2730
      %v2732 = vsub.f32 1.0, %v2731
      %v2733 = vmul.f32 %v2730, %v2732
      %v2734 = vadd.f32 %v2730, %v2733
      %vm2735 = vweird.f32 %v1328
      %vm2736 = vweird.f32 %v2730
      %vm2737 = vmor %vm2735, %vm2736
      %v2738 = vsel %vm2737, %v2730, %v2734
      %v2739 = vand.u32 2147483647, %v1328
      %vm2740 = vcmp.eq.f32.partialorder %v2739, 8.507059e+37
      %v2741 = vand.u32 %v1328, 2147483648
      %v2742 = vor.u32 1.1754944e-38, %v2741
      %v2743 = vsel %vm2740, %v2742, %v2738
      %v2744 = vmul.f32 1.0, %v2743
      %v2745 = vrcp.pop %v1331
      %v2746 = vmul.f32 %v1331, %v2745
      %v2747 = vsub.f32 1.0, %v2746
      %v2748 = vmul.f32 %v2745, %v2747
      %v2749 = vadd.f32 %v2745, %v2748
      %vm2750 = vweird.f32 %v1331
      %vm2751 = vweird.f32 %v2745
      %vm2752 = vmor %vm2750, %vm2751
      %v2753 = vsel %vm2752, %v2745, %v2749
      %v2754 = vand.u32 2147483647, %v1331
      %vm2755 = vcmp.eq.f32.partialorder %v2754, 8.507059e+37
      %v2756 = vand.u32 %v1331, 2147483648
      %v2757 = vor.u32 1.1754944e-38, %v2756
      %v2758 = vsel %vm2755, %v2757, %v2753
      %v2759 = vmul.f32 1.0, %v2758
      %v2760 = vrcp.pop %v1334
      %v2761 = vmul.f32 %v1334, %v2760
      %v2762 = vsub.f32 1.0, %v2761
      %v2763 = vmul.f32 %v2760, %v2762
      %v2764 = vadd.f32 %v2760, %v2763
      %vm2765 = vweird.f32 %v1334
      %vm2766 = vweird.f32 %v2760
      %vm2767 = vmor %vm2765, %vm2766
      %v2768 = vsel %vm2767, %v2760, %v2764
      %v2769 = vand.u32 2147483647, %v1334
      %vm2770 = vcmp.eq.f32.partialorder %v2769, 8.507059e+37
      %v2771 = vand.u32 %v1334, 2147483648
      %v2772 = vor.u32 1.1754944e-38, %v2771
      %v2773 = vsel %vm2770, %v2772, %v2768
      %v2774 = vmul.f32 1.0, %v2773
      %v2775 = vrcp.pop %v1337
      %v2776 = vmul.f32 %v1337, %v2775
      %v2777 = vsub.f32 1.0, %v2776
      %v2778 = vmul.f32 %v2775, %v2777
      %v2779 = vadd.f32 %v2775, %v2778
      %vm2780 = vweird.f32 %v1337
      %vm2781 = vweird.f32 %v2775
      %vm2782 = vmor %vm2780, %vm2781
      %v2783 = vsel %vm2782, %v2775, %v2779
      %v2784 = vand.u32 2147483647, %v1337
      %vm2785 = vcmp.eq.f32.partialorder %v2784, 8.507059e+37
      %v2786 = vand.u32 %v1337, 2147483648
      %v2787 = vor.u32 1.1754944e-38, %v2786
      %v2788 = vsel %vm2785, %v2787, %v2783
      %v2789 = vmul.f32 1.0, %v2788
      %v2790 = vrcp.pop %v1340
      %v2791 = vmul.f32 %v1340, %v2790
      %v2792 = vsub.f32 1.0, %v2791
      %v2793 = vmul.f32 %v2790, %v2792
      %v2794 = vadd.f32 %v2790, %v2793
      %vm2795 = vweird.f32 %v1340
      %vm2796 = vweird.f32 %v2790
      %vm2797 = vmor %vm2795, %vm2796
      %v2798 = vsel %vm2797, %v2790, %v2794
      %v2799 = vand.u32 2147483647, %v1340
      %vm2800 = vcmp.eq.f32.partialorder %v2799, 8.507059e+37
      %v2801 = vand.u32 %v1340, 2147483648
      %v2802 = vor.u32 1.1754944e-38, %v2801
      %v2803 = vsel %vm2800, %v2802, %v2798
      %v2804 = vmul.f32 1.0, %v2803
      %v2805 = vrcp.pop %v1343
      %v2806 = vmul.f32 %v1343, %v2805
      %v2807 = vsub.f32 1.0, %v2806
      %v2808 = vmul.f32 %v2805, %v2807
      %v2809 = vadd.f32 %v2805, %v2808
      %vm2810 = vweird.f32 %v1343
      %vm2811 = vweird.f32 %v2805
      %vm2812 = vmor %vm2810, %vm2811
      %v2813 = vsel %vm2812, %v2805, %v2809
      %v2814 = vand.u32 2147483647, %v1343
      %vm2815 = vcmp.eq.f32.partialorder %v2814, 8.507059e+37
      %v2816 = vand.u32 %v1343, 2147483648
      %v2817 = vor.u32 1.1754944e-38, %v2816
      %v2818 = vsel %vm2815, %v2817, %v2813
      %v2819 = vmul.f32 1.0, %v2818
      %v2820 = vrcp.pop %v1346
      %v2821 = vmul.f32 %v1346, %v2820
      %v2822 = vsub.f32 1.0, %v2821
      %v2823 = vmul.f32 %v2820, %v2822
      %v2824 = vadd.f32 %v2820, %v2823
      %vm2825 = vweird.f32 %v1346
      %vm2826 = vweird.f32 %v2820
      %vm2827 = vmor %vm2825, %vm2826
      %v2828 = vsel %vm2827, %v2820, %v2824
      %v2829 = vand.u32 2147483647, %v1346
      %vm2830 = vcmp.eq.f32.partialorder %v2829, 8.507059e+37
      %v2831 = vand.u32 %v1346, 2147483648
      %v2832 = vor.u32 1.1754944e-38, %v2831
      %v2833 = vsel %vm2830, %v2832, %v2828
      %v2834 = vmul.f32 1.0, %v2833
      %v2835 = vrcp.pop %v1349
      %v2836 = vmul.f32 %v1349, %v2835
      %v2837 = vsub.f32 1.0, %v2836
      %v2838 = vmul.f32 %v2835, %v2837
      %v2839 = vadd.f32 %v2835, %v2838
      %vm2840 = vweird.f32 %v1349
      %vm2841 = vweird.f32 %v2835
      %vm2842 = vmor %vm2840, %vm2841
      %v2843 = vsel %vm2842, %v2835, %v2839
      %v2844 = vand.u32 2147483647, %v1349
      %vm2845 = vcmp.eq.f32.partialorder %v2844, 8.507059e+37
      %v2846 = vand.u32 %v1349, 2147483648
      %v2847 = vor.u32 1.1754944e-38, %v2846
      %v2848 = vsel %vm2845, %v2847, %v2843
      %v2849 = vmul.f32 1.0, %v2848
      %v2850 = vrcp.pop %v1352
      %v2851 = vmul.f32 %v1352, %v2850
      %v2852 = vsub.f32 1.0, %v2851
      %v2853 = vmul.f32 %v2850, %v2852
      %v2854 = vadd.f32 %v2850, %v2853
      %vm2855 = vweird.f32 %v1352
      %vm2856 = vweird.f32 %v2850
      %vm2857 = vmor %vm2855, %vm2856
      %v2858 = vsel %vm2857, %v2850, %v2854
      %v2859 = vand.u32 2147483647, %v1352
      %vm2860 = vcmp.eq.f32.partialorder %v2859, 8.507059e+37
      %v2861 = vand.u32 %v1352, 2147483648
      %v2862 = vor.u32 1.1754944e-38, %v2861
      %v2863 = vsel %vm2860, %v2862, %v2858
      %v2864 = vmul.f32 1.0, %v2863
      %v2865 = vrcp.pop %v1355
      %v2866 = vmul.f32 %v1355, %v2865
      %v2867 = vsub.f32 1.0, %v2866
      %v2868 = vmul.f32 %v2865, %v2867
      %v2869 = vadd.f32 %v2865, %v2868
      %vm2870 = vweird.f32 %v1355
      %vm2871 = vweird.f32 %v2865
      %vm2872 = vmor %vm2870, %vm2871
      %v2873 = vsel %vm2872, %v2865, %v2869
      %v2874 = vand.u32 2147483647, %v1355
      %vm2875 = vcmp.eq.f32.partialorder %v2874, 8.507059e+37
      %v2876 = vand.u32 %v1355, 2147483648
      %v2877 = vor.u32 1.1754944e-38, %v2876
      %v2878 = vsel %vm2875, %v2877, %v2873
      %v2879 = vmul.f32 1.0, %v2878
      %v2880 = vrcp.pop %v1358
      %v2881 = vmul.f32 %v1358, %v2880
      %v2882 = vsub.f32 1.0, %v2881
      %v2883 = vmul.f32 %v2880, %v2882
      %v2884 = vadd.f32 %v2880, %v2883
      %vm2885 = vweird.f32 %v1358
      %vm2886 = vweird.f32 %v2880
      %vm2887 = vmor %vm2885, %vm2886
      %v2888 = vsel %vm2887, %v2880, %v2884
      %v2889 = vand.u32 2147483647, %v1358
      %vm2890 = vcmp.eq.f32.partialorder %v2889, 8.507059e+37
      %v2891 = vand.u32 %v1358, 2147483648
      %v2892 = vor.u32 1.1754944e-38, %v2891
      %v2893 = vsel %vm2890, %v2892, %v2888
      %v2894 = vmul.f32 1.0, %v2893
      %v2895 = vrcp.pop %v1361
      %v2896 = vmul.f32 %v1361, %v2895
      %v2897 = vsub.f32 1.0, %v2896
      %v2898 = vmul.f32 %v2895, %v2897
      %v2899 = vadd.f32 %v2895, %v2898
      %vm2900 = vweird.f32 %v1361
      %vm2901 = vweird.f32 %v2895
      %vm2902 = vmor %vm2900, %vm2901
      %v2903 = vsel %vm2902, %v2895, %v2899
      %v2904 = vand.u32 2147483647, %v1361
      %vm2905 = vcmp.eq.f32.partialorder %v2904, 8.507059e+37
      %v2906 = vand.u32 %v1361, 2147483648
      %v2907 = vor.u32 1.1754944e-38, %v2906
      %v2908 = vsel %vm2905, %v2907, %v2903
      %v2909 = vmul.f32 1.0, %v2908
      %v2910 = vrcp.pop %v1364
      %v2911 = vmul.f32 %v1364, %v2910
      %v2912 = vsub.f32 1.0, %v2911
      %v2913 = vmul.f32 %v2910, %v2912
      %v2914 = vadd.f32 %v2910, %v2913
      %vm2915 = vweird.f32 %v1364
      %vm2916 = vweird.f32 %v2910
      %vm2917 = vmor %vm2915, %vm2916
      %v2918 = vsel %vm2917, %v2910, %v2914
      %v2919 = vand.u32 2147483647, %v1364
      %vm2920 = vcmp.eq.f32.partialorder %v2919, 8.507059e+37
      %v2921 = vand.u32 %v1364, 2147483648
      %v2922 = vor.u32 1.1754944e-38, %v2921
      %v2923 = vsel %vm2920, %v2922, %v2918
      %v2924 = vmul.f32 1.0, %v2923
      %v2925 = vrcp.pop %v1367
      %v2926 = vmul.f32 %v1367, %v2925
      %v2927 = vsub.f32 1.0, %v2926
      %v2928 = vmul.f32 %v2925, %v2927
      %v2929 = vadd.f32 %v2925, %v2928
      %vm2930 = vweird.f32 %v1367
      %vm2931 = vweird.f32 %v2925
      %vm2932 = vmor %vm2930, %vm2931
      %v2933 = vsel %vm2932, %v2925, %v2929
      %v2934 = vand.u32 2147483647, %v1367
      %vm2935 = vcmp.eq.f32.partialorder %v2934, 8.507059e+37
      %v2936 = vand.u32 %v1367, 2147483648
      %v2937 = vor.u32 1.1754944e-38, %v2936
      %v2938 = vsel %vm2935, %v2937, %v2933
      %v2939 = vmul.f32 1.0, %v2938
      %v2940 = vrcp.pop %v1370
      %v2941 = vmul.f32 %v1370, %v2940
      %v2942 = vsub.f32 1.0, %v2941
      %v2943 = vmul.f32 %v2940, %v2942
      %v2944 = vadd.f32 %v2940, %v2943
      %vm2945 = vweird.f32 %v1370
      %vm2946 = vweird.f32 %v2940
      %vm2947 = vmor %vm2945, %vm2946
      %v2948 = vsel %vm2947, %v2940, %v2944
      %v2949 = vand.u32 2147483647, %v1370
      %vm2950 = vcmp.eq.f32.partialorder %v2949, 8.507059e+37
      %v2951 = vand.u32 %v1370, 2147483648
      %v2952 = vor.u32 1.1754944e-38, %v2951
      %v2953 = vsel %vm2950, %v2952, %v2948
      %v2954 = vmul.f32 1.0, %v2953
      %v2955 = vrcp.pop %v1373
      %v2956 = vmul.f32 %v1373, %v2955
      %v2957 = vsub.f32 1.0, %v2956
      %v2958 = vmul.f32 %v2955, %v2957
      %v2959 = vadd.f32 %v2955, %v2958
      %vm2960 = vweird.f32 %v1373
      %vm2961 = vweird.f32 %v2955
      %vm2962 = vmor %vm2960, %vm2961
      %v2963 = vsel %vm2962, %v2955, %v2959
      %v2964 = vand.u32 2147483647, %v1373
      %vm2965 = vcmp.eq.f32.partialorder %v2964, 8.507059e+37
      %v2966 = vand.u32 %v1373, 2147483648
      %v2967 = vor.u32 1.1754944e-38, %v2966
      %v2968 = vsel %vm2965, %v2967, %v2963
      %v2969 = vmul.f32 1.0, %v2968
      %v2970 = vrcp.pop %v1376
      %v2971 = vmul.f32 %v1376, %v2970
      %v2972 = vsub.f32 1.0, %v2971
      %v2973 = vmul.f32 %v2970, %v2972
      %v2974 = vadd.f32 %v2970, %v2973
      %vm2975 = vweird.f32 %v1376
      %vm2976 = vweird.f32 %v2970
      %vm2977 = vmor %vm2975, %vm2976
      %v2978 = vsel %vm2977, %v2970, %v2974
      %v2979 = vand.u32 2147483647, %v1376
      %vm2980 = vcmp.eq.f32.partialorder %v2979, 8.507059e+37
      %v2981 = vand.u32 %v1376, 2147483648
      %v2982 = vor.u32 1.1754944e-38, %v2981
      %v2983 = vsel %vm2980, %v2982, %v2978
      %v2984 = vmul.f32 1.0, %v2983
      %v2985 = vrcp.pop %v1379
      %v2986 = vmul.f32 %v1379, %v2985
      %v2987 = vsub.f32 1.0, %v2986
      %v2988 = vmul.f32 %v2985, %v2987
      %v2989 = vadd.f32 %v2985, %v2988
      %vm2990 = vweird.f32 %v1379
      %vm2991 = vweird.f32 %v2985
      %vm2992 = vmor %vm2990, %vm2991
      %v2993 = vsel %vm2992, %v2985, %v2989
      %v2994 = vand.u32 2147483647, %v1379
      %vm2995 = vcmp.eq.f32.partialorder %v2994, 8.507059e+37
      %v2996 = vand.u32 %v1379, 2147483648
      %v2997 = vor.u32 1.1754944e-38, %v2996
      %v2998 = vsel %vm2995, %v2997, %v2993
      %v2999 = vmul.f32 1.0, %v2998
      %v3000 = vrcp.pop %v1382
      %v3001 = vmul.f32 %v1382, %v3000
      %v3002 = vsub.f32 1.0, %v3001
      %v3003 = vmul.f32 %v3000, %v3002
      %v3004 = vadd.f32 %v3000, %v3003
      %vm3005 = vweird.f32 %v1382
      %vm3006 = vweird.f32 %v3000
      %vm3007 = vmor %vm3005, %vm3006
      %v3008 = vsel %vm3007, %v3000, %v3004
      %v3009 = vand.u32 2147483647, %v1382
      %vm3010 = vcmp.eq.f32.partialorder %v3009, 8.507059e+37
      %v3011 = vand.u32 %v1382, 2147483648
      %v3012 = vor.u32 1.1754944e-38, %v3011
      %v3013 = vsel %vm3010, %v3012, %v3008
      %v3014 = vmul.f32 1.0, %v3013
      %v3015 = vrcp.pop %v1385
      %v3016 = vmul.f32 %v1385, %v3015
      %v3017 = vsub.f32 1.0, %v3016
      %v3018 = vmul.f32 %v3015, %v3017
      %v3019 = vadd.f32 %v3015, %v3018
      %vm3020 = vweird.f32 %v1385
      %vm3021 = vweird.f32 %v3015
      %vm3022 = vmor %vm3020, %vm3021
      %v3023 = vsel %vm3022, %v3015, %v3019
      %v3024 = vand.u32 2147483647, %v1385
      %vm3025 = vcmp.eq.f32.partialorder %v3024, 8.507059e+37
      %v3026 = vand.u32 %v1385, 2147483648
      %v3027 = vor.u32 1.1754944e-38, %v3026
      %v3028 = vsel %vm3025, %v3027, %v3023
      %v3029 = vmul.f32 1.0, %v3028
      %v3030 = vrcp.pop %v1388
      %v3031 = vmul.f32 %v1388, %v3030
      %v3032 = vsub.f32 1.0, %v3031
      %v3033 = vmul.f32 %v3030, %v3032
      %v3034 = vadd.f32 %v3030, %v3033
      %vm3035 = vweird.f32 %v1388
      %vm3036 = vweird.f32 %v3030
      %vm3037 = vmor %vm3035, %vm3036
      %v3038 = vsel %vm3037, %v3030, %v3034
      %v3039 = vand.u32 2147483647, %v1388
      %vm3040 = vcmp.eq.f32.partialorder %v3039, 8.507059e+37
      %v3041 = vand.u32 %v1388, 2147483648
      %v3042 = vor.u32 1.1754944e-38, %v3041
      %v3043 = vsel %vm3040, %v3042, %v3038
      %v3044 = vmul.f32 1.0, %v3043
      %v3045 = vrcp.pop %v1391
      %v3046 = vmul.f32 %v1391, %v3045
      %v3047 = vsub.f32 1.0, %v3046
      %v3048 = vmul.f32 %v3045, %v3047
      %v3049 = vadd.f32 %v3045, %v3048
      %vm3050 = vweird.f32 %v1391
      %vm3051 = vweird.f32 %v3045
      %vm3052 = vmor %vm3050, %vm3051
      %v3053 = vsel %vm3052, %v3045, %v3049
      %v3054 = vand.u32 2147483647, %v1391
      %vm3055 = vcmp.eq.f32.partialorder %v3054, 8.507059e+37
      %v3056 = vand.u32 %v1391, 2147483648
      %v3057 = vor.u32 1.1754944e-38, %v3056
      %v3058 = vsel %vm3055, %v3057, %v3053
      %v3059 = vmul.f32 1.0, %v3058
      %v3060 = vrcp.pop %v1394
      %v3061 = vmul.f32 %v1394, %v3060
      %v3062 = vsub.f32 1.0, %v3061
      %v3063 = vmul.f32 %v3060, %v3062
      %v3064 = vadd.f32 %v3060, %v3063
      %vm3065 = vweird.f32 %v1394
      %vm3066 = vweird.f32 %v3060
      %vm3067 = vmor %vm3065, %vm3066
      %v3068 = vsel %vm3067, %v3060, %v3064
      %v3069 = vand.u32 2147483647, %v1394
      %vm3070 = vcmp.eq.f32.partialorder %v3069, 8.507059e+37
      %v3071 = vand.u32 %v1394, 2147483648
      %v3072 = vor.u32 1.1754944e-38, %v3071
      %v3073 = vsel %vm3070, %v3072, %v3068
      %v3074 = vmul.f32 1.0, %v3073
      %v3075 = vrcp.pop %v1397
      %v3076 = vmul.f32 %v1397, %v3075
      %v3077 = vsub.f32 1.0, %v3076
      %v3078 = vmul.f32 %v3075, %v3077
      %v3079 = vadd.f32 %v3075, %v3078
      %vm3080 = vweird.f32 %v1397
      %vm3081 = vweird.f32 %v3075
      %vm3082 = vmor %vm3080, %vm3081
      %v3083 = vsel %vm3082, %v3075, %v3079
      %v3084 = vand.u32 2147483647, %v1397
      %vm3085 = vcmp.eq.f32.partialorder %v3084, 8.507059e+37
      %v3086 = vand.u32 %v1397, 2147483648
      %v3087 = vor.u32 1.1754944e-38, %v3086
      %v3088 = vsel %vm3085, %v3087, %v3083
      %v3089 = vmul.f32 1.0, %v3088
      %v3090 = vrcp.pop %v1400
      %v3091 = vmul.f32 %v1400, %v3090
      %v3092 = vsub.f32 1.0, %v3091
      %v3093 = vmul.f32 %v3090, %v3092
      %v3094 = vadd.f32 %v3090, %v3093
      %vm3095 = vweird.f32 %v1400
      %vm3096 = vweird.f32 %v3090
      %vm3097 = vmor %vm3095, %vm3096
      %v3098 = vsel %vm3097, %v3090, %v3094
      %v3099 = vand.u32 2147483647, %v1400
      %vm3100 = vcmp.eq.f32.partialorder %v3099, 8.507059e+37
      %v3101 = vand.u32 %v1400, 2147483648
      %v3102 = vor.u32 1.1754944e-38, %v3101
      %v3103 = vsel %vm3100, %v3102, %v3098
      %v3104 = vmul.f32 1.0, %v3103
      %v3105 = vrcp.pop %v1403
      %v3106 = vmul.f32 %v1403, %v3105
      %v3107 = vsub.f32 1.0, %v3106
      %v3108 = vmul.f32 %v3105, %v3107
      %v3109 = vadd.f32 %v3105, %v3108
      %vm3110 = vweird.f32 %v1403
      %vm3111 = vweird.f32 %v3105
      %vm3112 = vmor %vm3110, %vm3111
      %v3113 = vsel %vm3112, %v3105, %v3109
      %v3114 = vand.u32 2147483647, %v1403
      %vm3115 = vcmp.eq.f32.partialorder %v3114, 8.507059e+37
      %v3116 = vand.u32 %v1403, 2147483648
      %v3117 = vor.u32 1.1754944e-38, %v3116
      %v3118 = vsel %vm3115, %v3117, %v3113
      %v3119 = vmul.f32 1.0, %v3118
      %v3120 = vrcp.pop %v1406
      %v3121 = vmul.f32 %v1406, %v3120
      %v3122 = vsub.f32 1.0, %v3121
      %v3123 = vmul.f32 %v3120, %v3122
      %v3124 = vadd.f32 %v3120, %v3123
      %vm3125 = vweird.f32 %v1406
      %vm3126 = vweird.f32 %v3120
      %vm3127 = vmor %vm3125, %vm3126
      %v3128 = vsel %vm3127, %v3120, %v3124
      %v3129 = vand.u32 2147483647, %v1406
      %vm3130 = vcmp.eq.f32.partialorder %v3129, 8.507059e+37
      %v3131 = vand.u32 %v1406, 2147483648
      %v3132 = vor.u32 1.1754944e-38, %v3131
      %v3133 = vsel %vm3130, %v3132, %v3128
      %v3134 = vmul.f32 1.0, %v3133
      %v3135 = vrcp.pop %v1409
      %v3136 = vmul.f32 %v1409, %v3135
      %v3137 = vsub.f32 1.0, %v3136
      %v3138 = vmul.f32 %v3135, %v3137
      %v3139 = vadd.f32 %v3135, %v3138
      %vm3140 = vweird.f32 %v1409
      %vm3141 = vweird.f32 %v3135
      %vm3142 = vmor %vm3140, %vm3141
      %v3143 = vsel %vm3142, %v3135, %v3139
      %v3144 = vand.u32 2147483647, %v1409
      %vm3145 = vcmp.eq.f32.partialorder %v3144, 8.507059e+37
      %v3146 = vand.u32 %v1409, 2147483648
      %v3147 = vor.u32 1.1754944e-38, %v3146
      %v3148 = vsel %vm3145, %v3147, %v3143
      %v3149 = vmul.f32 1.0, %v3148
      %v3150 = vrcp.pop %v1412
      %v3151 = vmul.f32 %v1412, %v3150
      %v3152 = vsub.f32 1.0, %v3151
      %v3153 = vmul.f32 %v3150, %v3152
      %v3154 = vadd.f32 %v3150, %v3153
      %vm3155 = vweird.f32 %v1412
      %vm3156 = vweird.f32 %v3150
      %vm3157 = vmor %vm3155, %vm3156
      %v3158 = vsel %vm3157, %v3150, %v3154
      %v3159 = vand.u32 2147483647, %v1412
      %vm3160 = vcmp.eq.f32.partialorder %v3159, 8.507059e+37
      %v3161 = vand.u32 %v1412, 2147483648
      %v3162 = vor.u32 1.1754944e-38, %v3161
      %v3163 = vsel %vm3160, %v3162, %v3158
      %v3164 = vmul.f32 1.0, %v3163
      %v3165 = vrcp.pop %v1415
      %v3166 = vmul.f32 %v1415, %v3165
      %v3167 = vsub.f32 1.0, %v3166
      %v3168 = vmul.f32 %v3165, %v3167
      %v3169 = vadd.f32 %v3165, %v3168
      %vm3170 = vweird.f32 %v1415
      %vm3171 = vweird.f32 %v3165
      %vm3172 = vmor %vm3170, %vm3171
      %v3173 = vsel %vm3172, %v3165, %v3169
      %v3174 = vand.u32 2147483647, %v1415
      %vm3175 = vcmp.eq.f32.partialorder %v3174, 8.507059e+37
      %v3176 = vand.u32 %v1415, 2147483648
      %v3177 = vor.u32 1.1754944e-38, %v3176
      %v3178 = vsel %vm3175, %v3177, %v3173
      %v3179 = vmul.f32 1.0, %v3178
      %v3180 = vrcp.pop %v1418
      %v3181 = vmul.f32 %v1418, %v3180
      %v3182 = vsub.f32 1.0, %v3181
      %v3183 = vmul.f32 %v3180, %v3182
      %v3184 = vadd.f32 %v3180, %v3183
      %vm3185 = vweird.f32 %v1418
      %vm3186 = vweird.f32 %v3180
      %vm3187 = vmor %vm3185, %vm3186
      %v3188 = vsel %vm3187, %v3180, %v3184
      %v3189 = vand.u32 2147483647, %v1418
      %vm3190 = vcmp.eq.f32.partialorder %v3189, 8.507059e+37
      %v3191 = vand.u32 %v1418, 2147483648
      %v3192 = vor.u32 1.1754944e-38, %v3191
      %v3193 = vsel %vm3190, %v3192, %v3188
      %v3194 = vmul.f32 1.0, %v3193
      %v3195 = vrcp.pop %v1421
      %v3196 = vmul.f32 %v1421, %v3195
      %v3197 = vsub.f32 1.0, %v3196
      %v3198 = vmul.f32 %v3195, %v3197
      %v3199 = vadd.f32 %v3195, %v3198
      %vm3200 = vweird.f32 %v1421
      %vm3201 = vweird.f32 %v3195
      %vm3202 = vmor %vm3200, %vm3201
      %v3203 = vsel %vm3202, %v3195, %v3199
      %v3204 = vand.u32 2147483647, %v1421
      %vm3205 = vcmp.eq.f32.partialorder %v3204, 8.507059e+37
      %v3206 = vand.u32 %v1421, 2147483648
      %v3207 = vor.u32 1.1754944e-38, %v3206
      %v3208 = vsel %vm3205, %v3207, %v3203
      %v3209 = vmul.f32 1.0, %v3208
      %v3210 = vrcp.pop %v1424
      %v3211 = vmul.f32 %v1424, %v3210
      %v3212 = vsub.f32 1.0, %v3211
      %v3213 = vmul.f32 %v3210, %v3212
      %v3214 = vadd.f32 %v3210, %v3213
      %vm3215 = vweird.f32 %v1424
      %vm3216 = vweird.f32 %v3210
      %vm3217 = vmor %vm3215, %vm3216
      %v3218 = vsel %vm3217, %v3210, %v3214
      %v3219 = vand.u32 2147483647, %v1424
      %vm3220 = vcmp.eq.f32.partialorder %v3219, 8.507059e+37
      %v3221 = vand.u32 %v1424, 2147483648
      %v3222 = vor.u32 1.1754944e-38, %v3221
      %v3223 = vsel %vm3220, %v3222, %v3218
      %v3224 = vmul.f32 1.0, %v3223
      %v3225 = vrcp.pop %v1427
      %v3226 = vmul.f32 %v1427, %v3225
      %v3227 = vsub.f32 1.0, %v3226
      %v3228 = vmul.f32 %v3225, %v3227
      %v3229 = vadd.f32 %v3225, %v3228
      %vm3230 = vweird.f32 %v1427
      %vm3231 = vweird.f32 %v3225
      %vm3232 = vmor %vm3230, %vm3231
      %v3233 = vsel %vm3232, %v3225, %v3229
      %v3234 = vand.u32 2147483647, %v1427
      %vm3235 = vcmp.eq.f32.partialorder %v3234, 8.507059e+37
      %v3236 = vand.u32 %v1427, 2147483648
      %v3237 = vor.u32 1.1754944e-38, %v3236
      %v3238 = vsel %vm3235, %v3237, %v3233
      %v3239 = vmul.f32 1.0, %v3238
      %v3240 = vrcp.pop %v1430
      %v3241 = vmul.f32 %v1430, %v3240
      %v3242 = vsub.f32 1.0, %v3241
      %v3243 = vmul.f32 %v3240, %v3242
      %v3244 = vadd.f32 %v3240, %v3243
      %vm3245 = vweird.f32 %v1430
      %vm3246 = vweird.f32 %v3240
      %vm3247 = vmor %vm3245, %vm3246
      %v3248 = vsel %vm3247, %v3240, %v3244
      %v3249 = vand.u32 2147483647, %v1430
      %vm3250 = vcmp.eq.f32.partialorder %v3249, 8.507059e+37
      %v3251 = vand.u32 %v1430, 2147483648
      %v3252 = vor.u32 1.1754944e-38, %v3251
      %v3253 = vsel %vm3250, %v3252, %v3248
      %v3254 = vmul.f32 1.0, %v3253
      %v3255 = vrcp.pop %v1433
      %v3256 = vmul.f32 %v1433, %v3255
      %v3257 = vsub.f32 1.0, %v3256
      %v3258 = vmul.f32 %v3255, %v3257
      %v3259 = vadd.f32 %v3255, %v3258
      %vm3260 = vweird.f32 %v1433
      %vm3261 = vweird.f32 %v3255
      %vm3262 = vmor %vm3260, %vm3261
      %v3263 = vsel %vm3262, %v3255, %v3259
      %v3264 = vand.u32 2147483647, %v1433
      %vm3265 = vcmp.eq.f32.partialorder %v3264, 8.507059e+37
      %v3266 = vand.u32 %v1433, 2147483648
      %v3267 = vor.u32 1.1754944e-38, %v3266
      %v3268 = vsel %vm3265, %v3267, %v3263
      %v3269 = vmul.f32 1.0, %v3268
      %v3270 = vrcp.pop %v1436
      %v3271 = vmul.f32 %v1436, %v3270
      %v3272 = vsub.f32 1.0, %v3271
      %v3273 = vmul.f32 %v3270, %v3272
      %v3274 = vadd.f32 %v3270, %v3273
      %vm3275 = vweird.f32 %v1436
      %vm3276 = vweird.f32 %v3270
      %vm3277 = vmor %vm3275, %vm3276
      %v3278 = vsel %vm3277, %v3270, %v3274
      %v3279 = vand.u32 2147483647, %v1436
      %vm3280 = vcmp.eq.f32.partialorder %v3279, 8.507059e+37
      %v3281 = vand.u32 %v1436, 2147483648
      %v3282 = vor.u32 1.1754944e-38, %v3281
      %v3283 = vsel %vm3280, %v3282, %v3278
      %v3284 = vmul.f32 1.0, %v3283
      %v3285 = vrcp.pop %v1439
      %v3286 = vmul.f32 %v1439, %v3285
      %v3287 = vsub.f32 1.0, %v3286
      %v3288 = vmul.f32 %v3285, %v3287
      %v3289 = vadd.f32 %v3285, %v3288
      %vm3290 = vweird.f32 %v1439
      %vm3291 = vweird.f32 %v3285
      %vm3292 = vmor %vm3290, %vm3291
      %v3293 = vsel %vm3292, %v3285, %v3289
      %v3294 = vand.u32 2147483647, %v1439
      %vm3295 = vcmp.eq.f32.partialorder %v3294, 8.507059e+37
      %v3296 = vand.u32 %v1439, 2147483648
      %v3297 = vor.u32 1.1754944e-38, %v3296
      %v3298 = vsel %vm3295, %v3297, %v3293
      %v3299 = vmul.f32 1.0, %v3298
      %v3300 = vrcp.pop %v1442
      %v3301 = vmul.f32 %v1442, %v3300
      %v3302 = vsub.f32 1.0, %v3301
      %v3303 = vmul.f32 %v3300, %v3302
      %v3304 = vadd.f32 %v3300, %v3303
      %vm3305 = vweird.f32 %v1442
      %vm3306 = vweird.f32 %v3300
      %vm3307 = vmor %vm3305, %vm3306
      %v3308 = vsel %vm3307, %v3300, %v3304
      %v3309 = vand.u32 2147483647, %v1442
      %vm3310 = vcmp.eq.f32.partialorder %v3309, 8.507059e+37
      %v3311 = vand.u32 %v1442, 2147483648
      %v3312 = vor.u32 1.1754944e-38, %v3311
      %v3313 = vsel %vm3310, %v3312, %v3308
      %v3314 = vmul.f32 1.0, %v3313
      %v3315 = vrcp.pop %v1445
      %v3316 = vmul.f32 %v1445, %v3315
      %v3317 = vsub.f32 1.0, %v3316
      %v3318 = vmul.f32 %v3315, %v3317
      %v3319 = vadd.f32 %v3315, %v3318
      %vm3320 = vweird.f32 %v1445
      %vm3321 = vweird.f32 %v3315
      %vm3322 = vmor %vm3320, %vm3321
      %v3323 = vsel %vm3322, %v3315, %v3319
      %v3324 = vand.u32 2147483647, %v1445
      %vm3325 = vcmp.eq.f32.partialorder %v3324, 8.507059e+37
      %v3326 = vand.u32 %v1445, 2147483648
      %v3327 = vor.u32 1.1754944e-38, %v3326
      %v3328 = vsel %vm3325, %v3327, %v3323
      %v3329 = vmul.f32 1.0, %v3328
      %v3330 = vrcp.pop %v1448
      %v3331 = vmul.f32 %v1448, %v3330
      %v3332 = vsub.f32 1.0, %v3331
      %v3333 = vmul.f32 %v3330, %v3332
      %v3334 = vadd.f32 %v3330, %v3333
      %vm3335 = vweird.f32 %v1448
      %vm3336 = vweird.f32 %v3330
      %vm3337 = vmor %vm3335, %vm3336
      %v3338 = vsel %vm3337, %v3330, %v3334
      %v3339 = vand.u32 2147483647, %v1448
      %vm3340 = vcmp.eq.f32.partialorder %v3339, 8.507059e+37
      %v3341 = vand.u32 %v1448, 2147483648
      %v3342 = vor.u32 1.1754944e-38, %v3341
      %v3343 = vsel %vm3340, %v3342, %v3338
      %v3344 = vmul.f32 1.0, %v3343
      %v3345 = vrcp.pop %v1451
      %v3346 = vmul.f32 %v1451, %v3345
      %v3347 = vsub.f32 1.0, %v3346
      %v3348 = vmul.f32 %v3345, %v3347
      %v3349 = vadd.f32 %v3345, %v3348
      %vm3350 = vweird.f32 %v1451
      %vm3351 = vweird.f32 %v3345
      %vm3352 = vmor %vm3350, %vm3351
      %v3353 = vsel %vm3352, %v3345, %v3349
      %v3354 = vand.u32 2147483647, %v1451
      %vm3355 = vcmp.eq.f32.partialorder %v3354, 8.507059e+37
      %v3356 = vand.u32 %v1451, 2147483648
      %v3357 = vor.u32 1.1754944e-38, %v3356
      %v3358 = vsel %vm3355, %v3357, %v3353
      %v3359 = vmul.f32 1.0, %v3358
      %v3360 = vrcp.pop %v1454
      %v3361 = vmul.f32 %v1454, %v3360
      %v3362 = vsub.f32 1.0, %v3361
      %v3363 = vmul.f32 %v3360, %v3362
      %v3364 = vadd.f32 %v3360, %v3363
      %vm3365 = vweird.f32 %v1454
      %vm3366 = vweird.f32 %v3360
      %vm3367 = vmor %vm3365, %vm3366
      %v3368 = vsel %vm3367, %v3360, %v3364
      %v3369 = vand.u32 2147483647, %v1454
      %vm3370 = vcmp.eq.f32.partialorder %v3369, 8.507059e+37
      %v3371 = vand.u32 %v1454, 2147483648
      %v3372 = vor.u32 1.1754944e-38, %v3371
      %v3373 = vsel %vm3370, %v3372, %v3368
      %v3374 = vmul.f32 1.0, %v3373
      %v3375 = vmul.f32 %v816, %v1469
      %v3376 = vmul.f32 %v818, %v1484
      %v3377 = vmul.f32 %v820, %v1499
      %v3378 = vmul.f32 %v822, %v1514
      %v3379 = vmul.f32 %v824, %v1529
      %v3380 = vmul.f32 %v826, %v1544
      %v3381 = vmul.f32 %v828, %v1559
      %v3382 = vmul.f32 %v830, %v1574
      %v3383 = vmul.f32 %v832, %v1589
      %v3384 = vmul.f32 %v834, %v1604
      %v3385 = vmul.f32 %v836, %v1619
      %v3386 = vmul.f32 %v838, %v1634
      %v3387 = vmul.f32 %v840, %v1649
      %v3388 = vmul.f32 %v842, %v1664
      %v3389 = vmul.f32 %v844, %v1679
      %v3390 = vmul.f32 %v846, %v1694
      %v3391 = vmul.f32 %v848, %v1709
      %v3392 = vmul.f32 %v850, %v1724
      %v3393 = vmul.f32 %v852, %v1739
      %v3394 = vmul.f32 %v854, %v1754
      %v3395 = vmul.f32 %v856, %v1769
      %v3396 = vmul.f32 %v858, %v1784
      %v3397 = vmul.f32 %v860, %v1799
      %v3398 = vmul.f32 %v862, %v1814
      %v3399 = vmul.f32 %v864, %v1829
      %v3400 = vmul.f32 %v866, %v1844
      %v3401 = vmul.f32 %v868, %v1859
      %v3402 = vmul.f32 %v870, %v1874
      %v3403 = vmul.f32 %v872, %v1889
      %v3404 = vmul.f32 %v874, %v1904
      %v3405 = vmul.f32 %v876, %v1919
      %v3406 = vmul.f32 %v878, %v1934
      %v3407 = vmul.f32 %v880, %v1949
      %v3408 = vmul.f32 %v882, %v1964
      %v3409 = vmul.f32 %v884, %v1979
      %v3410 = vmul.f32 %v886, %v1994
      %v3411 = vmul.f32 %v888, %v2009
      %v3412 = vmul.f32 %v890, %v2024
      %v3413 = vmul.f32 %v892, %v2039
      %v3414 = vmul.f32 %v894, %v2054
      %v3415 = vmul.f32 %v896, %v2069
      %v3416 = vmul.f32 %v898, %v2084
      %v3417 = vmul.f32 %v900, %v2099
      %v3418 = vmul.f32 %v902, %v2114
      %v3419 = vmul.f32 %v904, %v2129
      %v3420 = vmul.f32 %v906, %v2144
      %v3421 = vmul.f32 %v908, %v2159
      %v3422 = vmul.f32 %v910, %v2174
      %v3423 = vmul.f32 %v912, %v2189
      %v3424 = vmul.f32 %v914, %v2204
      %v3425 = vmul.f32 %v916, %v2219
      %v3426 = vmul.f32 %v918, %v2234
      %v3427 = vmul.f32 %v920, %v2249
      %v3428 = vmul.f32 %v922, %v2264
      %v3429 = vmul.f32 %v924, %v2279
      %v3430 = vmul.f32 %v926, %v2294
      %v3431 = vmul.f32 %v928, %v2309
      %v3432 = vmul.f32 %v930, %v2324
      %v3433 = vmul.f32 %v932, %v2339
      %v3434 = vmul.f32 %v934, %v2354
      %v3435 = vmul.f32 %v936, %v2369
      %v3436 = vmul.f32 %v938, %v2384
      %v3437 = vmul.f32 %v940, %v2399
      %v3438 = vmul.f32 %v942, %v2414
      %v3439 = vmul.f32 %v944, %v2429
      %v3440 = vmul.f32 %v946, %v2444
      %v3441 = vmul.f32 %v948, %v2459
      %v3442 = vmul.f32 %v950, %v2474
      %v3443 = vmul.f32 %v952, %v2489
      %v3444 = vmul.f32 %v954, %v2504
      %v3445 = vmul.f32 %v956, %v2519
      %v3446 = vmul.f32 %v958, %v2534
      %v3447 = vmul.f32 %v960, %v2549
      %v3448 = vmul.f32 %v962, %v2564
      %v3449 = vmul.f32 %v964, %v2579
      %v3450 = vmul.f32 %v966, %v2594
      %v3451 = vmul.f32 %v968, %v2609
      %v3452 = vmul.f32 %v970, %v2624
      %v3453 = vmul.f32 %v972, %v2639
      %v3454 = vmul.f32 %v974, %v2654
      %v3455 = vmul.f32 %v976, %v2669
      %v3456 = vmul.f32 %v978, %v2684
      %v3457 = vmul.f32 %v980, %v2699
      %v3458 = vmul.f32 %v982, %v2714
      %v3459 = vmul.f32 %v984, %v2729
      %v3460 = vmul.f32 %v986, %v2744
      %v3461 = vmul.f32 %v988, %v2759
      %v3462 = vmul.f32 %v990, %v2774
      %v3463 = vmul.f32 %v992, %v2789
      %v3464 = vmul.f32 %v994, %v2804
      %v3465 = vmul.f32 %v996, %v2819
      %v3466 = vmul.f32 %v998, %v2834
      %v3467 = vmul.f32 %v1000, %v2849
      %v3468 = vmul.f32 %v1002, %v2864
      %v3469 = vmul.f32 %v1004, %v2879
      %v3470 = vmul.f32 %v1006, %v2894
      %v3471 = vmul.f32 %v1008, %v2909
      %v3472 = vmul.f32 %v1010, %v2924
      %v3473 = vmul.f32 %v1012, %v2939
      %v3474 = vmul.f32 %v1014, %v2954
      %v3475 = vmul.f32 %v1016, %v2969
      %v3476 = vmul.f32 %v1018, %v2984
      %v3477 = vmul.f32 %v1020, %v2999
      %v3478 = vmul.f32 %v1022, %v3014
      %v3479 = vmul.f32 %v1024, %v3029
      %v3480 = vmul.f32 %v1026, %v3044
      %v3481 = vmul.f32 %v1028, %v3059
      %v3482 = vmul.f32 %v1030, %v3074
      %v3483 = vmul.f32 %v1032, %v3089
      %v3484 = vmul.f32 %v1034, %v3104
      %v3485 = vmul.f32 %v1036, %v3119
      %v3486 = vmul.f32 %v1038, %v3134
      %v3487 = vmul.f32 %v1040, %v3149
      %v3488 = vmul.f32 %v1042, %v3164
      %v3489 = vmul.f32 %v1044, %v3179
      %v3490 = vmul.f32 %v1046, %v3194
      %v3491 = vmul.f32 %v1048, %v3209
      %v3492 = vmul.f32 %v1050, %v3224
      %v3493 = vmul.f32 %v1052, %v3239
      %v3494 = vmul.f32 %v1054, %v3254
      %v3495 = vmul.f32 %v1056, %v3269
      %v3496 = vmul.f32 %v1058, %v3284
      %v3497 = vmul.f32 %v1060, %v3299
      %v3498 = vmul.f32 %v1062, %v3314
      %v3499 = vmul.f32 %v1064, %v3329
      %v3500 = vmul.f32 %v1066, %v3344
      %v3501 = vmul.f32 %v1068, %v3359
      %v3502 = vmul.f32 %v1070, %v3374
      %v3503 = vld [vmem:[%s1] sm:$0xff]
      %v3504 = vld [vmem:[%s1 + $0x8] sm:$0xff]
      %v3505 = vld [vmem:[%s1 + $0x10] sm:$0xff]
      %v3506 = vld [vmem:[%s1 + $0x18] sm:$0xff]
      %v3508 = vsel %vm302, %v3375, 0
      %v3511 = vsel %vm302, %v3376, 0
      %v3514 = vsel %vm302, %v3377, 0
      %v3517 = vsel %vm302, %v3378, 0
      %v3520 = vsel %vm302, %v3379, 0
      %v3523 = vsel %vm302, %v3380, 0
      %v3526 = vsel %vm302, %v3381, 0
      %v3529 = vsel %vm302, %v3382, 0
      %v3532 = vsel %vm302, %v3383, 0
      %v3535 = vsel %vm302, %v3384, 0
      %v3538 = vsel %vm302, %v3385, 0
      %v3541 = vsel %vm302, %v3386, 0
      %v3544 = vsel %vm302, %v3387, 0
      %v3547 = vsel %vm302, %v3388, 0
      %v3550 = vsel %vm302, %v3389, 0
      %v3553 = vsel %vm302, %v3390, 0
      %v3556 = vsel %vm302, %v3391, 0
      %v3559 = vsel %vm302, %v3392, 0
      %v3562 = vsel %vm302, %v3393, 0
      %v3565 = vsel %vm302, %v3394, 0
      %v3568 = vsel %vm302, %v3395, 0
      %v3571 = vsel %vm302, %v3396, 0
      %v3574 = vsel %vm302, %v3397, 0
      %v3577 = vsel %vm302, %v3398, 0
      %v3580 = vsel %vm302, %v3399, 0
      %v3583 = vsel %vm302, %v3400, 0
      %v3586 = vsel %vm302, %v3401, 0
      %v3589 = vsel %vm302, %v3402, 0
      %v3592 = vsel %vm302, %v3403, 0
      %v3595 = vsel %vm302, %v3404, 0
      %v3598 = vsel %vm302, %v3405, 0
      %v3601 = vsel %vm302, %v3406, 0
      %v3604 = vsel %vm302, %v3407, 0
      %v3607 = vsel %vm302, %v3408, 0
      %v3610 = vsel %vm302, %v3409, 0
      %v3613 = vsel %vm302, %v3410, 0
      %v3616 = vsel %vm302, %v3411, 0
      %v3619 = vsel %vm302, %v3412, 0
      %v3622 = vsel %vm302, %v3413, 0
      %v3625 = vsel %vm302, %v3414, 0
      %v3628 = vsel %vm302, %v3415, 0
      %v3631 = vsel %vm302, %v3416, 0
      %v3634 = vsel %vm302, %v3417, 0
      %v3637 = vsel %vm302, %v3418, 0
      %v3640 = vsel %vm302, %v3419, 0
      %v3643 = vsel %vm302, %v3420, 0
      %v3646 = vsel %vm302, %v3421, 0
      %v3649 = vsel %vm302, %v3422, 0
      %v3652 = vsel %vm302, %v3423, 0
      %v3655 = vsel %vm302, %v3424, 0
      %v3658 = vsel %vm302, %v3425, 0
      %v3661 = vsel %vm302, %v3426, 0
      %v3664 = vsel %vm302, %v3427, 0
      %v3667 = vsel %vm302, %v3428, 0
      %v3670 = vsel %vm302, %v3429, 0
      %v3673 = vsel %vm302, %v3430, 0
      %v3676 = vsel %vm302, %v3431, 0
      %v3679 = vsel %vm302, %v3432, 0
      %v3682 = vsel %vm302, %v3433, 0
      %v3685 = vsel %vm302, %v3434, 0
      %v3688 = vsel %vm302, %v3435, 0
      %v3691 = vsel %vm302, %v3436, 0
      %v3694 = vsel %vm302, %v3437, 0
      %v3697 = vsel %vm302, %v3438, 0
      %v3700 = vsel %vm302, %v3439, 0
      %v3703 = vsel %vm302, %v3440, 0
      %v3706 = vsel %vm302, %v3441, 0
      %v3709 = vsel %vm302, %v3442, 0
      %v3712 = vsel %vm302, %v3443, 0
      %v3715 = vsel %vm302, %v3444, 0
      %v3718 = vsel %vm302, %v3445, 0
      %v3721 = vsel %vm302, %v3446, 0
      %v3724 = vsel %vm302, %v3447, 0
      %v3727 = vsel %vm302, %v3448, 0
      %v3730 = vsel %vm302, %v3449, 0
      %v3733 = vsel %vm302, %v3450, 0
      %v3736 = vsel %vm302, %v3451, 0
      %v3739 = vsel %vm302, %v3452, 0
      %v3742 = vsel %vm302, %v3453, 0
      %v3745 = vsel %vm302, %v3454, 0
      %v3748 = vsel %vm302, %v3455, 0
      %v3751 = vsel %vm302, %v3456, 0
      %v3754 = vsel %vm302, %v3457, 0
      %v3757 = vsel %vm302, %v3458, 0
      %v3760 = vsel %vm302, %v3459, 0
      %v3763 = vsel %vm302, %v3460, 0
      %v3766 = vsel %vm302, %v3461, 0
      %v3769 = vsel %vm302, %v3462, 0
      %v3772 = vsel %vm302, %v3463, 0
      %v3775 = vsel %vm302, %v3464, 0
      %v3778 = vsel %vm302, %v3465, 0
      %v3781 = vsel %vm302, %v3466, 0
      %v3784 = vsel %vm302, %v3467, 0
      %v3787 = vsel %vm302, %v3468, 0
      %v3790 = vsel %vm302, %v3469, 0
      %v3793 = vsel %vm302, %v3470, 0
      %v3796 = vsel %vm302, %v3471, 0
      %v3799 = vsel %vm302, %v3472, 0
      %v3802 = vsel %vm302, %v3473, 0
      %v3805 = vsel %vm302, %v3474, 0
      %v3808 = vsel %vm302, %v3475, 0
      %v3811 = vsel %vm302, %v3476, 0
      %v3814 = vsel %vm302, %v3477, 0
      %v3817 = vsel %vm302, %v3478, 0
      %v3820 = vsel %vm302, %v3479, 0
      %v3823 = vsel %vm302, %v3480, 0
      %v3826 = vsel %vm302, %v3481, 0
      %v3829 = vsel %vm302, %v3482, 0
      %v3832 = vsel %vm302, %v3483, 0
      %v3835 = vsel %vm302, %v3484, 0
      %v3838 = vsel %vm302, %v3485, 0
      %v3841 = vsel %vm302, %v3486, 0
      %v3844 = vsel %vm302, %v3487, 0
      %v3847 = vsel %vm302, %v3488, 0
      %v3850 = vsel %vm302, %v3489, 0
      %v3853 = vsel %vm302, %v3490, 0
      %v3856 = vsel %vm302, %v3491, 0
      %v3859 = vsel %vm302, %v3492, 0
      %v3862 = vsel %vm302, %v3493, 0
      %v3865 = vsel %vm302, %v3494, 0
      %v3868 = vsel %vm302, %v3495, 0
      %v3871 = vsel %vm302, %v3496, 0
      %v3874 = vsel %vm302, %v3497, 0
      %v3877 = vsel %vm302, %v3498, 0
      %v3880 = vsel %vm302, %v3499, 0
      %v3883 = vsel %vm302, %v3500, 0
      %v3886 = vsel %vm302, %v3501, 0
      %v3889 = vsel %vm302, %v3502, 0
      %3891 = vmatpush.msra.mxu0 0.0
      %3892 = vmatpush.msra.mxu0 0.0
      %3893 = vmatpush.msra.mxu0 0.0
      %3894 = vmatpush.msra.mxu0 0.0
      %3895 = vmatpush.msra.mxu0 0.0
      %3896 = vmatpush.msra.mxu0 0.0
      %3897 = vmatpush.msra.mxu0 0.0
      %3898 = vmatpush.msra.mxu0 0.0
      %3899 = vmatpush.msra.mxu0 0.0
      %3900 = vmatpush.msra.mxu0 0.0
      %3901 = vmatpush.msra.mxu0 0.0
      %3902 = vmatpush.msra.mxu0 0.0
      %3903 = vmatpush.msra.mxu0 %v3506
      %3904 = vmatpush.msra.mxu0 %v3505
      %3905 = vmatpush.msra.mxu0 %v3504
      %3906 = vmatpush.msra.mxu0 %v3503
      %3907 = vmatmul.f32.gmra.mxu0 %v3508
      %v3908 = vpop.f32.mrf.mxu0
      %v3909 = vadd.f32 0.0, %v3908
      %3910 = vmatmul.f32.gmra.mxu0 %v3511
      %v3911 = vpop.f32.mrf.mxu0
      %v3912 = vadd.f32 0.0, %v3911
      %3913 = vmatmul.f32.gmra.mxu0 %v3514
      %v3914 = vpop.f32.mrf.mxu0
      %v3915 = vadd.f32 0.0, %v3914
      %3916 = vmatmul.f32.gmra.mxu0 %v3517
      %v3917 = vpop.f32.mrf.mxu0
      %v3918 = vadd.f32 0.0, %v3917
      %3919 = vmatmul.f32.gmra.mxu0 %v3520
      %v3920 = vpop.f32.mrf.mxu0
      %v3921 = vadd.f32 0.0, %v3920
      %3922 = vmatmul.f32.gmra.mxu0 %v3523
      %v3923 = vpop.f32.mrf.mxu0
      %v3924 = vadd.f32 0.0, %v3923
      %3925 = vmatmul.f32.gmra.mxu0 %v3526
      %v3926 = vpop.f32.mrf.mxu0
      %v3927 = vadd.f32 0.0, %v3926
      %3928 = vmatmul.f32.gmra.mxu0 %v3529
      %v3929 = vpop.f32.mrf.mxu0
      %v3930 = vadd.f32 0.0, %v3929
      %3931 = vmatmul.f32.gmra.mxu0 %v3532
      %v3932 = vpop.f32.mrf.mxu0
      %v3933 = vadd.f32 0.0, %v3932
      %3934 = vmatmul.f32.gmra.mxu0 %v3535
      %v3935 = vpop.f32.mrf.mxu0
      %v3936 = vadd.f32 0.0, %v3935
      %3937 = vmatmul.f32.gmra.mxu0 %v3538
      %v3938 = vpop.f32.mrf.mxu0
      %v3939 = vadd.f32 0.0, %v3938
      %3940 = vmatmul.f32.gmra.mxu0 %v3541
      %v3941 = vpop.f32.mrf.mxu0
      %v3942 = vadd.f32 0.0, %v3941
      %3943 = vmatmul.f32.gmra.mxu0 %v3544
      %v3944 = vpop.f32.mrf.mxu0
      %v3945 = vadd.f32 0.0, %v3944
      %3946 = vmatmul.f32.gmra.mxu0 %v3547
      %v3947 = vpop.f32.mrf.mxu0
      %v3948 = vadd.f32 0.0, %v3947
      %3949 = vmatmul.f32.gmra.mxu0 %v3550
      %v3950 = vpop.f32.mrf.mxu0
      %v3951 = vadd.f32 0.0, %v3950
      %3952 = vmatmul.f32.gmra.mxu0 %v3553
      %v3953 = vpop.f32.mrf.mxu0
      %v3954 = vadd.f32 0.0, %v3953
      %3955 = vmatmul.f32.gmra.mxu0 %v3556
      %v3956 = vpop.f32.mrf.mxu0
      %v3957 = vadd.f32 0.0, %v3956
      %3958 = vmatmul.f32.gmra.mxu0 %v3559
      %v3959 = vpop.f32.mrf.mxu0
      %v3960 = vadd.f32 0.0, %v3959
      %3961 = vmatmul.f32.gmra.mxu0 %v3562
      %v3962 = vpop.f32.mrf.mxu0
      %v3963 = vadd.f32 0.0, %v3962
      %3964 = vmatmul.f32.gmra.mxu0 %v3565
      %v3965 = vpop.f32.mrf.mxu0
      %v3966 = vadd.f32 0.0, %v3965
      %3967 = vmatmul.f32.gmra.mxu0 %v3568
      %v3968 = vpop.f32.mrf.mxu0
      %v3969 = vadd.f32 0.0, %v3968
      %3970 = vmatmul.f32.gmra.mxu0 %v3571
      %v3971 = vpop.f32.mrf.mxu0
      %v3972 = vadd.f32 0.0, %v3971
      %3973 = vmatmul.f32.gmra.mxu0 %v3574
      %v3974 = vpop.f32.mrf.mxu0
      %v3975 = vadd.f32 0.0, %v3974
      %3976 = vmatmul.f32.gmra.mxu0 %v3577
      %v3977 = vpop.f32.mrf.mxu0
      %v3978 = vadd.f32 0.0, %v3977
      %3979 = vmatmul.f32.gmra.mxu0 %v3580
      %v3980 = vpop.f32.mrf.mxu0
      %v3981 = vadd.f32 0.0, %v3980
      %3982 = vmatmul.f32.gmra.mxu0 %v3583
      %v3983 = vpop.f32.mrf.mxu0
      %v3984 = vadd.f32 0.0, %v3983
      %3985 = vmatmul.f32.gmra.mxu0 %v3586
      %v3986 = vpop.f32.mrf.mxu0
      %v3987 = vadd.f32 0.0, %v3986
      %3988 = vmatmul.f32.gmra.mxu0 %v3589
      %v3989 = vpop.f32.mrf.mxu0
      %v3990 = vadd.f32 0.0, %v3989
      %3991 = vmatmul.f32.gmra.mxu0 %v3592
      %v3992 = vpop.f32.mrf.mxu0
      %v3993 = vadd.f32 0.0, %v3992
      %3994 = vmatmul.f32.gmra.mxu0 %v3595
      %v3995 = vpop.f32.mrf.mxu0
      %v3996 = vadd.f32 0.0, %v3995
      %3997 = vmatmul.f32.gmra.mxu0 %v3598
      %v3998 = vpop.f32.mrf.mxu0
      %v3999 = vadd.f32 0.0, %v3998
      %4000 = vmatmul.f32.gmra.mxu0 %v3601
      %v4001 = vpop.f32.mrf.mxu0
      %v4002 = vadd.f32 0.0, %v4001
      %4003 = vmatmul.f32.gmra.mxu0 %v3604
      %v4004 = vpop.f32.mrf.mxu0
      %v4005 = vadd.f32 0.0, %v4004
      %4006 = vmatmul.f32.gmra.mxu0 %v3607
      %v4007 = vpop.f32.mrf.mxu0
      %v4008 = vadd.f32 0.0, %v4007
      %4009 = vmatmul.f32.gmra.mxu0 %v3610
      %v4010 = vpop.f32.mrf.mxu0
      %v4011 = vadd.f32 0.0, %v4010
      %4012 = vmatmul.f32.gmra.mxu0 %v3613
      %v4013 = vpop.f32.mrf.mxu0
      %v4014 = vadd.f32 0.0, %v4013
      %4015 = vmatmul.f32.gmra.mxu0 %v3616
      %v4016 = vpop.f32.mrf.mxu0
      %v4017 = vadd.f32 0.0, %v4016
      %4018 = vmatmul.f32.gmra.mxu0 %v3619
      %v4019 = vpop.f32.mrf.mxu0
      %v4020 = vadd.f32 0.0, %v4019
      %4021 = vmatmul.f32.gmra.mxu0 %v3622
      %v4022 = vpop.f32.mrf.mxu0
      %v4023 = vadd.f32 0.0, %v4022
      %4024 = vmatmul.f32.gmra.mxu0 %v3625
      %v4025 = vpop.f32.mrf.mxu0
      %v4026 = vadd.f32 0.0, %v4025
      %4027 = vmatmul.f32.gmra.mxu0 %v3628
      %v4028 = vpop.f32.mrf.mxu0
      %v4029 = vadd.f32 0.0, %v4028
      %4030 = vmatmul.f32.gmra.mxu0 %v3631
      %v4031 = vpop.f32.mrf.mxu0
      %v4032 = vadd.f32 0.0, %v4031
      %4033 = vmatmul.f32.gmra.mxu0 %v3634
      %v4034 = vpop.f32.mrf.mxu0
      %v4035 = vadd.f32 0.0, %v4034
      %4036 = vmatmul.f32.gmra.mxu0 %v3637
      %v4037 = vpop.f32.mrf.mxu0
      %v4038 = vadd.f32 0.0, %v4037
      %4039 = vmatmul.f32.gmra.mxu0 %v3640
      %v4040 = vpop.f32.mrf.mxu0
      %v4041 = vadd.f32 0.0, %v4040
      %4042 = vmatmul.f32.gmra.mxu0 %v3643
      %v4043 = vpop.f32.mrf.mxu0
      %v4044 = vadd.f32 0.0, %v4043
      %4045 = vmatmul.f32.gmra.mxu0 %v3646
      %v4046 = vpop.f32.mrf.mxu0
      %v4047 = vadd.f32 0.0, %v4046
      %4048 = vmatmul.f32.gmra.mxu0 %v3649
      %v4049 = vpop.f32.mrf.mxu0
      %v4050 = vadd.f32 0.0, %v4049
      %4051 = vmatmul.f32.gmra.mxu0 %v3652
      %v4052 = vpop.f32.mrf.mxu0
      %v4053 = vadd.f32 0.0, %v4052
      %4054 = vmatmul.f32.gmra.mxu0 %v3655
      %v4055 = vpop.f32.mrf.mxu0
      %v4056 = vadd.f32 0.0, %v4055
      %4057 = vmatmul.f32.gmra.mxu0 %v3658
      %v4058 = vpop.f32.mrf.mxu0
      %v4059 = vadd.f32 0.0, %v4058
      %4060 = vmatmul.f32.gmra.mxu0 %v3661
      %v4061 = vpop.f32.mrf.mxu0
      %v4062 = vadd.f32 0.0, %v4061
      %4063 = vmatmul.f32.gmra.mxu0 %v3664
      %v4064 = vpop.f32.mrf.mxu0
      %v4065 = vadd.f32 0.0, %v4064
      %4066 = vmatmul.f32.gmra.mxu0 %v3667
      %v4067 = vpop.f32.mrf.mxu0
      %v4068 = vadd.f32 0.0, %v4067
      %4069 = vmatmul.f32.gmra.mxu0 %v3670
      %v4070 = vpop.f32.mrf.mxu0
      %v4071 = vadd.f32 0.0, %v4070
      %4072 = vmatmul.f32.gmra.mxu0 %v3673
      %v4073 = vpop.f32.mrf.mxu0
      %v4074 = vadd.f32 0.0, %v4073
      %4075 = vmatmul.f32.gmra.mxu0 %v3676
      %v4076 = vpop.f32.mrf.mxu0
      %v4077 = vadd.f32 0.0, %v4076
      %4078 = vmatmul.f32.gmra.mxu0 %v3679
      %v4079 = vpop.f32.mrf.mxu0
      %v4080 = vadd.f32 0.0, %v4079
      %4081 = vmatmul.f32.gmra.mxu0 %v3682
      %v4082 = vpop.f32.mrf.mxu0
      %v4083 = vadd.f32 0.0, %v4082
      %4084 = vmatmul.f32.gmra.mxu0 %v3685
      %v4085 = vpop.f32.mrf.mxu0
      %v4086 = vadd.f32 0.0, %v4085
      %4087 = vmatmul.f32.gmra.mxu0 %v3688
      %v4088 = vpop.f32.mrf.mxu0
      %v4089 = vadd.f32 0.0, %v4088
      %4090 = vmatmul.f32.gmra.mxu0 %v3691
      %v4091 = vpop.f32.mrf.mxu0
      %v4092 = vadd.f32 0.0, %v4091
      %4093 = vmatmul.f32.gmra.mxu0 %v3694
      %v4094 = vpop.f32.mrf.mxu0
      %v4095 = vadd.f32 0.0, %v4094
      %4096 = vmatmul.f32.gmra.mxu0 %v3697
      %v4097 = vpop.f32.mrf.mxu0
      %v4098 = vadd.f32 0.0, %v4097
      %4099 = vmatmul.f32.gmra.mxu0 %v3700
      %v4100 = vpop.f32.mrf.mxu0
      %v4101 = vadd.f32 0.0, %v4100
      %4102 = vmatmul.f32.gmra.mxu0 %v3703
      %v4103 = vpop.f32.mrf.mxu0
      %v4104 = vadd.f32 0.0, %v4103
      %4105 = vmatmul.f32.gmra.mxu0 %v3706
      %v4106 = vpop.f32.mrf.mxu0
      %v4107 = vadd.f32 0.0, %v4106
      %4108 = vmatmul.f32.gmra.mxu0 %v3709
      %v4109 = vpop.f32.mrf.mxu0
      %v4110 = vadd.f32 0.0, %v4109
      %4111 = vmatmul.f32.gmra.mxu0 %v3712
      %v4112 = vpop.f32.mrf.mxu0
      %v4113 = vadd.f32 0.0, %v4112
      %4114 = vmatmul.f32.gmra.mxu0 %v3715
      %v4115 = vpop.f32.mrf.mxu0
      %v4116 = vadd.f32 0.0, %v4115
      %4117 = vmatmul.f32.gmra.mxu0 %v3718
      %v4118 = vpop.f32.mrf.mxu0
      %v4119 = vadd.f32 0.0, %v4118
      %4120 = vmatmul.f32.gmra.mxu0 %v3721
      %v4121 = vpop.f32.mrf.mxu0
      %v4122 = vadd.f32 0.0, %v4121
      %4123 = vmatmul.f32.gmra.mxu0 %v3724
      %v4124 = vpop.f32.mrf.mxu0
      %v4125 = vadd.f32 0.0, %v4124
      %4126 = vmatmul.f32.gmra.mxu0 %v3727
      %v4127 = vpop.f32.mrf.mxu0
      %v4128 = vadd.f32 0.0, %v4127
      %4129 = vmatmul.f32.gmra.mxu0 %v3730
      %v4130 = vpop.f32.mrf.mxu0
      %v4131 = vadd.f32 0.0, %v4130
      %4132 = vmatmul.f32.gmra.mxu0 %v3733
      %v4133 = vpop.f32.mrf.mxu0
      %v4134 = vadd.f32 0.0, %v4133
      %4135 = vmatmul.f32.gmra.mxu0 %v3736
      %v4136 = vpop.f32.mrf.mxu0
      %v4137 = vadd.f32 0.0, %v4136
      %4138 = vmatmul.f32.gmra.mxu0 %v3739
      %v4139 = vpop.f32.mrf.mxu0
      %v4140 = vadd.f32 0.0, %v4139
      %4141 = vmatmul.f32.gmra.mxu0 %v3742
      %v4142 = vpop.f32.mrf.mxu0
      %v4143 = vadd.f32 0.0, %v4142
      %4144 = vmatmul.f32.gmra.mxu0 %v3745
      %v4145 = vpop.f32.mrf.mxu0
      %v4146 = vadd.f32 0.0, %v4145
      %4147 = vmatmul.f32.gmra.mxu0 %v3748
      %v4148 = vpop.f32.mrf.mxu0
      %v4149 = vadd.f32 0.0, %v4148
      %4150 = vmatmul.f32.gmra.mxu0 %v3751
      %v4151 = vpop.f32.mrf.mxu0
      %v4152 = vadd.f32 0.0, %v4151
      %4153 = vmatmul.f32.gmra.mxu0 %v3754
      %v4154 = vpop.f32.mrf.mxu0
      %v4155 = vadd.f32 0.0, %v4154
      %4156 = vmatmul.f32.gmra.mxu0 %v3757
      %v4157 = vpop.f32.mrf.mxu0
      %v4158 = vadd.f32 0.0, %v4157
      %4159 = vmatmul.f32.gmra.mxu0 %v3760
      %v4160 = vpop.f32.mrf.mxu0
      %v4161 = vadd.f32 0.0, %v4160
      %4162 = vmatmul.f32.gmra.mxu0 %v3763
      %v4163 = vpop.f32.mrf.mxu0
      %v4164 = vadd.f32 0.0, %v4163
      %4165 = vmatmul.f32.gmra.mxu0 %v3766
      %v4166 = vpop.f32.mrf.mxu0
      %v4167 = vadd.f32 0.0, %v4166
      %4168 = vmatmul.f32.gmra.mxu0 %v3769
      %v4169 = vpop.f32.mrf.mxu0
      %v4170 = vadd.f32 0.0, %v4169
      %4171 = vmatmul.f32.gmra.mxu0 %v3772
      %v4172 = vpop.f32.mrf.mxu0
      %v4173 = vadd.f32 0.0, %v4172
      %4174 = vmatmul.f32.gmra.mxu0 %v3775
      %v4175 = vpop.f32.mrf.mxu0
      %v4176 = vadd.f32 0.0, %v4175
      %4177 = vmatmul.f32.gmra.mxu0 %v3778
      %v4178 = vpop.f32.mrf.mxu0
      %v4179 = vadd.f32 0.0, %v4178
      %4180 = vmatmul.f32.gmra.mxu0 %v3781
      %v4181 = vpop.f32.mrf.mxu0
      %v4182 = vadd.f32 0.0, %v4181
      %4183 = vmatmul.f32.gmra.mxu0 %v3784
      %v4184 = vpop.f32.mrf.mxu0
      %v4185 = vadd.f32 0.0, %v4184
      %4186 = vmatmul.f32.gmra.mxu0 %v3787
      %v4187 = vpop.f32.mrf.mxu0
      %v4188 = vadd.f32 0.0, %v4187
      %4189 = vmatmul.f32.gmra.mxu0 %v3790
      %v4190 = vpop.f32.mrf.mxu0
      %v4191 = vadd.f32 0.0, %v4190
      %4192 = vmatmul.f32.gmra.mxu0 %v3793
      %v4193 = vpop.f32.mrf.mxu0
      %v4194 = vadd.f32 0.0, %v4193
      %4195 = vmatmul.f32.gmra.mxu0 %v3796
      %v4196 = vpop.f32.mrf.mxu0
      %v4197 = vadd.f32 0.0, %v4196
      %4198 = vmatmul.f32.gmra.mxu0 %v3799
      %v4199 = vpop.f32.mrf.mxu0
      %v4200 = vadd.f32 0.0, %v4199
      %4201 = vmatmul.f32.gmra.mxu0 %v3802
      %v4202 = vpop.f32.mrf.mxu0
      %v4203 = vadd.f32 0.0, %v4202
      %4204 = vmatmul.f32.gmra.mxu0 %v3805
      %v4205 = vpop.f32.mrf.mxu0
      %v4206 = vadd.f32 0.0, %v4205
      %4207 = vmatmul.f32.gmra.mxu0 %v3808
      %v4208 = vpop.f32.mrf.mxu0
      %v4209 = vadd.f32 0.0, %v4208
      %4210 = vmatmul.f32.gmra.mxu0 %v3811
      %v4211 = vpop.f32.mrf.mxu0
      %v4212 = vadd.f32 0.0, %v4211
      %4213 = vmatmul.f32.gmra.mxu0 %v3814
      %v4214 = vpop.f32.mrf.mxu0
      %v4215 = vadd.f32 0.0, %v4214
      %4216 = vmatmul.f32.gmra.mxu0 %v3817
      %v4217 = vpop.f32.mrf.mxu0
      %v4218 = vadd.f32 0.0, %v4217
      %4219 = vmatmul.f32.gmra.mxu0 %v3820
      %v4220 = vpop.f32.mrf.mxu0
      %v4221 = vadd.f32 0.0, %v4220
      %4222 = vmatmul.f32.gmra.mxu0 %v3823
      %v4223 = vpop.f32.mrf.mxu0
      %v4224 = vadd.f32 0.0, %v4223
      %4225 = vmatmul.f32.gmra.mxu0 %v3826
      %v4226 = vpop.f32.mrf.mxu0
      %v4227 = vadd.f32 0.0, %v4226
      %4228 = vmatmul.f32.gmra.mxu0 %v3829
      %v4229 = vpop.f32.mrf.mxu0
      %v4230 = vadd.f32 0.0, %v4229
      %4231 = vmatmul.f32.gmra.mxu0 %v3832
      %v4232 = vpop.f32.mrf.mxu0
      %v4233 = vadd.f32 0.0, %v4232
      %4234 = vmatmul.f32.gmra.mxu0 %v3835
      %v4235 = vpop.f32.mrf.mxu0
      %v4236 = vadd.f32 0.0, %v4235
      %4237 = vmatmul.f32.gmra.mxu0 %v3838
      %v4238 = vpop.f32.mrf.mxu0
      %v4239 = vadd.f32 0.0, %v4238
      %4240 = vmatmul.f32.gmra.mxu0 %v3841
      %v4241 = vpop.f32.mrf.mxu0
      %v4242 = vadd.f32 0.0, %v4241
      %4243 = vmatmul.f32.gmra.mxu0 %v3844
      %v4244 = vpop.f32.mrf.mxu0
      %v4245 = vadd.f32 0.0, %v4244
      %4246 = vmatmul.f32.gmra.mxu0 %v3847
      %v4247 = vpop.f32.mrf.mxu0
      %v4248 = vadd.f32 0.0, %v4247
      %4249 = vmatmul.f32.gmra.mxu0 %v3850
      %v4250 = vpop.f32.mrf.mxu0
      %v4251 = vadd.f32 0.0, %v4250
      %4252 = vmatmul.f32.gmra.mxu0 %v3853
      %v4253 = vpop.f32.mrf.mxu0
      %v4254 = vadd.f32 0.0, %v4253
      %4255 = vmatmul.f32.gmra.mxu0 %v3856
      %v4256 = vpop.f32.mrf.mxu0
      %v4257 = vadd.f32 0.0, %v4256
      %4258 = vmatmul.f32.gmra.mxu0 %v3859
      %v4259 = vpop.f32.mrf.mxu0
      %v4260 = vadd.f32 0.0, %v4259
      %4261 = vmatmul.f32.gmra.mxu0 %v3862
      %v4262 = vpop.f32.mrf.mxu0
      %v4263 = vadd.f32 0.0, %v4262
      %4264 = vmatmul.f32.gmra.mxu0 %v3865
      %v4265 = vpop.f32.mrf.mxu0
      %v4266 = vadd.f32 0.0, %v4265
      %4267 = vmatmul.f32.gmra.mxu0 %v3868
      %v4268 = vpop.f32.mrf.mxu0
      %v4269 = vadd.f32 0.0, %v4268
      %4270 = vmatmul.f32.gmra.mxu0 %v3871
      %v4271 = vpop.f32.mrf.mxu0
      %v4272 = vadd.f32 0.0, %v4271
      %4273 = vmatmul.f32.gmra.mxu0 %v3874
      %v4274 = vpop.f32.mrf.mxu0
      %v4275 = vadd.f32 0.0, %v4274
      %4276 = vmatmul.f32.gmra.mxu0 %v3877
      %v4277 = vpop.f32.mrf.mxu0
      %v4278 = vadd.f32 0.0, %v4277
      %4279 = vmatmul.f32.gmra.mxu0 %v3880
      %v4280 = vpop.f32.mrf.mxu0
      %v4281 = vadd.f32 0.0, %v4280
      %4282 = vmatmul.f32.gmra.mxu0 %v3883
      %v4283 = vpop.f32.mrf.mxu0
      %v4284 = vadd.f32 0.0, %v4283
      %4285 = vmatmul.f32.gmra.mxu0 %v3886
      %v4286 = vpop.f32.mrf.mxu0
      %v4287 = vadd.f32 0.0, %v4286
      %4288 = vmatmul.f32.gmra.mxu0 %v3889
      %v4289 = vpop.f32.mrf.mxu0
      %v4290 = vadd.f32 0.0, %v4289
      %4291 = vdwg.mxu0
      %v4292 = vmax.f32 %v3909, 0.0
      %v4293 = vmax.f32 %v3912, 0.0
      %v4294 = vmax.f32 %v3915, 0.0
      %v4295 = vmax.f32 %v3918, 0.0
      %v4296 = vmax.f32 %v3921, 0.0
      %v4297 = vmax.f32 %v3924, 0.0
      %v4298 = vmax.f32 %v3927, 0.0
      %v4299 = vmax.f32 %v3930, 0.0
      %v4300 = vmax.f32 %v3933, 0.0
      %v4301 = vmax.f32 %v3936, 0.0
      %v4302 = vmax.f32 %v3939, 0.0
      %v4303 = vmax.f32 %v3942, 0.0
      %v4304 = vmax.f32 %v3945, 0.0
      %v4305 = vmax.f32 %v3948, 0.0
      %v4306 = vmax.f32 %v3951, 0.0
      %v4307 = vmax.f32 %v3954, 0.0
      %v4308 = vmax.f32 %v3957, 0.0
      %v4309 = vmax.f32 %v3960, 0.0
      %v4310 = vmax.f32 %v3963, 0.0
      %v4311 = vmax.f32 %v3966, 0.0
      %v4312 = vmax.f32 %v3969, 0.0
      %v4313 = vmax.f32 %v3972, 0.0
      %v4314 = vmax.f32 %v3975, 0.0
      %v4315 = vmax.f32 %v3978, 0.0
      %v4316 = vmax.f32 %v3981, 0.0
      %v4317 = vmax.f32 %v3984, 0.0
      %v4318 = vmax.f32 %v3987, 0.0
      %v4319 = vmax.f32 %v3990, 0.0
      %v4320 = vmax.f32 %v3993, 0.0
      %v4321 = vmax.f32 %v3996, 0.0
      %v4322 = vmax.f32 %v3999, 0.0
      %v4323 = vmax.f32 %v4002, 0.0
      %v4324 = vmax.f32 %v4005, 0.0
      %v4325 = vmax.f32 %v4008, 0.0
      %v4326 = vmax.f32 %v4011, 0.0
      %v4327 = vmax.f32 %v4014, 0.0
      %v4328 = vmax.f32 %v4017, 0.0
      %v4329 = vmax.f32 %v4020, 0.0
      %v4330 = vmax.f32 %v4023, 0.0
      %v4331 = vmax.f32 %v4026, 0.0
      %v4332 = vmax.f32 %v4029, 0.0
      %v4333 = vmax.f32 %v4032, 0.0
      %v4334 = vmax.f32 %v4035, 0.0
      %v4335 = vmax.f32 %v4038, 0.0
      %v4336 = vmax.f32 %v4041, 0.0
      %v4337 = vmax.f32 %v4044, 0.0
      %v4338 = vmax.f32 %v4047, 0.0
      %v4339 = vmax.f32 %v4050, 0.0
      %v4340 = vmax.f32 %v4053, 0.0
      %v4341 = vmax.f32 %v4056, 0.0
      %v4342 = vmax.f32 %v4059, 0.0
      %v4343 = vmax.f32 %v4062, 0.0
      %v4344 = vmax.f32 %v4065, 0.0
      %v4345 = vmax.f32 %v4068, 0.0
      %v4346 = vmax.f32 %v4071, 0.0
      %v4347 = vmax.f32 %v4074, 0.0
      %v4348 = vmax.f32 %v4077, 0.0
      %v4349 = vmax.f32 %v4080, 0.0
      %v4350 = vmax.f32 %v4083, 0.0
      %v4351 = vmax.f32 %v4086, 0.0
      %v4352 = vmax.f32 %v4089, 0.0
      %v4353 = vmax.f32 %v4092, 0.0
      %v4354 = vmax.f32 %v4095, 0.0
      %v4355 = vmax.f32 %v4098, 0.0
      %v4356 = vmax.f32 %v4101, 0.0
      %v4357 = vmax.f32 %v4104, 0.0
      %v4358 = vmax.f32 %v4107, 0.0
      %v4359 = vmax.f32 %v4110, 0.0
      %v4360 = vmax.f32 %v4113, 0.0
      %v4361 = vmax.f32 %v4116, 0.0
      %v4362 = vmax.f32 %v4119, 0.0
      %v4363 = vmax.f32 %v4122, 0.0
      %v4364 = vmax.f32 %v4125, 0.0
      %v4365 = vmax.f32 %v4128, 0.0
      %v4366 = vmax.f32 %v4131, 0.0
      %v4367 = vmax.f32 %v4134, 0.0
      %v4368 = vmax.f32 %v4137, 0.0
      %v4369 = vmax.f32 %v4140, 0.0
      %v4370 = vmax.f32 %v4143, 0.0
      %v4371 = vmax.f32 %v4146, 0.0
      %v4372 = vmax.f32 %v4149, 0.0
      %v4373 = vmax.f32 %v4152, 0.0
      %v4374 = vmax.f32 %v4155, 0.0
      %v4375 = vmax.f32 %v4158, 0.0
      %v4376 = vmax.f32 %v4161, 0.0
      %v4377 = vmax.f32 %v4164, 0.0
      %v4378 = vmax.f32 %v4167, 0.0
      %v4379 = vmax.f32 %v4170, 0.0
      %v4380 = vmax.f32 %v4173, 0.0
      %v4381 = vmax.f32 %v4176, 0.0
      %v4382 = vmax.f32 %v4179, 0.0
      %v4383 = vmax.f32 %v4182, 0.0
      %v4384 = vmax.f32 %v4185, 0.0
      %v4385 = vmax.f32 %v4188, 0.0
      %v4386 = vmax.f32 %v4191, 0.0
      %v4387 = vmax.f32 %v4194, 0.0
      %v4388 = vmax.f32 %v4197, 0.0
      %v4389 = vmax.f32 %v4200, 0.0
      %v4390 = vmax.f32 %v4203, 0.0
      %v4391 = vmax.f32 %v4206, 0.0
      %v4392 = vmax.f32 %v4209, 0.0
      %v4393 = vmax.f32 %v4212, 0.0
      %v4394 = vmax.f32 %v4215, 0.0
      %v4395 = vmax.f32 %v4218, 0.0
      %v4396 = vmax.f32 %v4221, 0.0
      %v4397 = vmax.f32 %v4224, 0.0
      %v4398 = vmax.f32 %v4227, 0.0
      %v4399 = vmax.f32 %v4230, 0.0
      %v4400 = vmax.f32 %v4233, 0.0
      %v4401 = vmax.f32 %v4236, 0.0
      %v4402 = vmax.f32 %v4239, 0.0
      %v4403 = vmax.f32 %v4242, 0.0
      %v4404 = vmax.f32 %v4245, 0.0
      %v4405 = vmax.f32 %v4248, 0.0
      %v4406 = vmax.f32 %v4251, 0.0
      %v4407 = vmax.f32 %v4254, 0.0
      %v4408 = vmax.f32 %v4257, 0.0
      %v4409 = vmax.f32 %v4260, 0.0
      %v4410 = vmax.f32 %v4263, 0.0
      %v4411 = vmax.f32 %v4266, 0.0
      %v4412 = vmax.f32 %v4269, 0.0
      %v4413 = vmax.f32 %v4272, 0.0
      %v4414 = vmax.f32 %v4275, 0.0
      %v4415 = vmax.f32 %v4278, 0.0
      %v4416 = vmax.f32 %v4281, 0.0
      %v4417 = vmax.f32 %v4284, 0.0
      %v4418 = vmax.f32 %v4287, 0.0
      %v4419 = vmax.f32 %v4290, 0.0
      %v4420 = vld [vmem:[%s2] sm:$0x1]
      %v4422 = vperm.slane %v4420, 0
      %v4424 = vmul.f32 %v4292, %v4422
      %v4425 = vmul.f32 %v4293, %v4422
      %v4426 = vmul.f32 %v4294, %v4422
      %v4427 = vmul.f32 %v4295, %v4422
      %v4428 = vmul.f32 %v4296, %v4422
      %v4429 = vmul.f32 %v4297, %v4422
      %v4430 = vmul.f32 %v4298, %v4422
      %v4431 = vmul.f32 %v4299, %v4422
      %v4432 = vmul.f32 %v4300, %v4422
      %v4433 = vmul.f32 %v4301, %v4422
      %v4434 = vmul.f32 %v4302, %v4422
      %v4435 = vmul.f32 %v4303, %v4422
      %v4436 = vmul.f32 %v4304, %v4422
      %v4437 = vmul.f32 %v4305, %v4422
      %v4438 = vmul.f32 %v4306, %v4422
      %v4439 = vmul.f32 %v4307, %v4422
      %v4440 = vmul.f32 %v4308, %v4422
      %v4441 = vmul.f32 %v4309, %v4422
      %v4442 = vmul.f32 %v4310, %v4422
      %v4443 = vmul.f32 %v4311, %v4422
      %v4444 = vmul.f32 %v4312, %v4422
      %v4445 = vmul.f32 %v4313, %v4422
      %v4446 = vmul.f32 %v4314, %v4422
      %v4447 = vmul.f32 %v4315, %v4422
      %v4448 = vmul.f32 %v4316, %v4422
      %v4449 = vmul.f32 %v4317, %v4422
      %v4450 = vmul.f32 %v4318, %v4422
      %v4451 = vmul.f32 %v4319, %v4422
      %v4452 = vmul.f32 %v4320, %v4422
      %v4453 = vmul.f32 %v4321, %v4422
      %v4454 = vmul.f32 %v4322, %v4422
      %v4455 = vmul.f32 %v4323, %v4422
      %v4456 = vmul.f32 %v4324, %v4422
      %v4457 = vmul.f32 %v4325, %v4422
      %v4458 = vmul.f32 %v4326, %v4422
      %v4459 = vmul.f32 %v4327, %v4422
      %v4460 = vmul.f32 %v4328, %v4422
      %v4461 = vmul.f32 %v4329, %v4422
      %v4462 = vmul.f32 %v4330, %v4422
      %v4463 = vmul.f32 %v4331, %v4422
      %v4464 = vmul.f32 %v4332, %v4422
      %v4465 = vmul.f32 %v4333, %v4422
      %v4466 = vmul.f32 %v4334, %v4422
      %v4467 = vmul.f32 %v4335, %v4422
      %v4468 = vmul.f32 %v4336, %v4422
      %v4469 = vmul.f32 %v4337, %v4422
      %v4470 = vmul.f32 %v4338, %v4422
      %v4471 = vmul.f32 %v4339, %v4422
      %v4472 = vmul.f32 %v4340, %v4422
      %v4473 = vmul.f32 %v4341, %v4422
      %v4474 = vmul.f32 %v4342, %v4422
      %v4475 = vmul.f32 %v4343, %v4422
      %v4476 = vmul.f32 %v4344, %v4422
      %v4477 = vmul.f32 %v4345, %v4422
      %v4478 = vmul.f32 %v4346, %v4422
      %v4479 = vmul.f32 %v4347, %v4422
      %v4480 = vmul.f32 %v4348, %v4422
      %v4481 = vmul.f32 %v4349, %v4422
      %v4482 = vmul.f32 %v4350, %v4422
      %v4483 = vmul.f32 %v4351, %v4422
      %v4484 = vmul.f32 %v4352, %v4422
      %v4485 = vmul.f32 %v4353, %v4422
      %v4486 = vmul.f32 %v4354, %v4422
      %v4487 = vmul.f32 %v4355, %v4422
      %v4488 = vmul.f32 %v4356, %v4422
      %v4489 = vmul.f32 %v4357, %v4422
      %v4490 = vmul.f32 %v4358, %v4422
      %v4491 = vmul.f32 %v4359, %v4422
      %v4492 = vmul.f32 %v4360, %v4422
      %v4493 = vmul.f32 %v4361, %v4422
      %v4494 = vmul.f32 %v4362, %v4422
      %v4495 = vmul.f32 %v4363, %v4422
      %v4496 = vmul.f32 %v4364, %v4422
      %v4497 = vmul.f32 %v4365, %v4422
      %v4498 = vmul.f32 %v4366, %v4422
      %v4499 = vmul.f32 %v4367, %v4422
      %v4500 = vmul.f32 %v4368, %v4422
      %v4501 = vmul.f32 %v4369, %v4422
      %v4502 = vmul.f32 %v4370, %v4422
      %v4503 = vmul.f32 %v4371, %v4422
      %v4504 = vmul.f32 %v4372, %v4422
      %v4505 = vmul.f32 %v4373, %v4422
      %v4506 = vmul.f32 %v4374, %v4422
      %v4507 = vmul.f32 %v4375, %v4422
      %v4508 = vmul.f32 %v4376, %v4422
      %v4509 = vmul.f32 %v4377, %v4422
      %v4510 = vmul.f32 %v4378, %v4422
      %v4511 = vmul.f32 %v4379, %v4422
      %v4512 = vmul.f32 %v4380, %v4422
      %v4513 = vmul.f32 %v4381, %v4422
      %v4514 = vmul.f32 %v4382, %v4422
      %v4515 = vmul.f32 %v4383, %v4422
      %v4516 = vmul.f32 %v4384, %v4422
      %v4517 = vmul.f32 %v4385, %v4422
      %v4518 = vmul.f32 %v4386, %v4422
      %v4519 = vmul.f32 %v4387, %v4422
      %v4520 = vmul.f32 %v4388, %v4422
      %v4521 = vmul.f32 %v4389, %v4422
      %v4522 = vmul.f32 %v4390, %v4422
      %v4523 = vmul.f32 %v4391, %v4422
      %v4524 = vmul.f32 %v4392, %v4422
      %v4525 = vmul.f32 %v4393, %v4422
      %v4526 = vmul.f32 %v4394, %v4422
      %v4527 = vmul.f32 %v4395, %v4422
      %v4528 = vmul.f32 %v4396, %v4422
      %v4529 = vmul.f32 %v4397, %v4422
      %v4530 = vmul.f32 %v4398, %v4422
      %v4531 = vmul.f32 %v4399, %v4422
      %v4532 = vmul.f32 %v4400, %v4422
      %v4533 = vmul.f32 %v4401, %v4422
      %v4534 = vmul.f32 %v4402, %v4422
      %v4535 = vmul.f32 %v4403, %v4422
      %v4536 = vmul.f32 %v4404, %v4422
      %v4537 = vmul.f32 %v4405, %v4422
      %v4538 = vmul.f32 %v4406, %v4422
      %v4539 = vmul.f32 %v4407, %v4422
      %v4540 = vmul.f32 %v4408, %v4422
      %v4541 = vmul.f32 %v4409, %v4422
      %v4542 = vmul.f32 %v4410, %v4422
      %v4543 = vmul.f32 %v4411, %v4422
      %v4544 = vmul.f32 %v4412, %v4422
      %v4545 = vmul.f32 %v4413, %v4422
      %v4546 = vmul.f32 %v4414, %v4422
      %v4547 = vmul.f32 %v4415, %v4422
      %v4548 = vmul.f32 %v4416, %v4422
      %v4549 = vmul.f32 %v4417, %v4422
      %v4550 = vmul.f32 %v4418, %v4422
      %v4551 = vmul.f32 %v4419, %v4422
      %v4552 = vsel %vm302, %v4424, 0.0
      %4553 = vadd.xlane.f32.xlu0 %v4552
      %v4554 = vpop.xlane.xlu0 %4553
      %v4555 = vsel %vm302, %v4425, 0.0
      %4556 = vadd.xlane.f32.xlu0 %v4555
      %v4557 = vpop.xlane.xlu0 %4556
      %v4558 = vsel %vm302, %v4426, 0.0
      %4559 = vadd.xlane.f32.xlu0 %v4558
      %v4560 = vpop.xlane.xlu0 %4559
      %v4561 = vsel %vm302, %v4427, 0.0
      %4562 = vadd.xlane.f32.xlu0 %v4561
      %v4563 = vpop.xlane.xlu0 %4562
      %v4564 = vsel %vm302, %v4428, 0.0
      %4565 = vadd.xlane.f32.xlu0 %v4564
      %v4566 = vpop.xlane.xlu0 %4565
      %v4567 = vsel %vm302, %v4429, 0.0
      %4568 = vadd.xlane.f32.xlu0 %v4567
      %v4569 = vpop.xlane.xlu0 %4568
      %v4570 = vsel %vm302, %v4430, 0.0
      %4571 = vadd.xlane.f32.xlu0 %v4570
      %v4572 = vpop.xlane.xlu0 %4571
      %v4573 = vsel %vm302, %v4431, 0.0
      %4574 = vadd.xlane.f32.xlu0 %v4573
      %v4575 = vpop.xlane.xlu0 %4574
      %v4576 = vsel %vm302, %v4432, 0.0
      %4577 = vadd.xlane.f32.xlu0 %v4576
      %v4578 = vpop.xlane.xlu0 %4577
      %v4579 = vsel %vm302, %v4433, 0.0
      %4580 = vadd.xlane.f32.xlu0 %v4579
      %v4581 = vpop.xlane.xlu0 %4580
      %v4582 = vsel %vm302, %v4434, 0.0
      %4583 = vadd.xlane.f32.xlu0 %v4582
      %v4584 = vpop.xlane.xlu0 %4583
      %v4585 = vsel %vm302, %v4435, 0.0
      %4586 = vadd.xlane.f32.xlu0 %v4585
      %v4587 = vpop.xlane.xlu0 %4586
      %v4588 = vsel %vm302, %v4436, 0.0
      %4589 = vadd.xlane.f32.xlu0 %v4588
      %v4590 = vpop.xlane.xlu0 %4589
      %v4591 = vsel %vm302, %v4437, 0.0
      %4592 = vadd.xlane.f32.xlu0 %v4591
      %v4593 = vpop.xlane.xlu0 %4592
      %v4594 = vsel %vm302, %v4438, 0.0
      %4595 = vadd.xlane.f32.xlu0 %v4594
      %v4596 = vpop.xlane.xlu0 %4595
      %v4597 = vsel %vm302, %v4439, 0.0
      %4598 = vadd.xlane.f32.xlu0 %v4597
      %v4599 = vpop.xlane.xlu0 %4598
      %v4600 = vsel %vm302, %v4440, 0.0
      %4601 = vadd.xlane.f32.xlu0 %v4600
      %v4602 = vpop.xlane.xlu0 %4601
      %v4603 = vsel %vm302, %v4441, 0.0
      %4604 = vadd.xlane.f32.xlu0 %v4603
      %v4605 = vpop.xlane.xlu0 %4604
      %v4606 = vsel %vm302, %v4442, 0.0
      %4607 = vadd.xlane.f32.xlu0 %v4606
      %v4608 = vpop.xlane.xlu0 %4607
      %v4609 = vsel %vm302, %v4443, 0.0
      %4610 = vadd.xlane.f32.xlu0 %v4609
      %v4611 = vpop.xlane.xlu0 %4610
      %v4612 = vsel %vm302, %v4444, 0.0
      %4613 = vadd.xlane.f32.xlu0 %v4612
      %v4614 = vpop.xlane.xlu0 %4613
      %v4615 = vsel %vm302, %v4445, 0.0
      %4616 = vadd.xlane.f32.xlu0 %v4615
      %v4617 = vpop.xlane.xlu0 %4616
      %v4618 = vsel %vm302, %v4446, 0.0
      %4619 = vadd.xlane.f32.xlu0 %v4618
      %v4620 = vpop.xlane.xlu0 %4619
      %v4621 = vsel %vm302, %v4447, 0.0
      %4622 = vadd.xlane.f32.xlu0 %v4621
      %v4623 = vpop.xlane.xlu0 %4622
      %v4624 = vsel %vm302, %v4448, 0.0
      %4625 = vadd.xlane.f32.xlu0 %v4624
      %v4626 = vpop.xlane.xlu0 %4625
      %v4627 = vsel %vm302, %v4449, 0.0
      %4628 = vadd.xlane.f32.xlu0 %v4627
      %v4629 = vpop.xlane.xlu0 %4628
      %v4630 = vsel %vm302, %v4450, 0.0
      %4631 = vadd.xlane.f32.xlu0 %v4630
      %v4632 = vpop.xlane.xlu0 %4631
      %v4633 = vsel %vm302, %v4451, 0.0
      %4634 = vadd.xlane.f32.xlu0 %v4633
      %v4635 = vpop.xlane.xlu0 %4634
      %v4636 = vsel %vm302, %v4452, 0.0
      %4637 = vadd.xlane.f32.xlu0 %v4636
      %v4638 = vpop.xlane.xlu0 %4637
      %v4639 = vsel %vm302, %v4453, 0.0
      %4640 = vadd.xlane.f32.xlu0 %v4639
      %v4641 = vpop.xlane.xlu0 %4640
      %v4642 = vsel %vm302, %v4454, 0.0
      %4643 = vadd.xlane.f32.xlu0 %v4642
      %v4644 = vpop.xlane.xlu0 %4643
      %v4645 = vsel %vm302, %v4455, 0.0
      %4646 = vadd.xlane.f32.xlu0 %v4645
      %v4647 = vpop.xlane.xlu0 %4646
      %v4648 = vsel %vm302, %v4456, 0.0
      %4649 = vadd.xlane.f32.xlu0 %v4648
      %v4650 = vpop.xlane.xlu0 %4649
      %v4651 = vsel %vm302, %v4457, 0.0
      %4652 = vadd.xlane.f32.xlu0 %v4651
      %v4653 = vpop.xlane.xlu0 %4652
      %v4654 = vsel %vm302, %v4458, 0.0
      %4655 = vadd.xlane.f32.xlu0 %v4654
      %v4656 = vpop.xlane.xlu0 %4655
      %v4657 = vsel %vm302, %v4459, 0.0
      %4658 = vadd.xlane.f32.xlu0 %v4657
      %v4659 = vpop.xlane.xlu0 %4658
      %v4660 = vsel %vm302, %v4460, 0.0
      %4661 = vadd.xlane.f32.xlu0 %v4660
      %v4662 = vpop.xlane.xlu0 %4661
      %v4663 = vsel %vm302, %v4461, 0.0
      %4664 = vadd.xlane.f32.xlu0 %v4663
      %v4665 = vpop.xlane.xlu0 %4664
      %v4666 = vsel %vm302, %v4462, 0.0
      %4667 = vadd.xlane.f32.xlu0 %v4666
      %v4668 = vpop.xlane.xlu0 %4667
      %v4669 = vsel %vm302, %v4463, 0.0
      %4670 = vadd.xlane.f32.xlu0 %v4669
      %v4671 = vpop.xlane.xlu0 %4670
      %v4672 = vsel %vm302, %v4464, 0.0
      %4673 = vadd.xlane.f32.xlu0 %v4672
      %v4674 = vpop.xlane.xlu0 %4673
      %v4675 = vsel %vm302, %v4465, 0.0
      %4676 = vadd.xlane.f32.xlu0 %v4675
      %v4677 = vpop.xlane.xlu0 %4676
      %v4678 = vsel %vm302, %v4466, 0.0
      %4679 = vadd.xlane.f32.xlu0 %v4678
      %v4680 = vpop.xlane.xlu0 %4679
      %v4681 = vsel %vm302, %v4467, 0.0
      %4682 = vadd.xlane.f32.xlu0 %v4681
      %v4683 = vpop.xlane.xlu0 %4682
      %v4684 = vsel %vm302, %v4468, 0.0
      %4685 = vadd.xlane.f32.xlu0 %v4684
      %v4686 = vpop.xlane.xlu0 %4685
      %v4687 = vsel %vm302, %v4469, 0.0
      %4688 = vadd.xlane.f32.xlu0 %v4687
      %v4689 = vpop.xlane.xlu0 %4688
      %v4690 = vsel %vm302, %v4470, 0.0
      %4691 = vadd.xlane.f32.xlu0 %v4690
      %v4692 = vpop.xlane.xlu0 %4691
      %v4693 = vsel %vm302, %v4471, 0.0
      %4694 = vadd.xlane.f32.xlu0 %v4693
      %v4695 = vpop.xlane.xlu0 %4694
      %v4696 = vsel %vm302, %v4472, 0.0
      %4697 = vadd.xlane.f32.xlu0 %v4696
      %v4698 = vpop.xlane.xlu0 %4697
      %v4699 = vsel %vm302, %v4473, 0.0
      %4700 = vadd.xlane.f32.xlu0 %v4699
      %v4701 = vpop.xlane.xlu0 %4700
      %v4702 = vsel %vm302, %v4474, 0.0
      %4703 = vadd.xlane.f32.xlu0 %v4702
      %v4704 = vpop.xlane.xlu0 %4703
      %v4705 = vsel %vm302, %v4475, 0.0
      %4706 = vadd.xlane.f32.xlu0 %v4705
      %v4707 = vpop.xlane.xlu0 %4706
      %v4708 = vsel %vm302, %v4476, 0.0
      %4709 = vadd.xlane.f32.xlu0 %v4708
      %v4710 = vpop.xlane.xlu0 %4709
      %v4711 = vsel %vm302, %v4477, 0.0
      %4712 = vadd.xlane.f32.xlu0 %v4711
      %v4713 = vpop.xlane.xlu0 %4712
      %v4714 = vsel %vm302, %v4478, 0.0
      %4715 = vadd.xlane.f32.xlu0 %v4714
      %v4716 = vpop.xlane.xlu0 %4715
      %v4717 = vsel %vm302, %v4479, 0.0
      %4718 = vadd.xlane.f32.xlu0 %v4717
      %v4719 = vpop.xlane.xlu0 %4718
      %v4720 = vsel %vm302, %v4480, 0.0
      %4721 = vadd.xlane.f32.xlu0 %v4720
      %v4722 = vpop.xlane.xlu0 %4721
      %v4723 = vsel %vm302, %v4481, 0.0
      %4724 = vadd.xlane.f32.xlu0 %v4723
      %v4725 = vpop.xlane.xlu0 %4724
      %v4726 = vsel %vm302, %v4482, 0.0
      %4727 = vadd.xlane.f32.xlu0 %v4726
      %v4728 = vpop.xlane.xlu0 %4727
      %v4729 = vsel %vm302, %v4483, 0.0
      %4730 = vadd.xlane.f32.xlu0 %v4729
      %v4731 = vpop.xlane.xlu0 %4730
      %v4732 = vsel %vm302, %v4484, 0.0
      %4733 = vadd.xlane.f32.xlu0 %v4732
      %v4734 = vpop.xlane.xlu0 %4733
      %v4735 = vsel %vm302, %v4485, 0.0
      %4736 = vadd.xlane.f32.xlu0 %v4735
      %v4737 = vpop.xlane.xlu0 %4736
      %v4738 = vsel %vm302, %v4486, 0.0
      %4739 = vadd.xlane.f32.xlu0 %v4738
      %v4740 = vpop.xlane.xlu0 %4739
      %v4741 = vsel %vm302, %v4487, 0.0
      %4742 = vadd.xlane.f32.xlu0 %v4741
      %v4743 = vpop.xlane.xlu0 %4742
      %v4744 = vsel %vm302, %v4488, 0.0
      %4745 = vadd.xlane.f32.xlu0 %v4744
      %v4746 = vpop.xlane.xlu0 %4745
      %v4747 = vsel %vm302, %v4489, 0.0
      %4748 = vadd.xlane.f32.xlu0 %v4747
      %v4749 = vpop.xlane.xlu0 %4748
      %v4750 = vsel %vm302, %v4490, 0.0
      %4751 = vadd.xlane.f32.xlu0 %v4750
      %v4752 = vpop.xlane.xlu0 %4751
      %v4753 = vsel %vm302, %v4491, 0.0
      %4754 = vadd.xlane.f32.xlu0 %v4753
      %v4755 = vpop.xlane.xlu0 %4754
      %v4756 = vsel %vm302, %v4492, 0.0
      %4757 = vadd.xlane.f32.xlu0 %v4756
      %v4758 = vpop.xlane.xlu0 %4757
      %v4759 = vsel %vm302, %v4493, 0.0
      %4760 = vadd.xlane.f32.xlu0 %v4759
      %v4761 = vpop.xlane.xlu0 %4760
      %v4762 = vsel %vm302, %v4494, 0.0
      %4763 = vadd.xlane.f32.xlu0 %v4762
      %v4764 = vpop.xlane.xlu0 %4763
      %v4765 = vsel %vm302, %v4495, 0.0
      %4766 = vadd.xlane.f32.xlu0 %v4765
      %v4767 = vpop.xlane.xlu0 %4766
      %v4768 = vsel %vm302, %v4496, 0.0
      %4769 = vadd.xlane.f32.xlu0 %v4768
      %v4770 = vpop.xlane.xlu0 %4769
      %v4771 = vsel %vm302, %v4497, 0.0
      %4772 = vadd.xlane.f32.xlu0 %v4771
      %v4773 = vpop.xlane.xlu0 %4772
      %v4774 = vsel %vm302, %v4498, 0.0
      %4775 = vadd.xlane.f32.xlu0 %v4774
      %v4776 = vpop.xlane.xlu0 %4775
      %v4777 = vsel %vm302, %v4499, 0.0
      %4778 = vadd.xlane.f32.xlu0 %v4777
      %v4779 = vpop.xlane.xlu0 %4778
      %v4780 = vsel %vm302, %v4500, 0.0
      %4781 = vadd.xlane.f32.xlu0 %v4780
      %v4782 = vpop.xlane.xlu0 %4781
      %v4783 = vsel %vm302, %v4501, 0.0
      %4784 = vadd.xlane.f32.xlu0 %v4783
      %v4785 = vpop.xlane.xlu0 %4784
      %v4786 = vsel %vm302, %v4502, 0.0
      %4787 = vadd.xlane.f32.xlu0 %v4786
      %v4788 = vpop.xlane.xlu0 %4787
      %v4789 = vsel %vm302, %v4503, 0.0
      %4790 = vadd.xlane.f32.xlu0 %v4789
      %v4791 = vpop.xlane.xlu0 %4790
      %v4792 = vsel %vm302, %v4504, 0.0
      %4793 = vadd.xlane.f32.xlu0 %v4792
      %v4794 = vpop.xlane.xlu0 %4793
      %v4795 = vsel %vm302, %v4505, 0.0
      %4796 = vadd.xlane.f32.xlu0 %v4795
      %v4797 = vpop.xlane.xlu0 %4796
      %v4798 = vsel %vm302, %v4506, 0.0
      %4799 = vadd.xlane.f32.xlu0 %v4798
      %v4800 = vpop.xlane.xlu0 %4799
      %v4801 = vsel %vm302, %v4507, 0.0
      %4802 = vadd.xlane.f32.xlu0 %v4801
      %v4803 = vpop.xlane.xlu0 %4802
      %v4804 = vsel %vm302, %v4508, 0.0
      %4805 = vadd.xlane.f32.xlu0 %v4804
      %v4806 = vpop.xlane.xlu0 %4805
      %v4807 = vsel %vm302, %v4509, 0.0
      %4808 = vadd.xlane.f32.xlu0 %v4807
      %v4809 = vpop.xlane.xlu0 %4808
      %v4810 = vsel %vm302, %v4510, 0.0
      %4811 = vadd.xlane.f32.xlu0 %v4810
      %v4812 = vpop.xlane.xlu0 %4811
      %v4813 = vsel %vm302, %v4511, 0.0
      %4814 = vadd.xlane.f32.xlu0 %v4813
      %v4815 = vpop.xlane.xlu0 %4814
      %v4816 = vsel %vm302, %v4512, 0.0
      %4817 = vadd.xlane.f32.xlu0 %v4816
      %v4818 = vpop.xlane.xlu0 %4817
      %v4819 = vsel %vm302, %v4513, 0.0
      %4820 = vadd.xlane.f32.xlu0 %v4819
      %v4821 = vpop.xlane.xlu0 %4820
      %v4822 = vsel %vm302, %v4514, 0.0
      %4823 = vadd.xlane.f32.xlu0 %v4822
      %v4824 = vpop.xlane.xlu0 %4823
      %v4825 = vsel %vm302, %v4515, 0.0
      %4826 = vadd.xlane.f32.xlu0 %v4825
      %v4827 = vpop.xlane.xlu0 %4826
      %v4828 = vsel %vm302, %v4516, 0.0
      %4829 = vadd.xlane.f32.xlu0 %v4828
      %v4830 = vpop.xlane.xlu0 %4829
      %v4831 = vsel %vm302, %v4517, 0.0
      %4832 = vadd.xlane.f32.xlu0 %v4831
      %v4833 = vpop.xlane.xlu0 %4832
      %v4834 = vsel %vm302, %v4518, 0.0
      %4835 = vadd.xlane.f32.xlu0 %v4834
      %v4836 = vpop.xlane.xlu0 %4835
      %v4837 = vsel %vm302, %v4519, 0.0
      %4838 = vadd.xlane.f32.xlu0 %v4837
      %v4839 = vpop.xlane.xlu0 %4838
      %v4840 = vsel %vm302, %v4520, 0.0
      %4841 = vadd.xlane.f32.xlu0 %v4840
      %v4842 = vpop.xlane.xlu0 %4841
      %v4843 = vsel %vm302, %v4521, 0.0
      %4844 = vadd.xlane.f32.xlu0 %v4843
      %v4845 = vpop.xlane.xlu0 %4844
      %v4846 = vsel %vm302, %v4522, 0.0
      %4847 = vadd.xlane.f32.xlu0 %v4846
      %v4848 = vpop.xlane.xlu0 %4847
      %v4849 = vsel %vm302, %v4523, 0.0
      %4850 = vadd.xlane.f32.xlu0 %v4849
      %v4851 = vpop.xlane.xlu0 %4850
      %v4852 = vsel %vm302, %v4524, 0.0
      %4853 = vadd.xlane.f32.xlu0 %v4852
      %v4854 = vpop.xlane.xlu0 %4853
      %v4855 = vsel %vm302, %v4525, 0.0
      %4856 = vadd.xlane.f32.xlu0 %v4855
      %v4857 = vpop.xlane.xlu0 %4856
      %v4858 = vsel %vm302, %v4526, 0.0
      %4859 = vadd.xlane.f32.xlu0 %v4858
      %v4860 = vpop.xlane.xlu0 %4859
      %v4861 = vsel %vm302, %v4527, 0.0
      %4862 = vadd.xlane.f32.xlu0 %v4861
      %v4863 = vpop.xlane.xlu0 %4862
      %v4864 = vsel %vm302, %v4528, 0.0
      %4865 = vadd.xlane.f32.xlu0 %v4864
      %v4866 = vpop.xlane.xlu0 %4865
      %v4867 = vsel %vm302, %v4529, 0.0
      %4868 = vadd.xlane.f32.xlu0 %v4867
      %v4869 = vpop.xlane.xlu0 %4868
      %v4870 = vsel %vm302, %v4530, 0.0
      %4871 = vadd.xlane.f32.xlu0 %v4870
      %v4872 = vpop.xlane.xlu0 %4871
      %v4873 = vsel %vm302, %v4531, 0.0
      %4874 = vadd.xlane.f32.xlu0 %v4873
      %v4875 = vpop.xlane.xlu0 %4874
      %v4876 = vsel %vm302, %v4532, 0.0
      %4877 = vadd.xlane.f32.xlu0 %v4876
      %v4878 = vpop.xlane.xlu0 %4877
      %v4879 = vsel %vm302, %v4533, 0.0
      %4880 = vadd.xlane.f32.xlu0 %v4879
      %v4881 = vpop.xlane.xlu0 %4880
      %v4882 = vsel %vm302, %v4534, 0.0
      %4883 = vadd.xlane.f32.xlu0 %v4882
      %v4884 = vpop.xlane.xlu0 %4883
      %v4885 = vsel %vm302, %v4535, 0.0
      %4886 = vadd.xlane.f32.xlu0 %v4885
      %v4887 = vpop.xlane.xlu0 %4886
      %v4888 = vsel %vm302, %v4536, 0.0
      %4889 = vadd.xlane.f32.xlu0 %v4888
      %v4890 = vpop.xlane.xlu0 %4889
      %v4891 = vsel %vm302, %v4537, 0.0
      %4892 = vadd.xlane.f32.xlu0 %v4891
      %v4893 = vpop.xlane.xlu0 %4892
      %v4894 = vsel %vm302, %v4538, 0.0
      %4895 = vadd.xlane.f32.xlu0 %v4894
      %v4896 = vpop.xlane.xlu0 %4895
      %v4897 = vsel %vm302, %v4539, 0.0
      %4898 = vadd.xlane.f32.xlu0 %v4897
      %v4899 = vpop.xlane.xlu0 %4898
      %v4900 = vsel %vm302, %v4540, 0.0
      %4901 = vadd.xlane.f32.xlu0 %v4900
      %v4902 = vpop.xlane.xlu0 %4901
      %v4903 = vsel %vm302, %v4541, 0.0
      %4904 = vadd.xlane.f32.xlu0 %v4903
      %v4905 = vpop.xlane.xlu0 %4904
      %v4906 = vsel %vm302, %v4542, 0.0
      %4907 = vadd.xlane.f32.xlu0 %v4906
      %v4908 = vpop.xlane.xlu0 %4907
      %v4909 = vsel %vm302, %v4543, 0.0
      %4910 = vadd.xlane.f32.xlu0 %v4909
      %v4911 = vpop.xlane.xlu0 %4910
      %v4912 = vsel %vm302, %v4544, 0.0
      %4913 = vadd.xlane.f32.xlu0 %v4912
      %v4914 = vpop.xlane.xlu0 %4913
      %v4915 = vsel %vm302, %v4545, 0.0
      %4916 = vadd.xlane.f32.xlu0 %v4915
      %v4917 = vpop.xlane.xlu0 %4916
      %v4918 = vsel %vm302, %v4546, 0.0
      %4919 = vadd.xlane.f32.xlu0 %v4918
      %v4920 = vpop.xlane.xlu0 %4919
      %v4921 = vsel %vm302, %v4547, 0.0
      %4922 = vadd.xlane.f32.xlu0 %v4921
      %v4923 = vpop.xlane.xlu0 %4922
      %v4924 = vsel %vm302, %v4548, 0.0
      %4925 = vadd.xlane.f32.xlu0 %v4924
      %v4926 = vpop.xlane.xlu0 %4925
      %v4927 = vsel %vm302, %v4549, 0.0
      %4928 = vadd.xlane.f32.xlu0 %v4927
      %v4929 = vpop.xlane.xlu0 %4928
      %v4930 = vsel %vm302, %v4550, 0.0
      %4931 = vadd.xlane.f32.xlu0 %v4930
      %v4932 = vpop.xlane.xlu0 %4931
      %v4933 = vsel %vm302, %v4551, 0.0
      %4934 = vadd.xlane.f32.xlu0 %v4933
      %v4935 = vpop.xlane.xlu0 %4934
      %v4936 = vrot.slane %v4554, 4
      %v4937 = vmax.f32 %v4554, %v4936
      %v4938 = vrot.slane %v4937, 2
      %v4939 = vmax.f32 %v4937, %v4938
      %v4940 = vrot.slane %v4939, 1
      %v4941 = vmax.f32 %v4939, %v4940
      %v4942 = vrot.slane %v4557, 4
      %v4943 = vmax.f32 %v4557, %v4942
      %v4944 = vrot.slane %v4943, 2
      %v4945 = vmax.f32 %v4943, %v4944
      %v4946 = vrot.slane %v4945, 1
      %v4947 = vmax.f32 %v4945, %v4946
      %v4948 = vrot.slane %v4560, 4
      %v4949 = vmax.f32 %v4560, %v4948
      %v4950 = vrot.slane %v4949, 2
      %v4951 = vmax.f32 %v4949, %v4950
      %v4952 = vrot.slane %v4951, 1
      %v4953 = vmax.f32 %v4951, %v4952
      %v4954 = vrot.slane %v4563, 4
      %v4955 = vmax.f32 %v4563, %v4954
      %v4956 = vrot.slane %v4955, 2
      %v4957 = vmax.f32 %v4955, %v4956
      %v4958 = vrot.slane %v4957, 1
      %v4959 = vmax.f32 %v4957, %v4958
      %v4960 = vrot.slane %v4566, 4
      %v4961 = vmax.f32 %v4566, %v4960
      %v4962 = vrot.slane %v4961, 2
      %v4963 = vmax.f32 %v4961, %v4962
      %v4964 = vrot.slane %v4963, 1
      %v4965 = vmax.f32 %v4963, %v4964
      %v4966 = vrot.slane %v4569, 4
      %v4967 = vmax.f32 %v4569, %v4966
      %v4968 = vrot.slane %v4967, 2
      %v4969 = vmax.f32 %v4967, %v4968
      %v4970 = vrot.slane %v4969, 1
      %v4971 = vmax.f32 %v4969, %v4970
      %v4972 = vrot.slane %v4572, 4
      %v4973 = vmax.f32 %v4572, %v4972
      %v4974 = vrot.slane %v4973, 2
      %v4975 = vmax.f32 %v4973, %v4974
      %v4976 = vrot.slane %v4975, 1
      %v4977 = vmax.f32 %v4975, %v4976
      %v4978 = vrot.slane %v4575, 4
      %v4979 = vmax.f32 %v4575, %v4978
      %v4980 = vrot.slane %v4979, 2
      %v4981 = vmax.f32 %v4979, %v4980
      %v4982 = vrot.slane %v4981, 1
      %v4983 = vmax.f32 %v4981, %v4982
      %v4984 = vrot.slane %v4578, 4
      %v4985 = vmax.f32 %v4578, %v4984
      %v4986 = vrot.slane %v4985, 2
      %v4987 = vmax.f32 %v4985, %v4986
      %v4988 = vrot.slane %v4987, 1
      %v4989 = vmax.f32 %v4987, %v4988
      %v4990 = vrot.slane %v4581, 4
      %v4991 = vmax.f32 %v4581, %v4990
      %v4992 = vrot.slane %v4991, 2
      %v4993 = vmax.f32 %v4991, %v4992
      %v4994 = vrot.slane %v4993, 1
      %v4995 = vmax.f32 %v4993, %v4994
      %v4996 = vrot.slane %v4584, 4
      %v4997 = vmax.f32 %v4584, %v4996
      %v4998 = vrot.slane %v4997, 2
      %v4999 = vmax.f32 %v4997, %v4998
      %v5000 = vrot.slane %v4999, 1
      %v5001 = vmax.f32 %v4999, %v5000
      %v5002 = vrot.slane %v4587, 4
      %v5003 = vmax.f32 %v4587, %v5002
      %v5004 = vrot.slane %v5003, 2
      %v5005 = vmax.f32 %v5003, %v5004
      %v5006 = vrot.slane %v5005, 1
      %v5007 = vmax.f32 %v5005, %v5006
      %v5008 = vrot.slane %v4590, 4
      %v5009 = vmax.f32 %v4590, %v5008
      %v5010 = vrot.slane %v5009, 2
      %v5011 = vmax.f32 %v5009, %v5010
      %v5012 = vrot.slane %v5011, 1
      %v5013 = vmax.f32 %v5011, %v5012
      %v5014 = vrot.slane %v4593, 4
      %v5015 = vmax.f32 %v4593, %v5014
      %v5016 = vrot.slane %v5015, 2
      %v5017 = vmax.f32 %v5015, %v5016
      %v5018 = vrot.slane %v5017, 1
      %v5019 = vmax.f32 %v5017, %v5018
      %v5020 = vrot.slane %v4596, 4
      %v5021 = vmax.f32 %v4596, %v5020
      %v5022 = vrot.slane %v5021, 2
      %v5023 = vmax.f32 %v5021, %v5022
      %v5024 = vrot.slane %v5023, 1
      %v5025 = vmax.f32 %v5023, %v5024
      %v5026 = vrot.slane %v4599, 4
      %v5027 = vmax.f32 %v4599, %v5026
      %v5028 = vrot.slane %v5027, 2
      %v5029 = vmax.f32 %v5027, %v5028
      %v5030 = vrot.slane %v5029, 1
      %v5031 = vmax.f32 %v5029, %v5030
      %v5032 = vrot.slane %v4602, 4
      %v5033 = vmax.f32 %v4602, %v5032
      %v5034 = vrot.slane %v5033, 2
      %v5035 = vmax.f32 %v5033, %v5034
      %v5036 = vrot.slane %v5035, 1
      %v5037 = vmax.f32 %v5035, %v5036
      %v5038 = vrot.slane %v4605, 4
      %v5039 = vmax.f32 %v4605, %v5038
      %v5040 = vrot.slane %v5039, 2
      %v5041 = vmax.f32 %v5039, %v5040
      %v5042 = vrot.slane %v5041, 1
      %v5043 = vmax.f32 %v5041, %v5042
      %v5044 = vrot.slane %v4608, 4
      %v5045 = vmax.f32 %v4608, %v5044
      %v5046 = vrot.slane %v5045, 2
      %v5047 = vmax.f32 %v5045, %v5046
      %v5048 = vrot.slane %v5047, 1
      %v5049 = vmax.f32 %v5047, %v5048
      %v5050 = vrot.slane %v4611, 4
      %v5051 = vmax.f32 %v4611, %v5050
      %v5052 = vrot.slane %v5051, 2
      %v5053 = vmax.f32 %v5051, %v5052
      %v5054 = vrot.slane %v5053, 1
      %v5055 = vmax.f32 %v5053, %v5054
      %v5056 = vrot.slane %v4614, 4
      %v5057 = vmax.f32 %v4614, %v5056
      %v5058 = vrot.slane %v5057, 2
      %v5059 = vmax.f32 %v5057, %v5058
      %v5060 = vrot.slane %v5059, 1
      %v5061 = vmax.f32 %v5059, %v5060
      %v5062 = vrot.slane %v4617, 4
      %v5063 = vmax.f32 %v4617, %v5062
      %v5064 = vrot.slane %v5063, 2
      %v5065 = vmax.f32 %v5063, %v5064
      %v5066 = vrot.slane %v5065, 1
      %v5067 = vmax.f32 %v5065, %v5066
      %v5068 = vrot.slane %v4620, 4
      %v5069 = vmax.f32 %v4620, %v5068
      %v5070 = vrot.slane %v5069, 2
      %v5071 = vmax.f32 %v5069, %v5070
      %v5072 = vrot.slane %v5071, 1
      %v5073 = vmax.f32 %v5071, %v5072
      %v5074 = vrot.slane %v4623, 4
      %v5075 = vmax.f32 %v4623, %v5074
      %v5076 = vrot.slane %v5075, 2
      %v5077 = vmax.f32 %v5075, %v5076
      %v5078 = vrot.slane %v5077, 1
      %v5079 = vmax.f32 %v5077, %v5078
      %v5080 = vrot.slane %v4626, 4
      %v5081 = vmax.f32 %v4626, %v5080
      %v5082 = vrot.slane %v5081, 2
      %v5083 = vmax.f32 %v5081, %v5082
      %v5084 = vrot.slane %v5083, 1
      %v5085 = vmax.f32 %v5083, %v5084
      %v5086 = vrot.slane %v4629, 4
      %v5087 = vmax.f32 %v4629, %v5086
      %v5088 = vrot.slane %v5087, 2
      %v5089 = vmax.f32 %v5087, %v5088
      %v5090 = vrot.slane %v5089, 1
      %v5091 = vmax.f32 %v5089, %v5090
      %v5092 = vrot.slane %v4632, 4
      %v5093 = vmax.f32 %v4632, %v5092
      %v5094 = vrot.slane %v5093, 2
      %v5095 = vmax.f32 %v5093, %v5094
      %v5096 = vrot.slane %v5095, 1
      %v5097 = vmax.f32 %v5095, %v5096
      %v5098 = vrot.slane %v4635, 4
      %v5099 = vmax.f32 %v4635, %v5098
      %v5100 = vrot.slane %v5099, 2
      %v5101 = vmax.f32 %v5099, %v5100
      %v5102 = vrot.slane %v5101, 1
      %v5103 = vmax.f32 %v5101, %v5102
      %v5104 = vrot.slane %v4638, 4
      %v5105 = vmax.f32 %v4638, %v5104
      %v5106 = vrot.slane %v5105, 2
      %v5107 = vmax.f32 %v5105, %v5106
      %v5108 = vrot.slane %v5107, 1
      %v5109 = vmax.f32 %v5107, %v5108
      %v5110 = vrot.slane %v4641, 4
      %v5111 = vmax.f32 %v4641, %v5110
      %v5112 = vrot.slane %v5111, 2
      %v5113 = vmax.f32 %v5111, %v5112
      %v5114 = vrot.slane %v5113, 1
      %v5115 = vmax.f32 %v5113, %v5114
      %v5116 = vrot.slane %v4644, 4
      %v5117 = vmax.f32 %v4644, %v5116
      %v5118 = vrot.slane %v5117, 2
      %v5119 = vmax.f32 %v5117, %v5118
      %v5120 = vrot.slane %v5119, 1
      %v5121 = vmax.f32 %v5119, %v5120
      %v5122 = vrot.slane %v4647, 4
      %v5123 = vmax.f32 %v4647, %v5122
      %v5124 = vrot.slane %v5123, 2
      %v5125 = vmax.f32 %v5123, %v5124
      %v5126 = vrot.slane %v5125, 1
      %v5127 = vmax.f32 %v5125, %v5126
      %v5128 = vrot.slane %v4650, 4
      %v5129 = vmax.f32 %v4650, %v5128
      %v5130 = vrot.slane %v5129, 2
      %v5131 = vmax.f32 %v5129, %v5130
      %v5132 = vrot.slane %v5131, 1
      %v5133 = vmax.f32 %v5131, %v5132
      %v5134 = vrot.slane %v4653, 4
      %v5135 = vmax.f32 %v4653, %v5134
      %v5136 = vrot.slane %v5135, 2
      %v5137 = vmax.f32 %v5135, %v5136
      %v5138 = vrot.slane %v5137, 1
      %v5139 = vmax.f32 %v5137, %v5138
      %v5140 = vrot.slane %v4656, 4
      %v5141 = vmax.f32 %v4656, %v5140
      %v5142 = vrot.slane %v5141, 2
      %v5143 = vmax.f32 %v5141, %v5142
      %v5144 = vrot.slane %v5143, 1
      %v5145 = vmax.f32 %v5143, %v5144
      %v5146 = vrot.slane %v4659, 4
      %v5147 = vmax.f32 %v4659, %v5146
      %v5148 = vrot.slane %v5147, 2
      %v5149 = vmax.f32 %v5147, %v5148
      %v5150 = vrot.slane %v5149, 1
      %v5151 = vmax.f32 %v5149, %v5150
      %v5152 = vrot.slane %v4662, 4
      %v5153 = vmax.f32 %v4662, %v5152
      %v5154 = vrot.slane %v5153, 2
      %v5155 = vmax.f32 %v5153, %v5154
      %v5156 = vrot.slane %v5155, 1
      %v5157 = vmax.f32 %v5155, %v5156
      %v5158 = vrot.slane %v4665, 4
      %v5159 = vmax.f32 %v4665, %v5158
      %v5160 = vrot.slane %v5159, 2
      %v5161 = vmax.f32 %v5159, %v5160
      %v5162 = vrot.slane %v5161, 1
      %v5163 = vmax.f32 %v5161, %v5162
      %v5164 = vrot.slane %v4668, 4
      %v5165 = vmax.f32 %v4668, %v5164
      %v5166 = vrot.slane %v5165, 2
      %v5167 = vmax.f32 %v5165, %v5166
      %v5168 = vrot.slane %v5167, 1
      %v5169 = vmax.f32 %v5167, %v5168
      %v5170 = vrot.slane %v4671, 4
      %v5171 = vmax.f32 %v4671, %v5170
      %v5172 = vrot.slane %v5171, 2
      %v5173 = vmax.f32 %v5171, %v5172
      %v5174 = vrot.slane %v5173, 1
      %v5175 = vmax.f32 %v5173, %v5174
      %v5176 = vrot.slane %v4674, 4
      %v5177 = vmax.f32 %v4674, %v5176
      %v5178 = vrot.slane %v5177, 2
      %v5179 = vmax.f32 %v5177, %v5178
      %v5180 = vrot.slane %v5179, 1
      %v5181 = vmax.f32 %v5179, %v5180
      %v5182 = vrot.slane %v4677, 4
      %v5183 = vmax.f32 %v4677, %v5182
      %v5184 = vrot.slane %v5183, 2
      %v5185 = vmax.f32 %v5183, %v5184
      %v5186 = vrot.slane %v5185, 1
      %v5187 = vmax.f32 %v5185, %v5186
      %v5188 = vrot.slane %v4680, 4
      %v5189 = vmax.f32 %v4680, %v5188
      %v5190 = vrot.slane %v5189, 2
      %v5191 = vmax.f32 %v5189, %v5190
      %v5192 = vrot.slane %v5191, 1
      %v5193 = vmax.f32 %v5191, %v5192
      %v5194 = vrot.slane %v4683, 4
      %v5195 = vmax.f32 %v4683, %v5194
      %v5196 = vrot.slane %v5195, 2
      %v5197 = vmax.f32 %v5195, %v5196
      %v5198 = vrot.slane %v5197, 1
      %v5199 = vmax.f32 %v5197, %v5198
      %v5200 = vrot.slane %v4686, 4
      %v5201 = vmax.f32 %v4686, %v5200
      %v5202 = vrot.slane %v5201, 2
      %v5203 = vmax.f32 %v5201, %v5202
      %v5204 = vrot.slane %v5203, 1
      %v5205 = vmax.f32 %v5203, %v5204
      %v5206 = vrot.slane %v4689, 4
      %v5207 = vmax.f32 %v4689, %v5206
      %v5208 = vrot.slane %v5207, 2
      %v5209 = vmax.f32 %v5207, %v5208
      %v5210 = vrot.slane %v5209, 1
      %v5211 = vmax.f32 %v5209, %v5210
      %v5212 = vrot.slane %v4692, 4
      %v5213 = vmax.f32 %v4692, %v5212
      %v5214 = vrot.slane %v5213, 2
      %v5215 = vmax.f32 %v5213, %v5214
      %v5216 = vrot.slane %v5215, 1
      %v5217 = vmax.f32 %v5215, %v5216
      %v5218 = vrot.slane %v4695, 4
      %v5219 = vmax.f32 %v4695, %v5218
      %v5220 = vrot.slane %v5219, 2
      %v5221 = vmax.f32 %v5219, %v5220
      %v5222 = vrot.slane %v5221, 1
      %v5223 = vmax.f32 %v5221, %v5222
      %v5224 = vrot.slane %v4698, 4
      %v5225 = vmax.f32 %v4698, %v5224
      %v5226 = vrot.slane %v5225, 2
      %v5227 = vmax.f32 %v5225, %v5226
      %v5228 = vrot.slane %v5227, 1
      %v5229 = vmax.f32 %v5227, %v5228
      %v5230 = vrot.slane %v4701, 4
      %v5231 = vmax.f32 %v4701, %v5230
      %v5232 = vrot.slane %v5231, 2
      %v5233 = vmax.f32 %v5231, %v5232
      %v5234 = vrot.slane %v5233, 1
      %v5235 = vmax.f32 %v5233, %v5234
      %v5236 = vrot.slane %v4704, 4
      %v5237 = vmax.f32 %v4704, %v5236
      %v5238 = vrot.slane %v5237, 2
      %v5239 = vmax.f32 %v5237, %v5238
      %v5240 = vrot.slane %v5239, 1
      %v5241 = vmax.f32 %v5239, %v5240
      %v5242 = vrot.slane %v4707, 4
      %v5243 = vmax.f32 %v4707, %v5242
      %v5244 = vrot.slane %v5243, 2
      %v5245 = vmax.f32 %v5243, %v5244
      %v5246 = vrot.slane %v5245, 1
      %v5247 = vmax.f32 %v5245, %v5246
      %v5248 = vrot.slane %v4710, 4
      %v5249 = vmax.f32 %v4710, %v5248
      %v5250 = vrot.slane %v5249, 2
      %v5251 = vmax.f32 %v5249, %v5250
      %v5252 = vrot.slane %v5251, 1
      %v5253 = vmax.f32 %v5251, %v5252
      %v5254 = vrot.slane %v4713, 4
      %v5255 = vmax.f32 %v4713, %v5254
      %v5256 = vrot.slane %v5255, 2
      %v5257 = vmax.f32 %v5255, %v5256
      %v5258 = vrot.slane %v5257, 1
      %v5259 = vmax.f32 %v5257, %v5258
      %v5260 = vrot.slane %v4716, 4
      %v5261 = vmax.f32 %v4716, %v5260
      %v5262 = vrot.slane %v5261, 2
      %v5263 = vmax.f32 %v5261, %v5262
      %v5264 = vrot.slane %v5263, 1
      %v5265 = vmax.f32 %v5263, %v5264
      %v5266 = vrot.slane %v4719, 4
      %v5267 = vmax.f32 %v4719, %v5266
      %v5268 = vrot.slane %v5267, 2
      %v5269 = vmax.f32 %v5267, %v5268
      %v5270 = vrot.slane %v5269, 1
      %v5271 = vmax.f32 %v5269, %v5270
      %v5272 = vrot.slane %v4722, 4
      %v5273 = vmax.f32 %v4722, %v5272
      %v5274 = vrot.slane %v5273, 2
      %v5275 = vmax.f32 %v5273, %v5274
      %v5276 = vrot.slane %v5275, 1
      %v5277 = vmax.f32 %v5275, %v5276
      %v5278 = vrot.slane %v4725, 4
      %v5279 = vmax.f32 %v4725, %v5278
      %v5280 = vrot.slane %v5279, 2
      %v5281 = vmax.f32 %v5279, %v5280
      %v5282 = vrot.slane %v5281, 1
      %v5283 = vmax.f32 %v5281, %v5282
      %v5284 = vrot.slane %v4728, 4
      %v5285 = vmax.f32 %v4728, %v5284
      %v5286 = vrot.slane %v5285, 2
      %v5287 = vmax.f32 %v5285, %v5286
      %v5288 = vrot.slane %v5287, 1
      %v5289 = vmax.f32 %v5287, %v5288
      %v5290 = vrot.slane %v4731, 4
      %v5291 = vmax.f32 %v4731, %v5290
      %v5292 = vrot.slane %v5291, 2
      %v5293 = vmax.f32 %v5291, %v5292
      %v5294 = vrot.slane %v5293, 1
      %v5295 = vmax.f32 %v5293, %v5294
      %v5296 = vrot.slane %v4734, 4
      %v5297 = vmax.f32 %v4734, %v5296
      %v5298 = vrot.slane %v5297, 2
      %v5299 = vmax.f32 %v5297, %v5298
      %v5300 = vrot.slane %v5299, 1
      %v5301 = vmax.f32 %v5299, %v5300
      %v5302 = vrot.slane %v4737, 4
      %v5303 = vmax.f32 %v4737, %v5302
      %v5304 = vrot.slane %v5303, 2
      %v5305 = vmax.f32 %v5303, %v5304
      %v5306 = vrot.slane %v5305, 1
      %v5307 = vmax.f32 %v5305, %v5306
      %v5308 = vrot.slane %v4740, 4
      %v5309 = vmax.f32 %v4740, %v5308
      %v5310 = vrot.slane %v5309, 2
      %v5311 = vmax.f32 %v5309, %v5310
      %v5312 = vrot.slane %v5311, 1
      %v5313 = vmax.f32 %v5311, %v5312
      %v5314 = vrot.slane %v4743, 4
      %v5315 = vmax.f32 %v4743, %v5314
      %v5316 = vrot.slane %v5315, 2
      %v5317 = vmax.f32 %v5315, %v5316
      %v5318 = vrot.slane %v5317, 1
      %v5319 = vmax.f32 %v5317, %v5318
      %v5320 = vrot.slane %v4746, 4
      %v5321 = vmax.f32 %v4746, %v5320
      %v5322 = vrot.slane %v5321, 2
      %v5323 = vmax.f32 %v5321, %v5322
      %v5324 = vrot.slane %v5323, 1
      %v5325 = vmax.f32 %v5323, %v5324
      %v5326 = vrot.slane %v4749, 4
      %v5327 = vmax.f32 %v4749, %v5326
      %v5328 = vrot.slane %v5327, 2
      %v5329 = vmax.f32 %v5327, %v5328
      %v5330 = vrot.slane %v5329, 1
      %v5331 = vmax.f32 %v5329, %v5330
      %v5332 = vrot.slane %v4752, 4
      %v5333 = vmax.f32 %v4752, %v5332
      %v5334 = vrot.slane %v5333, 2
      %v5335 = vmax.f32 %v5333, %v5334
      %v5336 = vrot.slane %v5335, 1
      %v5337 = vmax.f32 %v5335, %v5336
      %v5338 = vrot.slane %v4755, 4
      %v5339 = vmax.f32 %v4755, %v5338
      %v5340 = vrot.slane %v5339, 2
      %v5341 = vmax.f32 %v5339, %v5340
      %v5342 = vrot.slane %v5341, 1
      %v5343 = vmax.f32 %v5341, %v5342
      %v5344 = vrot.slane %v4758, 4
      %v5345 = vmax.f32 %v4758, %v5344
      %v5346 = vrot.slane %v5345, 2
      %v5347 = vmax.f32 %v5345, %v5346
      %v5348 = vrot.slane %v5347, 1
      %v5349 = vmax.f32 %v5347, %v5348
      %v5350 = vrot.slane %v4761, 4
      %v5351 = vmax.f32 %v4761, %v5350
      %v5352 = vrot.slane %v5351, 2
      %v5353 = vmax.f32 %v5351, %v5352
      %v5354 = vrot.slane %v5353, 1
      %v5355 = vmax.f32 %v5353, %v5354
      %v5356 = vrot.slane %v4764, 4
      %v5357 = vmax.f32 %v4764, %v5356
      %v5358 = vrot.slane %v5357, 2
      %v5359 = vmax.f32 %v5357, %v5358
      %v5360 = vrot.slane %v5359, 1
      %v5361 = vmax.f32 %v5359, %v5360
      %v5362 = vrot.slane %v4767, 4
      %v5363 = vmax.f32 %v4767, %v5362
      %v5364 = vrot.slane %v5363, 2
      %v5365 = vmax.f32 %v5363, %v5364
      %v5366 = vrot.slane %v5365, 1
      %v5367 = vmax.f32 %v5365, %v5366
      %v5368 = vrot.slane %v4770, 4
      %v5369 = vmax.f32 %v4770, %v5368
      %v5370 = vrot.slane %v5369, 2
      %v5371 = vmax.f32 %v5369, %v5370
      %v5372 = vrot.slane %v5371, 1
      %v5373 = vmax.f32 %v5371, %v5372
      %v5374 = vrot.slane %v4773, 4
      %v5375 = vmax.f32 %v4773, %v5374
      %v5376 = vrot.slane %v5375, 2
      %v5377 = vmax.f32 %v5375, %v5376
      %v5378 = vrot.slane %v5377, 1
      %v5379 = vmax.f32 %v5377, %v5378
      %v5380 = vrot.slane %v4776, 4
      %v5381 = vmax.f32 %v4776, %v5380
      %v5382 = vrot.slane %v5381, 2
      %v5383 = vmax.f32 %v5381, %v5382
      %v5384 = vrot.slane %v5383, 1
      %v5385 = vmax.f32 %v5383, %v5384
      %v5386 = vrot.slane %v4779, 4
      %v5387 = vmax.f32 %v4779, %v5386
      %v5388 = vrot.slane %v5387, 2
      %v5389 = vmax.f32 %v5387, %v5388
      %v5390 = vrot.slane %v5389, 1
      %v5391 = vmax.f32 %v5389, %v5390
      %v5392 = vrot.slane %v4782, 4
      %v5393 = vmax.f32 %v4782, %v5392
      %v5394 = vrot.slane %v5393, 2
      %v5395 = vmax.f32 %v5393, %v5394
      %v5396 = vrot.slane %v5395, 1
      %v5397 = vmax.f32 %v5395, %v5396
      %v5398 = vrot.slane %v4785, 4
      %v5399 = vmax.f32 %v4785, %v5398
      %v5400 = vrot.slane %v5399, 2
      %v5401 = vmax.f32 %v5399, %v5400
      %v5402 = vrot.slane %v5401, 1
      %v5403 = vmax.f32 %v5401, %v5402
      %v5404 = vrot.slane %v4788, 4
      %v5405 = vmax.f32 %v4788, %v5404
      %v5406 = vrot.slane %v5405, 2
      %v5407 = vmax.f32 %v5405, %v5406
      %v5408 = vrot.slane %v5407, 1
      %v5409 = vmax.f32 %v5407, %v5408
      %v5410 = vrot.slane %v4791, 4
      %v5411 = vmax.f32 %v4791, %v5410
      %v5412 = vrot.slane %v5411, 2
      %v5413 = vmax.f32 %v5411, %v5412
      %v5414 = vrot.slane %v5413, 1
      %v5415 = vmax.f32 %v5413, %v5414
      %v5416 = vrot.slane %v4794, 4
      %v5417 = vmax.f32 %v4794, %v5416
      %v5418 = vrot.slane %v5417, 2
      %v5419 = vmax.f32 %v5417, %v5418
      %v5420 = vrot.slane %v5419, 1
      %v5421 = vmax.f32 %v5419, %v5420
      %v5422 = vrot.slane %v4797, 4
      %v5423 = vmax.f32 %v4797, %v5422
      %v5424 = vrot.slane %v5423, 2
      %v5425 = vmax.f32 %v5423, %v5424
      %v5426 = vrot.slane %v5425, 1
      %v5427 = vmax.f32 %v5425, %v5426
      %v5428 = vrot.slane %v4800, 4
      %v5429 = vmax.f32 %v4800, %v5428
      %v5430 = vrot.slane %v5429, 2
      %v5431 = vmax.f32 %v5429, %v5430
      %v5432 = vrot.slane %v5431, 1
      %v5433 = vmax.f32 %v5431, %v5432
      %v5434 = vrot.slane %v4803, 4
      %v5435 = vmax.f32 %v4803, %v5434
      %v5436 = vrot.slane %v5435, 2
      %v5437 = vmax.f32 %v5435, %v5436
      %v5438 = vrot.slane %v5437, 1
      %v5439 = vmax.f32 %v5437, %v5438
      %v5440 = vrot.slane %v4806, 4
      %v5441 = vmax.f32 %v4806, %v5440
      %v5442 = vrot.slane %v5441, 2
      %v5443 = vmax.f32 %v5441, %v5442
      %v5444 = vrot.slane %v5443, 1
      %v5445 = vmax.f32 %v5443, %v5444
      %v5446 = vrot.slane %v4809, 4
      %v5447 = vmax.f32 %v4809, %v5446
      %v5448 = vrot.slane %v5447, 2
      %v5449 = vmax.f32 %v5447, %v5448
      %v5450 = vrot.slane %v5449, 1
      %v5451 = vmax.f32 %v5449, %v5450
      %v5452 = vrot.slane %v4812, 4
      %v5453 = vmax.f32 %v4812, %v5452
      %v5454 = vrot.slane %v5453, 2
      %v5455 = vmax.f32 %v5453, %v5454
      %v5456 = vrot.slane %v5455, 1
      %v5457 = vmax.f32 %v5455, %v5456
      %v5458 = vrot.slane %v4815, 4
      %v5459 = vmax.f32 %v4815, %v5458
      %v5460 = vrot.slane %v5459, 2
      %v5461 = vmax.f32 %v5459, %v5460
      %v5462 = vrot.slane %v5461, 1
      %v5463 = vmax.f32 %v5461, %v5462
      %v5464 = vrot.slane %v4818, 4
      %v5465 = vmax.f32 %v4818, %v5464
      %v5466 = vrot.slane %v5465, 2
      %v5467 = vmax.f32 %v5465, %v5466
      %v5468 = vrot.slane %v5467, 1
      %v5469 = vmax.f32 %v5467, %v5468
      %v5470 = vrot.slane %v4821, 4
      %v5471 = vmax.f32 %v4821, %v5470
      %v5472 = vrot.slane %v5471, 2
      %v5473 = vmax.f32 %v5471, %v5472
      %v5474 = vrot.slane %v5473, 1
      %v5475 = vmax.f32 %v5473, %v5474
      %v5476 = vrot.slane %v4824, 4
      %v5477 = vmax.f32 %v4824, %v5476
      %v5478 = vrot.slane %v5477, 2
      %v5479 = vmax.f32 %v5477, %v5478
      %v5480 = vrot.slane %v5479, 1
      %v5481 = vmax.f32 %v5479, %v5480
      %v5482 = vrot.slane %v4827, 4
      %v5483 = vmax.f32 %v4827, %v5482
      %v5484 = vrot.slane %v5483, 2
      %v5485 = vmax.f32 %v5483, %v5484
      %v5486 = vrot.slane %v5485, 1
      %v5487 = vmax.f32 %v5485, %v5486
      %v5488 = vrot.slane %v4830, 4
      %v5489 = vmax.f32 %v4830, %v5488
      %v5490 = vrot.slane %v5489, 2
      %v5491 = vmax.f32 %v5489, %v5490
      %v5492 = vrot.slane %v5491, 1
      %v5493 = vmax.f32 %v5491, %v5492
      %v5494 = vrot.slane %v4833, 4
      %v5495 = vmax.f32 %v4833, %v5494
      %v5496 = vrot.slane %v5495, 2
      %v5497 = vmax.f32 %v5495, %v5496
      %v5498 = vrot.slane %v5497, 1
      %v5499 = vmax.f32 %v5497, %v5498
      %v5500 = vrot.slane %v4836, 4
      %v5501 = vmax.f32 %v4836, %v5500
      %v5502 = vrot.slane %v5501, 2
      %v5503 = vmax.f32 %v5501, %v5502
      %v5504 = vrot.slane %v5503, 1
      %v5505 = vmax.f32 %v5503, %v5504
      %v5506 = vrot.slane %v4839, 4
      %v5507 = vmax.f32 %v4839, %v5506
      %v5508 = vrot.slane %v5507, 2
      %v5509 = vmax.f32 %v5507, %v5508
      %v5510 = vrot.slane %v5509, 1
      %v5511 = vmax.f32 %v5509, %v5510
      %v5512 = vrot.slane %v4842, 4
      %v5513 = vmax.f32 %v4842, %v5512
      %v5514 = vrot.slane %v5513, 2
      %v5515 = vmax.f32 %v5513, %v5514
      %v5516 = vrot.slane %v5515, 1
      %v5517 = vmax.f32 %v5515, %v5516
      %v5518 = vrot.slane %v4845, 4
      %v5519 = vmax.f32 %v4845, %v5518
      %v5520 = vrot.slane %v5519, 2
      %v5521 = vmax.f32 %v5519, %v5520
      %v5522 = vrot.slane %v5521, 1
      %v5523 = vmax.f32 %v5521, %v5522
      %v5524 = vrot.slane %v4848, 4
      %v5525 = vmax.f32 %v4848, %v5524
      %v5526 = vrot.slane %v5525, 2
      %v5527 = vmax.f32 %v5525, %v5526
      %v5528 = vrot.slane %v5527, 1
      %v5529 = vmax.f32 %v5527, %v5528
      %v5530 = vrot.slane %v4851, 4
      %v5531 = vmax.f32 %v4851, %v5530
      %v5532 = vrot.slane %v5531, 2
      %v5533 = vmax.f32 %v5531, %v5532
      %v5534 = vrot.slane %v5533, 1
      %v5535 = vmax.f32 %v5533, %v5534
      %v5536 = vrot.slane %v4854, 4
      %v5537 = vmax.f32 %v4854, %v5536
      %v5538 = vrot.slane %v5537, 2
      %v5539 = vmax.f32 %v5537, %v5538
      %v5540 = vrot.slane %v5539, 1
      %v5541 = vmax.f32 %v5539, %v5540
      %v5542 = vrot.slane %v4857, 4
      %v5543 = vmax.f32 %v4857, %v5542
      %v5544 = vrot.slane %v5543, 2
      %v5545 = vmax.f32 %v5543, %v5544
      %v5546 = vrot.slane %v5545, 1
      %v5547 = vmax.f32 %v5545, %v5546
      %v5548 = vrot.slane %v4860, 4
      %v5549 = vmax.f32 %v4860, %v5548
      %v5550 = vrot.slane %v5549, 2
      %v5551 = vmax.f32 %v5549, %v5550
      %v5552 = vrot.slane %v5551, 1
      %v5553 = vmax.f32 %v5551, %v5552
      %v5554 = vrot.slane %v4863, 4
      %v5555 = vmax.f32 %v4863, %v5554
      %v5556 = vrot.slane %v5555, 2
      %v5557 = vmax.f32 %v5555, %v5556
      %v5558 = vrot.slane %v5557, 1
      %v5559 = vmax.f32 %v5557, %v5558
      %v5560 = vrot.slane %v4866, 4
      %v5561 = vmax.f32 %v4866, %v5560
      %v5562 = vrot.slane %v5561, 2
      %v5563 = vmax.f32 %v5561, %v5562
      %v5564 = vrot.slane %v5563, 1
      %v5565 = vmax.f32 %v5563, %v5564
      %v5566 = vrot.slane %v4869, 4
      %v5567 = vmax.f32 %v4869, %v5566
      %v5568 = vrot.slane %v5567, 2
      %v5569 = vmax.f32 %v5567, %v5568
      %v5570 = vrot.slane %v5569, 1
      %v5571 = vmax.f32 %v5569, %v5570
      %v5572 = vrot.slane %v4872, 4
      %v5573 = vmax.f32 %v4872, %v5572
      %v5574 = vrot.slane %v5573, 2
      %v5575 = vmax.f32 %v5573, %v5574
      %v5576 = vrot.slane %v5575, 1
      %v5577 = vmax.f32 %v5575, %v5576
      %v5578 = vrot.slane %v4875, 4
      %v5579 = vmax.f32 %v4875, %v5578
      %v5580 = vrot.slane %v5579, 2
      %v5581 = vmax.f32 %v5579, %v5580
      %v5582 = vrot.slane %v5581, 1
      %v5583 = vmax.f32 %v5581, %v5582
      %v5584 = vrot.slane %v4878, 4
      %v5585 = vmax.f32 %v4878, %v5584
      %v5586 = vrot.slane %v5585, 2
      %v5587 = vmax.f32 %v5585, %v5586
      %v5588 = vrot.slane %v5587, 1
      %v5589 = vmax.f32 %v5587, %v5588
      %v5590 = vrot.slane %v4881, 4
      %v5591 = vmax.f32 %v4881, %v5590
      %v5592 = vrot.slane %v5591, 2
      %v5593 = vmax.f32 %v5591, %v5592
      %v5594 = vrot.slane %v5593, 1
      %v5595 = vmax.f32 %v5593, %v5594
      %v5596 = vrot.slane %v4884, 4
      %v5597 = vmax.f32 %v4884, %v5596
      %v5598 = vrot.slane %v5597, 2
      %v5599 = vmax.f32 %v5597, %v5598
      %v5600 = vrot.slane %v5599, 1
      %v5601 = vmax.f32 %v5599, %v5600
      %v5602 = vrot.slane %v4887, 4
      %v5603 = vmax.f32 %v4887, %v5602
      %v5604 = vrot.slane %v5603, 2
      %v5605 = vmax.f32 %v5603, %v5604
      %v5606 = vrot.slane %v5605, 1
      %v5607 = vmax.f32 %v5605, %v5606
      %v5608 = vrot.slane %v4890, 4
      %v5609 = vmax.f32 %v4890, %v5608
      %v5610 = vrot.slane %v5609, 2
      %v5611 = vmax.f32 %v5609, %v5610
      %v5612 = vrot.slane %v5611, 1
      %v5613 = vmax.f32 %v5611, %v5612
      %v5614 = vrot.slane %v4893, 4
      %v5615 = vmax.f32 %v4893, %v5614
      %v5616 = vrot.slane %v5615, 2
      %v5617 = vmax.f32 %v5615, %v5616
      %v5618 = vrot.slane %v5617, 1
      %v5619 = vmax.f32 %v5617, %v5618
      %v5620 = vrot.slane %v4896, 4
      %v5621 = vmax.f32 %v4896, %v5620
      %v5622 = vrot.slane %v5621, 2
      %v5623 = vmax.f32 %v5621, %v5622
      %v5624 = vrot.slane %v5623, 1
      %v5625 = vmax.f32 %v5623, %v5624
      %v5626 = vrot.slane %v4899, 4
      %v5627 = vmax.f32 %v4899, %v5626
      %v5628 = vrot.slane %v5627, 2
      %v5629 = vmax.f32 %v5627, %v5628
      %v5630 = vrot.slane %v5629, 1
      %v5631 = vmax.f32 %v5629, %v5630
      %v5632 = vrot.slane %v4902, 4
      %v5633 = vmax.f32 %v4902, %v5632
      %v5634 = vrot.slane %v5633, 2
      %v5635 = vmax.f32 %v5633, %v5634
      %v5636 = vrot.slane %v5635, 1
      %v5637 = vmax.f32 %v5635, %v5636
      %v5638 = vrot.slane %v4905, 4
      %v5639 = vmax.f32 %v4905, %v5638
      %v5640 = vrot.slane %v5639, 2
      %v5641 = vmax.f32 %v5639, %v5640
      %v5642 = vrot.slane %v5641, 1
      %v5643 = vmax.f32 %v5641, %v5642
      %v5644 = vrot.slane %v4908, 4
      %v5645 = vmax.f32 %v4908, %v5644
      %v5646 = vrot.slane %v5645, 2
      %v5647 = vmax.f32 %v5645, %v5646
      %v5648 = vrot.slane %v5647, 1
      %v5649 = vmax.f32 %v5647, %v5648
      %v5650 = vrot.slane %v4911, 4
      %v5651 = vmax.f32 %v4911, %v5650
      %v5652 = vrot.slane %v5651, 2
      %v5653 = vmax.f32 %v5651, %v5652
      %v5654 = vrot.slane %v5653, 1
      %v5655 = vmax.f32 %v5653, %v5654
      %v5656 = vrot.slane %v4914, 4
      %v5657 = vmax.f32 %v4914, %v5656
      %v5658 = vrot.slane %v5657, 2
      %v5659 = vmax.f32 %v5657, %v5658
      %v5660 = vrot.slane %v5659, 1
      %v5661 = vmax.f32 %v5659, %v5660
      %v5662 = vrot.slane %v4917, 4
      %v5663 = vmax.f32 %v4917, %v5662
      %v5664 = vrot.slane %v5663, 2
      %v5665 = vmax.f32 %v5663, %v5664
      %v5666 = vrot.slane %v5665, 1
      %v5667 = vmax.f32 %v5665, %v5666
      %v5668 = vrot.slane %v4920, 4
      %v5669 = vmax.f32 %v4920, %v5668
      %v5670 = vrot.slane %v5669, 2
      %v5671 = vmax.f32 %v5669, %v5670
      %v5672 = vrot.slane %v5671, 1
      %v5673 = vmax.f32 %v5671, %v5672
      %v5674 = vrot.slane %v4923, 4
      %v5675 = vmax.f32 %v4923, %v5674
      %v5676 = vrot.slane %v5675, 2
      %v5677 = vmax.f32 %v5675, %v5676
      %v5678 = vrot.slane %v5677, 1
      %v5679 = vmax.f32 %v5677, %v5678
      %v5680 = vrot.slane %v4926, 4
      %v5681 = vmax.f32 %v4926, %v5680
      %v5682 = vrot.slane %v5681, 2
      %v5683 = vmax.f32 %v5681, %v5682
      %v5684 = vrot.slane %v5683, 1
      %v5685 = vmax.f32 %v5683, %v5684
      %v5686 = vrot.slane %v4929, 4
      %v5687 = vmax.f32 %v4929, %v5686
      %v5688 = vrot.slane %v5687, 2
      %v5689 = vmax.f32 %v5687, %v5688
      %v5690 = vrot.slane %v5689, 1
      %v5691 = vmax.f32 %v5689, %v5690
      %v5692 = vrot.slane %v4932, 4
      %v5693 = vmax.f32 %v4932, %v5692
      %v5694 = vrot.slane %v5693, 2
      %v5695 = vmax.f32 %v5693, %v5694
      %v5696 = vrot.slane %v5695, 1
      %v5697 = vmax.f32 %v5695, %v5696
      %v5698 = vrot.slane %v4935, 4
      %v5699 = vmax.f32 %v4935, %v5698
      %v5700 = vrot.slane %v5699, 2
      %v5701 = vmax.f32 %v5699, %v5700
      %v5702 = vrot.slane %v5701, 1
      %v5703 = vmax.f32 %v5701, %v5702
      %v5704 = vsub.f32 %v4554, %v4941
      %v5705 = vsub.f32 %v4557, %v4947
      %v5706 = vsub.f32 %v4560, %v4953
      %v5707 = vsub.f32 %v4563, %v4959
      %v5708 = vsub.f32 %v4566, %v4965
      %v5709 = vsub.f32 %v4569, %v4971
      %v5710 = vsub.f32 %v4572, %v4977
      %v5711 = vsub.f32 %v4575, %v4983
      %v5712 = vsub.f32 %v4578, %v4989
      %v5713 = vsub.f32 %v4581, %v4995
      %v5714 = vsub.f32 %v4584, %v5001
      %v5715 = vsub.f32 %v4587, %v5007
      %v5716 = vsub.f32 %v4590, %v5013
      %v5717 = vsub.f32 %v4593, %v5019
      %v5718 = vsub.f32 %v4596, %v5025
      %v5719 = vsub.f32 %v4599, %v5031
      %v5720 = vsub.f32 %v4602, %v5037
      %v5721 = vsub.f32 %v4605, %v5043
      %v5722 = vsub.f32 %v4608, %v5049
      %v5723 = vsub.f32 %v4611, %v5055
      %v5724 = vsub.f32 %v4614, %v5061
      %v5725 = vsub.f32 %v4617, %v5067
      %v5726 = vsub.f32 %v4620, %v5073
      %v5727 = vsub.f32 %v4623, %v5079
      %v5728 = vsub.f32 %v4626, %v5085
      %v5729 = vsub.f32 %v4629, %v5091
      %v5730 = vsub.f32 %v4632, %v5097
      %v5731 = vsub.f32 %v4635, %v5103
      %v5732 = vsub.f32 %v4638, %v5109
      %v5733 = vsub.f32 %v4641, %v5115
      %v5734 = vsub.f32 %v4644, %v5121
      %v5735 = vsub.f32 %v4647, %v5127
      %v5736 = vsub.f32 %v4650, %v5133
      %v5737 = vsub.f32 %v4653, %v5139
      %v5738 = vsub.f32 %v4656, %v5145
      %v5739 = vsub.f32 %v4659, %v5151
      %v5740 = vsub.f32 %v4662, %v5157
      %v5741 = vsub.f32 %v4665, %v5163
      %v5742 = vsub.f32 %v4668, %v5169
      %v5743 = vsub.f32 %v4671, %v5175
      %v5744 = vsub.f32 %v4674, %v5181
      %v5745 = vsub.f32 %v4677, %v5187
      %v5746 = vsub.f32 %v4680, %v5193
      %v5747 = vsub.f32 %v4683, %v5199
      %v5748 = vsub.f32 %v4686, %v5205
      %v5749 = vsub.f32 %v4689, %v5211
      %v5750 = vsub.f32 %v4692, %v5217
      %v5751 = vsub.f32 %v4695, %v5223
      %v5752 = vsub.f32 %v4698, %v5229
      %v5753 = vsub.f32 %v4701, %v5235
      %v5754 = vsub.f32 %v4704, %v5241
      %v5755 = vsub.f32 %v4707, %v5247
      %v5756 = vsub.f32 %v4710, %v5253
      %v5757 = vsub.f32 %v4713, %v5259
      %v5758 = vsub.f32 %v4716, %v5265
      %v5759 = vsub.f32 %v4719, %v5271
      %v5760 = vsub.f32 %v4722, %v5277
      %v5761 = vsub.f32 %v4725, %v5283
      %v5762 = vsub.f32 %v4728, %v5289
      %v5763 = vsub.f32 %v4731, %v5295
      %v5764 = vsub.f32 %v4734, %v5301
      %v5765 = vsub.f32 %v4737, %v5307
      %v5766 = vsub.f32 %v4740, %v5313
      %v5767 = vsub.f32 %v4743, %v5319
      %v5768 = vsub.f32 %v4746, %v5325
      %v5769 = vsub.f32 %v4749, %v5331
      %v5770 = vsub.f32 %v4752, %v5337
      %v5771 = vsub.f32 %v4755, %v5343
      %v5772 = vsub.f32 %v4758, %v5349
      %v5773 = vsub.f32 %v4761, %v5355
      %v5774 = vsub.f32 %v4764, %v5361
      %v5775 = vsub.f32 %v4767, %v5367
      %v5776 = vsub.f32 %v4770, %v5373
      %v5777 = vsub.f32 %v4773, %v5379
      %v5778 = vsub.f32 %v4776, %v5385
      %v5779 = vsub.f32 %v4779, %v5391
      %v5780 = vsub.f32 %v4782, %v5397
      %v5781 = vsub.f32 %v4785, %v5403
      %v5782 = vsub.f32 %v4788, %v5409
      %v5783 = vsub.f32 %v4791, %v5415
      %v5784 = vsub.f32 %v4794, %v5421
      %v5785 = vsub.f32 %v4797, %v5427
      %v5786 = vsub.f32 %v4800, %v5433
      %v5787 = vsub.f32 %v4803, %v5439
      %v5788 = vsub.f32 %v4806, %v5445
      %v5789 = vsub.f32 %v4809, %v5451
      %v5790 = vsub.f32 %v4812, %v5457
      %v5791 = vsub.f32 %v4815, %v5463
      %v5792 = vsub.f32 %v4818, %v5469
      %v5793 = vsub.f32 %v4821, %v5475
      %v5794 = vsub.f32 %v4824, %v5481
      %v5795 = vsub.f32 %v4827, %v5487
      %v5796 = vsub.f32 %v4830, %v5493
      %v5797 = vsub.f32 %v4833, %v5499
      %v5798 = vsub.f32 %v4836, %v5505
      %v5799 = vsub.f32 %v4839, %v5511
      %v5800 = vsub.f32 %v4842, %v5517
      %v5801 = vsub.f32 %v4845, %v5523
      %v5802 = vsub.f32 %v4848, %v5529
      %v5803 = vsub.f32 %v4851, %v5535
      %v5804 = vsub.f32 %v4854, %v5541
      %v5805 = vsub.f32 %v4857, %v5547
      %v5806 = vsub.f32 %v4860, %v5553
      %v5807 = vsub.f32 %v4863, %v5559
      %v5808 = vsub.f32 %v4866, %v5565
      %v5809 = vsub.f32 %v4869, %v5571
      %v5810 = vsub.f32 %v4872, %v5577
      %v5811 = vsub.f32 %v4875, %v5583
      %v5812 = vsub.f32 %v4878, %v5589
      %v5813 = vsub.f32 %v4881, %v5595
      %v5814 = vsub.f32 %v4884, %v5601
      %v5815 = vsub.f32 %v4887, %v5607
      %v5816 = vsub.f32 %v4890, %v5613
      %v5817 = vsub.f32 %v4893, %v5619
      %v5818 = vsub.f32 %v4896, %v5625
      %v5819 = vsub.f32 %v4899, %v5631
      %v5820 = vsub.f32 %v4902, %v5637
      %v5821 = vsub.f32 %v4905, %v5643
      %v5822 = vsub.f32 %v4908, %v5649
      %v5823 = vsub.f32 %v4911, %v5655
      %v5824 = vsub.f32 %v4914, %v5661
      %v5825 = vsub.f32 %v4917, %v5667
      %v5826 = vsub.f32 %v4920, %v5673
      %v5827 = vsub.f32 %v4923, %v5679
      %v5828 = vsub.f32 %v4926, %v5685
      %v5829 = vsub.f32 %v4929, %v5691
      %v5830 = vsub.f32 %v4932, %v5697
      %v5831 = vsub.f32 %v4935, %v5703
      %v5832 = vmul.f32 %v5704, 1.442695
      %v5833 = vpow.pop %v5832
      %v5834 = vmul.f32 %v5705, 1.442695
      %v5835 = vpow.pop %v5834
      %v5836 = vmul.f32 %v5706, 1.442695
      %v5837 = vpow.pop %v5836
      %v5838 = vmul.f32 %v5707, 1.442695
      %v5839 = vpow.pop %v5838
      %v5840 = vmul.f32 %v5708, 1.442695
      %v5841 = vpow.pop %v5840
      %v5842 = vmul.f32 %v5709, 1.442695
      %v5843 = vpow.pop %v5842
      %v5844 = vmul.f32 %v5710, 1.442695
      %v5845 = vpow.pop %v5844
      %v5846 = vmul.f32 %v5711, 1.442695
      %v5847 = vpow.pop %v5846
      %v5848 = vmul.f32 %v5712, 1.442695
      %v5849 = vpow.pop %v5848
      %v5850 = vmul.f32 %v5713, 1.442695
      %v5851 = vpow.pop %v5850
      %v5852 = vmul.f32 %v5714, 1.442695
      %v5853 = vpow.pop %v5852
      %v5854 = vmul.f32 %v5715, 1.442695
      %v5855 = vpow.pop %v5854
      %v5856 = vmul.f32 %v5716, 1.442695
      %v5857 = vpow.pop %v5856
      %v5858 = vmul.f32 %v5717, 1.442695
      %v5859 = vpow.pop %v5858
      %v5860 = vmul.f32 %v5718, 1.442695
      %v5861 = vpow.pop %v5860
      %v5862 = vmul.f32 %v5719, 1.442695
      %v5863 = vpow.pop %v5862
      %v5864 = vmul.f32 %v5720, 1.442695
      %v5865 = vpow.pop %v5864
      %v5866 = vmul.f32 %v5721, 1.442695
      %v5867 = vpow.pop %v5866
      %v5868 = vmul.f32 %v5722, 1.442695
      %v5869 = vpow.pop %v5868
      %v5870 = vmul.f32 %v5723, 1.442695
      %v5871 = vpow.pop %v5870
      %v5872 = vmul.f32 %v5724, 1.442695
      %v5873 = vpow.pop %v5872
      %v5874 = vmul.f32 %v5725, 1.442695
      %v5875 = vpow.pop %v5874
      %v5876 = vmul.f32 %v5726, 1.442695
      %v5877 = vpow.pop %v5876
      %v5878 = vmul.f32 %v5727, 1.442695
      %v5879 = vpow.pop %v5878
      %v5880 = vmul.f32 %v5728, 1.442695
      %v5881 = vpow.pop %v5880
      %v5882 = vmul.f32 %v5729, 1.442695
      %v5883 = vpow.pop %v5882
      %v5884 = vmul.f32 %v5730, 1.442695
      %v5885 = vpow.pop %v5884
      %v5886 = vmul.f32 %v5731, 1.442695
      %v5887 = vpow.pop %v5886
      %v5888 = vmul.f32 %v5732, 1.442695
      %v5889 = vpow.pop %v5888
      %v5890 = vmul.f32 %v5733, 1.442695
      %v5891 = vpow.pop %v5890
      %v5892 = vmul.f32 %v5734, 1.442695
      %v5893 = vpow.pop %v5892
      %v5894 = vmul.f32 %v5735, 1.442695
      %v5895 = vpow.pop %v5894
      %v5896 = vmul.f32 %v5736, 1.442695
      %v5897 = vpow.pop %v5896
      %v5898 = vmul.f32 %v5737, 1.442695
      %v5899 = vpow.pop %v5898
      %v5900 = vmul.f32 %v5738, 1.442695
      %v5901 = vpow.pop %v5900
      %v5902 = vmul.f32 %v5739, 1.442695
      %v5903 = vpow.pop %v5902
      %v5904 = vmul.f32 %v5740, 1.442695
      %v5905 = vpow.pop %v5904
      %v5906 = vmul.f32 %v5741, 1.442695
      %v5907 = vpow.pop %v5906
      %v5908 = vmul.f32 %v5742, 1.442695
      %v5909 = vpow.pop %v5908
      %v5910 = vmul.f32 %v5743, 1.442695
      %v5911 = vpow.pop %v5910
      %v5912 = vmul.f32 %v5744, 1.442695
      %v5913 = vpow.pop %v5912
      %v5914 = vmul.f32 %v5745, 1.442695
      %v5915 = vpow.pop %v5914
      %v5916 = vmul.f32 %v5746, 1.442695
      %v5917 = vpow.pop %v5916
      %v5918 = vmul.f32 %v5747, 1.442695
      %v5919 = vpow.pop %v5918
      %v5920 = vmul.f32 %v5748, 1.442695
      %v5921 = vpow.pop %v5920
      %v5922 = vmul.f32 %v5749, 1.442695
      %v5923 = vpow.pop %v5922
      %v5924 = vmul.f32 %v5750, 1.442695
      %v5925 = vpow.pop %v5924
      %v5926 = vmul.f32 %v5751, 1.442695
      %v5927 = vpow.pop %v5926
      %v5928 = vmul.f32 %v5752, 1.442695
      %v5929 = vpow.pop %v5928
      %v5930 = vmul.f32 %v5753, 1.442695
      %v5931 = vpow.pop %v5930
      %v5932 = vmul.f32 %v5754, 1.442695
      %v5933 = vpow.pop %v5932
      %v5934 = vmul.f32 %v5755, 1.442695
      %v5935 = vpow.pop %v5934
      %v5936 = vmul.f32 %v5756, 1.442695
      %v5937 = vpow.pop %v5936
      %v5938 = vmul.f32 %v5757, 1.442695
      %v5939 = vpow.pop %v5938
      %v5940 = vmul.f32 %v5758, 1.442695
      %v5941 = vpow.pop %v5940
      %v5942 = vmul.f32 %v5759, 1.442695
      %v5943 = vpow.pop %v5942
      %v5944 = vmul.f32 %v5760, 1.442695
      %v5945 = vpow.pop %v5944
      %v5946 = vmul.f32 %v5761, 1.442695
      %v5947 = vpow.pop %v5946
      %v5948 = vmul.f32 %v5762, 1.442695
      %v5949 = vpow.pop %v5948
      %v5950 = vmul.f32 %v5763, 1.442695
      %v5951 = vpow.pop %v5950
      %v5952 = vmul.f32 %v5764, 1.442695
      %v5953 = vpow.pop %v5952
      %v5954 = vmul.f32 %v5765, 1.442695
      %v5955 = vpow.pop %v5954
      %v5956 = vmul.f32 %v5766, 1.442695
      %v5957 = vpow.pop %v5956
      %v5958 = vmul.f32 %v5767, 1.442695
      %v5959 = vpow.pop %v5958
      %v5960 = vmul.f32 %v5768, 1.442695
      %v5961 = vpow.pop %v5960
      %v5962 = vmul.f32 %v5769, 1.442695
      %v5963 = vpow.pop %v5962
      %v5964 = vmul.f32 %v5770, 1.442695
      %v5965 = vpow.pop %v5964
      %v5966 = vmul.f32 %v5771, 1.442695
      %v5967 = vpow.pop %v5966
      %v5968 = vmul.f32 %v5772, 1.442695
      %v5969 = vpow.pop %v5968
      %v5970 = vmul.f32 %v5773, 1.442695
      %v5971 = vpow.pop %v5970
      %v5972 = vmul.f32 %v5774, 1.442695
      %v5973 = vpow.pop %v5972
      %v5974 = vmul.f32 %v5775, 1.442695
      %v5975 = vpow.pop %v5974
      %v5976 = vmul.f32 %v5776, 1.442695
      %v5977 = vpow.pop %v5976
      %v5978 = vmul.f32 %v5777, 1.442695
      %v5979 = vpow.pop %v5978
      %v5980 = vmul.f32 %v5778, 1.442695
      %v5981 = vpow.pop %v5980
      %v5982 = vmul.f32 %v5779, 1.442695
      %v5983 = vpow.pop %v5982
      %v5984 = vmul.f32 %v5780, 1.442695
      %v5985 = vpow.pop %v5984
      %v5986 = vmul.f32 %v5781, 1.442695
      %v5987 = vpow.pop %v5986
      %v5988 = vmul.f32 %v5782, 1.442695
      %v5989 = vpow.pop %v5988
      %v5990 = vmul.f32 %v5783, 1.442695
      %v5991 = vpow.pop %v5990
      %v5992 = vmul.f32 %v5784, 1.442695
      %v5993 = vpow.pop %v5992
      %v5994 = vmul.f32 %v5785, 1.442695
      %v5995 = vpow.pop %v5994
      %v5996 = vmul.f32 %v5786, 1.442695
      %v5997 = vpow.pop %v5996
      %v5998 = vmul.f32 %v5787, 1.442695
      %v5999 = vpow.pop %v5998
      %v6000 = vmul.f32 %v5788, 1.442695
      %v6001 = vpow.pop %v6000
      %v6002 = vmul.f32 %v5789, 1.442695
      %v6003 = vpow.pop %v6002
      %v6004 = vmul.f32 %v5790, 1.442695
      %v6005 = vpow.pop %v6004
      %v6006 = vmul.f32 %v5791, 1.442695
      %v6007 = vpow.pop %v6006
      %v6008 = vmul.f32 %v5792, 1.442695
      %v6009 = vpow.pop %v6008
      %v6010 = vmul.f32 %v5793, 1.442695
      %v6011 = vpow.pop %v6010
      %v6012 = vmul.f32 %v5794, 1.442695
      %v6013 = vpow.pop %v6012
      %v6014 = vmul.f32 %v5795, 1.442695
      %v6015 = vpow.pop %v6014
      %v6016 = vmul.f32 %v5796, 1.442695
      %v6017 = vpow.pop %v6016
      %v6018 = vmul.f32 %v5797, 1.442695
      %v6019 = vpow.pop %v6018
      %v6020 = vmul.f32 %v5798, 1.442695
      %v6021 = vpow.pop %v6020
      %v6022 = vmul.f32 %v5799, 1.442695
      %v6023 = vpow.pop %v6022
      %v6024 = vmul.f32 %v5800, 1.442695
      %v6025 = vpow.pop %v6024
      %v6026 = vmul.f32 %v5801, 1.442695
      %v6027 = vpow.pop %v6026
      %v6028 = vmul.f32 %v5802, 1.442695
      %v6029 = vpow.pop %v6028
      %v6030 = vmul.f32 %v5803, 1.442695
      %v6031 = vpow.pop %v6030
      %v6032 = vmul.f32 %v5804, 1.442695
      %v6033 = vpow.pop %v6032
      %v6034 = vmul.f32 %v5805, 1.442695
      %v6035 = vpow.pop %v6034
      %v6036 = vmul.f32 %v5806, 1.442695
      %v6037 = vpow.pop %v6036
      %v6038 = vmul.f32 %v5807, 1.442695
      %v6039 = vpow.pop %v6038
      %v6040 = vmul.f32 %v5808, 1.442695
      %v6041 = vpow.pop %v6040
      %v6042 = vmul.f32 %v5809, 1.442695
      %v6043 = vpow.pop %v6042
      %v6044 = vmul.f32 %v5810, 1.442695
      %v6045 = vpow.pop %v6044
      %v6046 = vmul.f32 %v5811, 1.442695
      %v6047 = vpow.pop %v6046
      %v6048 = vmul.f32 %v5812, 1.442695
      %v6049 = vpow.pop %v6048
      %v6050 = vmul.f32 %v5813, 1.442695
      %v6051 = vpow.pop %v6050
      %v6052 = vmul.f32 %v5814, 1.442695
      %v6053 = vpow.pop %v6052
      %v6054 = vmul.f32 %v5815, 1.442695
      %v6055 = vpow.pop %v6054
      %v6056 = vmul.f32 %v5816, 1.442695
      %v6057 = vpow.pop %v6056
      %v6058 = vmul.f32 %v5817, 1.442695
      %v6059 = vpow.pop %v6058
      %v6060 = vmul.f32 %v5818, 1.442695
      %v6061 = vpow.pop %v6060
      %v6062 = vmul.f32 %v5819, 1.442695
      %v6063 = vpow.pop %v6062
      %v6064 = vmul.f32 %v5820, 1.442695
      %v6065 = vpow.pop %v6064
      %v6066 = vmul.f32 %v5821, 1.442695
      %v6067 = vpow.pop %v6066
      %v6068 = vmul.f32 %v5822, 1.442695
      %v6069 = vpow.pop %v6068
      %v6070 = vmul.f32 %v5823, 1.442695
      %v6071 = vpow.pop %v6070
      %v6072 = vmul.f32 %v5824, 1.442695
      %v6073 = vpow.pop %v6072
      %v6074 = vmul.f32 %v5825, 1.442695
      %v6075 = vpow.pop %v6074
      %v6076 = vmul.f32 %v5826, 1.442695
      %v6077 = vpow.pop %v6076
      %v6078 = vmul.f32 %v5827, 1.442695
      %v6079 = vpow.pop %v6078
      %v6080 = vmul.f32 %v5828, 1.442695
      %v6081 = vpow.pop %v6080
      %v6082 = vmul.f32 %v5829, 1.442695
      %v6083 = vpow.pop %v6082
      %v6084 = vmul.f32 %v5830, 1.442695
      %v6085 = vpow.pop %v6084
      %v6086 = vmul.f32 %v5831, 1.442695
      %v6087 = vpow.pop %v6086
      %v6088 = vrot.slane %v5833, 4
      %v6089 = vadd.f32 %v5833, %v6088
      %v6090 = vrot.slane %v6089, 2
      %v6091 = vadd.f32 %v6089, %v6090
      %v6092 = vrot.slane %v6091, 1
      %v6093 = vadd.f32 %v6091, %v6092
      %v6094 = vrot.slane %v5835, 4
      %v6095 = vadd.f32 %v5835, %v6094
      %v6096 = vrot.slane %v6095, 2
      %v6097 = vadd.f32 %v6095, %v6096
      %v6098 = vrot.slane %v6097, 1
      %v6099 = vadd.f32 %v6097, %v6098
      %v6100 = vrot.slane %v5837, 4
      %v6101 = vadd.f32 %v5837, %v6100
      %v6102 = vrot.slane %v6101, 2
      %v6103 = vadd.f32 %v6101, %v6102
      %v6104 = vrot.slane %v6103, 1
      %v6105 = vadd.f32 %v6103, %v6104
      %v6106 = vrot.slane %v5839, 4
      %v6107 = vadd.f32 %v5839, %v6106
      %v6108 = vrot.slane %v6107, 2
      %v6109 = vadd.f32 %v6107, %v6108
      %v6110 = vrot.slane %v6109, 1
      %v6111 = vadd.f32 %v6109, %v6110
      %v6112 = vrot.slane %v5841, 4
      %v6113 = vadd.f32 %v5841, %v6112
      %v6114 = vrot.slane %v6113, 2
      %v6115 = vadd.f32 %v6113, %v6114
      %v6116 = vrot.slane %v6115, 1
      %v6117 = vadd.f32 %v6115, %v6116
      %v6118 = vrot.slane %v5843, 4
      %v6119 = vadd.f32 %v5843, %v6118
      %v6120 = vrot.slane %v6119, 2
      %v6121 = vadd.f32 %v6119, %v6120
      %v6122 = vrot.slane %v6121, 1
      %v6123 = vadd.f32 %v6121, %v6122
      %v6124 = vrot.slane %v5845, 4
      %v6125 = vadd.f32 %v5845, %v6124
      %v6126 = vrot.slane %v6125, 2
      %v6127 = vadd.f32 %v6125, %v6126
      %v6128 = vrot.slane %v6127, 1
      %v6129 = vadd.f32 %v6127, %v6128
      %v6130 = vrot.slane %v5847, 4
      %v6131 = vadd.f32 %v5847, %v6130
      %v6132 = vrot.slane %v6131, 2
      %v6133 = vadd.f32 %v6131, %v6132
      %v6134 = vrot.slane %v6133, 1
      %v6135 = vadd.f32 %v6133, %v6134
      %v6136 = vrot.slane %v5849, 4
      %v6137 = vadd.f32 %v5849, %v6136
      %v6138 = vrot.slane %v6137, 2
      %v6139 = vadd.f32 %v6137, %v6138
      %v6140 = vrot.slane %v6139, 1
      %v6141 = vadd.f32 %v6139, %v6140
      %v6142 = vrot.slane %v5851, 4
      %v6143 = vadd.f32 %v5851, %v6142
      %v6144 = vrot.slane %v6143, 2
      %v6145 = vadd.f32 %v6143, %v6144
      %v6146 = vrot.slane %v6145, 1
      %v6147 = vadd.f32 %v6145, %v6146
      %v6148 = vrot.slane %v5853, 4
      %v6149 = vadd.f32 %v5853, %v6148
      %v6150 = vrot.slane %v6149, 2
      %v6151 = vadd.f32 %v6149, %v6150
      %v6152 = vrot.slane %v6151, 1
      %v6153 = vadd.f32 %v6151, %v6152
      %v6154 = vrot.slane %v5855, 4
      %v6155 = vadd.f32 %v5855, %v6154
      %v6156 = vrot.slane %v6155, 2
      %v6157 = vadd.f32 %v6155, %v6156
      %v6158 = vrot.slane %v6157, 1
      %v6159 = vadd.f32 %v6157, %v6158
      %v6160 = vrot.slane %v5857, 4
      %v6161 = vadd.f32 %v5857, %v6160
      %v6162 = vrot.slane %v6161, 2
      %v6163 = vadd.f32 %v6161, %v6162
      %v6164 = vrot.slane %v6163, 1
      %v6165 = vadd.f32 %v6163, %v6164
      %v6166 = vrot.slane %v5859, 4
      %v6167 = vadd.f32 %v5859, %v6166
      %v6168 = vrot.slane %v6167, 2
      %v6169 = vadd.f32 %v6167, %v6168
      %v6170 = vrot.slane %v6169, 1
      %v6171 = vadd.f32 %v6169, %v6170
      %v6172 = vrot.slane %v5861, 4
      %v6173 = vadd.f32 %v5861, %v6172
      %v6174 = vrot.slane %v6173, 2
      %v6175 = vadd.f32 %v6173, %v6174
      %v6176 = vrot.slane %v6175, 1
      %v6177 = vadd.f32 %v6175, %v6176
      %v6178 = vrot.slane %v5863, 4
      %v6179 = vadd.f32 %v5863, %v6178
      %v6180 = vrot.slane %v6179, 2
      %v6181 = vadd.f32 %v6179, %v6180
      %v6182 = vrot.slane %v6181, 1
      %v6183 = vadd.f32 %v6181, %v6182
      %v6184 = vrot.slane %v5865, 4
      %v6185 = vadd.f32 %v5865, %v6184
      %v6186 = vrot.slane %v6185, 2
      %v6187 = vadd.f32 %v6185, %v6186
      %v6188 = vrot.slane %v6187, 1
      %v6189 = vadd.f32 %v6187, %v6188
      %v6190 = vrot.slane %v5867, 4
      %v6191 = vadd.f32 %v5867, %v6190
      %v6192 = vrot.slane %v6191, 2
      %v6193 = vadd.f32 %v6191, %v6192
      %v6194 = vrot.slane %v6193, 1
      %v6195 = vadd.f32 %v6193, %v6194
      %v6196 = vrot.slane %v5869, 4
      %v6197 = vadd.f32 %v5869, %v6196
      %v6198 = vrot.slane %v6197, 2
      %v6199 = vadd.f32 %v6197, %v6198
      %v6200 = vrot.slane %v6199, 1
      %v6201 = vadd.f32 %v6199, %v6200
      %v6202 = vrot.slane %v5871, 4
      %v6203 = vadd.f32 %v5871, %v6202
      %v6204 = vrot.slane %v6203, 2
      %v6205 = vadd.f32 %v6203, %v6204
      %v6206 = vrot.slane %v6205, 1
      %v6207 = vadd.f32 %v6205, %v6206
      %v6208 = vrot.slane %v5873, 4
      %v6209 = vadd.f32 %v5873, %v6208
      %v6210 = vrot.slane %v6209, 2
      %v6211 = vadd.f32 %v6209, %v6210
      %v6212 = vrot.slane %v6211, 1
      %v6213 = vadd.f32 %v6211, %v6212
      %v6214 = vrot.slane %v5875, 4
      %v6215 = vadd.f32 %v5875, %v6214
      %v6216 = vrot.slane %v6215, 2
      %v6217 = vadd.f32 %v6215, %v6216
      %v6218 = vrot.slane %v6217, 1
      %v6219 = vadd.f32 %v6217, %v6218
      %v6220 = vrot.slane %v5877, 4
      %v6221 = vadd.f32 %v5877, %v6220
      %v6222 = vrot.slane %v6221, 2
      %v6223 = vadd.f32 %v6221, %v6222
      %v6224 = vrot.slane %v6223, 1
      %v6225 = vadd.f32 %v6223, %v6224
      %v6226 = vrot.slane %v5879, 4
      %v6227 = vadd.f32 %v5879, %v6226
      %v6228 = vrot.slane %v6227, 2
      %v6229 = vadd.f32 %v6227, %v6228
      %v6230 = vrot.slane %v6229, 1
      %v6231 = vadd.f32 %v6229, %v6230
      %v6232 = vrot.slane %v5881, 4
      %v6233 = vadd.f32 %v5881, %v6232
      %v6234 = vrot.slane %v6233, 2
      %v6235 = vadd.f32 %v6233, %v6234
      %v6236 = vrot.slane %v6235, 1
      %v6237 = vadd.f32 %v6235, %v6236
      %v6238 = vrot.slane %v5883, 4
      %v6239 = vadd.f32 %v5883, %v6238
      %v6240 = vrot.slane %v6239, 2
      %v6241 = vadd.f32 %v6239, %v6240
      %v6242 = vrot.slane %v6241, 1
      %v6243 = vadd.f32 %v6241, %v6242
      %v6244 = vrot.slane %v5885, 4
      %v6245 = vadd.f32 %v5885, %v6244
      %v6246 = vrot.slane %v6245, 2
      %v6247 = vadd.f32 %v6245, %v6246
      %v6248 = vrot.slane %v6247, 1
      %v6249 = vadd.f32 %v6247, %v6248
      %v6250 = vrot.slane %v5887, 4
      %v6251 = vadd.f32 %v5887, %v6250
      %v6252 = vrot.slane %v6251, 2
      %v6253 = vadd.f32 %v6251, %v6252
      %v6254 = vrot.slane %v6253, 1
      %v6255 = vadd.f32 %v6253, %v6254
      %v6256 = vrot.slane %v5889, 4
      %v6257 = vadd.f32 %v5889, %v6256
      %v6258 = vrot.slane %v6257, 2
      %v6259 = vadd.f32 %v6257, %v6258
      %v6260 = vrot.slane %v6259, 1
      %v6261 = vadd.f32 %v6259, %v6260
      %v6262 = vrot.slane %v5891, 4
      %v6263 = vadd.f32 %v5891, %v6262
      %v6264 = vrot.slane %v6263, 2
      %v6265 = vadd.f32 %v6263, %v6264
      %v6266 = vrot.slane %v6265, 1
      %v6267 = vadd.f32 %v6265, %v6266
      %v6268 = vrot.slane %v5893, 4
      %v6269 = vadd.f32 %v5893, %v6268
      %v6270 = vrot.slane %v6269, 2
      %v6271 = vadd.f32 %v6269, %v6270
      %v6272 = vrot.slane %v6271, 1
      %v6273 = vadd.f32 %v6271, %v6272
      %v6274 = vrot.slane %v5895, 4
      %v6275 = vadd.f32 %v5895, %v6274
      %v6276 = vrot.slane %v6275, 2
      %v6277 = vadd.f32 %v6275, %v6276
      %v6278 = vrot.slane %v6277, 1
      %v6279 = vadd.f32 %v6277, %v6278
      %v6280 = vrot.slane %v5897, 4
      %v6281 = vadd.f32 %v5897, %v6280
      %v6282 = vrot.slane %v6281, 2
      %v6283 = vadd.f32 %v6281, %v6282
      %v6284 = vrot.slane %v6283, 1
      %v6285 = vadd.f32 %v6283, %v6284
      %v6286 = vrot.slane %v5899, 4
      %v6287 = vadd.f32 %v5899, %v6286
      %v6288 = vrot.slane %v6287, 2
      %v6289 = vadd.f32 %v6287, %v6288
      %v6290 = vrot.slane %v6289, 1
      %v6291 = vadd.f32 %v6289, %v6290
      %v6292 = vrot.slane %v5901, 4
      %v6293 = vadd.f32 %v5901, %v6292
      %v6294 = vrot.slane %v6293, 2
      %v6295 = vadd.f32 %v6293, %v6294
      %v6296 = vrot.slane %v6295, 1
      %v6297 = vadd.f32 %v6295, %v6296
      %v6298 = vrot.slane %v5903, 4
      %v6299 = vadd.f32 %v5903, %v6298
      %v6300 = vrot.slane %v6299, 2
      %v6301 = vadd.f32 %v6299, %v6300
      %v6302 = vrot.slane %v6301, 1
      %v6303 = vadd.f32 %v6301, %v6302
      %v6304 = vrot.slane %v5905, 4
      %v6305 = vadd.f32 %v5905, %v6304
      %v6306 = vrot.slane %v6305, 2
      %v6307 = vadd.f32 %v6305, %v6306
      %v6308 = vrot.slane %v6307, 1
      %v6309 = vadd.f32 %v6307, %v6308
      %v6310 = vrot.slane %v5907, 4
      %v6311 = vadd.f32 %v5907, %v6310
      %v6312 = vrot.slane %v6311, 2
      %v6313 = vadd.f32 %v6311, %v6312
      %v6314 = vrot.slane %v6313, 1
      %v6315 = vadd.f32 %v6313, %v6314
      %v6316 = vrot.slane %v5909, 4
      %v6317 = vadd.f32 %v5909, %v6316
      %v6318 = vrot.slane %v6317, 2
      %v6319 = vadd.f32 %v6317, %v6318
      %v6320 = vrot.slane %v6319, 1
      %v6321 = vadd.f32 %v6319, %v6320
      %v6322 = vrot.slane %v5911, 4
      %v6323 = vadd.f32 %v5911, %v6322
      %v6324 = vrot.slane %v6323, 2
      %v6325 = vadd.f32 %v6323, %v6324
      %v6326 = vrot.slane %v6325, 1
      %v6327 = vadd.f32 %v6325, %v6326
      %v6328 = vrot.slane %v5913, 4
      %v6329 = vadd.f32 %v5913, %v6328
      %v6330 = vrot.slane %v6329, 2
      %v6331 = vadd.f32 %v6329, %v6330
      %v6332 = vrot.slane %v6331, 1
      %v6333 = vadd.f32 %v6331, %v6332
      %v6334 = vrot.slane %v5915, 4
      %v6335 = vadd.f32 %v5915, %v6334
      %v6336 = vrot.slane %v6335, 2
      %v6337 = vadd.f32 %v6335, %v6336
      %v6338 = vrot.slane %v6337, 1
      %v6339 = vadd.f32 %v6337, %v6338
      %v6340 = vrot.slane %v5917, 4
      %v6341 = vadd.f32 %v5917, %v6340
      %v6342 = vrot.slane %v6341, 2
      %v6343 = vadd.f32 %v6341, %v6342
      %v6344 = vrot.slane %v6343, 1
      %v6345 = vadd.f32 %v6343, %v6344
      %v6346 = vrot.slane %v5919, 4
      %v6347 = vadd.f32 %v5919, %v6346
      %v6348 = vrot.slane %v6347, 2
      %v6349 = vadd.f32 %v6347, %v6348
      %v6350 = vrot.slane %v6349, 1
      %v6351 = vadd.f32 %v6349, %v6350
      %v6352 = vrot.slane %v5921, 4
      %v6353 = vadd.f32 %v5921, %v6352
      %v6354 = vrot.slane %v6353, 2
      %v6355 = vadd.f32 %v6353, %v6354
      %v6356 = vrot.slane %v6355, 1
      %v6357 = vadd.f32 %v6355, %v6356
      %v6358 = vrot.slane %v5923, 4
      %v6359 = vadd.f32 %v5923, %v6358
      %v6360 = vrot.slane %v6359, 2
      %v6361 = vadd.f32 %v6359, %v6360
      %v6362 = vrot.slane %v6361, 1
      %v6363 = vadd.f32 %v6361, %v6362
      %v6364 = vrot.slane %v5925, 4
      %v6365 = vadd.f32 %v5925, %v6364
      %v6366 = vrot.slane %v6365, 2
      %v6367 = vadd.f32 %v6365, %v6366
      %v6368 = vrot.slane %v6367, 1
      %v6369 = vadd.f32 %v6367, %v6368
      %v6370 = vrot.slane %v5927, 4
      %v6371 = vadd.f32 %v5927, %v6370
      %v6372 = vrot.slane %v6371, 2
      %v6373 = vadd.f32 %v6371, %v6372
      %v6374 = vrot.slane %v6373, 1
      %v6375 = vadd.f32 %v6373, %v6374
      %v6376 = vrot.slane %v5929, 4
      %v6377 = vadd.f32 %v5929, %v6376
      %v6378 = vrot.slane %v6377, 2
      %v6379 = vadd.f32 %v6377, %v6378
      %v6380 = vrot.slane %v6379, 1
      %v6381 = vadd.f32 %v6379, %v6380
      %v6382 = vrot.slane %v5931, 4
      %v6383 = vadd.f32 %v5931, %v6382
      %v6384 = vrot.slane %v6383, 2
      %v6385 = vadd.f32 %v6383, %v6384
      %v6386 = vrot.slane %v6385, 1
      %v6387 = vadd.f32 %v6385, %v6386
      %v6388 = vrot.slane %v5933, 4
      %v6389 = vadd.f32 %v5933, %v6388
      %v6390 = vrot.slane %v6389, 2
      %v6391 = vadd.f32 %v6389, %v6390
      %v6392 = vrot.slane %v6391, 1
      %v6393 = vadd.f32 %v6391, %v6392
      %v6394 = vrot.slane %v5935, 4
      %v6395 = vadd.f32 %v5935, %v6394
      %v6396 = vrot.slane %v6395, 2
      %v6397 = vadd.f32 %v6395, %v6396
      %v6398 = vrot.slane %v6397, 1
      %v6399 = vadd.f32 %v6397, %v6398
      %v6400 = vrot.slane %v5937, 4
      %v6401 = vadd.f32 %v5937, %v6400
      %v6402 = vrot.slane %v6401, 2
      %v6403 = vadd.f32 %v6401, %v6402
      %v6404 = vrot.slane %v6403, 1
      %v6405 = vadd.f32 %v6403, %v6404
      %v6406 = vrot.slane %v5939, 4
      %v6407 = vadd.f32 %v5939, %v6406
      %v6408 = vrot.slane %v6407, 2
      %v6409 = vadd.f32 %v6407, %v6408
      %v6410 = vrot.slane %v6409, 1
      %v6411 = vadd.f32 %v6409, %v6410
      %v6412 = vrot.slane %v5941, 4
      %v6413 = vadd.f32 %v5941, %v6412
      %v6414 = vrot.slane %v6413, 2
      %v6415 = vadd.f32 %v6413, %v6414
      %v6416 = vrot.slane %v6415, 1
      %v6417 = vadd.f32 %v6415, %v6416
      %v6418 = vrot.slane %v5943, 4
      %v6419 = vadd.f32 %v5943, %v6418
      %v6420 = vrot.slane %v6419, 2
      %v6421 = vadd.f32 %v6419, %v6420
      %v6422 = vrot.slane %v6421, 1
      %v6423 = vadd.f32 %v6421, %v6422
      %v6424 = vrot.slane %v5945, 4
      %v6425 = vadd.f32 %v5945, %v6424
      %v6426 = vrot.slane %v6425, 2
      %v6427 = vadd.f32 %v6425, %v6426
      %v6428 = vrot.slane %v6427, 1
      %v6429 = vadd.f32 %v6427, %v6428
      %v6430 = vrot.slane %v5947, 4
      %v6431 = vadd.f32 %v5947, %v6430
      %v6432 = vrot.slane %v6431, 2
      %v6433 = vadd.f32 %v6431, %v6432
      %v6434 = vrot.slane %v6433, 1
      %v6435 = vadd.f32 %v6433, %v6434
      %v6436 = vrot.slane %v5949, 4
      %v6437 = vadd.f32 %v5949, %v6436
      %v6438 = vrot.slane %v6437, 2
      %v6439 = vadd.f32 %v6437, %v6438
      %v6440 = vrot.slane %v6439, 1
      %v6441 = vadd.f32 %v6439, %v6440
      %v6442 = vrot.slane %v5951, 4
      %v6443 = vadd.f32 %v5951, %v6442
      %v6444 = vrot.slane %v6443, 2
      %v6445 = vadd.f32 %v6443, %v6444
      %v6446 = vrot.slane %v6445, 1
      %v6447 = vadd.f32 %v6445, %v6446
      %v6448 = vrot.slane %v5953, 4
      %v6449 = vadd.f32 %v5953, %v6448
      %v6450 = vrot.slane %v6449, 2
      %v6451 = vadd.f32 %v6449, %v6450
      %v6452 = vrot.slane %v6451, 1
      %v6453 = vadd.f32 %v6451, %v6452
      %v6454 = vrot.slane %v5955, 4
      %v6455 = vadd.f32 %v5955, %v6454
      %v6456 = vrot.slane %v6455, 2
      %v6457 = vadd.f32 %v6455, %v6456
      %v6458 = vrot.slane %v6457, 1
      %v6459 = vadd.f32 %v6457, %v6458
      %v6460 = vrot.slane %v5957, 4
      %v6461 = vadd.f32 %v5957, %v6460
      %v6462 = vrot.slane %v6461, 2
      %v6463 = vadd.f32 %v6461, %v6462
      %v6464 = vrot.slane %v6463, 1
      %v6465 = vadd.f32 %v6463, %v6464
      %v6466 = vrot.slane %v5959, 4
      %v6467 = vadd.f32 %v5959, %v6466
      %v6468 = vrot.slane %v6467, 2
      %v6469 = vadd.f32 %v6467, %v6468
      %v6470 = vrot.slane %v6469, 1
      %v6471 = vadd.f32 %v6469, %v6470
      %v6472 = vrot.slane %v5961, 4
      %v6473 = vadd.f32 %v5961, %v6472
      %v6474 = vrot.slane %v6473, 2
      %v6475 = vadd.f32 %v6473, %v6474
      %v6476 = vrot.slane %v6475, 1
      %v6477 = vadd.f32 %v6475, %v6476
      %v6478 = vrot.slane %v5963, 4
      %v6479 = vadd.f32 %v5963, %v6478
      %v6480 = vrot.slane %v6479, 2
      %v6481 = vadd.f32 %v6479, %v6480
      %v6482 = vrot.slane %v6481, 1
      %v6483 = vadd.f32 %v6481, %v6482
      %v6484 = vrot.slane %v5965, 4
      %v6485 = vadd.f32 %v5965, %v6484
      %v6486 = vrot.slane %v6485, 2
      %v6487 = vadd.f32 %v6485, %v6486
      %v6488 = vrot.slane %v6487, 1
      %v6489 = vadd.f32 %v6487, %v6488
      %v6490 = vrot.slane %v5967, 4
      %v6491 = vadd.f32 %v5967, %v6490
      %v6492 = vrot.slane %v6491, 2
      %v6493 = vadd.f32 %v6491, %v6492
      %v6494 = vrot.slane %v6493, 1
      %v6495 = vadd.f32 %v6493, %v6494
      %v6496 = vrot.slane %v5969, 4
      %v6497 = vadd.f32 %v5969, %v6496
      %v6498 = vrot.slane %v6497, 2
      %v6499 = vadd.f32 %v6497, %v6498
      %v6500 = vrot.slane %v6499, 1
      %v6501 = vadd.f32 %v6499, %v6500
      %v6502 = vrot.slane %v5971, 4
      %v6503 = vadd.f32 %v5971, %v6502
      %v6504 = vrot.slane %v6503, 2
      %v6505 = vadd.f32 %v6503, %v6504
      %v6506 = vrot.slane %v6505, 1
      %v6507 = vadd.f32 %v6505, %v6506
      %v6508 = vrot.slane %v5973, 4
      %v6509 = vadd.f32 %v5973, %v6508
      %v6510 = vrot.slane %v6509, 2
      %v6511 = vadd.f32 %v6509, %v6510
      %v6512 = vrot.slane %v6511, 1
      %v6513 = vadd.f32 %v6511, %v6512
      %v6514 = vrot.slane %v5975, 4
      %v6515 = vadd.f32 %v5975, %v6514
      %v6516 = vrot.slane %v6515, 2
      %v6517 = vadd.f32 %v6515, %v6516
      %v6518 = vrot.slane %v6517, 1
      %v6519 = vadd.f32 %v6517, %v6518
      %v6520 = vrot.slane %v5977, 4
      %v6521 = vadd.f32 %v5977, %v6520
      %v6522 = vrot.slane %v6521, 2
      %v6523 = vadd.f32 %v6521, %v6522
      %v6524 = vrot.slane %v6523, 1
      %v6525 = vadd.f32 %v6523, %v6524
      %v6526 = vrot.slane %v5979, 4
      %v6527 = vadd.f32 %v5979, %v6526
      %v6528 = vrot.slane %v6527, 2
      %v6529 = vadd.f32 %v6527, %v6528
      %v6530 = vrot.slane %v6529, 1
      %v6531 = vadd.f32 %v6529, %v6530
      %v6532 = vrot.slane %v5981, 4
      %v6533 = vadd.f32 %v5981, %v6532
      %v6534 = vrot.slane %v6533, 2
      %v6535 = vadd.f32 %v6533, %v6534
      %v6536 = vrot.slane %v6535, 1
      %v6537 = vadd.f32 %v6535, %v6536
      %v6538 = vrot.slane %v5983, 4
      %v6539 = vadd.f32 %v5983, %v6538
      %v6540 = vrot.slane %v6539, 2
      %v6541 = vadd.f32 %v6539, %v6540
      %v6542 = vrot.slane %v6541, 1
      %v6543 = vadd.f32 %v6541, %v6542
      %v6544 = vrot.slane %v5985, 4
      %v6545 = vadd.f32 %v5985, %v6544
      %v6546 = vrot.slane %v6545, 2
      %v6547 = vadd.f32 %v6545, %v6546
      %v6548 = vrot.slane %v6547, 1
      %v6549 = vadd.f32 %v6547, %v6548
      %v6550 = vrot.slane %v5987, 4
      %v6551 = vadd.f32 %v5987, %v6550
      %v6552 = vrot.slane %v6551, 2
      %v6553 = vadd.f32 %v6551, %v6552
      %v6554 = vrot.slane %v6553, 1
      %v6555 = vadd.f32 %v6553, %v6554
      %v6556 = vrot.slane %v5989, 4
      %v6557 = vadd.f32 %v5989, %v6556
      %v6558 = vrot.slane %v6557, 2
      %v6559 = vadd.f32 %v6557, %v6558
      %v6560 = vrot.slane %v6559, 1
      %v6561 = vadd.f32 %v6559, %v6560
      %v6562 = vrot.slane %v5991, 4
      %v6563 = vadd.f32 %v5991, %v6562
      %v6564 = vrot.slane %v6563, 2
      %v6565 = vadd.f32 %v6563, %v6564
      %v6566 = vrot.slane %v6565, 1
      %v6567 = vadd.f32 %v6565, %v6566
      %v6568 = vrot.slane %v5993, 4
      %v6569 = vadd.f32 %v5993, %v6568
      %v6570 = vrot.slane %v6569, 2
      %v6571 = vadd.f32 %v6569, %v6570
      %v6572 = vrot.slane %v6571, 1
      %v6573 = vadd.f32 %v6571, %v6572
      %v6574 = vrot.slane %v5995, 4
      %v6575 = vadd.f32 %v5995, %v6574
      %v6576 = vrot.slane %v6575, 2
      %v6577 = vadd.f32 %v6575, %v6576
      %v6578 = vrot.slane %v6577, 1
      %v6579 = vadd.f32 %v6577, %v6578
      %v6580 = vrot.slane %v5997, 4
      %v6581 = vadd.f32 %v5997, %v6580
      %v6582 = vrot.slane %v6581, 2
      %v6583 = vadd.f32 %v6581, %v6582
      %v6584 = vrot.slane %v6583, 1
      %v6585 = vadd.f32 %v6583, %v6584
      %v6586 = vrot.slane %v5999, 4
      %v6587 = vadd.f32 %v5999, %v6586
      %v6588 = vrot.slane %v6587, 2
      %v6589 = vadd.f32 %v6587, %v6588
      %v6590 = vrot.slane %v6589, 1
      %v6591 = vadd.f32 %v6589, %v6590
      %v6592 = vrot.slane %v6001, 4
      %v6593 = vadd.f32 %v6001, %v6592
      %v6594 = vrot.slane %v6593, 2
      %v6595 = vadd.f32 %v6593, %v6594
      %v6596 = vrot.slane %v6595, 1
      %v6597 = vadd.f32 %v6595, %v6596
      %v6598 = vrot.slane %v6003, 4
      %v6599 = vadd.f32 %v6003, %v6598
      %v6600 = vrot.slane %v6599, 2
      %v6601 = vadd.f32 %v6599, %v6600
      %v6602 = vrot.slane %v6601, 1
      %v6603 = vadd.f32 %v6601, %v6602
      %v6604 = vrot.slane %v6005, 4
      %v6605 = vadd.f32 %v6005, %v6604
      %v6606 = vrot.slane %v6605, 2
      %v6607 = vadd.f32 %v6605, %v6606
      %v6608 = vrot.slane %v6607, 1
      %v6609 = vadd.f32 %v6607, %v6608
      %v6610 = vrot.slane %v6007, 4
      %v6611 = vadd.f32 %v6007, %v6610
      %v6612 = vrot.slane %v6611, 2
      %v6613 = vadd.f32 %v6611, %v6612
      %v6614 = vrot.slane %v6613, 1
      %v6615 = vadd.f32 %v6613, %v6614
      %v6616 = vrot.slane %v6009, 4
      %v6617 = vadd.f32 %v6009, %v6616
      %v6618 = vrot.slane %v6617, 2
      %v6619 = vadd.f32 %v6617, %v6618
      %v6620 = vrot.slane %v6619, 1
      %v6621 = vadd.f32 %v6619, %v6620
      %v6622 = vrot.slane %v6011, 4
      %v6623 = vadd.f32 %v6011, %v6622
      %v6624 = vrot.slane %v6623, 2
      %v6625 = vadd.f32 %v6623, %v6624
      %v6626 = vrot.slane %v6625, 1
      %v6627 = vadd.f32 %v6625, %v6626
      %v6628 = vrot.slane %v6013, 4
      %v6629 = vadd.f32 %v6013, %v6628
      %v6630 = vrot.slane %v6629, 2
      %v6631 = vadd.f32 %v6629, %v6630
      %v6632 = vrot.slane %v6631, 1
      %v6633 = vadd.f32 %v6631, %v6632
      %v6634 = vrot.slane %v6015, 4
      %v6635 = vadd.f32 %v6015, %v6634
      %v6636 = vrot.slane %v6635, 2
      %v6637 = vadd.f32 %v6635, %v6636
      %v6638 = vrot.slane %v6637, 1
      %v6639 = vadd.f32 %v6637, %v6638
      %v6640 = vrot.slane %v6017, 4
      %v6641 = vadd.f32 %v6017, %v6640
      %v6642 = vrot.slane %v6641, 2
      %v6643 = vadd.f32 %v6641, %v6642
      %v6644 = vrot.slane %v6643, 1
      %v6645 = vadd.f32 %v6643, %v6644
      %v6646 = vrot.slane %v6019, 4
      %v6647 = vadd.f32 %v6019, %v6646
      %v6648 = vrot.slane %v6647, 2
      %v6649 = vadd.f32 %v6647, %v6648
      %v6650 = vrot.slane %v6649, 1
      %v6651 = vadd.f32 %v6649, %v6650
      %v6652 = vrot.slane %v6021, 4
      %v6653 = vadd.f32 %v6021, %v6652
      %v6654 = vrot.slane %v6653, 2
      %v6655 = vadd.f32 %v6653, %v6654
      %v6656 = vrot.slane %v6655, 1
      %v6657 = vadd.f32 %v6655, %v6656
      %v6658 = vrot.slane %v6023, 4
      %v6659 = vadd.f32 %v6023, %v6658
      %v6660 = vrot.slane %v6659, 2
      %v6661 = vadd.f32 %v6659, %v6660
      %v6662 = vrot.slane %v6661, 1
      %v6663 = vadd.f32 %v6661, %v6662
      %v6664 = vrot.slane %v6025, 4
      %v6665 = vadd.f32 %v6025, %v6664
      %v6666 = vrot.slane %v6665, 2
      %v6667 = vadd.f32 %v6665, %v6666
      %v6668 = vrot.slane %v6667, 1
      %v6669 = vadd.f32 %v6667, %v6668
      %v6670 = vrot.slane %v6027, 4
      %v6671 = vadd.f32 %v6027, %v6670
      %v6672 = vrot.slane %v6671, 2
      %v6673 = vadd.f32 %v6671, %v6672
      %v6674 = vrot.slane %v6673, 1
      %v6675 = vadd.f32 %v6673, %v6674
      %v6676 = vrot.slane %v6029, 4
      %v6677 = vadd.f32 %v6029, %v6676
      %v6678 = vrot.slane %v6677, 2
      %v6679 = vadd.f32 %v6677, %v6678
      %v6680 = vrot.slane %v6679, 1
      %v6681 = vadd.f32 %v6679, %v6680
      %v6682 = vrot.slane %v6031, 4
      %v6683 = vadd.f32 %v6031, %v6682
      %v6684 = vrot.slane %v6683, 2
      %v6685 = vadd.f32 %v6683, %v6684
      %v6686 = vrot.slane %v6685, 1
      %v6687 = vadd.f32 %v6685, %v6686
      %v6688 = vrot.slane %v6033, 4
      %v6689 = vadd.f32 %v6033, %v6688
      %v6690 = vrot.slane %v6689, 2
      %v6691 = vadd.f32 %v6689, %v6690
      %v6692 = vrot.slane %v6691, 1
      %v6693 = vadd.f32 %v6691, %v6692
      %v6694 = vrot.slane %v6035, 4
      %v6695 = vadd.f32 %v6035, %v6694
      %v6696 = vrot.slane %v6695, 2
      %v6697 = vadd.f32 %v6695, %v6696
      %v6698 = vrot.slane %v6697, 1
      %v6699 = vadd.f32 %v6697, %v6698
      %v6700 = vrot.slane %v6037, 4
      %v6701 = vadd.f32 %v6037, %v6700
      %v6702 = vrot.slane %v6701, 2
      %v6703 = vadd.f32 %v6701, %v6702
      %v6704 = vrot.slane %v6703, 1
      %v6705 = vadd.f32 %v6703, %v6704
      %v6706 = vrot.slane %v6039, 4
      %v6707 = vadd.f32 %v6039, %v6706
      %v6708 = vrot.slane %v6707, 2
      %v6709 = vadd.f32 %v6707, %v6708
      %v6710 = vrot.slane %v6709, 1
      %v6711 = vadd.f32 %v6709, %v6710
      %v6712 = vrot.slane %v6041, 4
      %v6713 = vadd.f32 %v6041, %v6712
      %v6714 = vrot.slane %v6713, 2
      %v6715 = vadd.f32 %v6713, %v6714
      %v6716 = vrot.slane %v6715, 1
      %v6717 = vadd.f32 %v6715, %v6716
      %v6718 = vrot.slane %v6043, 4
      %v6719 = vadd.f32 %v6043, %v6718
      %v6720 = vrot.slane %v6719, 2
      %v6721 = vadd.f32 %v6719, %v6720
      %v6722 = vrot.slane %v6721, 1
      %v6723 = vadd.f32 %v6721, %v6722
      %v6724 = vrot.slane %v6045, 4
      %v6725 = vadd.f32 %v6045, %v6724
      %v6726 = vrot.slane %v6725, 2
      %v6727 = vadd.f32 %v6725, %v6726
      %v6728 = vrot.slane %v6727, 1
      %v6729 = vadd.f32 %v6727, %v6728
      %v6730 = vrot.slane %v6047, 4
      %v6731 = vadd.f32 %v6047, %v6730
      %v6732 = vrot.slane %v6731, 2
      %v6733 = vadd.f32 %v6731, %v6732
      %v6734 = vrot.slane %v6733, 1
      %v6735 = vadd.f32 %v6733, %v6734
      %v6736 = vrot.slane %v6049, 4
      %v6737 = vadd.f32 %v6049, %v6736
      %v6738 = vrot.slane %v6737, 2
      %v6739 = vadd.f32 %v6737, %v6738
      %v6740 = vrot.slane %v6739, 1
      %v6741 = vadd.f32 %v6739, %v6740
      %v6742 = vrot.slane %v6051, 4
      %v6743 = vadd.f32 %v6051, %v6742
      %v6744 = vrot.slane %v6743, 2
      %v6745 = vadd.f32 %v6743, %v6744
      %v6746 = vrot.slane %v6745, 1
      %v6747 = vadd.f32 %v6745, %v6746
      %v6748 = vrot.slane %v6053, 4
      %v6749 = vadd.f32 %v6053, %v6748
      %v6750 = vrot.slane %v6749, 2
      %v6751 = vadd.f32 %v6749, %v6750
      %v6752 = vrot.slane %v6751, 1
      %v6753 = vadd.f32 %v6751, %v6752
      %v6754 = vrot.slane %v6055, 4
      %v6755 = vadd.f32 %v6055, %v6754
      %v6756 = vrot.slane %v6755, 2
      %v6757 = vadd.f32 %v6755, %v6756
      %v6758 = vrot.slane %v6757, 1
      %v6759 = vadd.f32 %v6757, %v6758
      %v6760 = vrot.slane %v6057, 4
      %v6761 = vadd.f32 %v6057, %v6760
      %v6762 = vrot.slane %v6761, 2
      %v6763 = vadd.f32 %v6761, %v6762
      %v6764 = vrot.slane %v6763, 1
      %v6765 = vadd.f32 %v6763, %v6764
      %v6766 = vrot.slane %v6059, 4
      %v6767 = vadd.f32 %v6059, %v6766
      %v6768 = vrot.slane %v6767, 2
      %v6769 = vadd.f32 %v6767, %v6768
      %v6770 = vrot.slane %v6769, 1
      %v6771 = vadd.f32 %v6769, %v6770
      %v6772 = vrot.slane %v6061, 4
      %v6773 = vadd.f32 %v6061, %v6772
      %v6774 = vrot.slane %v6773, 2
      %v6775 = vadd.f32 %v6773, %v6774
      %v6776 = vrot.slane %v6775, 1
      %v6777 = vadd.f32 %v6775, %v6776
      %v6778 = vrot.slane %v6063, 4
      %v6779 = vadd.f32 %v6063, %v6778
      %v6780 = vrot.slane %v6779, 2
      %v6781 = vadd.f32 %v6779, %v6780
      %v6782 = vrot.slane %v6781, 1
      %v6783 = vadd.f32 %v6781, %v6782
      %v6784 = vrot.slane %v6065, 4
      %v6785 = vadd.f32 %v6065, %v6784
      %v6786 = vrot.slane %v6785, 2
      %v6787 = vadd.f32 %v6785, %v6786
      %v6788 = vrot.slane %v6787, 1
      %v6789 = vadd.f32 %v6787, %v6788
      %v6790 = vrot.slane %v6067, 4
      %v6791 = vadd.f32 %v6067, %v6790
      %v6792 = vrot.slane %v6791, 2
      %v6793 = vadd.f32 %v6791, %v6792
      %v6794 = vrot.slane %v6793, 1
      %v6795 = vadd.f32 %v6793, %v6794
      %v6796 = vrot.slane %v6069, 4
      %v6797 = vadd.f32 %v6069, %v6796
      %v6798 = vrot.slane %v6797, 2
      %v6799 = vadd.f32 %v6797, %v6798
      %v6800 = vrot.slane %v6799, 1
      %v6801 = vadd.f32 %v6799, %v6800
      %v6802 = vrot.slane %v6071, 4
      %v6803 = vadd.f32 %v6071, %v6802
      %v6804 = vrot.slane %v6803, 2
      %v6805 = vadd.f32 %v6803, %v6804
      %v6806 = vrot.slane %v6805, 1
      %v6807 = vadd.f32 %v6805, %v6806
      %v6808 = vrot.slane %v6073, 4
      %v6809 = vadd.f32 %v6073, %v6808
      %v6810 = vrot.slane %v6809, 2
      %v6811 = vadd.f32 %v6809, %v6810
      %v6812 = vrot.slane %v6811, 1
      %v6813 = vadd.f32 %v6811, %v6812
      %v6814 = vrot.slane %v6075, 4
      %v6815 = vadd.f32 %v6075, %v6814
      %v6816 = vrot.slane %v6815, 2
      %v6817 = vadd.f32 %v6815, %v6816
      %v6818 = vrot.slane %v6817, 1
      %v6819 = vadd.f32 %v6817, %v6818
      %v6820 = vrot.slane %v6077, 4
      %v6821 = vadd.f32 %v6077, %v6820
      %v6822 = vrot.slane %v6821, 2
      %v6823 = vadd.f32 %v6821, %v6822
      %v6824 = vrot.slane %v6823, 1
      %v6825 = vadd.f32 %v6823, %v6824
      %v6826 = vrot.slane %v6079, 4
      %v6827 = vadd.f32 %v6079, %v6826
      %v6828 = vrot.slane %v6827, 2
      %v6829 = vadd.f32 %v6827, %v6828
      %v6830 = vrot.slane %v6829, 1
      %v6831 = vadd.f32 %v6829, %v6830
      %v6832 = vrot.slane %v6081, 4
      %v6833 = vadd.f32 %v6081, %v6832
      %v6834 = vrot.slane %v6833, 2
      %v6835 = vadd.f32 %v6833, %v6834
      %v6836 = vrot.slane %v6835, 1
      %v6837 = vadd.f32 %v6835, %v6836
      %v6838 = vrot.slane %v6083, 4
      %v6839 = vadd.f32 %v6083, %v6838
      %v6840 = vrot.slane %v6839, 2
      %v6841 = vadd.f32 %v6839, %v6840
      %v6842 = vrot.slane %v6841, 1
      %v6843 = vadd.f32 %v6841, %v6842
      %v6844 = vrot.slane %v6085, 4
      %v6845 = vadd.f32 %v6085, %v6844
      %v6846 = vrot.slane %v6845, 2
      %v6847 = vadd.f32 %v6845, %v6846
      %v6848 = vrot.slane %v6847, 1
      %v6849 = vadd.f32 %v6847, %v6848
      %v6850 = vrot.slane %v6087, 4
      %v6851 = vadd.f32 %v6087, %v6850
      %v6852 = vrot.slane %v6851, 2
      %v6853 = vadd.f32 %v6851, %v6852
      %v6854 = vrot.slane %v6853, 1
      %v6855 = vadd.f32 %v6853, %v6854
      %v6856 = vrcp.pop %v6093
      %v6857 = vmul.f32 %v6093, %v6856
      %v6858 = vsub.f32 1.0, %v6857
      %v6859 = vmul.f32 %v6856, %v6858
      %v6860 = vadd.f32 %v6856, %v6859
      %vm6861 = vweird.f32 %v6093
      %vm6862 = vweird.f32 %v6856
      %vm6863 = vmor %vm6861, %vm6862
      %v6864 = vsel %vm6863, %v6856, %v6860
      %v6865 = vand.u32 2147483647, %v6093
      %vm6866 = vcmp.eq.f32.partialorder %v6865, 8.507059e+37
      %v6867 = vand.u32 %v6093, 2147483648
      %v6868 = vor.u32 1.1754944e-38, %v6867
      %v6869 = vsel %vm6866, %v6868, %v6864
      %v6870 = vmul.f32 1.0, %v6869
      %v6871 = vrcp.pop %v6099
      %v6872 = vmul.f32 %v6099, %v6871
      %v6873 = vsub.f32 1.0, %v6872
      %v6874 = vmul.f32 %v6871, %v6873
      %v6875 = vadd.f32 %v6871, %v6874
      %vm6876 = vweird.f32 %v6099
      %vm6877 = vweird.f32 %v6871
      %vm6878 = vmor %vm6876, %vm6877
      %v6879 = vsel %vm6878, %v6871, %v6875
      %v6880 = vand.u32 2147483647, %v6099
      %vm6881 = vcmp.eq.f32.partialorder %v6880, 8.507059e+37
      %v6882 = vand.u32 %v6099, 2147483648
      %v6883 = vor.u32 1.1754944e-38, %v6882
      %v6884 = vsel %vm6881, %v6883, %v6879
      %v6885 = vmul.f32 1.0, %v6884
      %v6886 = vrcp.pop %v6105
      %v6887 = vmul.f32 %v6105, %v6886
      %v6888 = vsub.f32 1.0, %v6887
      %v6889 = vmul.f32 %v6886, %v6888
      %v6890 = vadd.f32 %v6886, %v6889
      %vm6891 = vweird.f32 %v6105
      %vm6892 = vweird.f32 %v6886
      %vm6893 = vmor %vm6891, %vm6892
      %v6894 = vsel %vm6893, %v6886, %v6890
      %v6895 = vand.u32 2147483647, %v6105
      %vm6896 = vcmp.eq.f32.partialorder %v6895, 8.507059e+37
      %v6897 = vand.u32 %v6105, 2147483648
      %v6898 = vor.u32 1.1754944e-38, %v6897
      %v6899 = vsel %vm6896, %v6898, %v6894
      %v6900 = vmul.f32 1.0, %v6899
      %v6901 = vrcp.pop %v6111
      %v6902 = vmul.f32 %v6111, %v6901
      %v6903 = vsub.f32 1.0, %v6902
      %v6904 = vmul.f32 %v6901, %v6903
      %v6905 = vadd.f32 %v6901, %v6904
      %vm6906 = vweird.f32 %v6111
      %vm6907 = vweird.f32 %v6901
      %vm6908 = vmor %vm6906, %vm6907
      %v6909 = vsel %vm6908, %v6901, %v6905
      %v6910 = vand.u32 2147483647, %v6111
      %vm6911 = vcmp.eq.f32.partialorder %v6910, 8.507059e+37
      %v6912 = vand.u32 %v6111, 2147483648
      %v6913 = vor.u32 1.1754944e-38, %v6912
      %v6914 = vsel %vm6911, %v6913, %v6909
      %v6915 = vmul.f32 1.0, %v6914
      %v6916 = vrcp.pop %v6117
      %v6917 = vmul.f32 %v6117, %v6916
      %v6918 = vsub.f32 1.0, %v6917
      %v6919 = vmul.f32 %v6916, %v6918
      %v6920 = vadd.f32 %v6916, %v6919
      %vm6921 = vweird.f32 %v6117
      %vm6922 = vweird.f32 %v6916
      %vm6923 = vmor %vm6921, %vm6922
      %v6924 = vsel %vm6923, %v6916, %v6920
      %v6925 = vand.u32 2147483647, %v6117
      %vm6926 = vcmp.eq.f32.partialorder %v6925, 8.507059e+37
      %v6927 = vand.u32 %v6117, 2147483648
      %v6928 = vor.u32 1.1754944e-38, %v6927
      %v6929 = vsel %vm6926, %v6928, %v6924
      %v6930 = vmul.f32 1.0, %v6929
      %v6931 = vrcp.pop %v6123
      %v6932 = vmul.f32 %v6123, %v6931
      %v6933 = vsub.f32 1.0, %v6932
      %v6934 = vmul.f32 %v6931, %v6933
      %v6935 = vadd.f32 %v6931, %v6934
      %vm6936 = vweird.f32 %v6123
      %vm6937 = vweird.f32 %v6931
      %vm6938 = vmor %vm6936, %vm6937
      %v6939 = vsel %vm6938, %v6931, %v6935
      %v6940 = vand.u32 2147483647, %v6123
      %vm6941 = vcmp.eq.f32.partialorder %v6940, 8.507059e+37
      %v6942 = vand.u32 %v6123, 2147483648
      %v6943 = vor.u32 1.1754944e-38, %v6942
      %v6944 = vsel %vm6941, %v6943, %v6939
      %v6945 = vmul.f32 1.0, %v6944
      %v6946 = vrcp.pop %v6129
      %v6947 = vmul.f32 %v6129, %v6946
      %v6948 = vsub.f32 1.0, %v6947
      %v6949 = vmul.f32 %v6946, %v6948
      %v6950 = vadd.f32 %v6946, %v6949
      %vm6951 = vweird.f32 %v6129
      %vm6952 = vweird.f32 %v6946
      %vm6953 = vmor %vm6951, %vm6952
      %v6954 = vsel %vm6953, %v6946, %v6950
      %v6955 = vand.u32 2147483647, %v6129
      %vm6956 = vcmp.eq.f32.partialorder %v6955, 8.507059e+37
      %v6957 = vand.u32 %v6129, 2147483648
      %v6958 = vor.u32 1.1754944e-38, %v6957
      %v6959 = vsel %vm6956, %v6958, %v6954
      %v6960 = vmul.f32 1.0, %v6959
      %v6961 = vrcp.pop %v6135
      %v6962 = vmul.f32 %v6135, %v6961
      %v6963 = vsub.f32 1.0, %v6962
      %v6964 = vmul.f32 %v6961, %v6963
      %v6965 = vadd.f32 %v6961, %v6964
      %vm6966 = vweird.f32 %v6135
      %vm6967 = vweird.f32 %v6961
      %vm6968 = vmor %vm6966, %vm6967
      %v6969 = vsel %vm6968, %v6961, %v6965
      %v6970 = vand.u32 2147483647, %v6135
      %vm6971 = vcmp.eq.f32.partialorder %v6970, 8.507059e+37
      %v6972 = vand.u32 %v6135, 2147483648
      %v6973 = vor.u32 1.1754944e-38, %v6972
      %v6974 = vsel %vm6971, %v6973, %v6969
      %v6975 = vmul.f32 1.0, %v6974
      %v6976 = vrcp.pop %v6141
      %v6977 = vmul.f32 %v6141, %v6976
      %v6978 = vsub.f32 1.0, %v6977
      %v6979 = vmul.f32 %v6976, %v6978
      %v6980 = vadd.f32 %v6976, %v6979
      %vm6981 = vweird.f32 %v6141
      %vm6982 = vweird.f32 %v6976
      %vm6983 = vmor %vm6981, %vm6982
      %v6984 = vsel %vm6983, %v6976, %v6980
      %v6985 = vand.u32 2147483647, %v6141
      %vm6986 = vcmp.eq.f32.partialorder %v6985, 8.507059e+37
      %v6987 = vand.u32 %v6141, 2147483648
      %v6988 = vor.u32 1.1754944e-38, %v6987
      %v6989 = vsel %vm6986, %v6988, %v6984
      %v6990 = vmul.f32 1.0, %v6989
      %v6991 = vrcp.pop %v6147
      %v6992 = vmul.f32 %v6147, %v6991
      %v6993 = vsub.f32 1.0, %v6992
      %v6994 = vmul.f32 %v6991, %v6993
      %v6995 = vadd.f32 %v6991, %v6994
      %vm6996 = vweird.f32 %v6147
      %vm6997 = vweird.f32 %v6991
      %vm6998 = vmor %vm6996, %vm6997
      %v6999 = vsel %vm6998, %v6991, %v6995
      %v7000 = vand.u32 2147483647, %v6147
      %vm7001 = vcmp.eq.f32.partialorder %v7000, 8.507059e+37
      %v7002 = vand.u32 %v6147, 2147483648
      %v7003 = vor.u32 1.1754944e-38, %v7002
      %v7004 = vsel %vm7001, %v7003, %v6999
      %v7005 = vmul.f32 1.0, %v7004
      %v7006 = vrcp.pop %v6153
      %v7007 = vmul.f32 %v6153, %v7006
      %v7008 = vsub.f32 1.0, %v7007
      %v7009 = vmul.f32 %v7006, %v7008
      %v7010 = vadd.f32 %v7006, %v7009
      %vm7011 = vweird.f32 %v6153
      %vm7012 = vweird.f32 %v7006
      %vm7013 = vmor %vm7011, %vm7012
      %v7014 = vsel %vm7013, %v7006, %v7010
      %v7015 = vand.u32 2147483647, %v6153
      %vm7016 = vcmp.eq.f32.partialorder %v7015, 8.507059e+37
      %v7017 = vand.u32 %v6153, 2147483648
      %v7018 = vor.u32 1.1754944e-38, %v7017
      %v7019 = vsel %vm7016, %v7018, %v7014
      %v7020 = vmul.f32 1.0, %v7019
      %v7021 = vrcp.pop %v6159
      %v7022 = vmul.f32 %v6159, %v7021
      %v7023 = vsub.f32 1.0, %v7022
      %v7024 = vmul.f32 %v7021, %v7023
      %v7025 = vadd.f32 %v7021, %v7024
      %vm7026 = vweird.f32 %v6159
      %vm7027 = vweird.f32 %v7021
      %vm7028 = vmor %vm7026, %vm7027
      %v7029 = vsel %vm7028, %v7021, %v7025
      %v7030 = vand.u32 2147483647, %v6159
      %vm7031 = vcmp.eq.f32.partialorder %v7030, 8.507059e+37
      %v7032 = vand.u32 %v6159, 2147483648
      %v7033 = vor.u32 1.1754944e-38, %v7032
      %v7034 = vsel %vm7031, %v7033, %v7029
      %v7035 = vmul.f32 1.0, %v7034
      %v7036 = vrcp.pop %v6165
      %v7037 = vmul.f32 %v6165, %v7036
      %v7038 = vsub.f32 1.0, %v7037
      %v7039 = vmul.f32 %v7036, %v7038
      %v7040 = vadd.f32 %v7036, %v7039
      %vm7041 = vweird.f32 %v6165
      %vm7042 = vweird.f32 %v7036
      %vm7043 = vmor %vm7041, %vm7042
      %v7044 = vsel %vm7043, %v7036, %v7040
      %v7045 = vand.u32 2147483647, %v6165
      %vm7046 = vcmp.eq.f32.partialorder %v7045, 8.507059e+37
      %v7047 = vand.u32 %v6165, 2147483648
      %v7048 = vor.u32 1.1754944e-38, %v7047
      %v7049 = vsel %vm7046, %v7048, %v7044
      %v7050 = vmul.f32 1.0, %v7049
      %v7051 = vrcp.pop %v6171
      %v7052 = vmul.f32 %v6171, %v7051
      %v7053 = vsub.f32 1.0, %v7052
      %v7054 = vmul.f32 %v7051, %v7053
      %v7055 = vadd.f32 %v7051, %v7054
      %vm7056 = vweird.f32 %v6171
      %vm7057 = vweird.f32 %v7051
      %vm7058 = vmor %vm7056, %vm7057
      %v7059 = vsel %vm7058, %v7051, %v7055
      %v7060 = vand.u32 2147483647, %v6171
      %vm7061 = vcmp.eq.f32.partialorder %v7060, 8.507059e+37
      %v7062 = vand.u32 %v6171, 2147483648
      %v7063 = vor.u32 1.1754944e-38, %v7062
      %v7064 = vsel %vm7061, %v7063, %v7059
      %v7065 = vmul.f32 1.0, %v7064
      %v7066 = vrcp.pop %v6177
      %v7067 = vmul.f32 %v6177, %v7066
      %v7068 = vsub.f32 1.0, %v7067
      %v7069 = vmul.f32 %v7066, %v7068
      %v7070 = vadd.f32 %v7066, %v7069
      %vm7071 = vweird.f32 %v6177
      %vm7072 = vweird.f32 %v7066
      %vm7073 = vmor %vm7071, %vm7072
      %v7074 = vsel %vm7073, %v7066, %v7070
      %v7075 = vand.u32 2147483647, %v6177
      %vm7076 = vcmp.eq.f32.partialorder %v7075, 8.507059e+37
      %v7077 = vand.u32 %v6177, 2147483648
      %v7078 = vor.u32 1.1754944e-38, %v7077
      %v7079 = vsel %vm7076, %v7078, %v7074
      %v7080 = vmul.f32 1.0, %v7079
      %v7081 = vrcp.pop %v6183
      %v7082 = vmul.f32 %v6183, %v7081
      %v7083 = vsub.f32 1.0, %v7082
      %v7084 = vmul.f32 %v7081, %v7083
      %v7085 = vadd.f32 %v7081, %v7084
      %vm7086 = vweird.f32 %v6183
      %vm7087 = vweird.f32 %v7081
      %vm7088 = vmor %vm7086, %vm7087
      %v7089 = vsel %vm7088, %v7081, %v7085
      %v7090 = vand.u32 2147483647, %v6183
      %vm7091 = vcmp.eq.f32.partialorder %v7090, 8.507059e+37
      %v7092 = vand.u32 %v6183, 2147483648
      %v7093 = vor.u32 1.1754944e-38, %v7092
      %v7094 = vsel %vm7091, %v7093, %v7089
      %v7095 = vmul.f32 1.0, %v7094
      %v7096 = vrcp.pop %v6189
      %v7097 = vmul.f32 %v6189, %v7096
      %v7098 = vsub.f32 1.0, %v7097
      %v7099 = vmul.f32 %v7096, %v7098
      %v7100 = vadd.f32 %v7096, %v7099
      %vm7101 = vweird.f32 %v6189
      %vm7102 = vweird.f32 %v7096
      %vm7103 = vmor %vm7101, %vm7102
      %v7104 = vsel %vm7103, %v7096, %v7100
      %v7105 = vand.u32 2147483647, %v6189
      %vm7106 = vcmp.eq.f32.partialorder %v7105, 8.507059e+37
      %v7107 = vand.u32 %v6189, 2147483648
      %v7108 = vor.u32 1.1754944e-38, %v7107
      %v7109 = vsel %vm7106, %v7108, %v7104
      %v7110 = vmul.f32 1.0, %v7109
      %v7111 = vrcp.pop %v6195
      %v7112 = vmul.f32 %v6195, %v7111
      %v7113 = vsub.f32 1.0, %v7112
      %v7114 = vmul.f32 %v7111, %v7113
      %v7115 = vadd.f32 %v7111, %v7114
      %vm7116 = vweird.f32 %v6195
      %vm7117 = vweird.f32 %v7111
      %vm7118 = vmor %vm7116, %vm7117
      %v7119 = vsel %vm7118, %v7111, %v7115
      %v7120 = vand.u32 2147483647, %v6195
      %vm7121 = vcmp.eq.f32.partialorder %v7120, 8.507059e+37
      %v7122 = vand.u32 %v6195, 2147483648
      %v7123 = vor.u32 1.1754944e-38, %v7122
      %v7124 = vsel %vm7121, %v7123, %v7119
      %v7125 = vmul.f32 1.0, %v7124
      %v7126 = vrcp.pop %v6201
      %v7127 = vmul.f32 %v6201, %v7126
      %v7128 = vsub.f32 1.0, %v7127
      %v7129 = vmul.f32 %v7126, %v7128
      %v7130 = vadd.f32 %v7126, %v7129
      %vm7131 = vweird.f32 %v6201
      %vm7132 = vweird.f32 %v7126
      %vm7133 = vmor %vm7131, %vm7132
      %v7134 = vsel %vm7133, %v7126, %v7130
      %v7135 = vand.u32 2147483647, %v6201
      %vm7136 = vcmp.eq.f32.partialorder %v7135, 8.507059e+37
      %v7137 = vand.u32 %v6201, 2147483648
      %v7138 = vor.u32 1.1754944e-38, %v7137
      %v7139 = vsel %vm7136, %v7138, %v7134
      %v7140 = vmul.f32 1.0, %v7139
      %v7141 = vrcp.pop %v6207
      %v7142 = vmul.f32 %v6207, %v7141
      %v7143 = vsub.f32 1.0, %v7142
      %v7144 = vmul.f32 %v7141, %v7143
      %v7145 = vadd.f32 %v7141, %v7144
      %vm7146 = vweird.f32 %v6207
      %vm7147 = vweird.f32 %v7141
      %vm7148 = vmor %vm7146, %vm7147
      %v7149 = vsel %vm7148, %v7141, %v7145
      %v7150 = vand.u32 2147483647, %v6207
      %vm7151 = vcmp.eq.f32.partialorder %v7150, 8.507059e+37
      %v7152 = vand.u32 %v6207, 2147483648
      %v7153 = vor.u32 1.1754944e-38, %v7152
      %v7154 = vsel %vm7151, %v7153, %v7149
      %v7155 = vmul.f32 1.0, %v7154
      %v7156 = vrcp.pop %v6213
      %v7157 = vmul.f32 %v6213, %v7156
      %v7158 = vsub.f32 1.0, %v7157
      %v7159 = vmul.f32 %v7156, %v7158
      %v7160 = vadd.f32 %v7156, %v7159
      %vm7161 = vweird.f32 %v6213
      %vm7162 = vweird.f32 %v7156
      %vm7163 = vmor %vm7161, %vm7162
      %v7164 = vsel %vm7163, %v7156, %v7160
      %v7165 = vand.u32 2147483647, %v6213
      %vm7166 = vcmp.eq.f32.partialorder %v7165, 8.507059e+37
      %v7167 = vand.u32 %v6213, 2147483648
      %v7168 = vor.u32 1.1754944e-38, %v7167
      %v7169 = vsel %vm7166, %v7168, %v7164
      %v7170 = vmul.f32 1.0, %v7169
      %v7171 = vrcp.pop %v6219
      %v7172 = vmul.f32 %v6219, %v7171
      %v7173 = vsub.f32 1.0, %v7172
      %v7174 = vmul.f32 %v7171, %v7173
      %v7175 = vadd.f32 %v7171, %v7174
      %vm7176 = vweird.f32 %v6219
      %vm7177 = vweird.f32 %v7171
      %vm7178 = vmor %vm7176, %vm7177
      %v7179 = vsel %vm7178, %v7171, %v7175
      %v7180 = vand.u32 2147483647, %v6219
      %vm7181 = vcmp.eq.f32.partialorder %v7180, 8.507059e+37
      %v7182 = vand.u32 %v6219, 2147483648
      %v7183 = vor.u32 1.1754944e-38, %v7182
      %v7184 = vsel %vm7181, %v7183, %v7179
      %v7185 = vmul.f32 1.0, %v7184
      %v7186 = vrcp.pop %v6225
      %v7187 = vmul.f32 %v6225, %v7186
      %v7188 = vsub.f32 1.0, %v7187
      %v7189 = vmul.f32 %v7186, %v7188
      %v7190 = vadd.f32 %v7186, %v7189
      %vm7191 = vweird.f32 %v6225
      %vm7192 = vweird.f32 %v7186
      %vm7193 = vmor %vm7191, %vm7192
      %v7194 = vsel %vm7193, %v7186, %v7190
      %v7195 = vand.u32 2147483647, %v6225
      %vm7196 = vcmp.eq.f32.partialorder %v7195, 8.507059e+37
      %v7197 = vand.u32 %v6225, 2147483648
      %v7198 = vor.u32 1.1754944e-38, %v7197
      %v7199 = vsel %vm7196, %v7198, %v7194
      %v7200 = vmul.f32 1.0, %v7199
      %v7201 = vrcp.pop %v6231
      %v7202 = vmul.f32 %v6231, %v7201
      %v7203 = vsub.f32 1.0, %v7202
      %v7204 = vmul.f32 %v7201, %v7203
      %v7205 = vadd.f32 %v7201, %v7204
      %vm7206 = vweird.f32 %v6231
      %vm7207 = vweird.f32 %v7201
      %vm7208 = vmor %vm7206, %vm7207
      %v7209 = vsel %vm7208, %v7201, %v7205
      %v7210 = vand.u32 2147483647, %v6231
      %vm7211 = vcmp.eq.f32.partialorder %v7210, 8.507059e+37
      %v7212 = vand.u32 %v6231, 2147483648
      %v7213 = vor.u32 1.1754944e-38, %v7212
      %v7214 = vsel %vm7211, %v7213, %v7209
      %v7215 = vmul.f32 1.0, %v7214
      %v7216 = vrcp.pop %v6237
      %v7217 = vmul.f32 %v6237, %v7216
      %v7218 = vsub.f32 1.0, %v7217
      %v7219 = vmul.f32 %v7216, %v7218
      %v7220 = vadd.f32 %v7216, %v7219
      %vm7221 = vweird.f32 %v6237
      %vm7222 = vweird.f32 %v7216
      %vm7223 = vmor %vm7221, %vm7222
      %v7224 = vsel %vm7223, %v7216, %v7220
      %v7225 = vand.u32 2147483647, %v6237
      %vm7226 = vcmp.eq.f32.partialorder %v7225, 8.507059e+37
      %v7227 = vand.u32 %v6237, 2147483648
      %v7228 = vor.u32 1.1754944e-38, %v7227
      %v7229 = vsel %vm7226, %v7228, %v7224
      %v7230 = vmul.f32 1.0, %v7229
      %v7231 = vrcp.pop %v6243
      %v7232 = vmul.f32 %v6243, %v7231
      %v7233 = vsub.f32 1.0, %v7232
      %v7234 = vmul.f32 %v7231, %v7233
      %v7235 = vadd.f32 %v7231, %v7234
      %vm7236 = vweird.f32 %v6243
      %vm7237 = vweird.f32 %v7231
      %vm7238 = vmor %vm7236, %vm7237
      %v7239 = vsel %vm7238, %v7231, %v7235
      %v7240 = vand.u32 2147483647, %v6243
      %vm7241 = vcmp.eq.f32.partialorder %v7240, 8.507059e+37
      %v7242 = vand.u32 %v6243, 2147483648
      %v7243 = vor.u32 1.1754944e-38, %v7242
      %v7244 = vsel %vm7241, %v7243, %v7239
      %v7245 = vmul.f32 1.0, %v7244
      %v7246 = vrcp.pop %v6249
      %v7247 = vmul.f32 %v6249, %v7246
      %v7248 = vsub.f32 1.0, %v7247
      %v7249 = vmul.f32 %v7246, %v7248
      %v7250 = vadd.f32 %v7246, %v7249
      %vm7251 = vweird.f32 %v6249
      %vm7252 = vweird.f32 %v7246
      %vm7253 = vmor %vm7251, %vm7252
      %v7254 = vsel %vm7253, %v7246, %v7250
      %v7255 = vand.u32 2147483647, %v6249
      %vm7256 = vcmp.eq.f32.partialorder %v7255, 8.507059e+37
      %v7257 = vand.u32 %v6249, 2147483648
      %v7258 = vor.u32 1.1754944e-38, %v7257
      %v7259 = vsel %vm7256, %v7258, %v7254
      %v7260 = vmul.f32 1.0, %v7259
      %v7261 = vrcp.pop %v6255
      %v7262 = vmul.f32 %v6255, %v7261
      %v7263 = vsub.f32 1.0, %v7262
      %v7264 = vmul.f32 %v7261, %v7263
      %v7265 = vadd.f32 %v7261, %v7264
      %vm7266 = vweird.f32 %v6255
      %vm7267 = vweird.f32 %v7261
      %vm7268 = vmor %vm7266, %vm7267
      %v7269 = vsel %vm7268, %v7261, %v7265
      %v7270 = vand.u32 2147483647, %v6255
      %vm7271 = vcmp.eq.f32.partialorder %v7270, 8.507059e+37
      %v7272 = vand.u32 %v6255, 2147483648
      %v7273 = vor.u32 1.1754944e-38, %v7272
      %v7274 = vsel %vm7271, %v7273, %v7269
      %v7275 = vmul.f32 1.0, %v7274
      %v7276 = vrcp.pop %v6261
      %v7277 = vmul.f32 %v6261, %v7276
      %v7278 = vsub.f32 1.0, %v7277
      %v7279 = vmul.f32 %v7276, %v7278
      %v7280 = vadd.f32 %v7276, %v7279
      %vm7281 = vweird.f32 %v6261
      %vm7282 = vweird.f32 %v7276
      %vm7283 = vmor %vm7281, %vm7282
      %v7284 = vsel %vm7283, %v7276, %v7280
      %v7285 = vand.u32 2147483647, %v6261
      %vm7286 = vcmp.eq.f32.partialorder %v7285, 8.507059e+37
      %v7287 = vand.u32 %v6261, 2147483648
      %v7288 = vor.u32 1.1754944e-38, %v7287
      %v7289 = vsel %vm7286, %v7288, %v7284
      %v7290 = vmul.f32 1.0, %v7289
      %v7291 = vrcp.pop %v6267
      %v7292 = vmul.f32 %v6267, %v7291
      %v7293 = vsub.f32 1.0, %v7292
      %v7294 = vmul.f32 %v7291, %v7293
      %v7295 = vadd.f32 %v7291, %v7294
      %vm7296 = vweird.f32 %v6267
      %vm7297 = vweird.f32 %v7291
      %vm7298 = vmor %vm7296, %vm7297
      %v7299 = vsel %vm7298, %v7291, %v7295
      %v7300 = vand.u32 2147483647, %v6267
      %vm7301 = vcmp.eq.f32.partialorder %v7300, 8.507059e+37
      %v7302 = vand.u32 %v6267, 2147483648
      %v7303 = vor.u32 1.1754944e-38, %v7302
      %v7304 = vsel %vm7301, %v7303, %v7299
      %v7305 = vmul.f32 1.0, %v7304
      %v7306 = vrcp.pop %v6273
      %v7307 = vmul.f32 %v6273, %v7306
      %v7308 = vsub.f32 1.0, %v7307
      %v7309 = vmul.f32 %v7306, %v7308
      %v7310 = vadd.f32 %v7306, %v7309
      %vm7311 = vweird.f32 %v6273
      %vm7312 = vweird.f32 %v7306
      %vm7313 = vmor %vm7311, %vm7312
      %v7314 = vsel %vm7313, %v7306, %v7310
      %v7315 = vand.u32 2147483647, %v6273
      %vm7316 = vcmp.eq.f32.partialorder %v7315, 8.507059e+37
      %v7317 = vand.u32 %v6273, 2147483648
      %v7318 = vor.u32 1.1754944e-38, %v7317
      %v7319 = vsel %vm7316, %v7318, %v7314
      %v7320 = vmul.f32 1.0, %v7319
      %v7321 = vrcp.pop %v6279
      %v7322 = vmul.f32 %v6279, %v7321
      %v7323 = vsub.f32 1.0, %v7322
      %v7324 = vmul.f32 %v7321, %v7323
      %v7325 = vadd.f32 %v7321, %v7324
      %vm7326 = vweird.f32 %v6279
      %vm7327 = vweird.f32 %v7321
      %vm7328 = vmor %vm7326, %vm7327
      %v7329 = vsel %vm7328, %v7321, %v7325
      %v7330 = vand.u32 2147483647, %v6279
      %vm7331 = vcmp.eq.f32.partialorder %v7330, 8.507059e+37
      %v7332 = vand.u32 %v6279, 2147483648
      %v7333 = vor.u32 1.1754944e-38, %v7332
      %v7334 = vsel %vm7331, %v7333, %v7329
      %v7335 = vmul.f32 1.0, %v7334
      %v7336 = vrcp.pop %v6285
      %v7337 = vmul.f32 %v6285, %v7336
      %v7338 = vsub.f32 1.0, %v7337
      %v7339 = vmul.f32 %v7336, %v7338
      %v7340 = vadd.f32 %v7336, %v7339
      %vm7341 = vweird.f32 %v6285
      %vm7342 = vweird.f32 %v7336
      %vm7343 = vmor %vm7341, %vm7342
      %v7344 = vsel %vm7343, %v7336, %v7340
      %v7345 = vand.u32 2147483647, %v6285
      %vm7346 = vcmp.eq.f32.partialorder %v7345, 8.507059e+37
      %v7347 = vand.u32 %v6285, 2147483648
      %v7348 = vor.u32 1.1754944e-38, %v7347
      %v7349 = vsel %vm7346, %v7348, %v7344
      %v7350 = vmul.f32 1.0, %v7349
      %v7351 = vrcp.pop %v6291
      %v7352 = vmul.f32 %v6291, %v7351
      %v7353 = vsub.f32 1.0, %v7352
      %v7354 = vmul.f32 %v7351, %v7353
      %v7355 = vadd.f32 %v7351, %v7354
      %vm7356 = vweird.f32 %v6291
      %vm7357 = vweird.f32 %v7351
      %vm7358 = vmor %vm7356, %vm7357
      %v7359 = vsel %vm7358, %v7351, %v7355
      %v7360 = vand.u32 2147483647, %v6291
      %vm7361 = vcmp.eq.f32.partialorder %v7360, 8.507059e+37
      %v7362 = vand.u32 %v6291, 2147483648
      %v7363 = vor.u32 1.1754944e-38, %v7362
      %v7364 = vsel %vm7361, %v7363, %v7359
      %v7365 = vmul.f32 1.0, %v7364
      %v7366 = vrcp.pop %v6297
      %v7367 = vmul.f32 %v6297, %v7366
      %v7368 = vsub.f32 1.0, %v7367
      %v7369 = vmul.f32 %v7366, %v7368
      %v7370 = vadd.f32 %v7366, %v7369
      %vm7371 = vweird.f32 %v6297
      %vm7372 = vweird.f32 %v7366
      %vm7373 = vmor %vm7371, %vm7372
      %v7374 = vsel %vm7373, %v7366, %v7370
      %v7375 = vand.u32 2147483647, %v6297
      %vm7376 = vcmp.eq.f32.partialorder %v7375, 8.507059e+37
      %v7377 = vand.u32 %v6297, 2147483648
      %v7378 = vor.u32 1.1754944e-38, %v7377
      %v7379 = vsel %vm7376, %v7378, %v7374
      %v7380 = vmul.f32 1.0, %v7379
      %v7381 = vrcp.pop %v6303
      %v7382 = vmul.f32 %v6303, %v7381
      %v7383 = vsub.f32 1.0, %v7382
      %v7384 = vmul.f32 %v7381, %v7383
      %v7385 = vadd.f32 %v7381, %v7384
      %vm7386 = vweird.f32 %v6303
      %vm7387 = vweird.f32 %v7381
      %vm7388 = vmor %vm7386, %vm7387
      %v7389 = vsel %vm7388, %v7381, %v7385
      %v7390 = vand.u32 2147483647, %v6303
      %vm7391 = vcmp.eq.f32.partialorder %v7390, 8.507059e+37
      %v7392 = vand.u32 %v6303, 2147483648
      %v7393 = vor.u32 1.1754944e-38, %v7392
      %v7394 = vsel %vm7391, %v7393, %v7389
      %v7395 = vmul.f32 1.0, %v7394
      %v7396 = vrcp.pop %v6309
      %v7397 = vmul.f32 %v6309, %v7396
      %v7398 = vsub.f32 1.0, %v7397
      %v7399 = vmul.f32 %v7396, %v7398
      %v7400 = vadd.f32 %v7396, %v7399
      %vm7401 = vweird.f32 %v6309
      %vm7402 = vweird.f32 %v7396
      %vm7403 = vmor %vm7401, %vm7402
      %v7404 = vsel %vm7403, %v7396, %v7400
      %v7405 = vand.u32 2147483647, %v6309
      %vm7406 = vcmp.eq.f32.partialorder %v7405, 8.507059e+37
      %v7407 = vand.u32 %v6309, 2147483648
      %v7408 = vor.u32 1.1754944e-38, %v7407
      %v7409 = vsel %vm7406, %v7408, %v7404
      %v7410 = vmul.f32 1.0, %v7409
      %v7411 = vrcp.pop %v6315
      %v7412 = vmul.f32 %v6315, %v7411
      %v7413 = vsub.f32 1.0, %v7412
      %v7414 = vmul.f32 %v7411, %v7413
      %v7415 = vadd.f32 %v7411, %v7414
      %vm7416 = vweird.f32 %v6315
      %vm7417 = vweird.f32 %v7411
      %vm7418 = vmor %vm7416, %vm7417
      %v7419 = vsel %vm7418, %v7411, %v7415
      %v7420 = vand.u32 2147483647, %v6315
      %vm7421 = vcmp.eq.f32.partialorder %v7420, 8.507059e+37
      %v7422 = vand.u32 %v6315, 2147483648
      %v7423 = vor.u32 1.1754944e-38, %v7422
      %v7424 = vsel %vm7421, %v7423, %v7419
      %v7425 = vmul.f32 1.0, %v7424
      %v7426 = vrcp.pop %v6321
      %v7427 = vmul.f32 %v6321, %v7426
      %v7428 = vsub.f32 1.0, %v7427
      %v7429 = vmul.f32 %v7426, %v7428
      %v7430 = vadd.f32 %v7426, %v7429
      %vm7431 = vweird.f32 %v6321
      %vm7432 = vweird.f32 %v7426
      %vm7433 = vmor %vm7431, %vm7432
      %v7434 = vsel %vm7433, %v7426, %v7430
      %v7435 = vand.u32 2147483647, %v6321
      %vm7436 = vcmp.eq.f32.partialorder %v7435, 8.507059e+37
      %v7437 = vand.u32 %v6321, 2147483648
      %v7438 = vor.u32 1.1754944e-38, %v7437
      %v7439 = vsel %vm7436, %v7438, %v7434
      %v7440 = vmul.f32 1.0, %v7439
      %v7441 = vrcp.pop %v6327
      %v7442 = vmul.f32 %v6327, %v7441
      %v7443 = vsub.f32 1.0, %v7442
      %v7444 = vmul.f32 %v7441, %v7443
      %v7445 = vadd.f32 %v7441, %v7444
      %vm7446 = vweird.f32 %v6327
      %vm7447 = vweird.f32 %v7441
      %vm7448 = vmor %vm7446, %vm7447
      %v7449 = vsel %vm7448, %v7441, %v7445
      %v7450 = vand.u32 2147483647, %v6327
      %vm7451 = vcmp.eq.f32.partialorder %v7450, 8.507059e+37
      %v7452 = vand.u32 %v6327, 2147483648
      %v7453 = vor.u32 1.1754944e-38, %v7452
      %v7454 = vsel %vm7451, %v7453, %v7449
      %v7455 = vmul.f32 1.0, %v7454
      %v7456 = vrcp.pop %v6333
      %v7457 = vmul.f32 %v6333, %v7456
      %v7458 = vsub.f32 1.0, %v7457
      %v7459 = vmul.f32 %v7456, %v7458
      %v7460 = vadd.f32 %v7456, %v7459
      %vm7461 = vweird.f32 %v6333
      %vm7462 = vweird.f32 %v7456
      %vm7463 = vmor %vm7461, %vm7462
      %v7464 = vsel %vm7463, %v7456, %v7460
      %v7465 = vand.u32 2147483647, %v6333
      %vm7466 = vcmp.eq.f32.partialorder %v7465, 8.507059e+37
      %v7467 = vand.u32 %v6333, 2147483648
      %v7468 = vor.u32 1.1754944e-38, %v7467
      %v7469 = vsel %vm7466, %v7468, %v7464
      %v7470 = vmul.f32 1.0, %v7469
      %v7471 = vrcp.pop %v6339
      %v7472 = vmul.f32 %v6339, %v7471
      %v7473 = vsub.f32 1.0, %v7472
      %v7474 = vmul.f32 %v7471, %v7473
      %v7475 = vadd.f32 %v7471, %v7474
      %vm7476 = vweird.f32 %v6339
      %vm7477 = vweird.f32 %v7471
      %vm7478 = vmor %vm7476, %vm7477
      %v7479 = vsel %vm7478, %v7471, %v7475
      %v7480 = vand.u32 2147483647, %v6339
      %vm7481 = vcmp.eq.f32.partialorder %v7480, 8.507059e+37
      %v7482 = vand.u32 %v6339, 2147483648
      %v7483 = vor.u32 1.1754944e-38, %v7482
      %v7484 = vsel %vm7481, %v7483, %v7479
      %v7485 = vmul.f32 1.0, %v7484
      %v7486 = vrcp.pop %v6345
      %v7487 = vmul.f32 %v6345, %v7486
      %v7488 = vsub.f32 1.0, %v7487
      %v7489 = vmul.f32 %v7486, %v7488
      %v7490 = vadd.f32 %v7486, %v7489
      %vm7491 = vweird.f32 %v6345
      %vm7492 = vweird.f32 %v7486
      %vm7493 = vmor %vm7491, %vm7492
      %v7494 = vsel %vm7493, %v7486, %v7490
      %v7495 = vand.u32 2147483647, %v6345
      %vm7496 = vcmp.eq.f32.partialorder %v7495, 8.507059e+37
      %v7497 = vand.u32 %v6345, 2147483648
      %v7498 = vor.u32 1.1754944e-38, %v7497
      %v7499 = vsel %vm7496, %v7498, %v7494
      %v7500 = vmul.f32 1.0, %v7499
      %v7501 = vrcp.pop %v6351
      %v7502 = vmul.f32 %v6351, %v7501
      %v7503 = vsub.f32 1.0, %v7502
      %v7504 = vmul.f32 %v7501, %v7503
      %v7505 = vadd.f32 %v7501, %v7504
      %vm7506 = vweird.f32 %v6351
      %vm7507 = vweird.f32 %v7501
      %vm7508 = vmor %vm7506, %vm7507
      %v7509 = vsel %vm7508, %v7501, %v7505
      %v7510 = vand.u32 2147483647, %v6351
      %vm7511 = vcmp.eq.f32.partialorder %v7510, 8.507059e+37
      %v7512 = vand.u32 %v6351, 2147483648
      %v7513 = vor.u32 1.1754944e-38, %v7512
      %v7514 = vsel %vm7511, %v7513, %v7509
      %v7515 = vmul.f32 1.0, %v7514
      %v7516 = vrcp.pop %v6357
      %v7517 = vmul.f32 %v6357, %v7516
      %v7518 = vsub.f32 1.0, %v7517
      %v7519 = vmul.f32 %v7516, %v7518
      %v7520 = vadd.f32 %v7516, %v7519
      %vm7521 = vweird.f32 %v6357
      %vm7522 = vweird.f32 %v7516
      %vm7523 = vmor %vm7521, %vm7522
      %v7524 = vsel %vm7523, %v7516, %v7520
      %v7525 = vand.u32 2147483647, %v6357
      %vm7526 = vcmp.eq.f32.partialorder %v7525, 8.507059e+37
      %v7527 = vand.u32 %v6357, 2147483648
      %v7528 = vor.u32 1.1754944e-38, %v7527
      %v7529 = vsel %vm7526, %v7528, %v7524
      %v7530 = vmul.f32 1.0, %v7529
      %v7531 = vrcp.pop %v6363
      %v7532 = vmul.f32 %v6363, %v7531
      %v7533 = vsub.f32 1.0, %v7532
      %v7534 = vmul.f32 %v7531, %v7533
      %v7535 = vadd.f32 %v7531, %v7534
      %vm7536 = vweird.f32 %v6363
      %vm7537 = vweird.f32 %v7531
      %vm7538 = vmor %vm7536, %vm7537
      %v7539 = vsel %vm7538, %v7531, %v7535
      %v7540 = vand.u32 2147483647, %v6363
      %vm7541 = vcmp.eq.f32.partialorder %v7540, 8.507059e+37
      %v7542 = vand.u32 %v6363, 2147483648
      %v7543 = vor.u32 1.1754944e-38, %v7542
      %v7544 = vsel %vm7541, %v7543, %v7539
      %v7545 = vmul.f32 1.0, %v7544
      %v7546 = vrcp.pop %v6369
      %v7547 = vmul.f32 %v6369, %v7546
      %v7548 = vsub.f32 1.0, %v7547
      %v7549 = vmul.f32 %v7546, %v7548
      %v7550 = vadd.f32 %v7546, %v7549
      %vm7551 = vweird.f32 %v6369
      %vm7552 = vweird.f32 %v7546
      %vm7553 = vmor %vm7551, %vm7552
      %v7554 = vsel %vm7553, %v7546, %v7550
      %v7555 = vand.u32 2147483647, %v6369
      %vm7556 = vcmp.eq.f32.partialorder %v7555, 8.507059e+37
      %v7557 = vand.u32 %v6369, 2147483648
      %v7558 = vor.u32 1.1754944e-38, %v7557
      %v7559 = vsel %vm7556, %v7558, %v7554
      %v7560 = vmul.f32 1.0, %v7559
      %v7561 = vrcp.pop %v6375
      %v7562 = vmul.f32 %v6375, %v7561
      %v7563 = vsub.f32 1.0, %v7562
      %v7564 = vmul.f32 %v7561, %v7563
      %v7565 = vadd.f32 %v7561, %v7564
      %vm7566 = vweird.f32 %v6375
      %vm7567 = vweird.f32 %v7561
      %vm7568 = vmor %vm7566, %vm7567
      %v7569 = vsel %vm7568, %v7561, %v7565
      %v7570 = vand.u32 2147483647, %v6375
      %vm7571 = vcmp.eq.f32.partialorder %v7570, 8.507059e+37
      %v7572 = vand.u32 %v6375, 2147483648
      %v7573 = vor.u32 1.1754944e-38, %v7572
      %v7574 = vsel %vm7571, %v7573, %v7569
      %v7575 = vmul.f32 1.0, %v7574
      %v7576 = vrcp.pop %v6381
      %v7577 = vmul.f32 %v6381, %v7576
      %v7578 = vsub.f32 1.0, %v7577
      %v7579 = vmul.f32 %v7576, %v7578
      %v7580 = vadd.f32 %v7576, %v7579
      %vm7581 = vweird.f32 %v6381
      %vm7582 = vweird.f32 %v7576
      %vm7583 = vmor %vm7581, %vm7582
      %v7584 = vsel %vm7583, %v7576, %v7580
      %v7585 = vand.u32 2147483647, %v6381
      %vm7586 = vcmp.eq.f32.partialorder %v7585, 8.507059e+37
      %v7587 = vand.u32 %v6381, 2147483648
      %v7588 = vor.u32 1.1754944e-38, %v7587
      %v7589 = vsel %vm7586, %v7588, %v7584
      %v7590 = vmul.f32 1.0, %v7589
      %v7591 = vrcp.pop %v6387
      %v7592 = vmul.f32 %v6387, %v7591
      %v7593 = vsub.f32 1.0, %v7592
      %v7594 = vmul.f32 %v7591, %v7593
      %v7595 = vadd.f32 %v7591, %v7594
      %vm7596 = vweird.f32 %v6387
      %vm7597 = vweird.f32 %v7591
      %vm7598 = vmor %vm7596, %vm7597
      %v7599 = vsel %vm7598, %v7591, %v7595
      %v7600 = vand.u32 2147483647, %v6387
      %vm7601 = vcmp.eq.f32.partialorder %v7600, 8.507059e+37
      %v7602 = vand.u32 %v6387, 2147483648
      %v7603 = vor.u32 1.1754944e-38, %v7602
      %v7604 = vsel %vm7601, %v7603, %v7599
      %v7605 = vmul.f32 1.0, %v7604
      %v7606 = vrcp.pop %v6393
      %v7607 = vmul.f32 %v6393, %v7606
      %v7608 = vsub.f32 1.0, %v7607
      %v7609 = vmul.f32 %v7606, %v7608
      %v7610 = vadd.f32 %v7606, %v7609
      %vm7611 = vweird.f32 %v6393
      %vm7612 = vweird.f32 %v7606
      %vm7613 = vmor %vm7611, %vm7612
      %v7614 = vsel %vm7613, %v7606, %v7610
      %v7615 = vand.u32 2147483647, %v6393
      %vm7616 = vcmp.eq.f32.partialorder %v7615, 8.507059e+37
      %v7617 = vand.u32 %v6393, 2147483648
      %v7618 = vor.u32 1.1754944e-38, %v7617
      %v7619 = vsel %vm7616, %v7618, %v7614
      %v7620 = vmul.f32 1.0, %v7619
      %v7621 = vrcp.pop %v6399
      %v7622 = vmul.f32 %v6399, %v7621
      %v7623 = vsub.f32 1.0, %v7622
      %v7624 = vmul.f32 %v7621, %v7623
      %v7625 = vadd.f32 %v7621, %v7624
      %vm7626 = vweird.f32 %v6399
      %vm7627 = vweird.f32 %v7621
      %vm7628 = vmor %vm7626, %vm7627
      %v7629 = vsel %vm7628, %v7621, %v7625
      %v7630 = vand.u32 2147483647, %v6399
      %vm7631 = vcmp.eq.f32.partialorder %v7630, 8.507059e+37
      %v7632 = vand.u32 %v6399, 2147483648
      %v7633 = vor.u32 1.1754944e-38, %v7632
      %v7634 = vsel %vm7631, %v7633, %v7629
      %v7635 = vmul.f32 1.0, %v7634
      %v7636 = vrcp.pop %v6405
      %v7637 = vmul.f32 %v6405, %v7636
      %v7638 = vsub.f32 1.0, %v7637
      %v7639 = vmul.f32 %v7636, %v7638
      %v7640 = vadd.f32 %v7636, %v7639
      %vm7641 = vweird.f32 %v6405
      %vm7642 = vweird.f32 %v7636
      %vm7643 = vmor %vm7641, %vm7642
      %v7644 = vsel %vm7643, %v7636, %v7640
      %v7645 = vand.u32 2147483647, %v6405
      %vm7646 = vcmp.eq.f32.partialorder %v7645, 8.507059e+37
      %v7647 = vand.u32 %v6405, 2147483648
      %v7648 = vor.u32 1.1754944e-38, %v7647
      %v7649 = vsel %vm7646, %v7648, %v7644
      %v7650 = vmul.f32 1.0, %v7649
      %v7651 = vrcp.pop %v6411
      %v7652 = vmul.f32 %v6411, %v7651
      %v7653 = vsub.f32 1.0, %v7652
      %v7654 = vmul.f32 %v7651, %v7653
      %v7655 = vadd.f32 %v7651, %v7654
      %vm7656 = vweird.f32 %v6411
      %vm7657 = vweird.f32 %v7651
      %vm7658 = vmor %vm7656, %vm7657
      %v7659 = vsel %vm7658, %v7651, %v7655
      %v7660 = vand.u32 2147483647, %v6411
      %vm7661 = vcmp.eq.f32.partialorder %v7660, 8.507059e+37
      %v7662 = vand.u32 %v6411, 2147483648
      %v7663 = vor.u32 1.1754944e-38, %v7662
      %v7664 = vsel %vm7661, %v7663, %v7659
      %v7665 = vmul.f32 1.0, %v7664
      %v7666 = vrcp.pop %v6417
      %v7667 = vmul.f32 %v6417, %v7666
      %v7668 = vsub.f32 1.0, %v7667
      %v7669 = vmul.f32 %v7666, %v7668
      %v7670 = vadd.f32 %v7666, %v7669
      %vm7671 = vweird.f32 %v6417
      %vm7672 = vweird.f32 %v7666
      %vm7673 = vmor %vm7671, %vm7672
      %v7674 = vsel %vm7673, %v7666, %v7670
      %v7675 = vand.u32 2147483647, %v6417
      %vm7676 = vcmp.eq.f32.partialorder %v7675, 8.507059e+37
      %v7677 = vand.u32 %v6417, 2147483648
      %v7678 = vor.u32 1.1754944e-38, %v7677
      %v7679 = vsel %vm7676, %v7678, %v7674
      %v7680 = vmul.f32 1.0, %v7679
      %v7681 = vrcp.pop %v6423
      %v7682 = vmul.f32 %v6423, %v7681
      %v7683 = vsub.f32 1.0, %v7682
      %v7684 = vmul.f32 %v7681, %v7683
      %v7685 = vadd.f32 %v7681, %v7684
      %vm7686 = vweird.f32 %v6423
      %vm7687 = vweird.f32 %v7681
      %vm7688 = vmor %vm7686, %vm7687
      %v7689 = vsel %vm7688, %v7681, %v7685
      %v7690 = vand.u32 2147483647, %v6423
      %vm7691 = vcmp.eq.f32.partialorder %v7690, 8.507059e+37
      %v7692 = vand.u32 %v6423, 2147483648
      %v7693 = vor.u32 1.1754944e-38, %v7692
      %v7694 = vsel %vm7691, %v7693, %v7689
      %v7695 = vmul.f32 1.0, %v7694
      %v7696 = vrcp.pop %v6429
      %v7697 = vmul.f32 %v6429, %v7696
      %v7698 = vsub.f32 1.0, %v7697
      %v7699 = vmul.f32 %v7696, %v7698
      %v7700 = vadd.f32 %v7696, %v7699
      %vm7701 = vweird.f32 %v6429
      %vm7702 = vweird.f32 %v7696
      %vm7703 = vmor %vm7701, %vm7702
      %v7704 = vsel %vm7703, %v7696, %v7700
      %v7705 = vand.u32 2147483647, %v6429
      %vm7706 = vcmp.eq.f32.partialorder %v7705, 8.507059e+37
      %v7707 = vand.u32 %v6429, 2147483648
      %v7708 = vor.u32 1.1754944e-38, %v7707
      %v7709 = vsel %vm7706, %v7708, %v7704
      %v7710 = vmul.f32 1.0, %v7709
      %v7711 = vrcp.pop %v6435
      %v7712 = vmul.f32 %v6435, %v7711
      %v7713 = vsub.f32 1.0, %v7712
      %v7714 = vmul.f32 %v7711, %v7713
      %v7715 = vadd.f32 %v7711, %v7714
      %vm7716 = vweird.f32 %v6435
      %vm7717 = vweird.f32 %v7711
      %vm7718 = vmor %vm7716, %vm7717
      %v7719 = vsel %vm7718, %v7711, %v7715
      %v7720 = vand.u32 2147483647, %v6435
      %vm7721 = vcmp.eq.f32.partialorder %v7720, 8.507059e+37
      %v7722 = vand.u32 %v6435, 2147483648
      %v7723 = vor.u32 1.1754944e-38, %v7722
      %v7724 = vsel %vm7721, %v7723, %v7719
      %v7725 = vmul.f32 1.0, %v7724
      %v7726 = vrcp.pop %v6441
      %v7727 = vmul.f32 %v6441, %v7726
      %v7728 = vsub.f32 1.0, %v7727
      %v7729 = vmul.f32 %v7726, %v7728
      %v7730 = vadd.f32 %v7726, %v7729
      %vm7731 = vweird.f32 %v6441
      %vm7732 = vweird.f32 %v7726
      %vm7733 = vmor %vm7731, %vm7732
      %v7734 = vsel %vm7733, %v7726, %v7730
      %v7735 = vand.u32 2147483647, %v6441
      %vm7736 = vcmp.eq.f32.partialorder %v7735, 8.507059e+37
      %v7737 = vand.u32 %v6441, 2147483648
      %v7738 = vor.u32 1.1754944e-38, %v7737
      %v7739 = vsel %vm7736, %v7738, %v7734
      %v7740 = vmul.f32 1.0, %v7739
      %v7741 = vrcp.pop %v6447
      %v7742 = vmul.f32 %v6447, %v7741
      %v7743 = vsub.f32 1.0, %v7742
      %v7744 = vmul.f32 %v7741, %v7743
      %v7745 = vadd.f32 %v7741, %v7744
      %vm7746 = vweird.f32 %v6447
      %vm7747 = vweird.f32 %v7741
      %vm7748 = vmor %vm7746, %vm7747
      %v7749 = vsel %vm7748, %v7741, %v7745
      %v7750 = vand.u32 2147483647, %v6447
      %vm7751 = vcmp.eq.f32.partialorder %v7750, 8.507059e+37
      %v7752 = vand.u32 %v6447, 2147483648
      %v7753 = vor.u32 1.1754944e-38, %v7752
      %v7754 = vsel %vm7751, %v7753, %v7749
      %v7755 = vmul.f32 1.0, %v7754
      %v7756 = vrcp.pop %v6453
      %v7757 = vmul.f32 %v6453, %v7756
      %v7758 = vsub.f32 1.0, %v7757
      %v7759 = vmul.f32 %v7756, %v7758
      %v7760 = vadd.f32 %v7756, %v7759
      %vm7761 = vweird.f32 %v6453
      %vm7762 = vweird.f32 %v7756
      %vm7763 = vmor %vm7761, %vm7762
      %v7764 = vsel %vm7763, %v7756, %v7760
      %v7765 = vand.u32 2147483647, %v6453
      %vm7766 = vcmp.eq.f32.partialorder %v7765, 8.507059e+37
      %v7767 = vand.u32 %v6453, 2147483648
      %v7768 = vor.u32 1.1754944e-38, %v7767
      %v7769 = vsel %vm7766, %v7768, %v7764
      %v7770 = vmul.f32 1.0, %v7769
      %v7771 = vrcp.pop %v6459
      %v7772 = vmul.f32 %v6459, %v7771
      %v7773 = vsub.f32 1.0, %v7772
      %v7774 = vmul.f32 %v7771, %v7773
      %v7775 = vadd.f32 %v7771, %v7774
      %vm7776 = vweird.f32 %v6459
      %vm7777 = vweird.f32 %v7771
      %vm7778 = vmor %vm7776, %vm7777
      %v7779 = vsel %vm7778, %v7771, %v7775
      %v7780 = vand.u32 2147483647, %v6459
      %vm7781 = vcmp.eq.f32.partialorder %v7780, 8.507059e+37
      %v7782 = vand.u32 %v6459, 2147483648
      %v7783 = vor.u32 1.1754944e-38, %v7782
      %v7784 = vsel %vm7781, %v7783, %v7779
      %v7785 = vmul.f32 1.0, %v7784
      %v7786 = vrcp.pop %v6465
      %v7787 = vmul.f32 %v6465, %v7786
      %v7788 = vsub.f32 1.0, %v7787
      %v7789 = vmul.f32 %v7786, %v7788
      %v7790 = vadd.f32 %v7786, %v7789
      %vm7791 = vweird.f32 %v6465
      %vm7792 = vweird.f32 %v7786
      %vm7793 = vmor %vm7791, %vm7792
      %v7794 = vsel %vm7793, %v7786, %v7790
      %v7795 = vand.u32 2147483647, %v6465
      %vm7796 = vcmp.eq.f32.partialorder %v7795, 8.507059e+37
      %v7797 = vand.u32 %v6465, 2147483648
      %v7798 = vor.u32 1.1754944e-38, %v7797
      %v7799 = vsel %vm7796, %v7798, %v7794
      %v7800 = vmul.f32 1.0, %v7799
      %v7801 = vrcp.pop %v6471
      %v7802 = vmul.f32 %v6471, %v7801
      %v7803 = vsub.f32 1.0, %v7802
      %v7804 = vmul.f32 %v7801, %v7803
      %v7805 = vadd.f32 %v7801, %v7804
      %vm7806 = vweird.f32 %v6471
      %vm7807 = vweird.f32 %v7801
      %vm7808 = vmor %vm7806, %vm7807
      %v7809 = vsel %vm7808, %v7801, %v7805
      %v7810 = vand.u32 2147483647, %v6471
      %vm7811 = vcmp.eq.f32.partialorder %v7810, 8.507059e+37
      %v7812 = vand.u32 %v6471, 2147483648
      %v7813 = vor.u32 1.1754944e-38, %v7812
      %v7814 = vsel %vm7811, %v7813, %v7809
      %v7815 = vmul.f32 1.0, %v7814
      %v7816 = vrcp.pop %v6477
      %v7817 = vmul.f32 %v6477, %v7816
      %v7818 = vsub.f32 1.0, %v7817
      %v7819 = vmul.f32 %v7816, %v7818
      %v7820 = vadd.f32 %v7816, %v7819
      %vm7821 = vweird.f32 %v6477
      %vm7822 = vweird.f32 %v7816
      %vm7823 = vmor %vm7821, %vm7822
      %v7824 = vsel %vm7823, %v7816, %v7820
      %v7825 = vand.u32 2147483647, %v6477
      %vm7826 = vcmp.eq.f32.partialorder %v7825, 8.507059e+37
      %v7827 = vand.u32 %v6477, 2147483648
      %v7828 = vor.u32 1.1754944e-38, %v7827
      %v7829 = vsel %vm7826, %v7828, %v7824
      %v7830 = vmul.f32 1.0, %v7829
      %v7831 = vrcp.pop %v6483
      %v7832 = vmul.f32 %v6483, %v7831
      %v7833 = vsub.f32 1.0, %v7832
      %v7834 = vmul.f32 %v7831, %v7833
      %v7835 = vadd.f32 %v7831, %v7834
      %vm7836 = vweird.f32 %v6483
      %vm7837 = vweird.f32 %v7831
      %vm7838 = vmor %vm7836, %vm7837
      %v7839 = vsel %vm7838, %v7831, %v7835
      %v7840 = vand.u32 2147483647, %v6483
      %vm7841 = vcmp.eq.f32.partialorder %v7840, 8.507059e+37
      %v7842 = vand.u32 %v6483, 2147483648
      %v7843 = vor.u32 1.1754944e-38, %v7842
      %v7844 = vsel %vm7841, %v7843, %v7839
      %v7845 = vmul.f32 1.0, %v7844
      %v7846 = vrcp.pop %v6489
      %v7847 = vmul.f32 %v6489, %v7846
      %v7848 = vsub.f32 1.0, %v7847
      %v7849 = vmul.f32 %v7846, %v7848
      %v7850 = vadd.f32 %v7846, %v7849
      %vm7851 = vweird.f32 %v6489
      %vm7852 = vweird.f32 %v7846
      %vm7853 = vmor %vm7851, %vm7852
      %v7854 = vsel %vm7853, %v7846, %v7850
      %v7855 = vand.u32 2147483647, %v6489
      %vm7856 = vcmp.eq.f32.partialorder %v7855, 8.507059e+37
      %v7857 = vand.u32 %v6489, 2147483648
      %v7858 = vor.u32 1.1754944e-38, %v7857
      %v7859 = vsel %vm7856, %v7858, %v7854
      %v7860 = vmul.f32 1.0, %v7859
      %v7861 = vrcp.pop %v6495
      %v7862 = vmul.f32 %v6495, %v7861
      %v7863 = vsub.f32 1.0, %v7862
      %v7864 = vmul.f32 %v7861, %v7863
      %v7865 = vadd.f32 %v7861, %v7864
      %vm7866 = vweird.f32 %v6495
      %vm7867 = vweird.f32 %v7861
      %vm7868 = vmor %vm7866, %vm7867
      %v7869 = vsel %vm7868, %v7861, %v7865
      %v7870 = vand.u32 2147483647, %v6495
      %vm7871 = vcmp.eq.f32.partialorder %v7870, 8.507059e+37
      %v7872 = vand.u32 %v6495, 2147483648
      %v7873 = vor.u32 1.1754944e-38, %v7872
      %v7874 = vsel %vm7871, %v7873, %v7869
      %v7875 = vmul.f32 1.0, %v7874
      %v7876 = vrcp.pop %v6501
      %v7877 = vmul.f32 %v6501, %v7876
      %v7878 = vsub.f32 1.0, %v7877
      %v7879 = vmul.f32 %v7876, %v7878
      %v7880 = vadd.f32 %v7876, %v7879
      %vm7881 = vweird.f32 %v6501
      %vm7882 = vweird.f32 %v7876
      %vm7883 = vmor %vm7881, %vm7882
      %v7884 = vsel %vm7883, %v7876, %v7880
      %v7885 = vand.u32 2147483647, %v6501
      %vm7886 = vcmp.eq.f32.partialorder %v7885, 8.507059e+37
      %v7887 = vand.u32 %v6501, 2147483648
      %v7888 = vor.u32 1.1754944e-38, %v7887
      %v7889 = vsel %vm7886, %v7888, %v7884
      %v7890 = vmul.f32 1.0, %v7889
      %v7891 = vrcp.pop %v6507
      %v7892 = vmul.f32 %v6507, %v7891
      %v7893 = vsub.f32 1.0, %v7892
      %v7894 = vmul.f32 %v7891, %v7893
      %v7895 = vadd.f32 %v7891, %v7894
      %vm7896 = vweird.f32 %v6507
      %vm7897 = vweird.f32 %v7891
      %vm7898 = vmor %vm7896, %vm7897
      %v7899 = vsel %vm7898, %v7891, %v7895
      %v7900 = vand.u32 2147483647, %v6507
      %vm7901 = vcmp.eq.f32.partialorder %v7900, 8.507059e+37
      %v7902 = vand.u32 %v6507, 2147483648
      %v7903 = vor.u32 1.1754944e-38, %v7902
      %v7904 = vsel %vm7901, %v7903, %v7899
      %v7905 = vmul.f32 1.0, %v7904
      %v7906 = vrcp.pop %v6513
      %v7907 = vmul.f32 %v6513, %v7906
      %v7908 = vsub.f32 1.0, %v7907
      %v7909 = vmul.f32 %v7906, %v7908
      %v7910 = vadd.f32 %v7906, %v7909
      %vm7911 = vweird.f32 %v6513
      %vm7912 = vweird.f32 %v7906
      %vm7913 = vmor %vm7911, %vm7912
      %v7914 = vsel %vm7913, %v7906, %v7910
      %v7915 = vand.u32 2147483647, %v6513
      %vm7916 = vcmp.eq.f32.partialorder %v7915, 8.507059e+37
      %v7917 = vand.u32 %v6513, 2147483648
      %v7918 = vor.u32 1.1754944e-38, %v7917
      %v7919 = vsel %vm7916, %v7918, %v7914
      %v7920 = vmul.f32 1.0, %v7919
      %v7921 = vrcp.pop %v6519
      %v7922 = vmul.f32 %v6519, %v7921
      %v7923 = vsub.f32 1.0, %v7922
      %v7924 = vmul.f32 %v7921, %v7923
      %v7925 = vadd.f32 %v7921, %v7924
      %vm7926 = vweird.f32 %v6519
      %vm7927 = vweird.f32 %v7921
      %vm7928 = vmor %vm7926, %vm7927
      %v7929 = vsel %vm7928, %v7921, %v7925
      %v7930 = vand.u32 2147483647, %v6519
      %vm7931 = vcmp.eq.f32.partialorder %v7930, 8.507059e+37
      %v7932 = vand.u32 %v6519, 2147483648
      %v7933 = vor.u32 1.1754944e-38, %v7932
      %v7934 = vsel %vm7931, %v7933, %v7929
      %v7935 = vmul.f32 1.0, %v7934
      %v7936 = vrcp.pop %v6525
      %v7937 = vmul.f32 %v6525, %v7936
      %v7938 = vsub.f32 1.0, %v7937
      %v7939 = vmul.f32 %v7936, %v7938
      %v7940 = vadd.f32 %v7936, %v7939
      %vm7941 = vweird.f32 %v6525
      %vm7942 = vweird.f32 %v7936
      %vm7943 = vmor %vm7941, %vm7942
      %v7944 = vsel %vm7943, %v7936, %v7940
      %v7945 = vand.u32 2147483647, %v6525
      %vm7946 = vcmp.eq.f32.partialorder %v7945, 8.507059e+37
      %v7947 = vand.u32 %v6525, 2147483648
      %v7948 = vor.u32 1.1754944e-38, %v7947
      %v7949 = vsel %vm7946, %v7948, %v7944
      %v7950 = vmul.f32 1.0, %v7949
      %v7951 = vrcp.pop %v6531
      %v7952 = vmul.f32 %v6531, %v7951
      %v7953 = vsub.f32 1.0, %v7952
      %v7954 = vmul.f32 %v7951, %v7953
      %v7955 = vadd.f32 %v7951, %v7954
      %vm7956 = vweird.f32 %v6531
      %vm7957 = vweird.f32 %v7951
      %vm7958 = vmor %vm7956, %vm7957
      %v7959 = vsel %vm7958, %v7951, %v7955
      %v7960 = vand.u32 2147483647, %v6531
      %vm7961 = vcmp.eq.f32.partialorder %v7960, 8.507059e+37
      %v7962 = vand.u32 %v6531, 2147483648
      %v7963 = vor.u32 1.1754944e-38, %v7962
      %v7964 = vsel %vm7961, %v7963, %v7959
      %v7965 = vmul.f32 1.0, %v7964
      %v7966 = vrcp.pop %v6537
      %v7967 = vmul.f32 %v6537, %v7966
      %v7968 = vsub.f32 1.0, %v7967
      %v7969 = vmul.f32 %v7966, %v7968
      %v7970 = vadd.f32 %v7966, %v7969
      %vm7971 = vweird.f32 %v6537
      %vm7972 = vweird.f32 %v7966
      %vm7973 = vmor %vm7971, %vm7972
      %v7974 = vsel %vm7973, %v7966, %v7970
      %v7975 = vand.u32 2147483647, %v6537
      %vm7976 = vcmp.eq.f32.partialorder %v7975, 8.507059e+37
      %v7977 = vand.u32 %v6537, 2147483648
      %v7978 = vor.u32 1.1754944e-38, %v7977
      %v7979 = vsel %vm7976, %v7978, %v7974
      %v7980 = vmul.f32 1.0, %v7979
      %v7981 = vrcp.pop %v6543
      %v7982 = vmul.f32 %v6543, %v7981
      %v7983 = vsub.f32 1.0, %v7982
      %v7984 = vmul.f32 %v7981, %v7983
      %v7985 = vadd.f32 %v7981, %v7984
      %vm7986 = vweird.f32 %v6543
      %vm7987 = vweird.f32 %v7981
      %vm7988 = vmor %vm7986, %vm7987
      %v7989 = vsel %vm7988, %v7981, %v7985
      %v7990 = vand.u32 2147483647, %v6543
      %vm7991 = vcmp.eq.f32.partialorder %v7990, 8.507059e+37
      %v7992 = vand.u32 %v6543, 2147483648
      %v7993 = vor.u32 1.1754944e-38, %v7992
      %v7994 = vsel %vm7991, %v7993, %v7989
      %v7995 = vmul.f32 1.0, %v7994
      %v7996 = vrcp.pop %v6549
      %v7997 = vmul.f32 %v6549, %v7996
      %v7998 = vsub.f32 1.0, %v7997
      %v7999 = vmul.f32 %v7996, %v7998
      %v8000 = vadd.f32 %v7996, %v7999
      %vm8001 = vweird.f32 %v6549
      %vm8002 = vweird.f32 %v7996
      %vm8003 = vmor %vm8001, %vm8002
      %v8004 = vsel %vm8003, %v7996, %v8000
      %v8005 = vand.u32 2147483647, %v6549
      %vm8006 = vcmp.eq.f32.partialorder %v8005, 8.507059e+37
      %v8007 = vand.u32 %v6549, 2147483648
      %v8008 = vor.u32 1.1754944e-38, %v8007
      %v8009 = vsel %vm8006, %v8008, %v8004
      %v8010 = vmul.f32 1.0, %v8009
      %v8011 = vrcp.pop %v6555
      %v8012 = vmul.f32 %v6555, %v8011
      %v8013 = vsub.f32 1.0, %v8012
      %v8014 = vmul.f32 %v8011, %v8013
      %v8015 = vadd.f32 %v8011, %v8014
      %vm8016 = vweird.f32 %v6555
      %vm8017 = vweird.f32 %v8011
      %vm8018 = vmor %vm8016, %vm8017
      %v8019 = vsel %vm8018, %v8011, %v8015
      %v8020 = vand.u32 2147483647, %v6555
      %vm8021 = vcmp.eq.f32.partialorder %v8020, 8.507059e+37
      %v8022 = vand.u32 %v6555, 2147483648
      %v8023 = vor.u32 1.1754944e-38, %v8022
      %v8024 = vsel %vm8021, %v8023, %v8019
      %v8025 = vmul.f32 1.0, %v8024
      %v8026 = vrcp.pop %v6561
      %v8027 = vmul.f32 %v6561, %v8026
      %v8028 = vsub.f32 1.0, %v8027
      %v8029 = vmul.f32 %v8026, %v8028
      %v8030 = vadd.f32 %v8026, %v8029
      %vm8031 = vweird.f32 %v6561
      %vm8032 = vweird.f32 %v8026
      %vm8033 = vmor %vm8031, %vm8032
      %v8034 = vsel %vm8033, %v8026, %v8030
      %v8035 = vand.u32 2147483647, %v6561
      %vm8036 = vcmp.eq.f32.partialorder %v8035, 8.507059e+37
      %v8037 = vand.u32 %v6561, 2147483648
      %v8038 = vor.u32 1.1754944e-38, %v8037
      %v8039 = vsel %vm8036, %v8038, %v8034
      %v8040 = vmul.f32 1.0, %v8039
      %v8041 = vrcp.pop %v6567
      %v8042 = vmul.f32 %v6567, %v8041
      %v8043 = vsub.f32 1.0, %v8042
      %v8044 = vmul.f32 %v8041, %v8043
      %v8045 = vadd.f32 %v8041, %v8044
      %vm8046 = vweird.f32 %v6567
      %vm8047 = vweird.f32 %v8041
      %vm8048 = vmor %vm8046, %vm8047
      %v8049 = vsel %vm8048, %v8041, %v8045
      %v8050 = vand.u32 2147483647, %v6567
      %vm8051 = vcmp.eq.f32.partialorder %v8050, 8.507059e+37
      %v8052 = vand.u32 %v6567, 2147483648
      %v8053 = vor.u32 1.1754944e-38, %v8052
      %v8054 = vsel %vm8051, %v8053, %v8049
      %v8055 = vmul.f32 1.0, %v8054
      %v8056 = vrcp.pop %v6573
      %v8057 = vmul.f32 %v6573, %v8056
      %v8058 = vsub.f32 1.0, %v8057
      %v8059 = vmul.f32 %v8056, %v8058
      %v8060 = vadd.f32 %v8056, %v8059
      %vm8061 = vweird.f32 %v6573
      %vm8062 = vweird.f32 %v8056
      %vm8063 = vmor %vm8061, %vm8062
      %v8064 = vsel %vm8063, %v8056, %v8060
      %v8065 = vand.u32 2147483647, %v6573
      %vm8066 = vcmp.eq.f32.partialorder %v8065, 8.507059e+37
      %v8067 = vand.u32 %v6573, 2147483648
      %v8068 = vor.u32 1.1754944e-38, %v8067
      %v8069 = vsel %vm8066, %v8068, %v8064
      %v8070 = vmul.f32 1.0, %v8069
      %v8071 = vrcp.pop %v6579
      %v8072 = vmul.f32 %v6579, %v8071
      %v8073 = vsub.f32 1.0, %v8072
      %v8074 = vmul.f32 %v8071, %v8073
      %v8075 = vadd.f32 %v8071, %v8074
      %vm8076 = vweird.f32 %v6579
      %vm8077 = vweird.f32 %v8071
      %vm8078 = vmor %vm8076, %vm8077
      %v8079 = vsel %vm8078, %v8071, %v8075
      %v8080 = vand.u32 2147483647, %v6579
      %vm8081 = vcmp.eq.f32.partialorder %v8080, 8.507059e+37
      %v8082 = vand.u32 %v6579, 2147483648
      %v8083 = vor.u32 1.1754944e-38, %v8082
      %v8084 = vsel %vm8081, %v8083, %v8079
      %v8085 = vmul.f32 1.0, %v8084
      %v8086 = vrcp.pop %v6585
      %v8087 = vmul.f32 %v6585, %v8086
      %v8088 = vsub.f32 1.0, %v8087
      %v8089 = vmul.f32 %v8086, %v8088
      %v8090 = vadd.f32 %v8086, %v8089
      %vm8091 = vweird.f32 %v6585
      %vm8092 = vweird.f32 %v8086
      %vm8093 = vmor %vm8091, %vm8092
      %v8094 = vsel %vm8093, %v8086, %v8090
      %v8095 = vand.u32 2147483647, %v6585
      %vm8096 = vcmp.eq.f32.partialorder %v8095, 8.507059e+37
      %v8097 = vand.u32 %v6585, 2147483648
      %v8098 = vor.u32 1.1754944e-38, %v8097
      %v8099 = vsel %vm8096, %v8098, %v8094
      %v8100 = vmul.f32 1.0, %v8099
      %v8101 = vrcp.pop %v6591
      %v8102 = vmul.f32 %v6591, %v8101
      %v8103 = vsub.f32 1.0, %v8102
      %v8104 = vmul.f32 %v8101, %v8103
      %v8105 = vadd.f32 %v8101, %v8104
      %vm8106 = vweird.f32 %v6591
      %vm8107 = vweird.f32 %v8101
      %vm8108 = vmor %vm8106, %vm8107
      %v8109 = vsel %vm8108, %v8101, %v8105
      %v8110 = vand.u32 2147483647, %v6591
      %vm8111 = vcmp.eq.f32.partialorder %v8110, 8.507059e+37
      %v8112 = vand.u32 %v6591, 2147483648
      %v8113 = vor.u32 1.1754944e-38, %v8112
      %v8114 = vsel %vm8111, %v8113, %v8109
      %v8115 = vmul.f32 1.0, %v8114
      %v8116 = vrcp.pop %v6597
      %v8117 = vmul.f32 %v6597, %v8116
      %v8118 = vsub.f32 1.0, %v8117
      %v8119 = vmul.f32 %v8116, %v8118
      %v8120 = vadd.f32 %v8116, %v8119
      %vm8121 = vweird.f32 %v6597
      %vm8122 = vweird.f32 %v8116
      %vm8123 = vmor %vm8121, %vm8122
      %v8124 = vsel %vm8123, %v8116, %v8120
      %v8125 = vand.u32 2147483647, %v6597
      %vm8126 = vcmp.eq.f32.partialorder %v8125, 8.507059e+37
      %v8127 = vand.u32 %v6597, 2147483648
      %v8128 = vor.u32 1.1754944e-38, %v8127
      %v8129 = vsel %vm8126, %v8128, %v8124
      %v8130 = vmul.f32 1.0, %v8129
      %v8131 = vrcp.pop %v6603
      %v8132 = vmul.f32 %v6603, %v8131
      %v8133 = vsub.f32 1.0, %v8132
      %v8134 = vmul.f32 %v8131, %v8133
      %v8135 = vadd.f32 %v8131, %v8134
      %vm8136 = vweird.f32 %v6603
      %vm8137 = vweird.f32 %v8131
      %vm8138 = vmor %vm8136, %vm8137
      %v8139 = vsel %vm8138, %v8131, %v8135
      %v8140 = vand.u32 2147483647, %v6603
      %vm8141 = vcmp.eq.f32.partialorder %v8140, 8.507059e+37
      %v8142 = vand.u32 %v6603, 2147483648
      %v8143 = vor.u32 1.1754944e-38, %v8142
      %v8144 = vsel %vm8141, %v8143, %v8139
      %v8145 = vmul.f32 1.0, %v8144
      %v8146 = vrcp.pop %v6609
      %v8147 = vmul.f32 %v6609, %v8146
      %v8148 = vsub.f32 1.0, %v8147
      %v8149 = vmul.f32 %v8146, %v8148
      %v8150 = vadd.f32 %v8146, %v8149
      %vm8151 = vweird.f32 %v6609
      %vm8152 = vweird.f32 %v8146
      %vm8153 = vmor %vm8151, %vm8152
      %v8154 = vsel %vm8153, %v8146, %v8150
      %v8155 = vand.u32 2147483647, %v6609
      %vm8156 = vcmp.eq.f32.partialorder %v8155, 8.507059e+37
      %v8157 = vand.u32 %v6609, 2147483648
      %v8158 = vor.u32 1.1754944e-38, %v8157
      %v8159 = vsel %vm8156, %v8158, %v8154
      %v8160 = vmul.f32 1.0, %v8159
      %v8161 = vrcp.pop %v6615
      %v8162 = vmul.f32 %v6615, %v8161
      %v8163 = vsub.f32 1.0, %v8162
      %v8164 = vmul.f32 %v8161, %v8163
      %v8165 = vadd.f32 %v8161, %v8164
      %vm8166 = vweird.f32 %v6615
      %vm8167 = vweird.f32 %v8161
      %vm8168 = vmor %vm8166, %vm8167
      %v8169 = vsel %vm8168, %v8161, %v8165
      %v8170 = vand.u32 2147483647, %v6615
      %vm8171 = vcmp.eq.f32.partialorder %v8170, 8.507059e+37
      %v8172 = vand.u32 %v6615, 2147483648
      %v8173 = vor.u32 1.1754944e-38, %v8172
      %v8174 = vsel %vm8171, %v8173, %v8169
      %v8175 = vmul.f32 1.0, %v8174
      %v8176 = vrcp.pop %v6621
      %v8177 = vmul.f32 %v6621, %v8176
      %v8178 = vsub.f32 1.0, %v8177
      %v8179 = vmul.f32 %v8176, %v8178
      %v8180 = vadd.f32 %v8176, %v8179
      %vm8181 = vweird.f32 %v6621
      %vm8182 = vweird.f32 %v8176
      %vm8183 = vmor %vm8181, %vm8182
      %v8184 = vsel %vm8183, %v8176, %v8180
      %v8185 = vand.u32 2147483647, %v6621
      %vm8186 = vcmp.eq.f32.partialorder %v8185, 8.507059e+37
      %v8187 = vand.u32 %v6621, 2147483648
      %v8188 = vor.u32 1.1754944e-38, %v8187
      %v8189 = vsel %vm8186, %v8188, %v8184
      %v8190 = vmul.f32 1.0, %v8189
      %v8191 = vrcp.pop %v6627
      %v8192 = vmul.f32 %v6627, %v8191
      %v8193 = vsub.f32 1.0, %v8192
      %v8194 = vmul.f32 %v8191, %v8193
      %v8195 = vadd.f32 %v8191, %v8194
      %vm8196 = vweird.f32 %v6627
      %vm8197 = vweird.f32 %v8191
      %vm8198 = vmor %vm8196, %vm8197
      %v8199 = vsel %vm8198, %v8191, %v8195
      %v8200 = vand.u32 2147483647, %v6627
      %vm8201 = vcmp.eq.f32.partialorder %v8200, 8.507059e+37
      %v8202 = vand.u32 %v6627, 2147483648
      %v8203 = vor.u32 1.1754944e-38, %v8202
      %v8204 = vsel %vm8201, %v8203, %v8199
      %v8205 = vmul.f32 1.0, %v8204
      %v8206 = vrcp.pop %v6633
      %v8207 = vmul.f32 %v6633, %v8206
      %v8208 = vsub.f32 1.0, %v8207
      %v8209 = vmul.f32 %v8206, %v8208
      %v8210 = vadd.f32 %v8206, %v8209
      %vm8211 = vweird.f32 %v6633
      %vm8212 = vweird.f32 %v8206
      %vm8213 = vmor %vm8211, %vm8212
      %v8214 = vsel %vm8213, %v8206, %v8210
      %v8215 = vand.u32 2147483647, %v6633
      %vm8216 = vcmp.eq.f32.partialorder %v8215, 8.507059e+37
      %v8217 = vand.u32 %v6633, 2147483648
      %v8218 = vor.u32 1.1754944e-38, %v8217
      %v8219 = vsel %vm8216, %v8218, %v8214
      %v8220 = vmul.f32 1.0, %v8219
      %v8221 = vrcp.pop %v6639
      %v8222 = vmul.f32 %v6639, %v8221
      %v8223 = vsub.f32 1.0, %v8222
      %v8224 = vmul.f32 %v8221, %v8223
      %v8225 = vadd.f32 %v8221, %v8224
      %vm8226 = vweird.f32 %v6639
      %vm8227 = vweird.f32 %v8221
      %vm8228 = vmor %vm8226, %vm8227
      %v8229 = vsel %vm8228, %v8221, %v8225
      %v8230 = vand.u32 2147483647, %v6639
      %vm8231 = vcmp.eq.f32.partialorder %v8230, 8.507059e+37
      %v8232 = vand.u32 %v6639, 2147483648
      %v8233 = vor.u32 1.1754944e-38, %v8232
      %v8234 = vsel %vm8231, %v8233, %v8229
      %v8235 = vmul.f32 1.0, %v8234
      %v8236 = vrcp.pop %v6645
      %v8237 = vmul.f32 %v6645, %v8236
      %v8238 = vsub.f32 1.0, %v8237
      %v8239 = vmul.f32 %v8236, %v8238
      %v8240 = vadd.f32 %v8236, %v8239
      %vm8241 = vweird.f32 %v6645
      %vm8242 = vweird.f32 %v8236
      %vm8243 = vmor %vm8241, %vm8242
      %v8244 = vsel %vm8243, %v8236, %v8240
      %v8245 = vand.u32 2147483647, %v6645
      %vm8246 = vcmp.eq.f32.partialorder %v8245, 8.507059e+37
      %v8247 = vand.u32 %v6645, 2147483648
      %v8248 = vor.u32 1.1754944e-38, %v8247
      %v8249 = vsel %vm8246, %v8248, %v8244
      %v8250 = vmul.f32 1.0, %v8249
      %v8251 = vrcp.pop %v6651
      %v8252 = vmul.f32 %v6651, %v8251
      %v8253 = vsub.f32 1.0, %v8252
      %v8254 = vmul.f32 %v8251, %v8253
      %v8255 = vadd.f32 %v8251, %v8254
      %vm8256 = vweird.f32 %v6651
      %vm8257 = vweird.f32 %v8251
      %vm8258 = vmor %vm8256, %vm8257
      %v8259 = vsel %vm8258, %v8251, %v8255
      %v8260 = vand.u32 2147483647, %v6651
      %vm8261 = vcmp.eq.f32.partialorder %v8260, 8.507059e+37
      %v8262 = vand.u32 %v6651, 2147483648
      %v8263 = vor.u32 1.1754944e-38, %v8262
      %v8264 = vsel %vm8261, %v8263, %v8259
      %v8265 = vmul.f32 1.0, %v8264
      %v8266 = vrcp.pop %v6657
      %v8267 = vmul.f32 %v6657, %v8266
      %v8268 = vsub.f32 1.0, %v8267
      %v8269 = vmul.f32 %v8266, %v8268
      %v8270 = vadd.f32 %v8266, %v8269
      %vm8271 = vweird.f32 %v6657
      %vm8272 = vweird.f32 %v8266
      %vm8273 = vmor %vm8271, %vm8272
      %v8274 = vsel %vm8273, %v8266, %v8270
      %v8275 = vand.u32 2147483647, %v6657
      %vm8276 = vcmp.eq.f32.partialorder %v8275, 8.507059e+37
      %v8277 = vand.u32 %v6657, 2147483648
      %v8278 = vor.u32 1.1754944e-38, %v8277
      %v8279 = vsel %vm8276, %v8278, %v8274
      %v8280 = vmul.f32 1.0, %v8279
      %v8281 = vrcp.pop %v6663
      %v8282 = vmul.f32 %v6663, %v8281
      %v8283 = vsub.f32 1.0, %v8282
      %v8284 = vmul.f32 %v8281, %v8283
      %v8285 = vadd.f32 %v8281, %v8284
      %vm8286 = vweird.f32 %v6663
      %vm8287 = vweird.f32 %v8281
      %vm8288 = vmor %vm8286, %vm8287
      %v8289 = vsel %vm8288, %v8281, %v8285
      %v8290 = vand.u32 2147483647, %v6663
      %vm8291 = vcmp.eq.f32.partialorder %v8290, 8.507059e+37
      %v8292 = vand.u32 %v6663, 2147483648
      %v8293 = vor.u32 1.1754944e-38, %v8292
      %v8294 = vsel %vm8291, %v8293, %v8289
      %v8295 = vmul.f32 1.0, %v8294
      %v8296 = vrcp.pop %v6669
      %v8297 = vmul.f32 %v6669, %v8296
      %v8298 = vsub.f32 1.0, %v8297
      %v8299 = vmul.f32 %v8296, %v8298
      %v8300 = vadd.f32 %v8296, %v8299
      %vm8301 = vweird.f32 %v6669
      %vm8302 = vweird.f32 %v8296
      %vm8303 = vmor %vm8301, %vm8302
      %v8304 = vsel %vm8303, %v8296, %v8300
      %v8305 = vand.u32 2147483647, %v6669
      %vm8306 = vcmp.eq.f32.partialorder %v8305, 8.507059e+37
      %v8307 = vand.u32 %v6669, 2147483648
      %v8308 = vor.u32 1.1754944e-38, %v8307
      %v8309 = vsel %vm8306, %v8308, %v8304
      %v8310 = vmul.f32 1.0, %v8309
      %v8311 = vrcp.pop %v6675
      %v8312 = vmul.f32 %v6675, %v8311
      %v8313 = vsub.f32 1.0, %v8312
      %v8314 = vmul.f32 %v8311, %v8313
      %v8315 = vadd.f32 %v8311, %v8314
      %vm8316 = vweird.f32 %v6675
      %vm8317 = vweird.f32 %v8311
      %vm8318 = vmor %vm8316, %vm8317
      %v8319 = vsel %vm8318, %v8311, %v8315
      %v8320 = vand.u32 2147483647, %v6675
      %vm8321 = vcmp.eq.f32.partialorder %v8320, 8.507059e+37
      %v8322 = vand.u32 %v6675, 2147483648
      %v8323 = vor.u32 1.1754944e-38, %v8322
      %v8324 = vsel %vm8321, %v8323, %v8319
      %v8325 = vmul.f32 1.0, %v8324
      %v8326 = vrcp.pop %v6681
      %v8327 = vmul.f32 %v6681, %v8326
      %v8328 = vsub.f32 1.0, %v8327
      %v8329 = vmul.f32 %v8326, %v8328
      %v8330 = vadd.f32 %v8326, %v8329
      %vm8331 = vweird.f32 %v6681
      %vm8332 = vweird.f32 %v8326
      %vm8333 = vmor %vm8331, %vm8332
      %v8334 = vsel %vm8333, %v8326, %v8330
      %v8335 = vand.u32 2147483647, %v6681
      %vm8336 = vcmp.eq.f32.partialorder %v8335, 8.507059e+37
      %v8337 = vand.u32 %v6681, 2147483648
      %v8338 = vor.u32 1.1754944e-38, %v8337
      %v8339 = vsel %vm8336, %v8338, %v8334
      %v8340 = vmul.f32 1.0, %v8339
      %v8341 = vrcp.pop %v6687
      %v8342 = vmul.f32 %v6687, %v8341
      %v8343 = vsub.f32 1.0, %v8342
      %v8344 = vmul.f32 %v8341, %v8343
      %v8345 = vadd.f32 %v8341, %v8344
      %vm8346 = vweird.f32 %v6687
      %vm8347 = vweird.f32 %v8341
      %vm8348 = vmor %vm8346, %vm8347
      %v8349 = vsel %vm8348, %v8341, %v8345
      %v8350 = vand.u32 2147483647, %v6687
      %vm8351 = vcmp.eq.f32.partialorder %v8350, 8.507059e+37
      %v8352 = vand.u32 %v6687, 2147483648
      %v8353 = vor.u32 1.1754944e-38, %v8352
      %v8354 = vsel %vm8351, %v8353, %v8349
      %v8355 = vmul.f32 1.0, %v8354
      %v8356 = vrcp.pop %v6693
      %v8357 = vmul.f32 %v6693, %v8356
      %v8358 = vsub.f32 1.0, %v8357
      %v8359 = vmul.f32 %v8356, %v8358
      %v8360 = vadd.f32 %v8356, %v8359
      %vm8361 = vweird.f32 %v6693
      %vm8362 = vweird.f32 %v8356
      %vm8363 = vmor %vm8361, %vm8362
      %v8364 = vsel %vm8363, %v8356, %v8360
      %v8365 = vand.u32 2147483647, %v6693
      %vm8366 = vcmp.eq.f32.partialorder %v8365, 8.507059e+37
      %v8367 = vand.u32 %v6693, 2147483648
      %v8368 = vor.u32 1.1754944e-38, %v8367
      %v8369 = vsel %vm8366, %v8368, %v8364
      %v8370 = vmul.f32 1.0, %v8369
      %v8371 = vrcp.pop %v6699
      %v8372 = vmul.f32 %v6699, %v8371
      %v8373 = vsub.f32 1.0, %v8372
      %v8374 = vmul.f32 %v8371, %v8373
      %v8375 = vadd.f32 %v8371, %v8374
      %vm8376 = vweird.f32 %v6699
      %vm8377 = vweird.f32 %v8371
      %vm8378 = vmor %vm8376, %vm8377
      %v8379 = vsel %vm8378, %v8371, %v8375
      %v8380 = vand.u32 2147483647, %v6699
      %vm8381 = vcmp.eq.f32.partialorder %v8380, 8.507059e+37
      %v8382 = vand.u32 %v6699, 2147483648
      %v8383 = vor.u32 1.1754944e-38, %v8382
      %v8384 = vsel %vm8381, %v8383, %v8379
      %v8385 = vmul.f32 1.0, %v8384
      %v8386 = vrcp.pop %v6705
      %v8387 = vmul.f32 %v6705, %v8386
      %v8388 = vsub.f32 1.0, %v8387
      %v8389 = vmul.f32 %v8386, %v8388
      %v8390 = vadd.f32 %v8386, %v8389
      %vm8391 = vweird.f32 %v6705
      %vm8392 = vweird.f32 %v8386
      %vm8393 = vmor %vm8391, %vm8392
      %v8394 = vsel %vm8393, %v8386, %v8390
      %v8395 = vand.u32 2147483647, %v6705
      %vm8396 = vcmp.eq.f32.partialorder %v8395, 8.507059e+37
      %v8397 = vand.u32 %v6705, 2147483648
      %v8398 = vor.u32 1.1754944e-38, %v8397
      %v8399 = vsel %vm8396, %v8398, %v8394
      %v8400 = vmul.f32 1.0, %v8399
      %v8401 = vrcp.pop %v6711
      %v8402 = vmul.f32 %v6711, %v8401
      %v8403 = vsub.f32 1.0, %v8402
      %v8404 = vmul.f32 %v8401, %v8403
      %v8405 = vadd.f32 %v8401, %v8404
      %vm8406 = vweird.f32 %v6711
      %vm8407 = vweird.f32 %v8401
      %vm8408 = vmor %vm8406, %vm8407
      %v8409 = vsel %vm8408, %v8401, %v8405
      %v8410 = vand.u32 2147483647, %v6711
      %vm8411 = vcmp.eq.f32.partialorder %v8410, 8.507059e+37
      %v8412 = vand.u32 %v6711, 2147483648
      %v8413 = vor.u32 1.1754944e-38, %v8412
      %v8414 = vsel %vm8411, %v8413, %v8409
      %v8415 = vmul.f32 1.0, %v8414
      %v8416 = vrcp.pop %v6717
      %v8417 = vmul.f32 %v6717, %v8416
      %v8418 = vsub.f32 1.0, %v8417
      %v8419 = vmul.f32 %v8416, %v8418
      %v8420 = vadd.f32 %v8416, %v8419
      %vm8421 = vweird.f32 %v6717
      %vm8422 = vweird.f32 %v8416
      %vm8423 = vmor %vm8421, %vm8422
      %v8424 = vsel %vm8423, %v8416, %v8420
      %v8425 = vand.u32 2147483647, %v6717
      %vm8426 = vcmp.eq.f32.partialorder %v8425, 8.507059e+37
      %v8427 = vand.u32 %v6717, 2147483648
      %v8428 = vor.u32 1.1754944e-38, %v8427
      %v8429 = vsel %vm8426, %v8428, %v8424
      %v8430 = vmul.f32 1.0, %v8429
      %v8431 = vrcp.pop %v6723
      %v8432 = vmul.f32 %v6723, %v8431
      %v8433 = vsub.f32 1.0, %v8432
      %v8434 = vmul.f32 %v8431, %v8433
      %v8435 = vadd.f32 %v8431, %v8434
      %vm8436 = vweird.f32 %v6723
      %vm8437 = vweird.f32 %v8431
      %vm8438 = vmor %vm8436, %vm8437
      %v8439 = vsel %vm8438, %v8431, %v8435
      %v8440 = vand.u32 2147483647, %v6723
      %vm8441 = vcmp.eq.f32.partialorder %v8440, 8.507059e+37
      %v8442 = vand.u32 %v6723, 2147483648
      %v8443 = vor.u32 1.1754944e-38, %v8442
      %v8444 = vsel %vm8441, %v8443, %v8439
      %v8445 = vmul.f32 1.0, %v8444
      %v8446 = vrcp.pop %v6729
      %v8447 = vmul.f32 %v6729, %v8446
      %v8448 = vsub.f32 1.0, %v8447
      %v8449 = vmul.f32 %v8446, %v8448
      %v8450 = vadd.f32 %v8446, %v8449
      %vm8451 = vweird.f32 %v6729
      %vm8452 = vweird.f32 %v8446
      %vm8453 = vmor %vm8451, %vm8452
      %v8454 = vsel %vm8453, %v8446, %v8450
      %v8455 = vand.u32 2147483647, %v6729
      %vm8456 = vcmp.eq.f32.partialorder %v8455, 8.507059e+37
      %v8457 = vand.u32 %v6729, 2147483648
      %v8458 = vor.u32 1.1754944e-38, %v8457
      %v8459 = vsel %vm8456, %v8458, %v8454
      %v8460 = vmul.f32 1.0, %v8459
      %v8461 = vrcp.pop %v6735
      %v8462 = vmul.f32 %v6735, %v8461
      %v8463 = vsub.f32 1.0, %v8462
      %v8464 = vmul.f32 %v8461, %v8463
      %v8465 = vadd.f32 %v8461, %v8464
      %vm8466 = vweird.f32 %v6735
      %vm8467 = vweird.f32 %v8461
      %vm8468 = vmor %vm8466, %vm8467
      %v8469 = vsel %vm8468, %v8461, %v8465
      %v8470 = vand.u32 2147483647, %v6735
      %vm8471 = vcmp.eq.f32.partialorder %v8470, 8.507059e+37
      %v8472 = vand.u32 %v6735, 2147483648
      %v8473 = vor.u32 1.1754944e-38, %v8472
      %v8474 = vsel %vm8471, %v8473, %v8469
      %v8475 = vmul.f32 1.0, %v8474
      %v8476 = vrcp.pop %v6741
      %v8477 = vmul.f32 %v6741, %v8476
      %v8478 = vsub.f32 1.0, %v8477
      %v8479 = vmul.f32 %v8476, %v8478
      %v8480 = vadd.f32 %v8476, %v8479
      %vm8481 = vweird.f32 %v6741
      %vm8482 = vweird.f32 %v8476
      %vm8483 = vmor %vm8481, %vm8482
      %v8484 = vsel %vm8483, %v8476, %v8480
      %v8485 = vand.u32 2147483647, %v6741
      %vm8486 = vcmp.eq.f32.partialorder %v8485, 8.507059e+37
      %v8487 = vand.u32 %v6741, 2147483648
      %v8488 = vor.u32 1.1754944e-38, %v8487
      %v8489 = vsel %vm8486, %v8488, %v8484
      %v8490 = vmul.f32 1.0, %v8489
      %v8491 = vrcp.pop %v6747
      %v8492 = vmul.f32 %v6747, %v8491
      %v8493 = vsub.f32 1.0, %v8492
      %v8494 = vmul.f32 %v8491, %v8493
      %v8495 = vadd.f32 %v8491, %v8494
      %vm8496 = vweird.f32 %v6747
      %vm8497 = vweird.f32 %v8491
      %vm8498 = vmor %vm8496, %vm8497
      %v8499 = vsel %vm8498, %v8491, %v8495
      %v8500 = vand.u32 2147483647, %v6747
      %vm8501 = vcmp.eq.f32.partialorder %v8500, 8.507059e+37
      %v8502 = vand.u32 %v6747, 2147483648
      %v8503 = vor.u32 1.1754944e-38, %v8502
      %v8504 = vsel %vm8501, %v8503, %v8499
      %v8505 = vmul.f32 1.0, %v8504
      %v8506 = vrcp.pop %v6753
      %v8507 = vmul.f32 %v6753, %v8506
      %v8508 = vsub.f32 1.0, %v8507
      %v8509 = vmul.f32 %v8506, %v8508
      %v8510 = vadd.f32 %v8506, %v8509
      %vm8511 = vweird.f32 %v6753
      %vm8512 = vweird.f32 %v8506
      %vm8513 = vmor %vm8511, %vm8512
      %v8514 = vsel %vm8513, %v8506, %v8510
      %v8515 = vand.u32 2147483647, %v6753
      %vm8516 = vcmp.eq.f32.partialorder %v8515, 8.507059e+37
      %v8517 = vand.u32 %v6753, 2147483648
      %v8518 = vor.u32 1.1754944e-38, %v8517
      %v8519 = vsel %vm8516, %v8518, %v8514
      %v8520 = vmul.f32 1.0, %v8519
      %v8521 = vrcp.pop %v6759
      %v8522 = vmul.f32 %v6759, %v8521
      %v8523 = vsub.f32 1.0, %v8522
      %v8524 = vmul.f32 %v8521, %v8523
      %v8525 = vadd.f32 %v8521, %v8524
      %vm8526 = vweird.f32 %v6759
      %vm8527 = vweird.f32 %v8521
      %vm8528 = vmor %vm8526, %vm8527
      %v8529 = vsel %vm8528, %v8521, %v8525
      %v8530 = vand.u32 2147483647, %v6759
      %vm8531 = vcmp.eq.f32.partialorder %v8530, 8.507059e+37
      %v8532 = vand.u32 %v6759, 2147483648
      %v8533 = vor.u32 1.1754944e-38, %v8532
      %v8534 = vsel %vm8531, %v8533, %v8529
      %v8535 = vmul.f32 1.0, %v8534
      %v8536 = vrcp.pop %v6765
      %v8537 = vmul.f32 %v6765, %v8536
      %v8538 = vsub.f32 1.0, %v8537
      %v8539 = vmul.f32 %v8536, %v8538
      %v8540 = vadd.f32 %v8536, %v8539
      %vm8541 = vweird.f32 %v6765
      %vm8542 = vweird.f32 %v8536
      %vm8543 = vmor %vm8541, %vm8542
      %v8544 = vsel %vm8543, %v8536, %v8540
      %v8545 = vand.u32 2147483647, %v6765
      %vm8546 = vcmp.eq.f32.partialorder %v8545, 8.507059e+37
      %v8547 = vand.u32 %v6765, 2147483648
      %v8548 = vor.u32 1.1754944e-38, %v8547
      %v8549 = vsel %vm8546, %v8548, %v8544
      %v8550 = vmul.f32 1.0, %v8549
      %v8551 = vrcp.pop %v6771
      %v8552 = vmul.f32 %v6771, %v8551
      %v8553 = vsub.f32 1.0, %v8552
      %v8554 = vmul.f32 %v8551, %v8553
      %v8555 = vadd.f32 %v8551, %v8554
      %vm8556 = vweird.f32 %v6771
      %vm8557 = vweird.f32 %v8551
      %vm8558 = vmor %vm8556, %vm8557
      %v8559 = vsel %vm8558, %v8551, %v8555
      %v8560 = vand.u32 2147483647, %v6771
      %vm8561 = vcmp.eq.f32.partialorder %v8560, 8.507059e+37
      %v8562 = vand.u32 %v6771, 2147483648
      %v8563 = vor.u32 1.1754944e-38, %v8562
      %v8564 = vsel %vm8561, %v8563, %v8559
      %v8565 = vmul.f32 1.0, %v8564
      %v8566 = vrcp.pop %v6777
      %v8567 = vmul.f32 %v6777, %v8566
      %v8568 = vsub.f32 1.0, %v8567
      %v8569 = vmul.f32 %v8566, %v8568
      %v8570 = vadd.f32 %v8566, %v8569
      %vm8571 = vweird.f32 %v6777
      %vm8572 = vweird.f32 %v8566
      %vm8573 = vmor %vm8571, %vm8572
      %v8574 = vsel %vm8573, %v8566, %v8570
      %v8575 = vand.u32 2147483647, %v6777
      %vm8576 = vcmp.eq.f32.partialorder %v8575, 8.507059e+37
      %v8577 = vand.u32 %v6777, 2147483648
      %v8578 = vor.u32 1.1754944e-38, %v8577
      %v8579 = vsel %vm8576, %v8578, %v8574
      %v8580 = vmul.f32 1.0, %v8579
      %v8581 = vrcp.pop %v6783
      %v8582 = vmul.f32 %v6783, %v8581
      %v8583 = vsub.f32 1.0, %v8582
      %v8584 = vmul.f32 %v8581, %v8583
      %v8585 = vadd.f32 %v8581, %v8584
      %vm8586 = vweird.f32 %v6783
      %vm8587 = vweird.f32 %v8581
      %vm8588 = vmor %vm8586, %vm8587
      %v8589 = vsel %vm8588, %v8581, %v8585
      %v8590 = vand.u32 2147483647, %v6783
      %vm8591 = vcmp.eq.f32.partialorder %v8590, 8.507059e+37
      %v8592 = vand.u32 %v6783, 2147483648
      %v8593 = vor.u32 1.1754944e-38, %v8592
      %v8594 = vsel %vm8591, %v8593, %v8589
      %v8595 = vmul.f32 1.0, %v8594
      %v8596 = vrcp.pop %v6789
      %v8597 = vmul.f32 %v6789, %v8596
      %v8598 = vsub.f32 1.0, %v8597
      %v8599 = vmul.f32 %v8596, %v8598
      %v8600 = vadd.f32 %v8596, %v8599
      %vm8601 = vweird.f32 %v6789
      %vm8602 = vweird.f32 %v8596
      %vm8603 = vmor %vm8601, %vm8602
      %v8604 = vsel %vm8603, %v8596, %v8600
      %v8605 = vand.u32 2147483647, %v6789
      %vm8606 = vcmp.eq.f32.partialorder %v8605, 8.507059e+37
      %v8607 = vand.u32 %v6789, 2147483648
      %v8608 = vor.u32 1.1754944e-38, %v8607
      %v8609 = vsel %vm8606, %v8608, %v8604
      %v8610 = vmul.f32 1.0, %v8609
      %v8611 = vrcp.pop %v6795
      %v8612 = vmul.f32 %v6795, %v8611
      %v8613 = vsub.f32 1.0, %v8612
      %v8614 = vmul.f32 %v8611, %v8613
      %v8615 = vadd.f32 %v8611, %v8614
      %vm8616 = vweird.f32 %v6795
      %vm8617 = vweird.f32 %v8611
      %vm8618 = vmor %vm8616, %vm8617
      %v8619 = vsel %vm8618, %v8611, %v8615
      %v8620 = vand.u32 2147483647, %v6795
      %vm8621 = vcmp.eq.f32.partialorder %v8620, 8.507059e+37
      %v8622 = vand.u32 %v6795, 2147483648
      %v8623 = vor.u32 1.1754944e-38, %v8622
      %v8624 = vsel %vm8621, %v8623, %v8619
      %v8625 = vmul.f32 1.0, %v8624
      %v8626 = vrcp.pop %v6801
      %v8627 = vmul.f32 %v6801, %v8626
      %v8628 = vsub.f32 1.0, %v8627
      %v8629 = vmul.f32 %v8626, %v8628
      %v8630 = vadd.f32 %v8626, %v8629
      %vm8631 = vweird.f32 %v6801
      %vm8632 = vweird.f32 %v8626
      %vm8633 = vmor %vm8631, %vm8632
      %v8634 = vsel %vm8633, %v8626, %v8630
      %v8635 = vand.u32 2147483647, %v6801
      %vm8636 = vcmp.eq.f32.partialorder %v8635, 8.507059e+37
      %v8637 = vand.u32 %v6801, 2147483648
      %v8638 = vor.u32 1.1754944e-38, %v8637
      %v8639 = vsel %vm8636, %v8638, %v8634
      %v8640 = vmul.f32 1.0, %v8639
      %v8641 = vrcp.pop %v6807
      %v8642 = vmul.f32 %v6807, %v8641
      %v8643 = vsub.f32 1.0, %v8642
      %v8644 = vmul.f32 %v8641, %v8643
      %v8645 = vadd.f32 %v8641, %v8644
      %vm8646 = vweird.f32 %v6807
      %vm8647 = vweird.f32 %v8641
      %vm8648 = vmor %vm8646, %vm8647
      %v8649 = vsel %vm8648, %v8641, %v8645
      %v8650 = vand.u32 2147483647, %v6807
      %vm8651 = vcmp.eq.f32.partialorder %v8650, 8.507059e+37
      %v8652 = vand.u32 %v6807, 2147483648
      %v8653 = vor.u32 1.1754944e-38, %v8652
      %v8654 = vsel %vm8651, %v8653, %v8649
      %v8655 = vmul.f32 1.0, %v8654
      %v8656 = vrcp.pop %v6813
      %v8657 = vmul.f32 %v6813, %v8656
      %v8658 = vsub.f32 1.0, %v8657
      %v8659 = vmul.f32 %v8656, %v8658
      %v8660 = vadd.f32 %v8656, %v8659
      %vm8661 = vweird.f32 %v6813
      %vm8662 = vweird.f32 %v8656
      %vm8663 = vmor %vm8661, %vm8662
      %v8664 = vsel %vm8663, %v8656, %v8660
      %v8665 = vand.u32 2147483647, %v6813
      %vm8666 = vcmp.eq.f32.partialorder %v8665, 8.507059e+37
      %v8667 = vand.u32 %v6813, 2147483648
      %v8668 = vor.u32 1.1754944e-38, %v8667
      %v8669 = vsel %vm8666, %v8668, %v8664
      %v8670 = vmul.f32 1.0, %v8669
      %v8671 = vrcp.pop %v6819
      %v8672 = vmul.f32 %v6819, %v8671
      %v8673 = vsub.f32 1.0, %v8672
      %v8674 = vmul.f32 %v8671, %v8673
      %v8675 = vadd.f32 %v8671, %v8674
      %vm8676 = vweird.f32 %v6819
      %vm8677 = vweird.f32 %v8671
      %vm8678 = vmor %vm8676, %vm8677
      %v8679 = vsel %vm8678, %v8671, %v8675
      %v8680 = vand.u32 2147483647, %v6819
      %vm8681 = vcmp.eq.f32.partialorder %v8680, 8.507059e+37
      %v8682 = vand.u32 %v6819, 2147483648
      %v8683 = vor.u32 1.1754944e-38, %v8682
      %v8684 = vsel %vm8681, %v8683, %v8679
      %v8685 = vmul.f32 1.0, %v8684
      %v8686 = vrcp.pop %v6825
      %v8687 = vmul.f32 %v6825, %v8686
      %v8688 = vsub.f32 1.0, %v8687
      %v8689 = vmul.f32 %v8686, %v8688
      %v8690 = vadd.f32 %v8686, %v8689
      %vm8691 = vweird.f32 %v6825
      %vm8692 = vweird.f32 %v8686
      %vm8693 = vmor %vm8691, %vm8692
      %v8694 = vsel %vm8693, %v8686, %v8690
      %v8695 = vand.u32 2147483647, %v6825
      %vm8696 = vcmp.eq.f32.partialorder %v8695, 8.507059e+37
      %v8697 = vand.u32 %v6825, 2147483648
      %v8698 = vor.u32 1.1754944e-38, %v8697
      %v8699 = vsel %vm8696, %v8698, %v8694
      %v8700 = vmul.f32 1.0, %v8699
      %v8701 = vrcp.pop %v6831
      %v8702 = vmul.f32 %v6831, %v8701
      %v8703 = vsub.f32 1.0, %v8702
      %v8704 = vmul.f32 %v8701, %v8703
      %v8705 = vadd.f32 %v8701, %v8704
      %vm8706 = vweird.f32 %v6831
      %vm8707 = vweird.f32 %v8701
      %vm8708 = vmor %vm8706, %vm8707
      %v8709 = vsel %vm8708, %v8701, %v8705
      %v8710 = vand.u32 2147483647, %v6831
      %vm8711 = vcmp.eq.f32.partialorder %v8710, 8.507059e+37
      %v8712 = vand.u32 %v6831, 2147483648
      %v8713 = vor.u32 1.1754944e-38, %v8712
      %v8714 = vsel %vm8711, %v8713, %v8709
      %v8715 = vmul.f32 1.0, %v8714
      %v8716 = vrcp.pop %v6837
      %v8717 = vmul.f32 %v6837, %v8716
      %v8718 = vsub.f32 1.0, %v8717
      %v8719 = vmul.f32 %v8716, %v8718
      %v8720 = vadd.f32 %v8716, %v8719
      %vm8721 = vweird.f32 %v6837
      %vm8722 = vweird.f32 %v8716
      %vm8723 = vmor %vm8721, %vm8722
      %v8724 = vsel %vm8723, %v8716, %v8720
      %v8725 = vand.u32 2147483647, %v6837
      %vm8726 = vcmp.eq.f32.partialorder %v8725, 8.507059e+37
      %v8727 = vand.u32 %v6837, 2147483648
      %v8728 = vor.u32 1.1754944e-38, %v8727
      %v8729 = vsel %vm8726, %v8728, %v8724
      %v8730 = vmul.f32 1.0, %v8729
      %v8731 = vrcp.pop %v6843
      %v8732 = vmul.f32 %v6843, %v8731
      %v8733 = vsub.f32 1.0, %v8732
      %v8734 = vmul.f32 %v8731, %v8733
      %v8735 = vadd.f32 %v8731, %v8734
      %vm8736 = vweird.f32 %v6843
      %vm8737 = vweird.f32 %v8731
      %vm8738 = vmor %vm8736, %vm8737
      %v8739 = vsel %vm8738, %v8731, %v8735
      %v8740 = vand.u32 2147483647, %v6843
      %vm8741 = vcmp.eq.f32.partialorder %v8740, 8.507059e+37
      %v8742 = vand.u32 %v6843, 2147483648
      %v8743 = vor.u32 1.1754944e-38, %v8742
      %v8744 = vsel %vm8741, %v8743, %v8739
      %v8745 = vmul.f32 1.0, %v8744
      %v8746 = vrcp.pop %v6849
      %v8747 = vmul.f32 %v6849, %v8746
      %v8748 = vsub.f32 1.0, %v8747
      %v8749 = vmul.f32 %v8746, %v8748
      %v8750 = vadd.f32 %v8746, %v8749
      %vm8751 = vweird.f32 %v6849
      %vm8752 = vweird.f32 %v8746
      %vm8753 = vmor %vm8751, %vm8752
      %v8754 = vsel %vm8753, %v8746, %v8750
      %v8755 = vand.u32 2147483647, %v6849
      %vm8756 = vcmp.eq.f32.partialorder %v8755, 8.507059e+37
      %v8757 = vand.u32 %v6849, 2147483648
      %v8758 = vor.u32 1.1754944e-38, %v8757
      %v8759 = vsel %vm8756, %v8758, %v8754
      %v8760 = vmul.f32 1.0, %v8759
      %v8761 = vrcp.pop %v6855
      %v8762 = vmul.f32 %v6855, %v8761
      %v8763 = vsub.f32 1.0, %v8762
      %v8764 = vmul.f32 %v8761, %v8763
      %v8765 = vadd.f32 %v8761, %v8764
      %vm8766 = vweird.f32 %v6855
      %vm8767 = vweird.f32 %v8761
      %vm8768 = vmor %vm8766, %vm8767
      %v8769 = vsel %vm8768, %v8761, %v8765
      %v8770 = vand.u32 2147483647, %v6855
      %vm8771 = vcmp.eq.f32.partialorder %v8770, 8.507059e+37
      %v8772 = vand.u32 %v6855, 2147483648
      %v8773 = vor.u32 1.1754944e-38, %v8772
      %v8774 = vsel %vm8771, %v8773, %v8769
      %v8775 = vmul.f32 1.0, %v8774
      %v8776 = vmul.f32 %v5833, %v6870
      %v8777 = vmul.f32 %v5835, %v6885
      %v8778 = vmul.f32 %v5837, %v6900
      %v8779 = vmul.f32 %v5839, %v6915
      %v8780 = vmul.f32 %v5841, %v6930
      %v8781 = vmul.f32 %v5843, %v6945
      %v8782 = vmul.f32 %v5845, %v6960
      %v8783 = vmul.f32 %v5847, %v6975
      %v8784 = vmul.f32 %v5849, %v6990
      %v8785 = vmul.f32 %v5851, %v7005
      %v8786 = vmul.f32 %v5853, %v7020
      %v8787 = vmul.f32 %v5855, %v7035
      %v8788 = vmul.f32 %v5857, %v7050
      %v8789 = vmul.f32 %v5859, %v7065
      %v8790 = vmul.f32 %v5861, %v7080
      %v8791 = vmul.f32 %v5863, %v7095
      %v8792 = vmul.f32 %v5865, %v7110
      %v8793 = vmul.f32 %v5867, %v7125
      %v8794 = vmul.f32 %v5869, %v7140
      %v8795 = vmul.f32 %v5871, %v7155
      %v8796 = vmul.f32 %v5873, %v7170
      %v8797 = vmul.f32 %v5875, %v7185
      %v8798 = vmul.f32 %v5877, %v7200
      %v8799 = vmul.f32 %v5879, %v7215
      %v8800 = vmul.f32 %v5881, %v7230
      %v8801 = vmul.f32 %v5883, %v7245
      %v8802 = vmul.f32 %v5885, %v7260
      %v8803 = vmul.f32 %v5887, %v7275
      %v8804 = vmul.f32 %v5889, %v7290
      %v8805 = vmul.f32 %v5891, %v7305
      %v8806 = vmul.f32 %v5893, %v7320
      %v8807 = vmul.f32 %v5895, %v7335
      %v8808 = vmul.f32 %v5897, %v7350
      %v8809 = vmul.f32 %v5899, %v7365
      %v8810 = vmul.f32 %v5901, %v7380
      %v8811 = vmul.f32 %v5903, %v7395
      %v8812 = vmul.f32 %v5905, %v7410
      %v8813 = vmul.f32 %v5907, %v7425
      %v8814 = vmul.f32 %v5909, %v7440
      %v8815 = vmul.f32 %v5911, %v7455
      %v8816 = vmul.f32 %v5913, %v7470
      %v8817 = vmul.f32 %v5915, %v7485
      %v8818 = vmul.f32 %v5917, %v7500
      %v8819 = vmul.f32 %v5919, %v7515
      %v8820 = vmul.f32 %v5921, %v7530
      %v8821 = vmul.f32 %v5923, %v7545
      %v8822 = vmul.f32 %v5925, %v7560
      %v8823 = vmul.f32 %v5927, %v7575
      %v8824 = vmul.f32 %v5929, %v7590
      %v8825 = vmul.f32 %v5931, %v7605
      %v8826 = vmul.f32 %v5933, %v7620
      %v8827 = vmul.f32 %v5935, %v7635
      %v8828 = vmul.f32 %v5937, %v7650
      %v8829 = vmul.f32 %v5939, %v7665
      %v8830 = vmul.f32 %v5941, %v7680
      %v8831 = vmul.f32 %v5943, %v7695
      %v8832 = vmul.f32 %v5945, %v7710
      %v8833 = vmul.f32 %v5947, %v7725
      %v8834 = vmul.f32 %v5949, %v7740
      %v8835 = vmul.f32 %v5951, %v7755
      %v8836 = vmul.f32 %v5953, %v7770
      %v8837 = vmul.f32 %v5955, %v7785
      %v8838 = vmul.f32 %v5957, %v7800
      %v8839 = vmul.f32 %v5959, %v7815
      %v8840 = vmul.f32 %v5961, %v7830
      %v8841 = vmul.f32 %v5963, %v7845
      %v8842 = vmul.f32 %v5965, %v7860
      %v8843 = vmul.f32 %v5967, %v7875
      %v8844 = vmul.f32 %v5969, %v7890
      %v8845 = vmul.f32 %v5971, %v7905
      %v8846 = vmul.f32 %v5973, %v7920
      %v8847 = vmul.f32 %v5975, %v7935
      %v8848 = vmul.f32 %v5977, %v7950
      %v8849 = vmul.f32 %v5979, %v7965
      %v8850 = vmul.f32 %v5981, %v7980
      %v8851 = vmul.f32 %v5983, %v7995
      %v8852 = vmul.f32 %v5985, %v8010
      %v8853 = vmul.f32 %v5987, %v8025
      %v8854 = vmul.f32 %v5989, %v8040
      %v8855 = vmul.f32 %v5991, %v8055
      %v8856 = vmul.f32 %v5993, %v8070
      %v8857 = vmul.f32 %v5995, %v8085
      %v8858 = vmul.f32 %v5997, %v8100
      %v8859 = vmul.f32 %v5999, %v8115
      %v8860 = vmul.f32 %v6001, %v8130
      %v8861 = vmul.f32 %v6003, %v8145
      %v8862 = vmul.f32 %v6005, %v8160
      %v8863 = vmul.f32 %v6007, %v8175
      %v8864 = vmul.f32 %v6009, %v8190
      %v8865 = vmul.f32 %v6011, %v8205
      %v8866 = vmul.f32 %v6013, %v8220
      %v8867 = vmul.f32 %v6015, %v8235
      %v8868 = vmul.f32 %v6017, %v8250
      %v8869 = vmul.f32 %v6019, %v8265
      %v8870 = vmul.f32 %v6021, %v8280
      %v8871 = vmul.f32 %v6023, %v8295
      %v8872 = vmul.f32 %v6025, %v8310
      %v8873 = vmul.f32 %v6027, %v8325
      %v8874 = vmul.f32 %v6029, %v8340
      %v8875 = vmul.f32 %v6031, %v8355
      %v8876 = vmul.f32 %v6033, %v8370
      %v8877 = vmul.f32 %v6035, %v8385
      %v8878 = vmul.f32 %v6037, %v8400
      %v8879 = vmul.f32 %v6039, %v8415
      %v8880 = vmul.f32 %v6041, %v8430
      %v8881 = vmul.f32 %v6043, %v8445
      %v8882 = vmul.f32 %v6045, %v8460
      %v8883 = vmul.f32 %v6047, %v8475
      %v8884 = vmul.f32 %v6049, %v8490
      %v8885 = vmul.f32 %v6051, %v8505
      %v8886 = vmul.f32 %v6053, %v8520
      %v8887 = vmul.f32 %v6055, %v8535
      %v8888 = vmul.f32 %v6057, %v8550
      %v8889 = vmul.f32 %v6059, %v8565
      %v8890 = vmul.f32 %v6061, %v8580
      %v8891 = vmul.f32 %v6063, %v8595
      %v8892 = vmul.f32 %v6065, %v8610
      %v8893 = vmul.f32 %v6067, %v8625
      %v8894 = vmul.f32 %v6069, %v8640
      %v8895 = vmul.f32 %v6071, %v8655
      %v8896 = vmul.f32 %v6073, %v8670
      %v8897 = vmul.f32 %v6075, %v8685
      %v8898 = vmul.f32 %v6077, %v8700
      %v8899 = vmul.f32 %v6079, %v8715
      %v8900 = vmul.f32 %v6081, %v8730
      %v8901 = vmul.f32 %v6083, %v8745
      %v8902 = vmul.f32 %v6085, %v8760
      %v8903 = vmul.f32 %v6087, %v8775
      %v8904 = vmul.f32 %v8776, %v3375
      %v8905 = vmul.f32 %v8777, %v3376
      %v8906 = vmul.f32 %v8778, %v3377
      %v8907 = vmul.f32 %v8779, %v3378
      %v8908 = vmul.f32 %v8780, %v3379
      %v8909 = vmul.f32 %v8781, %v3380
      %v8910 = vmul.f32 %v8782, %v3381
      %v8911 = vmul.f32 %v8783, %v3382
      %v8912 = vmul.f32 %v8784, %v3383
      %v8913 = vmul.f32 %v8785, %v3384
      %v8914 = vmul.f32 %v8786, %v3385
      %v8915 = vmul.f32 %v8787, %v3386
      %v8916 = vmul.f32 %v8788, %v3387
      %v8917 = vmul.f32 %v8789, %v3388
      %v8918 = vmul.f32 %v8790, %v3389
      %v8919 = vmul.f32 %v8791, %v3390
      %v8920 = vmul.f32 %v8792, %v3391
      %v8921 = vmul.f32 %v8793, %v3392
      %v8922 = vmul.f32 %v8794, %v3393
      %v8923 = vmul.f32 %v8795, %v3394
      %v8924 = vmul.f32 %v8796, %v3395
      %v8925 = vmul.f32 %v8797, %v3396
      %v8926 = vmul.f32 %v8798, %v3397
      %v8927 = vmul.f32 %v8799, %v3398
      %v8928 = vmul.f32 %v8800, %v3399
      %v8929 = vmul.f32 %v8801, %v3400
      %v8930 = vmul.f32 %v8802, %v3401
      %v8931 = vmul.f32 %v8803, %v3402
      %v8932 = vmul.f32 %v8804, %v3403
      %v8933 = vmul.f32 %v8805, %v3404
      %v8934 = vmul.f32 %v8806, %v3405
      %v8935 = vmul.f32 %v8807, %v3406
      %v8936 = vmul.f32 %v8808, %v3407
      %v8937 = vmul.f32 %v8809, %v3408
      %v8938 = vmul.f32 %v8810, %v3409
      %v8939 = vmul.f32 %v8811, %v3410
      %v8940 = vmul.f32 %v8812, %v3411
      %v8941 = vmul.f32 %v8813, %v3412
      %v8942 = vmul.f32 %v8814, %v3413
      %v8943 = vmul.f32 %v8815, %v3414
      %v8944 = vmul.f32 %v8816, %v3415
      %v8945 = vmul.f32 %v8817, %v3416
      %v8946 = vmul.f32 %v8818, %v3417
      %v8947 = vmul.f32 %v8819, %v3418
      %v8948 = vmul.f32 %v8820, %v3419
      %v8949 = vmul.f32 %v8821, %v3420
      %v8950 = vmul.f32 %v8822, %v3421
      %v8951 = vmul.f32 %v8823, %v3422
      %v8952 = vmul.f32 %v8824, %v3423
      %v8953 = vmul.f32 %v8825, %v3424
      %v8954 = vmul.f32 %v8826, %v3425
      %v8955 = vmul.f32 %v8827, %v3426
      %v8956 = vmul.f32 %v8828, %v3427
      %v8957 = vmul.f32 %v8829, %v3428
      %v8958 = vmul.f32 %v8830, %v3429
      %v8959 = vmul.f32 %v8831, %v3430
      %v8960 = vmul.f32 %v8832, %v3431
      %v8961 = vmul.f32 %v8833, %v3432
      %v8962 = vmul.f32 %v8834, %v3433
      %v8963 = vmul.f32 %v8835, %v3434
      %v8964 = vmul.f32 %v8836, %v3435
      %v8965 = vmul.f32 %v8837, %v3436
      %v8966 = vmul.f32 %v8838, %v3437
      %v8967 = vmul.f32 %v8839, %v3438
      %v8968 = vmul.f32 %v8840, %v3439
      %v8969 = vmul.f32 %v8841, %v3440
      %v8970 = vmul.f32 %v8842, %v3441
      %v8971 = vmul.f32 %v8843, %v3442
      %v8972 = vmul.f32 %v8844, %v3443
      %v8973 = vmul.f32 %v8845, %v3444
      %v8974 = vmul.f32 %v8846, %v3445
      %v8975 = vmul.f32 %v8847, %v3446
      %v8976 = vmul.f32 %v8848, %v3447
      %v8977 = vmul.f32 %v8849, %v3448
      %v8978 = vmul.f32 %v8850, %v3449
      %v8979 = vmul.f32 %v8851, %v3450
      %v8980 = vmul.f32 %v8852, %v3451
      %v8981 = vmul.f32 %v8853, %v3452
      %v8982 = vmul.f32 %v8854, %v3453
      %v8983 = vmul.f32 %v8855, %v3454
      %v8984 = vmul.f32 %v8856, %v3455
      %v8985 = vmul.f32 %v8857, %v3456
      %v8986 = vmul.f32 %v8858, %v3457
      %v8987 = vmul.f32 %v8859, %v3458
      %v8988 = vmul.f32 %v8860, %v3459
      %v8989 = vmul.f32 %v8861, %v3460
      %v8990 = vmul.f32 %v8862, %v3461
      %v8991 = vmul.f32 %v8863, %v3462
      %v8992 = vmul.f32 %v8864, %v3463
      %v8993 = vmul.f32 %v8865, %v3464
      %v8994 = vmul.f32 %v8866, %v3465
      %v8995 = vmul.f32 %v8867, %v3466
      %v8996 = vmul.f32 %v8868, %v3467
      %v8997 = vmul.f32 %v8869, %v3468
      %v8998 = vmul.f32 %v8870, %v3469
      %v8999 = vmul.f32 %v8871, %v3470
      %v9000 = vmul.f32 %v8872, %v3471
      %v9001 = vmul.f32 %v8873, %v3472
      %v9002 = vmul.f32 %v8874, %v3473
      %v9003 = vmul.f32 %v8875, %v3474
      %v9004 = vmul.f32 %v8876, %v3475
      %v9005 = vmul.f32 %v8877, %v3476
      %v9006 = vmul.f32 %v8878, %v3477
      %v9007 = vmul.f32 %v8879, %v3478
      %v9008 = vmul.f32 %v8880, %v3479
      %v9009 = vmul.f32 %v8881, %v3480
      %v9010 = vmul.f32 %v8882, %v3481
      %v9011 = vmul.f32 %v8883, %v3482
      %v9012 = vmul.f32 %v8884, %v3483
      %v9013 = vmul.f32 %v8885, %v3484
      %v9014 = vmul.f32 %v8886, %v3485
      %v9015 = vmul.f32 %v8887, %v3486
      %v9016 = vmul.f32 %v8888, %v3487
      %v9017 = vmul.f32 %v8889, %v3488
      %v9018 = vmul.f32 %v8890, %v3489
      %v9019 = vmul.f32 %v8891, %v3490
      %v9020 = vmul.f32 %v8892, %v3491
      %v9021 = vmul.f32 %v8893, %v3492
      %v9022 = vmul.f32 %v8894, %v3493
      %v9023 = vmul.f32 %v8895, %v3494
      %v9024 = vmul.f32 %v8896, %v3495
      %v9025 = vmul.f32 %v8897, %v3496
      %v9026 = vmul.f32 %v8898, %v3497
      %v9027 = vmul.f32 %v8899, %v3498
      %v9028 = vmul.f32 %v8900, %v3499
      %v9029 = vmul.f32 %v8901, %v3500
      %v9030 = vmul.f32 %v8902, %v3501
      %v9031 = vmul.f32 %v8903, %v3502
      %v9032 = vsel %vm302, %v8904, 0.0
      %v9033 = vrot.slane %v9032, 4
      %v9034 = vadd.f32 %v9032, %v9033
      %v9035 = vrot.slane %v9034, 2
      %v9036 = vadd.f32 %v9034, %v9035
      %v9037 = vrot.slane %v9036, 1
      %v9038 = vadd.f32 %v9036, %v9037
      %v9039 = vsel %vm302, %v8905, 0.0
      %v9040 = vrot.slane %v9039, 4
      %v9041 = vadd.f32 %v9039, %v9040
      %v9042 = vrot.slane %v9041, 2
      %v9043 = vadd.f32 %v9041, %v9042
      %v9044 = vrot.slane %v9043, 1
      %v9045 = vadd.f32 %v9043, %v9044
      %v9046 = vsel %vm302, %v8906, 0.0
      %v9047 = vrot.slane %v9046, 4
      %v9048 = vadd.f32 %v9046, %v9047
      %v9049 = vrot.slane %v9048, 2
      %v9050 = vadd.f32 %v9048, %v9049
      %v9051 = vrot.slane %v9050, 1
      %v9052 = vadd.f32 %v9050, %v9051
      %v9053 = vsel %vm302, %v8907, 0.0
      %v9054 = vrot.slane %v9053, 4
      %v9055 = vadd.f32 %v9053, %v9054
      %v9056 = vrot.slane %v9055, 2
      %v9057 = vadd.f32 %v9055, %v9056
      %v9058 = vrot.slane %v9057, 1
      %v9059 = vadd.f32 %v9057, %v9058
      %v9060 = vsel %vm302, %v8908, 0.0
      %v9061 = vrot.slane %v9060, 4
      %v9062 = vadd.f32 %v9060, %v9061
      %v9063 = vrot.slane %v9062, 2
      %v9064 = vadd.f32 %v9062, %v9063
      %v9065 = vrot.slane %v9064, 1
      %v9066 = vadd.f32 %v9064, %v9065
      %v9067 = vsel %vm302, %v8909, 0.0
      %v9068 = vrot.slane %v9067, 4
      %v9069 = vadd.f32 %v9067, %v9068
      %v9070 = vrot.slane %v9069, 2
      %v9071 = vadd.f32 %v9069, %v9070
      %v9072 = vrot.slane %v9071, 1
      %v9073 = vadd.f32 %v9071, %v9072
      %v9074 = vsel %vm302, %v8910, 0.0
      %v9075 = vrot.slane %v9074, 4
      %v9076 = vadd.f32 %v9074, %v9075
      %v9077 = vrot.slane %v9076, 2
      %v9078 = vadd.f32 %v9076, %v9077
      %v9079 = vrot.slane %v9078, 1
      %v9080 = vadd.f32 %v9078, %v9079
      %v9081 = vsel %vm302, %v8911, 0.0
      %v9082 = vrot.slane %v9081, 4
      %v9083 = vadd.f32 %v9081, %v9082
      %v9084 = vrot.slane %v9083, 2
      %v9085 = vadd.f32 %v9083, %v9084
      %v9086 = vrot.slane %v9085, 1
      %v9087 = vadd.f32 %v9085, %v9086
      %v9088 = vsel %vm302, %v8912, 0.0
      %v9089 = vrot.slane %v9088, 4
      %v9090 = vadd.f32 %v9088, %v9089
      %v9091 = vrot.slane %v9090, 2
      %v9092 = vadd.f32 %v9090, %v9091
      %v9093 = vrot.slane %v9092, 1
      %v9094 = vadd.f32 %v9092, %v9093
      %v9095 = vsel %vm302, %v8913, 0.0
      %v9096 = vrot.slane %v9095, 4
      %v9097 = vadd.f32 %v9095, %v9096
      %v9098 = vrot.slane %v9097, 2
      %v9099 = vadd.f32 %v9097, %v9098
      %v9100 = vrot.slane %v9099, 1
      %v9101 = vadd.f32 %v9099, %v9100
      %v9102 = vsel %vm302, %v8914, 0.0
      %v9103 = vrot.slane %v9102, 4
      %v9104 = vadd.f32 %v9102, %v9103
      %v9105 = vrot.slane %v9104, 2
      %v9106 = vadd.f32 %v9104, %v9105
      %v9107 = vrot.slane %v9106, 1
      %v9108 = vadd.f32 %v9106, %v9107
      %v9109 = vsel %vm302, %v8915, 0.0
      %v9110 = vrot.slane %v9109, 4
      %v9111 = vadd.f32 %v9109, %v9110
      %v9112 = vrot.slane %v9111, 2
      %v9113 = vadd.f32 %v9111, %v9112
      %v9114 = vrot.slane %v9113, 1
      %v9115 = vadd.f32 %v9113, %v9114
      %v9116 = vsel %vm302, %v8916, 0.0
      %v9117 = vrot.slane %v9116, 4
      %v9118 = vadd.f32 %v9116, %v9117
      %v9119 = vrot.slane %v9118, 2
      %v9120 = vadd.f32 %v9118, %v9119
      %v9121 = vrot.slane %v9120, 1
      %v9122 = vadd.f32 %v9120, %v9121
      %v9123 = vsel %vm302, %v8917, 0.0
      %v9124 = vrot.slane %v9123, 4
      %v9125 = vadd.f32 %v9123, %v9124
      %v9126 = vrot.slane %v9125, 2
      %v9127 = vadd.f32 %v9125, %v9126
      %v9128 = vrot.slane %v9127, 1
      %v9129 = vadd.f32 %v9127, %v9128
      %v9130 = vsel %vm302, %v8918, 0.0
      %v9131 = vrot.slane %v9130, 4
      %v9132 = vadd.f32 %v9130, %v9131
      %v9133 = vrot.slane %v9132, 2
      %v9134 = vadd.f32 %v9132, %v9133
      %v9135 = vrot.slane %v9134, 1
      %v9136 = vadd.f32 %v9134, %v9135
      %v9137 = vsel %vm302, %v8919, 0.0
      %v9138 = vrot.slane %v9137, 4
      %v9139 = vadd.f32 %v9137, %v9138
      %v9140 = vrot.slane %v9139, 2
      %v9141 = vadd.f32 %v9139, %v9140
      %v9142 = vrot.slane %v9141, 1
      %v9143 = vadd.f32 %v9141, %v9142
      %v9144 = vsel %vm302, %v8920, 0.0
      %v9145 = vrot.slane %v9144, 4
      %v9146 = vadd.f32 %v9144, %v9145
      %v9147 = vrot.slane %v9146, 2
      %v9148 = vadd.f32 %v9146, %v9147
      %v9149 = vrot.slane %v9148, 1
      %v9150 = vadd.f32 %v9148, %v9149
      %v9151 = vsel %vm302, %v8921, 0.0
      %v9152 = vrot.slane %v9151, 4
      %v9153 = vadd.f32 %v9151, %v9152
      %v9154 = vrot.slane %v9153, 2
      %v9155 = vadd.f32 %v9153, %v9154
      %v9156 = vrot.slane %v9155, 1
      %v9157 = vadd.f32 %v9155, %v9156
      %v9158 = vsel %vm302, %v8922, 0.0
      %v9159 = vrot.slane %v9158, 4
      %v9160 = vadd.f32 %v9158, %v9159
      %v9161 = vrot.slane %v9160, 2
      %v9162 = vadd.f32 %v9160, %v9161
      %v9163 = vrot.slane %v9162, 1
      %v9164 = vadd.f32 %v9162, %v9163
      %v9165 = vsel %vm302, %v8923, 0.0
      %v9166 = vrot.slane %v9165, 4
      %v9167 = vadd.f32 %v9165, %v9166
      %v9168 = vrot.slane %v9167, 2
      %v9169 = vadd.f32 %v9167, %v9168
      %v9170 = vrot.slane %v9169, 1
      %v9171 = vadd.f32 %v9169, %v9170
      %v9172 = vsel %vm302, %v8924, 0.0
      %v9173 = vrot.slane %v9172, 4
      %v9174 = vadd.f32 %v9172, %v9173
      %v9175 = vrot.slane %v9174, 2
      %v9176 = vadd.f32 %v9174, %v9175
      %v9177 = vrot.slane %v9176, 1
      %v9178 = vadd.f32 %v9176, %v9177
      %v9179 = vsel %vm302, %v8925, 0.0
      %v9180 = vrot.slane %v9179, 4
      %v9181 = vadd.f32 %v9179, %v9180
      %v9182 = vrot.slane %v9181, 2
      %v9183 = vadd.f32 %v9181, %v9182
      %v9184 = vrot.slane %v9183, 1
      %v9185 = vadd.f32 %v9183, %v9184
      %v9186 = vsel %vm302, %v8926, 0.0
      %v9187 = vrot.slane %v9186, 4
      %v9188 = vadd.f32 %v9186, %v9187
      %v9189 = vrot.slane %v9188, 2
      %v9190 = vadd.f32 %v9188, %v9189
      %v9191 = vrot.slane %v9190, 1
      %v9192 = vadd.f32 %v9190, %v9191
      %v9193 = vsel %vm302, %v8927, 0.0
      %v9194 = vrot.slane %v9193, 4
      %v9195 = vadd.f32 %v9193, %v9194
      %v9196 = vrot.slane %v9195, 2
      %v9197 = vadd.f32 %v9195, %v9196
      %v9198 = vrot.slane %v9197, 1
      %v9199 = vadd.f32 %v9197, %v9198
      %v9200 = vsel %vm302, %v8928, 0.0
      %v9201 = vrot.slane %v9200, 4
      %v9202 = vadd.f32 %v9200, %v9201
      %v9203 = vrot.slane %v9202, 2
      %v9204 = vadd.f32 %v9202, %v9203
      %v9205 = vrot.slane %v9204, 1
      %v9206 = vadd.f32 %v9204, %v9205
      %v9207 = vsel %vm302, %v8929, 0.0
      %v9208 = vrot.slane %v9207, 4
      %v9209 = vadd.f32 %v9207, %v9208
      %v9210 = vrot.slane %v9209, 2
      %v9211 = vadd.f32 %v9209, %v9210
      %v9212 = vrot.slane %v9211, 1
      %v9213 = vadd.f32 %v9211, %v9212
      %v9214 = vsel %vm302, %v8930, 0.0
      %v9215 = vrot.slane %v9214, 4
      %v9216 = vadd.f32 %v9214, %v9215
      %v9217 = vrot.slane %v9216, 2
      %v9218 = vadd.f32 %v9216, %v9217
      %v9219 = vrot.slane %v9218, 1
      %v9220 = vadd.f32 %v9218, %v9219
      %v9221 = vsel %vm302, %v8931, 0.0
      %v9222 = vrot.slane %v9221, 4
      %v9223 = vadd.f32 %v9221, %v9222
      %v9224 = vrot.slane %v9223, 2
      %v9225 = vadd.f32 %v9223, %v9224
      %v9226 = vrot.slane %v9225, 1
      %v9227 = vadd.f32 %v9225, %v9226
      %v9228 = vsel %vm302, %v8932, 0.0
      %v9229 = vrot.slane %v9228, 4
      %v9230 = vadd.f32 %v9228, %v9229
      %v9231 = vrot.slane %v9230, 2
      %v9232 = vadd.f32 %v9230, %v9231
      %v9233 = vrot.slane %v9232, 1
      %v9234 = vadd.f32 %v9232, %v9233
      %v9235 = vsel %vm302, %v8933, 0.0
      %v9236 = vrot.slane %v9235, 4
      %v9237 = vadd.f32 %v9235, %v9236
      %v9238 = vrot.slane %v9237, 2
      %v9239 = vadd.f32 %v9237, %v9238
      %v9240 = vrot.slane %v9239, 1
      %v9241 = vadd.f32 %v9239, %v9240
      %v9242 = vsel %vm302, %v8934, 0.0
      %v9243 = vrot.slane %v9242, 4
      %v9244 = vadd.f32 %v9242, %v9243
      %v9245 = vrot.slane %v9244, 2
      %v9246 = vadd.f32 %v9244, %v9245
      %v9247 = vrot.slane %v9246, 1
      %v9248 = vadd.f32 %v9246, %v9247
      %v9249 = vsel %vm302, %v8935, 0.0
      %v9250 = vrot.slane %v9249, 4
      %v9251 = vadd.f32 %v9249, %v9250
      %v9252 = vrot.slane %v9251, 2
      %v9253 = vadd.f32 %v9251, %v9252
      %v9254 = vrot.slane %v9253, 1
      %v9255 = vadd.f32 %v9253, %v9254
      %v9256 = vsel %vm302, %v8936, 0.0
      %v9257 = vrot.slane %v9256, 4
      %v9258 = vadd.f32 %v9256, %v9257
      %v9259 = vrot.slane %v9258, 2
      %v9260 = vadd.f32 %v9258, %v9259
      %v9261 = vrot.slane %v9260, 1
      %v9262 = vadd.f32 %v9260, %v9261
      %v9263 = vsel %vm302, %v8937, 0.0
      %v9264 = vrot.slane %v9263, 4
      %v9265 = vadd.f32 %v9263, %v9264
      %v9266 = vrot.slane %v9265, 2
      %v9267 = vadd.f32 %v9265, %v9266
      %v9268 = vrot.slane %v9267, 1
      %v9269 = vadd.f32 %v9267, %v9268
      %v9270 = vsel %vm302, %v8938, 0.0
      %v9271 = vrot.slane %v9270, 4
      %v9272 = vadd.f32 %v9270, %v9271
      %v9273 = vrot.slane %v9272, 2
      %v9274 = vadd.f32 %v9272, %v9273
      %v9275 = vrot.slane %v9274, 1
      %v9276 = vadd.f32 %v9274, %v9275
      %v9277 = vsel %vm302, %v8939, 0.0
      %v9278 = vrot.slane %v9277, 4
      %v9279 = vadd.f32 %v9277, %v9278
      %v9280 = vrot.slane %v9279, 2
      %v9281 = vadd.f32 %v9279, %v9280
      %v9282 = vrot.slane %v9281, 1
      %v9283 = vadd.f32 %v9281, %v9282
      %v9284 = vsel %vm302, %v8940, 0.0
      %v9285 = vrot.slane %v9284, 4
      %v9286 = vadd.f32 %v9284, %v9285
      %v9287 = vrot.slane %v9286, 2
      %v9288 = vadd.f32 %v9286, %v9287
      %v9289 = vrot.slane %v9288, 1
      %v9290 = vadd.f32 %v9288, %v9289
      %v9291 = vsel %vm302, %v8941, 0.0
      %v9292 = vrot.slane %v9291, 4
      %v9293 = vadd.f32 %v9291, %v9292
      %v9294 = vrot.slane %v9293, 2
      %v9295 = vadd.f32 %v9293, %v9294
      %v9296 = vrot.slane %v9295, 1
      %v9297 = vadd.f32 %v9295, %v9296
      %v9298 = vsel %vm302, %v8942, 0.0
      %v9299 = vrot.slane %v9298, 4
      %v9300 = vadd.f32 %v9298, %v9299
      %v9301 = vrot.slane %v9300, 2
      %v9302 = vadd.f32 %v9300, %v9301
      %v9303 = vrot.slane %v9302, 1
      %v9304 = vadd.f32 %v9302, %v9303
      %v9305 = vsel %vm302, %v8943, 0.0
      %v9306 = vrot.slane %v9305, 4
      %v9307 = vadd.f32 %v9305, %v9306
      %v9308 = vrot.slane %v9307, 2
      %v9309 = vadd.f32 %v9307, %v9308
      %v9310 = vrot.slane %v9309, 1
      %v9311 = vadd.f32 %v9309, %v9310
      %v9312 = vsel %vm302, %v8944, 0.0
      %v9313 = vrot.slane %v9312, 4
      %v9314 = vadd.f32 %v9312, %v9313
      %v9315 = vrot.slane %v9314, 2
      %v9316 = vadd.f32 %v9314, %v9315
      %v9317 = vrot.slane %v9316, 1
      %v9318 = vadd.f32 %v9316, %v9317
      %v9319 = vsel %vm302, %v8945, 0.0
      %v9320 = vrot.slane %v9319, 4
      %v9321 = vadd.f32 %v9319, %v9320
      %v9322 = vrot.slane %v9321, 2
      %v9323 = vadd.f32 %v9321, %v9322
      %v9324 = vrot.slane %v9323, 1
      %v9325 = vadd.f32 %v9323, %v9324
      %v9326 = vsel %vm302, %v8946, 0.0
      %v9327 = vrot.slane %v9326, 4
      %v9328 = vadd.f32 %v9326, %v9327
      %v9329 = vrot.slane %v9328, 2
      %v9330 = vadd.f32 %v9328, %v9329
      %v9331 = vrot.slane %v9330, 1
      %v9332 = vadd.f32 %v9330, %v9331
      %v9333 = vsel %vm302, %v8947, 0.0
      %v9334 = vrot.slane %v9333, 4
      %v9335 = vadd.f32 %v9333, %v9334
      %v9336 = vrot.slane %v9335, 2
      %v9337 = vadd.f32 %v9335, %v9336
      %v9338 = vrot.slane %v9337, 1
      %v9339 = vadd.f32 %v9337, %v9338
      %v9340 = vsel %vm302, %v8948, 0.0
      %v9341 = vrot.slane %v9340, 4
      %v9342 = vadd.f32 %v9340, %v9341
      %v9343 = vrot.slane %v9342, 2
      %v9344 = vadd.f32 %v9342, %v9343
      %v9345 = vrot.slane %v9344, 1
      %v9346 = vadd.f32 %v9344, %v9345
      %v9347 = vsel %vm302, %v8949, 0.0
      %v9348 = vrot.slane %v9347, 4
      %v9349 = vadd.f32 %v9347, %v9348
      %v9350 = vrot.slane %v9349, 2
      %v9351 = vadd.f32 %v9349, %v9350
      %v9352 = vrot.slane %v9351, 1
      %v9353 = vadd.f32 %v9351, %v9352
      %v9354 = vsel %vm302, %v8950, 0.0
      %v9355 = vrot.slane %v9354, 4
      %v9356 = vadd.f32 %v9354, %v9355
      %v9357 = vrot.slane %v9356, 2
      %v9358 = vadd.f32 %v9356, %v9357
      %v9359 = vrot.slane %v9358, 1
      %v9360 = vadd.f32 %v9358, %v9359
      %v9361 = vsel %vm302, %v8951, 0.0
      %v9362 = vrot.slane %v9361, 4
      %v9363 = vadd.f32 %v9361, %v9362
      %v9364 = vrot.slane %v9363, 2
      %v9365 = vadd.f32 %v9363, %v9364
      %v9366 = vrot.slane %v9365, 1
      %v9367 = vadd.f32 %v9365, %v9366
      %v9368 = vsel %vm302, %v8952, 0.0
      %v9369 = vrot.slane %v9368, 4
      %v9370 = vadd.f32 %v9368, %v9369
      %v9371 = vrot.slane %v9370, 2
      %v9372 = vadd.f32 %v9370, %v9371
      %v9373 = vrot.slane %v9372, 1
      %v9374 = vadd.f32 %v9372, %v9373
      %v9375 = vsel %vm302, %v8953, 0.0
      %v9376 = vrot.slane %v9375, 4
      %v9377 = vadd.f32 %v9375, %v9376
      %v9378 = vrot.slane %v9377, 2
      %v9379 = vadd.f32 %v9377, %v9378
      %v9380 = vrot.slane %v9379, 1
      %v9381 = vadd.f32 %v9379, %v9380
      %v9382 = vsel %vm302, %v8954, 0.0
      %v9383 = vrot.slane %v9382, 4
      %v9384 = vadd.f32 %v9382, %v9383
      %v9385 = vrot.slane %v9384, 2
      %v9386 = vadd.f32 %v9384, %v9385
      %v9387 = vrot.slane %v9386, 1
      %v9388 = vadd.f32 %v9386, %v9387
      %v9389 = vsel %vm302, %v8955, 0.0
      %v9390 = vrot.slane %v9389, 4
      %v9391 = vadd.f32 %v9389, %v9390
      %v9392 = vrot.slane %v9391, 2
      %v9393 = vadd.f32 %v9391, %v9392
      %v9394 = vrot.slane %v9393, 1
      %v9395 = vadd.f32 %v9393, %v9394
      %v9396 = vsel %vm302, %v8956, 0.0
      %v9397 = vrot.slane %v9396, 4
      %v9398 = vadd.f32 %v9396, %v9397
      %v9399 = vrot.slane %v9398, 2
      %v9400 = vadd.f32 %v9398, %v9399
      %v9401 = vrot.slane %v9400, 1
      %v9402 = vadd.f32 %v9400, %v9401
      %v9403 = vsel %vm302, %v8957, 0.0
      %v9404 = vrot.slane %v9403, 4
      %v9405 = vadd.f32 %v9403, %v9404
      %v9406 = vrot.slane %v9405, 2
      %v9407 = vadd.f32 %v9405, %v9406
      %v9408 = vrot.slane %v9407, 1
      %v9409 = vadd.f32 %v9407, %v9408
      %v9410 = vsel %vm302, %v8958, 0.0
      %v9411 = vrot.slane %v9410, 4
      %v9412 = vadd.f32 %v9410, %v9411
      %v9413 = vrot.slane %v9412, 2
      %v9414 = vadd.f32 %v9412, %v9413
      %v9415 = vrot.slane %v9414, 1
      %v9416 = vadd.f32 %v9414, %v9415
      %v9417 = vsel %vm302, %v8959, 0.0
      %v9418 = vrot.slane %v9417, 4
      %v9419 = vadd.f32 %v9417, %v9418
      %v9420 = vrot.slane %v9419, 2
      %v9421 = vadd.f32 %v9419, %v9420
      %v9422 = vrot.slane %v9421, 1
      %v9423 = vadd.f32 %v9421, %v9422
      %v9424 = vsel %vm302, %v8960, 0.0
      %v9425 = vrot.slane %v9424, 4
      %v9426 = vadd.f32 %v9424, %v9425
      %v9427 = vrot.slane %v9426, 2
      %v9428 = vadd.f32 %v9426, %v9427
      %v9429 = vrot.slane %v9428, 1
      %v9430 = vadd.f32 %v9428, %v9429
      %v9431 = vsel %vm302, %v8961, 0.0
      %v9432 = vrot.slane %v9431, 4
      %v9433 = vadd.f32 %v9431, %v9432
      %v9434 = vrot.slane %v9433, 2
      %v9435 = vadd.f32 %v9433, %v9434
      %v9436 = vrot.slane %v9435, 1
      %v9437 = vadd.f32 %v9435, %v9436
      %v9438 = vsel %vm302, %v8962, 0.0
      %v9439 = vrot.slane %v9438, 4
      %v9440 = vadd.f32 %v9438, %v9439
      %v9441 = vrot.slane %v9440, 2
      %v9442 = vadd.f32 %v9440, %v9441
      %v9443 = vrot.slane %v9442, 1
      %v9444 = vadd.f32 %v9442, %v9443
      %v9445 = vsel %vm302, %v8963, 0.0
      %v9446 = vrot.slane %v9445, 4
      %v9447 = vadd.f32 %v9445, %v9446
      %v9448 = vrot.slane %v9447, 2
      %v9449 = vadd.f32 %v9447, %v9448
      %v9450 = vrot.slane %v9449, 1
      %v9451 = vadd.f32 %v9449, %v9450
      %v9452 = vsel %vm302, %v8964, 0.0
      %v9453 = vrot.slane %v9452, 4
      %v9454 = vadd.f32 %v9452, %v9453
      %v9455 = vrot.slane %v9454, 2
      %v9456 = vadd.f32 %v9454, %v9455
      %v9457 = vrot.slane %v9456, 1
      %v9458 = vadd.f32 %v9456, %v9457
      %v9459 = vsel %vm302, %v8965, 0.0
      %v9460 = vrot.slane %v9459, 4
      %v9461 = vadd.f32 %v9459, %v9460
      %v9462 = vrot.slane %v9461, 2
      %v9463 = vadd.f32 %v9461, %v9462
      %v9464 = vrot.slane %v9463, 1
      %v9465 = vadd.f32 %v9463, %v9464
      %v9466 = vsel %vm302, %v8966, 0.0
      %v9467 = vrot.slane %v9466, 4
      %v9468 = vadd.f32 %v9466, %v9467
      %v9469 = vrot.slane %v9468, 2
      %v9470 = vadd.f32 %v9468, %v9469
      %v9471 = vrot.slane %v9470, 1
      %v9472 = vadd.f32 %v9470, %v9471
      %v9473 = vsel %vm302, %v8967, 0.0
      %v9474 = vrot.slane %v9473, 4
      %v9475 = vadd.f32 %v9473, %v9474
      %v9476 = vrot.slane %v9475, 2
      %v9477 = vadd.f32 %v9475, %v9476
      %v9478 = vrot.slane %v9477, 1
      %v9479 = vadd.f32 %v9477, %v9478
      %v9480 = vsel %vm302, %v8968, 0.0
      %v9481 = vrot.slane %v9480, 4
      %v9482 = vadd.f32 %v9480, %v9481
      %v9483 = vrot.slane %v9482, 2
      %v9484 = vadd.f32 %v9482, %v9483
      %v9485 = vrot.slane %v9484, 1
      %v9486 = vadd.f32 %v9484, %v9485
      %v9487 = vsel %vm302, %v8969, 0.0
      %v9488 = vrot.slane %v9487, 4
      %v9489 = vadd.f32 %v9487, %v9488
      %v9490 = vrot.slane %v9489, 2
      %v9491 = vadd.f32 %v9489, %v9490
      %v9492 = vrot.slane %v9491, 1
      %v9493 = vadd.f32 %v9491, %v9492
      %v9494 = vsel %vm302, %v8970, 0.0
      %v9495 = vrot.slane %v9494, 4
      %v9496 = vadd.f32 %v9494, %v9495
      %v9497 = vrot.slane %v9496, 2
      %v9498 = vadd.f32 %v9496, %v9497
      %v9499 = vrot.slane %v9498, 1
      %v9500 = vadd.f32 %v9498, %v9499
      %v9501 = vsel %vm302, %v8971, 0.0
      %v9502 = vrot.slane %v9501, 4
      %v9503 = vadd.f32 %v9501, %v9502
      %v9504 = vrot.slane %v9503, 2
      %v9505 = vadd.f32 %v9503, %v9504
      %v9506 = vrot.slane %v9505, 1
      %v9507 = vadd.f32 %v9505, %v9506
      %v9508 = vsel %vm302, %v8972, 0.0
      %v9509 = vrot.slane %v9508, 4
      %v9510 = vadd.f32 %v9508, %v9509
      %v9511 = vrot.slane %v9510, 2
      %v9512 = vadd.f32 %v9510, %v9511
      %v9513 = vrot.slane %v9512, 1
      %v9514 = vadd.f32 %v9512, %v9513
      %v9515 = vsel %vm302, %v8973, 0.0
      %v9516 = vrot.slane %v9515, 4
      %v9517 = vadd.f32 %v9515, %v9516
      %v9518 = vrot.slane %v9517, 2
      %v9519 = vadd.f32 %v9517, %v9518
      %v9520 = vrot.slane %v9519, 1
      %v9521 = vadd.f32 %v9519, %v9520
      %v9522 = vsel %vm302, %v8974, 0.0
      %v9523 = vrot.slane %v9522, 4
      %v9524 = vadd.f32 %v9522, %v9523
      %v9525 = vrot.slane %v9524, 2
      %v9526 = vadd.f32 %v9524, %v9525
      %v9527 = vrot.slane %v9526, 1
      %v9528 = vadd.f32 %v9526, %v9527
      %v9529 = vsel %vm302, %v8975, 0.0
      %v9530 = vrot.slane %v9529, 4
      %v9531 = vadd.f32 %v9529, %v9530
      %v9532 = vrot.slane %v9531, 2
      %v9533 = vadd.f32 %v9531, %v9532
      %v9534 = vrot.slane %v9533, 1
      %v9535 = vadd.f32 %v9533, %v9534
      %v9536 = vsel %vm302, %v8976, 0.0
      %v9537 = vrot.slane %v9536, 4
      %v9538 = vadd.f32 %v9536, %v9537
      %v9539 = vrot.slane %v9538, 2
      %v9540 = vadd.f32 %v9538, %v9539
      %v9541 = vrot.slane %v9540, 1
      %v9542 = vadd.f32 %v9540, %v9541
      %v9543 = vsel %vm302, %v8977, 0.0
      %v9544 = vrot.slane %v9543, 4
      %v9545 = vadd.f32 %v9543, %v9544
      %v9546 = vrot.slane %v9545, 2
      %v9547 = vadd.f32 %v9545, %v9546
      %v9548 = vrot.slane %v9547, 1
      %v9549 = vadd.f32 %v9547, %v9548
      %v9550 = vsel %vm302, %v8978, 0.0
      %v9551 = vrot.slane %v9550, 4
      %v9552 = vadd.f32 %v9550, %v9551
      %v9553 = vrot.slane %v9552, 2
      %v9554 = vadd.f32 %v9552, %v9553
      %v9555 = vrot.slane %v9554, 1
      %v9556 = vadd.f32 %v9554, %v9555
      %v9557 = vsel %vm302, %v8979, 0.0
      %v9558 = vrot.slane %v9557, 4
      %v9559 = vadd.f32 %v9557, %v9558
      %v9560 = vrot.slane %v9559, 2
      %v9561 = vadd.f32 %v9559, %v9560
      %v9562 = vrot.slane %v9561, 1
      %v9563 = vadd.f32 %v9561, %v9562
      %v9564 = vsel %vm302, %v8980, 0.0
      %v9565 = vrot.slane %v9564, 4
      %v9566 = vadd.f32 %v9564, %v9565
      %v9567 = vrot.slane %v9566, 2
      %v9568 = vadd.f32 %v9566, %v9567
      %v9569 = vrot.slane %v9568, 1
      %v9570 = vadd.f32 %v9568, %v9569
      %v9571 = vsel %vm302, %v8981, 0.0
      %v9572 = vrot.slane %v9571, 4
      %v9573 = vadd.f32 %v9571, %v9572
      %v9574 = vrot.slane %v9573, 2
      %v9575 = vadd.f32 %v9573, %v9574
      %v9576 = vrot.slane %v9575, 1
      %v9577 = vadd.f32 %v9575, %v9576
      %v9578 = vsel %vm302, %v8982, 0.0
      %v9579 = vrot.slane %v9578, 4
      %v9580 = vadd.f32 %v9578, %v9579
      %v9581 = vrot.slane %v9580, 2
      %v9582 = vadd.f32 %v9580, %v9581
      %v9583 = vrot.slane %v9582, 1
      %v9584 = vadd.f32 %v9582, %v9583
      %v9585 = vsel %vm302, %v8983, 0.0
      %v9586 = vrot.slane %v9585, 4
      %v9587 = vadd.f32 %v9585, %v9586
      %v9588 = vrot.slane %v9587, 2
      %v9589 = vadd.f32 %v9587, %v9588
      %v9590 = vrot.slane %v9589, 1
      %v9591 = vadd.f32 %v9589, %v9590
      %v9592 = vsel %vm302, %v8984, 0.0
      %v9593 = vrot.slane %v9592, 4
      %v9594 = vadd.f32 %v9592, %v9593
      %v9595 = vrot.slane %v9594, 2
      %v9596 = vadd.f32 %v9594, %v9595
      %v9597 = vrot.slane %v9596, 1
      %v9598 = vadd.f32 %v9596, %v9597
      %v9599 = vsel %vm302, %v8985, 0.0
      %v9600 = vrot.slane %v9599, 4
      %v9601 = vadd.f32 %v9599, %v9600
      %v9602 = vrot.slane %v9601, 2
      %v9603 = vadd.f32 %v9601, %v9602
      %v9604 = vrot.slane %v9603, 1
      %v9605 = vadd.f32 %v9603, %v9604
      %v9606 = vsel %vm302, %v8986, 0.0
      %v9607 = vrot.slane %v9606, 4
      %v9608 = vadd.f32 %v9606, %v9607
      %v9609 = vrot.slane %v9608, 2
      %v9610 = vadd.f32 %v9608, %v9609
      %v9611 = vrot.slane %v9610, 1
      %v9612 = vadd.f32 %v9610, %v9611
      %v9613 = vsel %vm302, %v8987, 0.0
      %v9614 = vrot.slane %v9613, 4
      %v9615 = vadd.f32 %v9613, %v9614
      %v9616 = vrot.slane %v9615, 2
      %v9617 = vadd.f32 %v9615, %v9616
      %v9618 = vrot.slane %v9617, 1
      %v9619 = vadd.f32 %v9617, %v9618
      %v9620 = vsel %vm302, %v8988, 0.0
      %v9621 = vrot.slane %v9620, 4
      %v9622 = vadd.f32 %v9620, %v9621
      %v9623 = vrot.slane %v9622, 2
      %v9624 = vadd.f32 %v9622, %v9623
      %v9625 = vrot.slane %v9624, 1
      %v9626 = vadd.f32 %v9624, %v9625
      %v9627 = vsel %vm302, %v8989, 0.0
      %v9628 = vrot.slane %v9627, 4
      %v9629 = vadd.f32 %v9627, %v9628
      %v9630 = vrot.slane %v9629, 2
      %v9631 = vadd.f32 %v9629, %v9630
      %v9632 = vrot.slane %v9631, 1
      %v9633 = vadd.f32 %v9631, %v9632
      %v9634 = vsel %vm302, %v8990, 0.0
      %v9635 = vrot.slane %v9634, 4
      %v9636 = vadd.f32 %v9634, %v9635
      %v9637 = vrot.slane %v9636, 2
      %v9638 = vadd.f32 %v9636, %v9637
      %v9639 = vrot.slane %v9638, 1
      %v9640 = vadd.f32 %v9638, %v9639
      %v9641 = vsel %vm302, %v8991, 0.0
      %v9642 = vrot.slane %v9641, 4
      %v9643 = vadd.f32 %v9641, %v9642
      %v9644 = vrot.slane %v9643, 2
      %v9645 = vadd.f32 %v9643, %v9644
      %v9646 = vrot.slane %v9645, 1
      %v9647 = vadd.f32 %v9645, %v9646
      %v9648 = vsel %vm302, %v8992, 0.0
      %v9649 = vrot.slane %v9648, 4
      %v9650 = vadd.f32 %v9648, %v9649
      %v9651 = vrot.slane %v9650, 2
      %v9652 = vadd.f32 %v9650, %v9651
      %v9653 = vrot.slane %v9652, 1
      %v9654 = vadd.f32 %v9652, %v9653
      %v9655 = vsel %vm302, %v8993, 0.0
      %v9656 = vrot.slane %v9655, 4
      %v9657 = vadd.f32 %v9655, %v9656
      %v9658 = vrot.slane %v9657, 2
      %v9659 = vadd.f32 %v9657, %v9658
      %v9660 = vrot.slane %v9659, 1
      %v9661 = vadd.f32 %v9659, %v9660
      %v9662 = vsel %vm302, %v8994, 0.0
      %v9663 = vrot.slane %v9662, 4
      %v9664 = vadd.f32 %v9662, %v9663
      %v9665 = vrot.slane %v9664, 2
      %v9666 = vadd.f32 %v9664, %v9665
      %v9667 = vrot.slane %v9666, 1
      %v9668 = vadd.f32 %v9666, %v9667
      %v9669 = vsel %vm302, %v8995, 0.0
      %v9670 = vrot.slane %v9669, 4
      %v9671 = vadd.f32 %v9669, %v9670
      %v9672 = vrot.slane %v9671, 2
      %v9673 = vadd.f32 %v9671, %v9672
      %v9674 = vrot.slane %v9673, 1
      %v9675 = vadd.f32 %v9673, %v9674
      %v9676 = vsel %vm302, %v8996, 0.0
      %v9677 = vrot.slane %v9676, 4
      %v9678 = vadd.f32 %v9676, %v9677
      %v9679 = vrot.slane %v9678, 2
      %v9680 = vadd.f32 %v9678, %v9679
      %v9681 = vrot.slane %v9680, 1
      %v9682 = vadd.f32 %v9680, %v9681
      %v9683 = vsel %vm302, %v8997, 0.0
      %v9684 = vrot.slane %v9683, 4
      %v9685 = vadd.f32 %v9683, %v9684
      %v9686 = vrot.slane %v9685, 2
      %v9687 = vadd.f32 %v9685, %v9686
      %v9688 = vrot.slane %v9687, 1
      %v9689 = vadd.f32 %v9687, %v9688
      %v9690 = vsel %vm302, %v8998, 0.0
      %v9691 = vrot.slane %v9690, 4
      %v9692 = vadd.f32 %v9690, %v9691
      %v9693 = vrot.slane %v9692, 2
      %v9694 = vadd.f32 %v9692, %v9693
      %v9695 = vrot.slane %v9694, 1
      %v9696 = vadd.f32 %v9694, %v9695
      %v9697 = vsel %vm302, %v8999, 0.0
      %v9698 = vrot.slane %v9697, 4
      %v9699 = vadd.f32 %v9697, %v9698
      %v9700 = vrot.slane %v9699, 2
      %v9701 = vadd.f32 %v9699, %v9700
      %v9702 = vrot.slane %v9701, 1
      %v9703 = vadd.f32 %v9701, %v9702
      %v9704 = vsel %vm302, %v9000, 0.0
      %v9705 = vrot.slane %v9704, 4
      %v9706 = vadd.f32 %v9704, %v9705
      %v9707 = vrot.slane %v9706, 2
      %v9708 = vadd.f32 %v9706, %v9707
      %v9709 = vrot.slane %v9708, 1
      %v9710 = vadd.f32 %v9708, %v9709
      %v9711 = vsel %vm302, %v9001, 0.0
      %v9712 = vrot.slane %v9711, 4
      %v9713 = vadd.f32 %v9711, %v9712
      %v9714 = vrot.slane %v9713, 2
      %v9715 = vadd.f32 %v9713, %v9714
      %v9716 = vrot.slane %v9715, 1
      %v9717 = vadd.f32 %v9715, %v9716
      %v9718 = vsel %vm302, %v9002, 0.0
      %v9719 = vrot.slane %v9718, 4
      %v9720 = vadd.f32 %v9718, %v9719
      %v9721 = vrot.slane %v9720, 2
      %v9722 = vadd.f32 %v9720, %v9721
      %v9723 = vrot.slane %v9722, 1
      %v9724 = vadd.f32 %v9722, %v9723
      %v9725 = vsel %vm302, %v9003, 0.0
      %v9726 = vrot.slane %v9725, 4
      %v9727 = vadd.f32 %v9725, %v9726
      %v9728 = vrot.slane %v9727, 2
      %v9729 = vadd.f32 %v9727, %v9728
      %v9730 = vrot.slane %v9729, 1
      %v9731 = vadd.f32 %v9729, %v9730
      %v9732 = vsel %vm302, %v9004, 0.0
      %v9733 = vrot.slane %v9732, 4
      %v9734 = vadd.f32 %v9732, %v9733
      %v9735 = vrot.slane %v9734, 2
      %v9736 = vadd.f32 %v9734, %v9735
      %v9737 = vrot.slane %v9736, 1
      %v9738 = vadd.f32 %v9736, %v9737
      %v9739 = vsel %vm302, %v9005, 0.0
      %v9740 = vrot.slane %v9739, 4
      %v9741 = vadd.f32 %v9739, %v9740
      %v9742 = vrot.slane %v9741, 2
      %v9743 = vadd.f32 %v9741, %v9742
      %v9744 = vrot.slane %v9743, 1
      %v9745 = vadd.f32 %v9743, %v9744
      %v9746 = vsel %vm302, %v9006, 0.0
      %v9747 = vrot.slane %v9746, 4
      %v9748 = vadd.f32 %v9746, %v9747
      %v9749 = vrot.slane %v9748, 2
      %v9750 = vadd.f32 %v9748, %v9749
      %v9751 = vrot.slane %v9750, 1
      %v9752 = vadd.f32 %v9750, %v9751
      %v9753 = vsel %vm302, %v9007, 0.0
      %v9754 = vrot.slane %v9753, 4
      %v9755 = vadd.f32 %v9753, %v9754
      %v9756 = vrot.slane %v9755, 2
      %v9757 = vadd.f32 %v9755, %v9756
      %v9758 = vrot.slane %v9757, 1
      %v9759 = vadd.f32 %v9757, %v9758
      %v9760 = vsel %vm302, %v9008, 0.0
      %v9761 = vrot.slane %v9760, 4
      %v9762 = vadd.f32 %v9760, %v9761
      %v9763 = vrot.slane %v9762, 2
      %v9764 = vadd.f32 %v9762, %v9763
      %v9765 = vrot.slane %v9764, 1
      %v9766 = vadd.f32 %v9764, %v9765
      %v9767 = vsel %vm302, %v9009, 0.0
      %v9768 = vrot.slane %v9767, 4
      %v9769 = vadd.f32 %v9767, %v9768
      %v9770 = vrot.slane %v9769, 2
      %v9771 = vadd.f32 %v9769, %v9770
      %v9772 = vrot.slane %v9771, 1
      %v9773 = vadd.f32 %v9771, %v9772
      %v9774 = vsel %vm302, %v9010, 0.0
      %v9775 = vrot.slane %v9774, 4
      %v9776 = vadd.f32 %v9774, %v9775
      %v9777 = vrot.slane %v9776, 2
      %v9778 = vadd.f32 %v9776, %v9777
      %v9779 = vrot.slane %v9778, 1
      %v9780 = vadd.f32 %v9778, %v9779
      %v9781 = vsel %vm302, %v9011, 0.0
      %v9782 = vrot.slane %v9781, 4
      %v9783 = vadd.f32 %v9781, %v9782
      %v9784 = vrot.slane %v9783, 2
      %v9785 = vadd.f32 %v9783, %v9784
      %v9786 = vrot.slane %v9785, 1
      %v9787 = vadd.f32 %v9785, %v9786
      %v9788 = vsel %vm302, %v9012, 0.0
      %v9789 = vrot.slane %v9788, 4
      %v9790 = vadd.f32 %v9788, %v9789
      %v9791 = vrot.slane %v9790, 2
      %v9792 = vadd.f32 %v9790, %v9791
      %v9793 = vrot.slane %v9792, 1
      %v9794 = vadd.f32 %v9792, %v9793
      %v9795 = vsel %vm302, %v9013, 0.0
      %v9796 = vrot.slane %v9795, 4
      %v9797 = vadd.f32 %v9795, %v9796
      %v9798 = vrot.slane %v9797, 2
      %v9799 = vadd.f32 %v9797, %v9798
      %v9800 = vrot.slane %v9799, 1
      %v9801 = vadd.f32 %v9799, %v9800
      %v9802 = vsel %vm302, %v9014, 0.0
      %v9803 = vrot.slane %v9802, 4
      %v9804 = vadd.f32 %v9802, %v9803
      %v9805 = vrot.slane %v9804, 2
      %v9806 = vadd.f32 %v9804, %v9805
      %v9807 = vrot.slane %v9806, 1
      %v9808 = vadd.f32 %v9806, %v9807
      %v9809 = vsel %vm302, %v9015, 0.0
      %v9810 = vrot.slane %v9809, 4
      %v9811 = vadd.f32 %v9809, %v9810
      %v9812 = vrot.slane %v9811, 2
      %v9813 = vadd.f32 %v9811, %v9812
      %v9814 = vrot.slane %v9813, 1
      %v9815 = vadd.f32 %v9813, %v9814
      %v9816 = vsel %vm302, %v9016, 0.0
      %v9817 = vrot.slane %v9816, 4
      %v9818 = vadd.f32 %v9816, %v9817
      %v9819 = vrot.slane %v9818, 2
      %v9820 = vadd.f32 %v9818, %v9819
      %v9821 = vrot.slane %v9820, 1
      %v9822 = vadd.f32 %v9820, %v9821
      %v9823 = vsel %vm302, %v9017, 0.0
      %v9824 = vrot.slane %v9823, 4
      %v9825 = vadd.f32 %v9823, %v9824
      %v9826 = vrot.slane %v9825, 2
      %v9827 = vadd.f32 %v9825, %v9826
      %v9828 = vrot.slane %v9827, 1
      %v9829 = vadd.f32 %v9827, %v9828
      %v9830 = vsel %vm302, %v9018, 0.0
      %v9831 = vrot.slane %v9830, 4
      %v9832 = vadd.f32 %v9830, %v9831
      %v9833 = vrot.slane %v9832, 2
      %v9834 = vadd.f32 %v9832, %v9833
      %v9835 = vrot.slane %v9834, 1
      %v9836 = vadd.f32 %v9834, %v9835
      %v9837 = vsel %vm302, %v9019, 0.0
      %v9838 = vrot.slane %v9837, 4
      %v9839 = vadd.f32 %v9837, %v9838
      %v9840 = vrot.slane %v9839, 2
      %v9841 = vadd.f32 %v9839, %v9840
      %v9842 = vrot.slane %v9841, 1
      %v9843 = vadd.f32 %v9841, %v9842
      %v9844 = vsel %vm302, %v9020, 0.0
      %v9845 = vrot.slane %v9844, 4
      %v9846 = vadd.f32 %v9844, %v9845
      %v9847 = vrot.slane %v9846, 2
      %v9848 = vadd.f32 %v9846, %v9847
      %v9849 = vrot.slane %v9848, 1
      %v9850 = vadd.f32 %v9848, %v9849
      %v9851 = vsel %vm302, %v9021, 0.0
      %v9852 = vrot.slane %v9851, 4
      %v9853 = vadd.f32 %v9851, %v9852
      %v9854 = vrot.slane %v9853, 2
      %v9855 = vadd.f32 %v9853, %v9854
      %v9856 = vrot.slane %v9855, 1
      %v9857 = vadd.f32 %v9855, %v9856
      %v9858 = vsel %vm302, %v9022, 0.0
      %v9859 = vrot.slane %v9858, 4
      %v9860 = vadd.f32 %v9858, %v9859
      %v9861 = vrot.slane %v9860, 2
      %v9862 = vadd.f32 %v9860, %v9861
      %v9863 = vrot.slane %v9862, 1
      %v9864 = vadd.f32 %v9862, %v9863
      %v9865 = vsel %vm302, %v9023, 0.0
      %v9866 = vrot.slane %v9865, 4
      %v9867 = vadd.f32 %v9865, %v9866
      %v9868 = vrot.slane %v9867, 2
      %v9869 = vadd.f32 %v9867, %v9868
      %v9870 = vrot.slane %v9869, 1
      %v9871 = vadd.f32 %v9869, %v9870
      %v9872 = vsel %vm302, %v9024, 0.0
      %v9873 = vrot.slane %v9872, 4
      %v9874 = vadd.f32 %v9872, %v9873
      %v9875 = vrot.slane %v9874, 2
      %v9876 = vadd.f32 %v9874, %v9875
      %v9877 = vrot.slane %v9876, 1
      %v9878 = vadd.f32 %v9876, %v9877
      %v9879 = vsel %vm302, %v9025, 0.0
      %v9880 = vrot.slane %v9879, 4
      %v9881 = vadd.f32 %v9879, %v9880
      %v9882 = vrot.slane %v9881, 2
      %v9883 = vadd.f32 %v9881, %v9882
      %v9884 = vrot.slane %v9883, 1
      %v9885 = vadd.f32 %v9883, %v9884
      %v9886 = vsel %vm302, %v9026, 0.0
      %v9887 = vrot.slane %v9886, 4
      %v9888 = vadd.f32 %v9886, %v9887
      %v9889 = vrot.slane %v9888, 2
      %v9890 = vadd.f32 %v9888, %v9889
      %v9891 = vrot.slane %v9890, 1
      %v9892 = vadd.f32 %v9890, %v9891
      %v9893 = vsel %vm302, %v9027, 0.0
      %v9894 = vrot.slane %v9893, 4
      %v9895 = vadd.f32 %v9893, %v9894
      %v9896 = vrot.slane %v9895, 2
      %v9897 = vadd.f32 %v9895, %v9896
      %v9898 = vrot.slane %v9897, 1
      %v9899 = vadd.f32 %v9897, %v9898
      %v9900 = vsel %vm302, %v9028, 0.0
      %v9901 = vrot.slane %v9900, 4
      %v9902 = vadd.f32 %v9900, %v9901
      %v9903 = vrot.slane %v9902, 2
      %v9904 = vadd.f32 %v9902, %v9903
      %v9905 = vrot.slane %v9904, 1
      %v9906 = vadd.f32 %v9904, %v9905
      %v9907 = vsel %vm302, %v9029, 0.0
      %v9908 = vrot.slane %v9907, 4
      %v9909 = vadd.f32 %v9907, %v9908
      %v9910 = vrot.slane %v9909, 2
      %v9911 = vadd.f32 %v9909, %v9910
      %v9912 = vrot.slane %v9911, 1
      %v9913 = vadd.f32 %v9911, %v9912
      %v9914 = vsel %vm302, %v9030, 0.0
      %v9915 = vrot.slane %v9914, 4
      %v9916 = vadd.f32 %v9914, %v9915
      %v9917 = vrot.slane %v9916, 2
      %v9918 = vadd.f32 %v9916, %v9917
      %v9919 = vrot.slane %v9918, 1
      %v9920 = vadd.f32 %v9918, %v9919
      %v9921 = vsel %vm302, %v9031, 0.0
      %v9922 = vrot.slane %v9921, 4
      %v9923 = vadd.f32 %v9921, %v9922
      %v9924 = vrot.slane %v9923, 2
      %v9925 = vadd.f32 %v9923, %v9924
      %v9926 = vrot.slane %v9925, 1
      %v9927 = vadd.f32 %v9925, %v9926
      %v9928 = vlog2.pop %v9038
      %v9929 = vmul.f32 %v9928, 0.6931472
      %v9930 = vlog2.pop %v9045
      %v9931 = vmul.f32 %v9930, 0.6931472
      %v9932 = vlog2.pop %v9052
      %v9933 = vmul.f32 %v9932, 0.6931472
      %v9934 = vlog2.pop %v9059
      %v9935 = vmul.f32 %v9934, 0.6931472
      %v9936 = vlog2.pop %v9066
      %v9937 = vmul.f32 %v9936, 0.6931472
      %v9938 = vlog2.pop %v9073
      %v9939 = vmul.f32 %v9938, 0.6931472
      %v9940 = vlog2.pop %v9080
      %v9941 = vmul.f32 %v9940, 0.6931472
      %v9942 = vlog2.pop %v9087
      %v9943 = vmul.f32 %v9942, 0.6931472
      %v9944 = vlog2.pop %v9094
      %v9945 = vmul.f32 %v9944, 0.6931472
      %v9946 = vlog2.pop %v9101
      %v9947 = vmul.f32 %v9946, 0.6931472
      %v9948 = vlog2.pop %v9108
      %v9949 = vmul.f32 %v9948, 0.6931472
      %v9950 = vlog2.pop %v9115
      %v9951 = vmul.f32 %v9950, 0.6931472
      %v9952 = vlog2.pop %v9122
      %v9953 = vmul.f32 %v9952, 0.6931472
      %v9954 = vlog2.pop %v9129
      %v9955 = vmul.f32 %v9954, 0.6931472
      %v9956 = vlog2.pop %v9136
      %v9957 = vmul.f32 %v9956, 0.6931472
      %v9958 = vlog2.pop %v9143
      %v9959 = vmul.f32 %v9958, 0.6931472
      %v9960 = vlog2.pop %v9150
      %v9961 = vmul.f32 %v9960, 0.6931472
      %v9962 = vlog2.pop %v9157
      %v9963 = vmul.f32 %v9962, 0.6931472
      %v9964 = vlog2.pop %v9164
      %v9965 = vmul.f32 %v9964, 0.6931472
      %v9966 = vlog2.pop %v9171
      %v9967 = vmul.f32 %v9966, 0.6931472
      %v9968 = vlog2.pop %v9178
      %v9969 = vmul.f32 %v9968, 0.6931472
      %v9970 = vlog2.pop %v9185
      %v9971 = vmul.f32 %v9970, 0.6931472
      %v9972 = vlog2.pop %v9192
      %v9973 = vmul.f32 %v9972, 0.6931472
      %v9974 = vlog2.pop %v9199
      %v9975 = vmul.f32 %v9974, 0.6931472
      %v9976 = vlog2.pop %v9206
      %v9977 = vmul.f32 %v9976, 0.6931472
      %v9978 = vlog2.pop %v9213
      %v9979 = vmul.f32 %v9978, 0.6931472
      %v9980 = vlog2.pop %v9220
      %v9981 = vmul.f32 %v9980, 0.6931472
      %v9982 = vlog2.pop %v9227
      %v9983 = vmul.f32 %v9982, 0.6931472
      %v9984 = vlog2.pop %v9234
      %v9985 = vmul.f32 %v9984, 0.6931472
      %v9986 = vlog2.pop %v9241
      %v9987 = vmul.f32 %v9986, 0.6931472
      %v9988 = vlog2.pop %v9248
      %v9989 = vmul.f32 %v9988, 0.6931472
      %v9990 = vlog2.pop %v9255
      %v9991 = vmul.f32 %v9990, 0.6931472
      %v9992 = vlog2.pop %v9262
      %v9993 = vmul.f32 %v9992, 0.6931472
      %v9994 = vlog2.pop %v9269
      %v9995 = vmul.f32 %v9994, 0.6931472
      %v9996 = vlog2.pop %v9276
      %v9997 = vmul.f32 %v9996, 0.6931472
      %v9998 = vlog2.pop %v9283
      %v9999 = vmul.f32 %v9998, 0.6931472
      %v10000 = vlog2.pop %v9290
      %v10001 = vmul.f32 %v10000, 0.6931472
      %v10002 = vlog2.pop %v9297
      %v10003 = vmul.f32 %v10002, 0.6931472
      %v10004 = vlog2.pop %v9304
      %v10005 = vmul.f32 %v10004, 0.6931472
      %v10006 = vlog2.pop %v9311
      %v10007 = vmul.f32 %v10006, 0.6931472
      %v10008 = vlog2.pop %v9318
      %v10009 = vmul.f32 %v10008, 0.6931472
      %v10010 = vlog2.pop %v9325
      %v10011 = vmul.f32 %v10010, 0.6931472
      %v10012 = vlog2.pop %v9332
      %v10013 = vmul.f32 %v10012, 0.6931472
      %v10014 = vlog2.pop %v9339
      %v10015 = vmul.f32 %v10014, 0.6931472
      %v10016 = vlog2.pop %v9346
      %v10017 = vmul.f32 %v10016, 0.6931472
      %v10018 = vlog2.pop %v9353
      %v10019 = vmul.f32 %v10018, 0.6931472
      %v10020 = vlog2.pop %v9360
      %v10021 = vmul.f32 %v10020, 0.6931472
      %v10022 = vlog2.pop %v9367
      %v10023 = vmul.f32 %v10022, 0.6931472
      %v10024 = vlog2.pop %v9374
      %v10025 = vmul.f32 %v10024, 0.6931472
      %v10026 = vlog2.pop %v9381
      %v10027 = vmul.f32 %v10026, 0.6931472
      %v10028 = vlog2.pop %v9388
      %v10029 = vmul.f32 %v10028, 0.6931472
      %v10030 = vlog2.pop %v9395
      %v10031 = vmul.f32 %v10030, 0.6931472
      %v10032 = vlog2.pop %v9402
      %v10033 = vmul.f32 %v10032, 0.6931472
      %v10034 = vlog2.pop %v9409
      %v10035 = vmul.f32 %v10034, 0.6931472
      %v10036 = vlog2.pop %v9416
      %v10037 = vmul.f32 %v10036, 0.6931472
      %v10038 = vlog2.pop %v9423
      %v10039 = vmul.f32 %v10038, 0.6931472
      %v10040 = vlog2.pop %v9430
      %v10041 = vmul.f32 %v10040, 0.6931472
      %v10042 = vlog2.pop %v9437
      %v10043 = vmul.f32 %v10042, 0.6931472
      %v10044 = vlog2.pop %v9444
      %v10045 = vmul.f32 %v10044, 0.6931472
      %v10046 = vlog2.pop %v9451
      %v10047 = vmul.f32 %v10046, 0.6931472
      %v10048 = vlog2.pop %v9458
      %v10049 = vmul.f32 %v10048, 0.6931472
      %v10050 = vlog2.pop %v9465
      %v10051 = vmul.f32 %v10050, 0.6931472
      %v10052 = vlog2.pop %v9472
      %v10053 = vmul.f32 %v10052, 0.6931472
      %v10054 = vlog2.pop %v9479
      %v10055 = vmul.f32 %v10054, 0.6931472
      %v10056 = vlog2.pop %v9486
      %v10057 = vmul.f32 %v10056, 0.6931472
      %v10058 = vlog2.pop %v9493
      %v10059 = vmul.f32 %v10058, 0.6931472
      %v10060 = vlog2.pop %v9500
      %v10061 = vmul.f32 %v10060, 0.6931472
      %v10062 = vlog2.pop %v9507
      %v10063 = vmul.f32 %v10062, 0.6931472
      %v10064 = vlog2.pop %v9514
      %v10065 = vmul.f32 %v10064, 0.6931472
      %v10066 = vlog2.pop %v9521
      %v10067 = vmul.f32 %v10066, 0.6931472
      %v10068 = vlog2.pop %v9528
      %v10069 = vmul.f32 %v10068, 0.6931472
      %v10070 = vlog2.pop %v9535
      %v10071 = vmul.f32 %v10070, 0.6931472
      %v10072 = vlog2.pop %v9542
      %v10073 = vmul.f32 %v10072, 0.6931472
      %v10074 = vlog2.pop %v9549
      %v10075 = vmul.f32 %v10074, 0.6931472
      %v10076 = vlog2.pop %v9556
      %v10077 = vmul.f32 %v10076, 0.6931472
      %v10078 = vlog2.pop %v9563
      %v10079 = vmul.f32 %v10078, 0.6931472
      %v10080 = vlog2.pop %v9570
      %v10081 = vmul.f32 %v10080, 0.6931472
      %v10082 = vlog2.pop %v9577
      %v10083 = vmul.f32 %v10082, 0.6931472
      %v10084 = vlog2.pop %v9584
      %v10085 = vmul.f32 %v10084, 0.6931472
      %v10086 = vlog2.pop %v9591
      %v10087 = vmul.f32 %v10086, 0.6931472
      %v10088 = vlog2.pop %v9598
      %v10089 = vmul.f32 %v10088, 0.6931472
      %v10090 = vlog2.pop %v9605
      %v10091 = vmul.f32 %v10090, 0.6931472
      %v10092 = vlog2.pop %v9612
      %v10093 = vmul.f32 %v10092, 0.6931472
      %v10094 = vlog2.pop %v9619
      %v10095 = vmul.f32 %v10094, 0.6931472
      %v10096 = vlog2.pop %v9626
      %v10097 = vmul.f32 %v10096, 0.6931472
      %v10098 = vlog2.pop %v9633
      %v10099 = vmul.f32 %v10098, 0.6931472
      %v10100 = vlog2.pop %v9640
      %v10101 = vmul.f32 %v10100, 0.6931472
      %v10102 = vlog2.pop %v9647
      %v10103 = vmul.f32 %v10102, 0.6931472
      %v10104 = vlog2.pop %v9654
      %v10105 = vmul.f32 %v10104, 0.6931472
      %v10106 = vlog2.pop %v9661
      %v10107 = vmul.f32 %v10106, 0.6931472
      %v10108 = vlog2.pop %v9668
      %v10109 = vmul.f32 %v10108, 0.6931472
      %v10110 = vlog2.pop %v9675
      %v10111 = vmul.f32 %v10110, 0.6931472
      %v10112 = vlog2.pop %v9682
      %v10113 = vmul.f32 %v10112, 0.6931472
      %v10114 = vlog2.pop %v9689
      %v10115 = vmul.f32 %v10114, 0.6931472
      %v10116 = vlog2.pop %v9696
      %v10117 = vmul.f32 %v10116, 0.6931472
      %v10118 = vlog2.pop %v9703
      %v10119 = vmul.f32 %v10118, 0.6931472
      %v10120 = vlog2.pop %v9710
      %v10121 = vmul.f32 %v10120, 0.6931472
      %v10122 = vlog2.pop %v9717
      %v10123 = vmul.f32 %v10122, 0.6931472
      %v10124 = vlog2.pop %v9724
      %v10125 = vmul.f32 %v10124, 0.6931472
      %v10126 = vlog2.pop %v9731
      %v10127 = vmul.f32 %v10126, 0.6931472
      %v10128 = vlog2.pop %v9738
      %v10129 = vmul.f32 %v10128, 0.6931472
      %v10130 = vlog2.pop %v9745
      %v10131 = vmul.f32 %v10130, 0.6931472
      %v10132 = vlog2.pop %v9752
      %v10133 = vmul.f32 %v10132, 0.6931472
      %v10134 = vlog2.pop %v9759
      %v10135 = vmul.f32 %v10134, 0.6931472
      %v10136 = vlog2.pop %v9766
      %v10137 = vmul.f32 %v10136, 0.6931472
      %v10138 = vlog2.pop %v9773
      %v10139 = vmul.f32 %v10138, 0.6931472
      %v10140 = vlog2.pop %v9780
      %v10141 = vmul.f32 %v10140, 0.6931472
      %v10142 = vlog2.pop %v9787
      %v10143 = vmul.f32 %v10142, 0.6931472
      %v10144 = vlog2.pop %v9794
      %v10145 = vmul.f32 %v10144, 0.6931472
      %v10146 = vlog2.pop %v9801
      %v10147 = vmul.f32 %v10146, 0.6931472
      %v10148 = vlog2.pop %v9808
      %v10149 = vmul.f32 %v10148, 0.6931472
      %v10150 = vlog2.pop %v9815
      %v10151 = vmul.f32 %v10150, 0.6931472
      %v10152 = vlog2.pop %v9822
      %v10153 = vmul.f32 %v10152, 0.6931472
      %v10154 = vlog2.pop %v9829
      %v10155 = vmul.f32 %v10154, 0.6931472
      %v10156 = vlog2.pop %v9836
      %v10157 = vmul.f32 %v10156, 0.6931472
      %v10158 = vlog2.pop %v9843
      %v10159 = vmul.f32 %v10158, 0.6931472
      %v10160 = vlog2.pop %v9850
      %v10161 = vmul.f32 %v10160, 0.6931472
      %v10162 = vlog2.pop %v9857
      %v10163 = vmul.f32 %v10162, 0.6931472
      %v10164 = vlog2.pop %v9864
      %v10165 = vmul.f32 %v10164, 0.6931472
      %v10166 = vlog2.pop %v9871
      %v10167 = vmul.f32 %v10166, 0.6931472
      %v10168 = vlog2.pop %v9878
      %v10169 = vmul.f32 %v10168, 0.6931472
      %v10170 = vlog2.pop %v9885
      %v10171 = vmul.f32 %v10170, 0.6931472
      %v10172 = vlog2.pop %v9892
      %v10173 = vmul.f32 %v10172, 0.6931472
      %v10174 = vlog2.pop %v9899
      %v10175 = vmul.f32 %v10174, 0.6931472
      %v10176 = vlog2.pop %v9906
      %v10177 = vmul.f32 %v10176, 0.6931472
      %v10178 = vlog2.pop %v9913
      %v10179 = vmul.f32 %v10178, 0.6931472
      %v10180 = vlog2.pop %v9920
      %v10181 = vmul.f32 %v10180, 0.6931472
      %v10182 = vlog2.pop %v9927
      %v10183 = vmul.f32 %v10182, 0.6931472
      %vm10312 = vcmask 1041409
      %v10313 = vsel %vm10312, %v9931, %v9929
      %vm10314 = vcmask 1042434
      %v10315 = vsel %vm10314, %v9933, %v10313
      %vm10316 = vcmask 1043459
      %v10317 = vsel %vm10316, %v9935, %v10315
      %vm10318 = vcmask 1044484
      %v10319 = vsel %vm10318, %v9937, %v10317
      %vm10320 = vcmask 1045509
      %v10321 = vsel %vm10320, %v9939, %v10319
      %vm10322 = vcmask 1046534
      %v10323 = vsel %vm10322, %v9941, %v10321
      %vm10324 = vcmask 1047559
      %v10325 = vsel %vm10324, %v9943, %v10323
      %v10326 = vsel %vm10312, %v9947, %v9945
      %v10327 = vsel %vm10314, %v9949, %v10326
      %v10328 = vsel %vm10316, %v9951, %v10327
      %v10329 = vsel %vm10318, %v9953, %v10328
      %v10330 = vsel %vm10320, %v9955, %v10329
      %v10331 = vsel %vm10322, %v9957, %v10330
      %v10332 = vsel %vm10324, %v9959, %v10331
      %v10333 = vsel %vm10312, %v9963, %v9961
      %v10334 = vsel %vm10314, %v9965, %v10333
      %v10335 = vsel %vm10316, %v9967, %v10334
      %v10336 = vsel %vm10318, %v9969, %v10335
      %v10337 = vsel %vm10320, %v9971, %v10336
      %v10338 = vsel %vm10322, %v9973, %v10337
      %v10339 = vsel %vm10324, %v9975, %v10338
      %v10340 = vsel %vm10312, %v9979, %v9977
      %v10341 = vsel %vm10314, %v9981, %v10340
      %v10342 = vsel %vm10316, %v9983, %v10341
      %v10343 = vsel %vm10318, %v9985, %v10342
      %v10344 = vsel %vm10320, %v9987, %v10343
      %v10345 = vsel %vm10322, %v9989, %v10344
      %v10346 = vsel %vm10324, %v9991, %v10345
      %v10347 = vsel %vm10312, %v9995, %v9993
      %v10348 = vsel %vm10314, %v9997, %v10347
      %v10349 = vsel %vm10316, %v9999, %v10348
      %v10350 = vsel %vm10318, %v10001, %v10349
      %v10351 = vsel %vm10320, %v10003, %v10350
      %v10352 = vsel %vm10322, %v10005, %v10351
      %v10353 = vsel %vm10324, %v10007, %v10352
      %v10354 = vsel %vm10312, %v10011, %v10009
      %v10355 = vsel %vm10314, %v10013, %v10354
      %v10356 = vsel %vm10316, %v10015, %v10355
      %v10357 = vsel %vm10318, %v10017, %v10356
      %v10358 = vsel %vm10320, %v10019, %v10357
      %v10359 = vsel %vm10322, %v10021, %v10358
      %v10360 = vsel %vm10324, %v10023, %v10359
      %v10361 = vsel %vm10312, %v10027, %v10025
      %v10362 = vsel %vm10314, %v10029, %v10361
      %v10363 = vsel %vm10316, %v10031, %v10362
      %v10364 = vsel %vm10318, %v10033, %v10363
      %v10365 = vsel %vm10320, %v10035, %v10364
      %v10366 = vsel %vm10322, %v10037, %v10365
      %v10367 = vsel %vm10324, %v10039, %v10366
      %v10368 = vsel %vm10312, %v10043, %v10041
      %v10369 = vsel %vm10314, %v10045, %v10368
      %v10370 = vsel %vm10316, %v10047, %v10369
      %v10371 = vsel %vm10318, %v10049, %v10370
      %v10372 = vsel %vm10320, %v10051, %v10371
      %v10373 = vsel %vm10322, %v10053, %v10372
      %v10374 = vsel %vm10324, %v10055, %v10373
      %v10375 = vsel %vm10312, %v10059, %v10057
      %v10376 = vsel %vm10314, %v10061, %v10375
      %v10377 = vsel %vm10316, %v10063, %v10376
      %v10378 = vsel %vm10318, %v10065, %v10377
      %v10379 = vsel %vm10320, %v10067, %v10378
      %v10380 = vsel %vm10322, %v10069, %v10379
      %v10381 = vsel %vm10324, %v10071, %v10380
      %v10382 = vsel %vm10312, %v10075, %v10073
      %v10383 = vsel %vm10314, %v10077, %v10382
      %v10384 = vsel %vm10316, %v10079, %v10383
      %v10385 = vsel %vm10318, %v10081, %v10384
      %v10386 = vsel %vm10320, %v10083, %v10385
      %v10387 = vsel %vm10322, %v10085, %v10386
      %v10388 = vsel %vm10324, %v10087, %v10387
      %v10389 = vsel %vm10312, %v10091, %v10089
      %v10390 = vsel %vm10314, %v10093, %v10389
      %v10391 = vsel %vm10316, %v10095, %v10390
      %v10392 = vsel %vm10318, %v10097, %v10391
      %v10393 = vsel %vm10320, %v10099, %v10392
      %v10394 = vsel %vm10322, %v10101, %v10393
      %v10395 = vsel %vm10324, %v10103, %v10394
      %v10396 = vsel %vm10312, %v10107, %v10105
      %v10397 = vsel %vm10314, %v10109, %v10396
      %v10398 = vsel %vm10316, %v10111, %v10397
      %v10399 = vsel %vm10318, %v10113, %v10398
      %v10400 = vsel %vm10320, %v10115, %v10399
      %v10401 = vsel %vm10322, %v10117, %v10400
      %v10402 = vsel %vm10324, %v10119, %v10401
      %v10403 = vsel %vm10312, %v10123, %v10121
      %v10404 = vsel %vm10314, %v10125, %v10403
      %v10405 = vsel %vm10316, %v10127, %v10404
      %v10406 = vsel %vm10318, %v10129, %v10405
      %v10407 = vsel %vm10320, %v10131, %v10406
      %v10408 = vsel %vm10322, %v10133, %v10407
      %v10409 = vsel %vm10324, %v10135, %v10408
      %v10410 = vsel %vm10312, %v10139, %v10137
      %v10411 = vsel %vm10314, %v10141, %v10410
      %v10412 = vsel %vm10316, %v10143, %v10411
      %v10413 = vsel %vm10318, %v10145, %v10412
      %v10414 = vsel %vm10320, %v10147, %v10413
      %v10415 = vsel %vm10322, %v10149, %v10414
      %v10416 = vsel %vm10324, %v10151, %v10415
      %v10417 = vsel %vm10312, %v10155, %v10153
      %v10418 = vsel %vm10314, %v10157, %v10417
      %v10419 = vsel %vm10316, %v10159, %v10418
      %v10420 = vsel %vm10318, %v10161, %v10419
      %v10421 = vsel %vm10320, %v10163, %v10420
      %v10422 = vsel %vm10322, %v10165, %v10421
      %v10423 = vsel %vm10324, %v10167, %v10422
      %v10424 = vsel %vm10312, %v10171, %v10169
      %v10425 = vsel %vm10314, %v10173, %v10424
      %v10426 = vsel %vm10316, %v10175, %v10425
      %v10427 = vsel %vm10318, %v10177, %v10426
      %v10428 = vsel %vm10320, %v10179, %v10427
      %v10429 = vsel %vm10322, %v10181, %v10428
      %v10430 = vsel %vm10324, %v10183, %v10429
      %10447 = vst.msk [vmem:[%s172] sm:$0xff] %vm302, %v10325
      %10448 = vst.msk [vmem:[%s172 + $0x8] sm:$0xff] %vm302, %v10332
      %10449 = vst.msk [vmem:[%s172 + $0x10] sm:$0xff] %vm302, %v10339
      %10450 = vst.msk [vmem:[%s172 + $0x18] sm:$0xff] %vm302, %v10346
      %10451 = vst.msk [vmem:[%s172 + $0x20] sm:$0xff] %vm302, %v10353
      %10452 = vst.msk [vmem:[%s172 + $0x28] sm:$0xff] %vm302, %v10360
      %10453 = vst.msk [vmem:[%s172 + $0x30] sm:$0xff] %vm302, %v10367
      %10454 = vst.msk [vmem:[%s172 + $0x38] sm:$0xff] %vm302, %v10374
      %10455 = vst.msk [vmem:[%s172 + $0x40] sm:$0xff] %vm302, %v10381
      %10456 = vst.msk [vmem:[%s172 + $0x48] sm:$0xff] %vm302, %v10388
      %10457 = vst.msk [vmem:[%s172 + $0x50] sm:$0xff] %vm302, %v10395
      %10458 = vst.msk [vmem:[%s172 + $0x58] sm:$0xff] %vm302, %v10402
      %10459 = vst.msk [vmem:[%s172 + $0x60] sm:$0xff] %vm302, %v10409
      %10460 = vst.msk [vmem:[%s172 + $0x68] sm:$0xff] %vm302, %v10416
      %10461 = vst.msk [vmem:[%s172 + $0x70] sm:$0xff] %vm302, %v10423
      %10462 = vst.msk [vmem:[%s172 + $0x78] sm:$0xff] %vm302, %v10430
      %s10463 = smul.u32 16, %s14
      %p10464 = scmp.lt.s32.totalorder %s10463, 31
      %s10465 = scalar_select %p10464, %s10463, 31
      %s10466 = smul.addr %s10465, 8
      %s10467 = scalar_lea.vmem %s3, %s10466
      // Predicated region
      $region33: #{tpu_custom_call.1} parent=31 // pred_check
        %p10468 = pneg %p100
      $region34: #{tpu_custom_call.1} parent=31 // pred_check_branch
        %10470 = sbr.rel (%p10468) target = $region36
      $region35: #{tpu_custom_call.1} parent=31 // pred_region
        %s10471 = smul.u32 16, %s14
      $region36: #{tpu_custom_call.1} parent=31 // pred_fallthru
        _
    $region32: #{tpu_custom_call.1} parent=5 // pred_fallthru
      _
    %p10472 = scmp.le.s32.totalorder 2, %s9
    // Predicated region
    $region37: #{tpu_custom_call.1} parent=5 // pred_check
      %p10473 = pneg %p10472
    $region38: #{tpu_custom_call.1} parent=5 // pred_check_branch
      %10475 = sbr.rel (%p10473) target = $region40
    $region39: #{tpu_custom_call.1} parent=5 // pred_region
      %s10476 = ssub.s32 %s9, 2
      // Predicated region
      $region41: #{tpu_custom_call.1} parent=39 // pred_check
        %p10477 = pneg %p106
      $region42: #{tpu_custom_call.1} parent=39 // pred_check_branch
        %10479 = sbr.rel (%p10477) target = $region44
      $region43: #{tpu_custom_call.1} parent=39 // pred_region
        %s10480 = smul.u32 16, %s15
        %p10481 = scmp.lt.s32.totalorder %s10480, 31
        %s10482 = scalar_select %p10481, %s10480, 31
        %s10483 = smul.addr %s10482, 8
        %s10484 = scalar_lea.vmem %s3, %s10483
      $region44: #{tpu_custom_call.1} parent=39 // pred_fallthru
        _
    $region40: #{tpu_custom_call.1} parent=5 // pred_fallthru
      _
  $region6: #{tpu_custom_call.1} parent=0 // loop_footer
    %s13 = sadd.s32 1, %s9
  $region7: #{tpu_custom_call.1} parent=0 // loop_footer_branch
    %8 = sbr.rel target = $region3
  $region8: #{tpu_custom_call.1} parent=0 // loop_exit
    _

</llo_original>
